<compile_context>
chip_gen: v6e
topology: v6e:2x2x1
jax: 0.10.0
libtpu: 0.0.40
codegen_flags: <defaults>
</compile_context>

<pallas_src>
import math
import functools

import jax
import jax.numpy as jnp
from jax.experimental import pallas as pl
from jax.experimental.pallas import tpu as pltpu


_LANE = 128          # vreg lane width / MXU column alignment target
_PALLAS_MIN_P = 64   # below this many output pixels a pallas_call is pure overhead


def _round_up(n, m):
    return ((n + m - 1) // m) * m


# ----------------------------------------------------------------------------
# Pallas kernels
# ----------------------------------------------------------------------------

def _conv_mm_kernel(p_ref, w_ref, b_ref, o_ref, *, apply_relu):
    """p_ref: (1, TP, K_pad) bf16   w_ref: (K_pad, Cout_pad) bf16
    b_ref: (1, Cout_pad) f32        o_ref: (1, TP, Cout_pad) bf16.
    One MXU matmul contracting over the zero-padded K, with bias add, optional
    ReLU and the bf16 down-cast fused into the epilogue (f32 accumulate)."""
    acc = jnp.dot(p_ref[0], w_ref[...], preferred_element_type=jnp.float32)
    acc = acc + b_ref[...]                         # (TP,Cout_pad) + (1,Cout_pad)
    if apply_relu:
        acc = jnp.maximum(acc, 0.0)
    o_ref[0] = acc.astype(o_ref.dtype)


def _l2norm_kernel(x_ref, w_ref, o_ref):
    """x_ref: (1, P, C) (any float), w_ref: (1, C) f32, o_ref: (1, P, C) f32.
    out = weight * x * rsqrt(sum(x^2) + tiny)  (SSD L2Norm semantics)."""
    x = x_ref[0].astype(jnp.float32)                        # (P, C)
    sumsq = jnp.sum(x * x, axis=-1, keepdims=True)
    inv = jax.lax.rsqrt(sumsq + 1e-20)                      # EUP slot, ~free
    o_ref[0] = ((x * inv) * w_ref[...]).astype(o_ref.dtype)


# ----------------------------------------------------------------------------
# Glue: im2col, conv dispatch (Pallas vs. tiny-layer fallback), L2Norm, pooling
# ----------------------------------------------------------------------------

def _im2col_flat(x, KH, KW, stride, pad, dilation):
    """x: (B, H, W, C) -> patches (B, Ho*Wo, KH*KW*C), plus (Ho, Wo)."""
    B, H, W, C = x.shape
    Ho = (H + 2 * pad - dilation * (KH - 1) - 1) // stride + 1
    Wo = (W + 2 * pad - dilation * (KW - 1) - 1) // stride + 1
    xp = jnp.pad(x, ((0, 0), (pad, pad), (pad, pad), (0, 0)))
    taps = []
    for ky in range(KH):
        for kx in range(KW):
            sl = xp[:, ky * dilation: ky * dilation + (Ho - 1) * stride + 1: stride,
                       kx * dilation: kx * dilation + (Wo - 1) * stride + 1: stride, :]
            taps.append(sl.reshape(B, Ho * Wo, C))
    patches = jnp.concatenate(taps, axis=-1)       # (B, P, KH*KW*C)
    return patches, Ho, Wo


def _conv2d_pallas(x, w, b, *, stride, pad, dilation, relu, out_dtype):
    B, H, W, Cin = x.shape
    KH, KW, _, Cout = w.shape
    patches, Ho, Wo = _im2col_flat(x, KH, KW, stride, pad, dilation)
    P = Ho * Wo
    K = KH * KW * Cin

    # Lane-dense padding of both the contraction dim and the output channels.
    K_pad = _round_up(K, _LANE)
    Cout_pad = _round_up(Cout, _LANE)

    # Large spatial tiles: at this scale a single tile per batch element.
    TP = min(2048, _round_up(P, 8))
    P_pad = _round_up(P, TP)

    patches = jnp.pad(patches.astype(jnp.bfloat16),
                      ((0, 0), (0, P_pad - P), (0, K_pad - K)))
    wm = jnp.pad(w.reshape(K, Cout).astype(jnp.bfloat16),
                 ((0, K_pad - K), (0, Cout_pad - Cout)))
    bm = jnp.pad(b.astype(jnp.float32), (0, Cout_pad - Cout)).reshape(1, Cout_pad)

    out = pl.pallas_call(
        functools.partial(_conv_mm_kernel, apply_relu=relu),
        out_shape=jax.ShapeDtypeStruct((B, P_pad, Cout_pad), out_dtype),
        grid=(B, P_pad // TP),
        in_specs=[
            pl.BlockSpec((1, TP, K_pad), lambda bb, pp: (bb, pp, 0)),
            pl.BlockSpec((K_pad, Cout_pad), lambda bb, pp: (0, 0)),
            pl.BlockSpec((1, Cout_pad), lambda bb, pp: (0, 0)),
        ],
        out_specs=pl.BlockSpec((1, TP, Cout_pad), lambda bb, pp: (bb, pp, 0)),
        compiler_params=pltpu.CompilerParams(
            dimension_semantics=("parallel", "parallel")),
    )(patches, wm, bm)
    return out[:, :P, :Cout].reshape(B, Ho, Wo, Cout)


def _conv2d_xla(x, w, b, *, stride, pad, dilation, relu, out_dtype):
    # Tiny late layers / heads: a pallas_call here is pure launch overhead,
    # so compute them as plain XLA glue (per performance review).
    y = jax.lax.conv_general_dilated(
        x.astype(jnp.float32), w.astype(jnp.float32),
        window_strides=(stride, stride),
        padding=((pad, pad), (pad, pad)),
        rhs_dilation=(dilation, dilation),
        dimension_numbers=('NHWC', 'HWIO', 'NHWC'))
    y = y + b.reshape(1, 1, 1, -1).astype(jnp.float32)
    if relu:
        y = jnp.maximum(y, 0.0)
    return y.astype(out_dtype)


def conv2d(x, w, b, *, stride=1, pad=0, dilation=1, relu=False,
           out_dtype=jnp.bfloat16):
    """x: (B,H,W,Cin) NHWC.  w: (KH,KW,Cin,Cout) f32.  b: (Cout,) f32."""
    B, H, W, Cin = x.shape
    KH, KW, _, Cout = w.shape
    Ho = (H + 2 * pad - dilation * (KH - 1) - 1) // stride + 1
    Wo = (W + 2 * pad - dilation * (KW - 1) - 1) // stride + 1
    if Ho * Wo >= _PALLAS_MIN_P:
        return _conv2d_pallas(x, w, b, stride=stride, pad=pad, dilation=dilation,
                              relu=relu, out_dtype=out_dtype)
    return _conv2d_xla(x, w, b, stride=stride, pad=pad, dilation=dilation,
                       relu=relu, out_dtype=out_dtype)


def l2norm_pallas(x, weight):
    """SSD L2Norm: per-pixel channel L2 normalization scaled by learned weight."""
    B, H, W, C = x.shape
    P = H * W
    xf = x.reshape(B, P, C)
    wf = weight.reshape(1, C).astype(jnp.float32)
    out = pl.pallas_call(
        _l2norm_kernel,
        out_shape=jax.ShapeDtypeStruct((B, P, C), jnp.float32),
        grid=(B,),
        in_specs=[
            pl.BlockSpec((1, P, C), lambda bb: (bb, 0, 0)),
            pl.BlockSpec((1, C), lambda bb: (0, 0)),
        ],
        out_specs=pl.BlockSpec((1, P, C), lambda bb: (bb, 0, 0)),
        compiler_params=pltpu.CompilerParams(dimension_semantics=("parallel",)),
    )(xf, wf)
    return out.reshape(B, H, W, C)


def maxpool2d(x, k=2, s=2, pad=0, ceil_mode=False):
    # Pooling is not the hot path; lax.reduce_window glue.
    B, H, W, C = x.shape

    def osz(n):
        v = (n + 2 * pad - k) / s
        v = math.ceil(v) if ceil_mode else math.floor(v)
        return int(v) + 1

    Ho, Wo = osz(H), osz(W)
    hi_h = max((Ho - 1) * s + k - H - pad, 0)
    hi_w = max((Wo - 1) * s + k - W - pad, 0)
    neg_inf = jnp.array(-jnp.inf, dtype=x.dtype)
    return jax.lax.reduce_window(
        x, neg_inf, jax.lax.max,
        window_dimensions=(1, k, k, 1),
        window_strides=(1, s, s, 1),
        padding=((0, 0), (pad, hi_h), (pad, hi_w), (0, 0)))


# ----------------------------------------------------------------------------
# Parameter construction (deterministic, synthetic — mini Sph_SSD)
# ----------------------------------------------------------------------------

def _conv_params(key, cin, cout, k):
    kw, kb = jax.random.split(key)
    fan_in = cin * k * k
    w = jax.random.normal(kw, (k, k, cin, cout), jnp.float32) / math.sqrt(fan_in)
    b = 0.01 * jax.random.normal(kb, (cout,), jnp.float32)
    return w, b


def build_params(key, in_ch=3, H=32, W=64, num_classes=3):
    # Mini VGG base with the same layer layout as SSD's base['300'], ReLU fused
    # into every conv.  PyTorch's split at vgg index 23 (just after conv4_3 +
    # ReLU) is tracked as `vgg_split`.
    cfg = [8, 8, 'M', 16, 16, 'M', 32, 32, 32, 'C', 32, 32, 32, 'C', 32, 32, 32]
    vgg = []
    c = in_ch
    orig_idx = 0
    vgg_split = None
    for v in cfg:
        if v == 'M':
            vgg.append(('pool', dict(k=2, s=2, pad=0, ceil_mode=False)))
            orig_idx += 1
        elif v == 'C':
            vgg.append(('pool', dict(k=2, s=2, pad=0, ceil_mode=True)))
            orig_idx += 1
        else:
            key, sub = jax.random.split(key)
            w, b = _conv_params(sub, c, v, 3)
            vgg.append(('conv', w, b, dict(stride=1, pad=1, dilation=1, relu=True)))
            orig_idx += 2                       # conv + (fused) relu
            c = v
        if orig_idx == 23 and vgg_split is None:
            vgg_split = len(vgg)                # L2Norm source tap point
    assert vgg_split == 13

    # pool5, conv6 (dilated) + relu, conv7 (1x1) + relu — relu fused.
    vgg.append(('pool', dict(k=3, s=1, pad=1, ceil_mode=False)))
    key, sub = jax.random.split(key)
    w, b = _conv_params(sub, c, 64, 3)
    vgg.append(('conv', w, b, dict(stride=1, pad=2, dilation=2, relu=True)))
    key, sub = jax.random.split(key)
    w, b = _conv_params(sub, 64, 64, 1)
    vgg.append(('conv', w, b, dict(stride=1, pad=0, dilation=1, relu=True)))
    assert len(vgg) == 20

    # L2Norm(conv4_3 channels, scale=20).
    l2norm_w = jnp.full((32,), 20.0, jnp.float32)

    # Extras: mirrors add_extras([16,'S',32, 16,'S',32], in=64)
    extras = []
    for cin, cout, kk, st, pd in [(64, 16, 1, 1, 0), (16, 32, 3, 2, 1),
                                  (32, 16, 1, 1, 0), (16, 32, 3, 2, 1)]:
        key, sub = jax.random.split(key)
        w, b = _conv_params(sub, cin, cout, kk)
        extras.append((w, b, dict(stride=st, pad=pd, dilation=1)))

    # Multibox heads (3x3, pad 1) for the 4 source feature maps.
    src_ch = [32, 64, 32, 32]
    mbox = [4, 6, 6, 6]
    annot_len = 4
    loc_head, conf_head = [], []
    for ch, m in zip(src_ch, mbox):
        key, sl = jax.random.split(key)
        w, b = _conv_params(sl, ch, m * annot_len, 3)
        loc_head.append((w, b, dict(stride=1, pad=1, dilation=1)))
        key, sc = jax.random.split(key)
        w, b = _conv_params(sc, ch, m * num_classes, 3)
        conf_head.append((w, b, dict(stride=1, pad=1, dilation=1)))

    # Priors (placeholder geometry, correct shape).
    f0 = (H // 8, W // 8)
    f1 = (H // 16, W // 16)
    f2 = (-(-f1[0] // 2), -(-f1[1] // 2))
    f3 = (-(-f2[0] // 2), -(-f2[1] // 2))
    feats = [f0, f1, f2, f3]
    num_priors = sum(h * w * m for (h, w), m in zip(feats, mbox))
    key, kp = jax.random.split(key)
    priors = jax.random.uniform(kp, (num_priors, annot_len), jnp.float32)

    return dict(vgg=vgg, vgg_split=vgg_split, l2norm_w=l2norm_w, extras=extras,
                loc=loc_head, conf=conf_head, mbox=mbox, priors=priors,
                num_classes=num_classes)


# ----------------------------------------------------------------------------
# Forward pass (mirrors Sph_SSD.forward)
# ----------------------------------------------------------------------------

def _apply_vgg_layer(layer, x):
    kind = layer[0]
    if kind == 'conv':
        _, w, b, cfg = layer
        return conv2d(x, w, b, out_dtype=jnp.bfloat16, **cfg)
    if kind == 'pool':
        return maxpool2d(x, **layer[1])
    raise ValueError(kind)


def sph_ssd_forward(params, x_nchw):
    x = jnp.transpose(x_nchw.astype(jnp.float32), (0, 2, 3, 1))  # NCHW -> NHWC

    sources, loc, conf = [], [], []
    vgg = params['vgg']
    split = params['vgg_split']

    for k in range(split):                      # through conv4_3 + ReLU
        x = _apply_vgg_layer(vgg[k], x)
    s = l2norm_pallas(x, params['l2norm_w'])
    sources.append(s)

    for k in range(split, len(vgg)):
        x = _apply_vgg_layer(vgg[k], x)
    sources.append(x)

    for k, (w, b, cfg) in enumerate(params['extras']):
        x = conv2d(x, w, b, relu=True, out_dtype=jnp.bfloat16, **cfg)
        if k % 2 == 1:
            sources.append(x)

    annot_len = params['priors'].shape[1]
    num_classes = params['num_classes']
    for src, (lw, lb, lcfg), (cw, cb, _ccfg), m in zip(
            sources, params['loc'], params['conf'], params['mbox']):
        # Fuse the loc and conf heads into one conv with concatenated Cout,
        # then split; head outputs kept in f32 for numeric stability.
        wf = jnp.concatenate([lw, cw], axis=-1)
        bf = jnp.concatenate([lb, cb], axis=0)
        out = conv2d(src, wf, bf, out_dtype=jnp.float32, **lcfg)
        loc_c = m * annot_len
        # NHWC output is already the .permute(0, 2, 3, 1) of PyTorch's NCHW.
        loc.append(out[..., :loc_c])
        conf.append(out[..., loc_c:loc_c + m * num_classes])

    loc = jnp.concatenate([o.reshape(o.shape[0], -1) for o in loc], axis=1)
    conf = jnp.concatenate([o.reshape(o.shape[0], -1) for o in conf], axis=1)

    output = (loc.reshape(loc.shape[0], -1, annot_len),
              conf.reshape(conf.shape[0], -1, num_classes),
              params['priors'])
    assert output[0].shape[-2] == output[2].shape[-2]
    return output


# ----------------------------------------------------------------------------

if __name__ == "__main__":
    key = jax.random.PRNGKey(0)
    kparams, kx = jax.random.split(key)

    B, C, H, W = 2, 3, 32, 64          # spherical 2:1 aspect, mini scale
    params = build_params(kparams, in_ch=C, H=H, W=W, num_classes=3)
    x = jax.random.normal(kx, (B, C, H, W), jnp.float32)

    fwd = jax.jit(lambda inp: sph_ssd_forward(params, inp))
    loc, conf, priors = fwd(x)
    jax.block_until_ready((loc, conf, priors))

    num_priors = priors.shape[0]
    assert loc.shape == (B, num_priors, 4)
    assert conf.shape == (B, num_priors, 3)
    assert bool(jnp.all(jnp.isfinite(loc))) and bool(jnp.all(jnp.isfinite(conf)))
    print("KERNEL_OK")
</pallas_src>

<mosaic_0001>
module attributes {stable_mosaic.version = 11 : i64} {
  func.func @_conv_mm_kernel(%arg0: i32, %arg1: i32, %arg2: memref<1x2048x128xbf16, #tpu.memory_space<vmem>>, %arg3: memref<128x128xbf16, #tpu.memory_space<vmem>>, %arg4: memref<1x128xf32, #tpu.memory_space<vmem>>, %arg5: memref<1x2048x128xbf16, #tpu.memory_space<vmem>>) attributes {dimension_semantics = [#tpu.dimension_semantics<parallel>, #tpu.dimension_semantics<parallel>], iteration_bounds = array<i64: 2, 1>, scalar_prefetch = 0 : i64, scratch_operands = 0 : i64, tpu.core_type = #tpu.core_type<tc>, window_params = [{transform_indices = @transform_0, window_bounds = array<i64: 1, 2048, 128>}, {pipeline_mode = #tpu.pipeline_mode<synchronous>, transform_indices = @transform_1, window_bounds = array<i64: 128, 128>}, {pipeline_mode = #tpu.pipeline_mode<synchronous>, transform_indices = @transform_2, window_bounds = array<i64: 1, 128>}, {transform_indices = @transform_3, window_bounds = array<i64: 1, 2048, 128>}]} {
    %c0 = arith.constant 0 : index
    %c0_0 = arith.constant 0 : index
    %c0_1 = arith.constant 0 : index
    %0 = vector.load %arg2[%c0, %c0_0, %c0_1] : memref<1x2048x128xbf16, #tpu.memory_space<vmem>>, vector<1x2048x128xbf16>
    %1 = vector.shape_cast %0 : vector<1x2048x128xbf16> to vector<2048x128xbf16>
    %c0_2 = arith.constant 0 : index
    %c0_3 = arith.constant 0 : index
    %2 = vector.load %arg3[%c0_2, %c0_3] : memref<128x128xbf16, #tpu.memory_space<vmem>>, vector<128x128xbf16>
    %cst = arith.constant dense<0.000000e+00> : vector<2048x128xf32>
    %3 = tpu.matmul %1, %2, %cst {dimension_numbers = #tpu.dot_dimension_numbers<[1], [0], [0], [1], [0, 0, 1, 1], [], []>} : vector<2048x128xbf16>, vector<128x128xbf16>, vector<2048x128xf32> -> vector<2048x128xf32>
    %c0_4 = arith.constant 0 : index
    %c0_5 = arith.constant 0 : index
    %4 = vector.load %arg4[%c0_4, %c0_5] : memref<1x128xf32, #tpu.memory_space<vmem>>, vector<1x128xf32>
    %5 = vector.broadcast %4 : vector<1x128xf32> to vector<2048x128xf32>
    %6 = arith.addf %3, %5 : vector<2048x128xf32>
    %cst_6 = arith.constant 0.000000e+00 : f32
    %7 = vector.broadcast %cst_6 : f32 to vector<2048x128xf32>
    %8 = arith.maximumf %6, %7 : vector<2048x128xf32>
    %9 = arith.truncf %8 : vector<2048x128xf32> to vector<2048x128xbf16>
    %c0_7 = arith.constant 0 : index
    %c0_8 = arith.constant 0 : index
    %c0_9 = arith.constant 0 : index
    %10 = vector.load %arg5[%c0_7, %c0_8, %c0_9] : memref<1x2048x128xbf16, #tpu.memory_space<vmem>>, vector<1x2048x128xbf16>
    %11 = vector.shape_cast %10 : vector<1x2048x128xbf16> to vector<2048x128xbf16>
    %12 = vector.shape_cast %9 : vector<2048x128xbf16> to vector<1x2048x128xbf16>
    tpu.vector_store %arg5[%c0_7, %c0_8, %c0_9], %12 {strides = array<i32>} : memref<1x2048x128xbf16, #tpu.memory_space<vmem>>, vector<1x2048x128xbf16>,
    return
  }
  func.func @transform_0(%arg0: i32, %arg1: i32) -> (i32, i32, i32) {
    %c0_i32 = arith.constant 0 : i32
    %c0_i32_0 = arith.constant 0 : i32
    return %arg0, %arg1, %c0_i32 : i32, i32, i32
  }
  func.func @transform_1(%arg0: i32, %arg1: i32) -> (i32, i32) {
    %c0_i32 = arith.constant 0 : i32
    %c0_i32_0 = arith.constant 0 : i32
    %c0_i32_1 = arith.constant 0 : i32
    return %c0_i32, %c0_i32_0 : i32, i32
  }
  func.func @transform_2(%arg0: i32, %arg1: i32) -> (i32, i32) {
    %c0_i32 = arith.constant 0 : i32
    %c0_i32_0 = arith.constant 0 : i32
    %c0_i32_1 = arith.constant 0 : i32
    return %c0_i32, %c0_i32_0 : i32, i32
  }
  func.func @transform_3(%arg0: i32, %arg1: i32) -> (i32, i32, i32) {
    %c0_i32 = arith.constant 0 : i32
    %c0_i32_0 = arith.constant 0 : i32
    return %arg0, %arg1, %c0_i32 : i32, i32, i32
  }
}

module attributes {stable_mosaic.version = 11 : i64} {
  func.func @_conv_mm_kernel(%arg0: i32, %arg1: i32, %arg2: memref<1x512x128xbf16, #tpu.memory_space<vmem>>, %arg3: memref<128x128xbf16, #tpu.memory_space<vmem>>, %arg4: memref<1x128xf32, #tpu.memory_space<vmem>>, %arg5: memref<1x512x128xbf16, #tpu.memory_space<vmem>>) attributes {dimension_semantics = [#tpu.dimension_semantics<parallel>, #tpu.dimension_semantics<parallel>], iteration_bounds = array<i64: 2, 1>, scalar_prefetch = 0 : i64, scratch_operands = 0 : i64, tpu.core_type = #tpu.core_type<tc>, window_params = [{transform_indices = @transform_0, window_bounds = array<i64: 1, 512, 128>}, {pipeline_mode = #tpu.pipeline_mode<synchronous>, transform_indices = @transform_1, window_bounds = array<i64: 128, 128>}, {pipeline_mode = #tpu.pipeline_mode<synchronous>, transform_indices = @transform_2, window_bounds = array<i64: 1, 128>}, {transform_indices = @transform_3, window_bounds = array<i64: 1, 512, 128>}]} {
    %c0 = arith.constant 0 : index
    %c0_0 = arith.constant 0 : index
    %c0_1 = arith.constant 0 : index
    %0 = vector.load %arg2[%c0, %c0_0, %c0_1] : memref<1x512x128xbf16, #tpu.memory_space<vmem>>, vector<1x512x128xbf16>
    %1 = vector.shape_cast %0 : vector<1x512x128xbf16> to vector<512x128xbf16>
    %c0_2 = arith.constant 0 : index
    %c0_3 = arith.constant 0 : index
    %2 = vector.load %arg3[%c0_2, %c0_3] : memref<128x128xbf16, #tpu.memory_space<vmem>>, vector<128x128xbf16>
    %cst = arith.constant dense<0.000000e+00> : vector<512x128xf32>
    %3 = tpu.matmul %1, %2, %cst {dimension_numbers = #tpu.dot_dimension_numbers<[1], [0], [0], [1], [0, 0, 1, 1], [], []>} : vector<512x128xbf16>, vector<128x128xbf16>, vector<512x128xf32> -> vector<512x128xf32>
    %c0_4 = arith.constant 0 : index
    %c0_5 = arith.constant 0 : index
    %4 = vector.load %arg4[%c0_4, %c0_5] : memref<1x128xf32, #tpu.memory_space<vmem>>, vector<1x128xf32>
    %5 = vector.broadcast %4 : vector<1x128xf32> to vector<512x128xf32>
    %6 = arith.addf %3, %5 : vector<512x128xf32>
    %cst_6 = arith.constant 0.000000e+00 : f32
    %7 = vector.broadcast %cst_6 : f32 to vector<512x128xf32>
    %8 = arith.maximumf %6, %7 : vector<512x128xf32>
    %9 = arith.truncf %8 : vector<512x128xf32> to vector<512x128xbf16>
    %c0_7 = arith.constant 0 : index
    %c0_8 = arith.constant 0 : index
    %c0_9 = arith.constant 0 : index
    %10 = vector.load %arg5[%c0_7, %c0_8, %c0_9] : memref<1x512x128xbf16, #tpu.memory_space<vmem>>, vector<1x512x128xbf16>
    %11 = vector.shape_cast %10 : vector<1x512x128xbf16> to vector<512x128xbf16>
    %12 = vector.shape_cast %9 : vector<512x128xbf16> to vector<1x512x128xbf16>
    tpu.vector_store %arg5[%c0_7, %c0_8, %c0_9], %12 {strides = array<i32>} : memref<1x512x128xbf16, #tpu.memory_space<vmem>>, vector<1x512x128xbf16>,
    return
  }
  func.func @transform_0(%arg0: i32, %arg1: i32) -> (i32, i32, i32) {
    %c0_i32 = arith.constant 0 : i32
    %c0_i32_0 = arith.constant 0 : i32
    return %arg0, %arg1, %c0_i32 : i32, i32, i32
  }
  func.func @transform_1(%arg0: i32, %arg1: i32) -> (i32, i32) {
    %c0_i32 = arith.constant 0 : i32
    %c0_i32_0 = arith.constant 0 : i32
    %c0_i32_1 = arith.constant 0 : i32
    return %c0_i32, %c0_i32_0 : i32, i32
  }
  func.func @transform_2(%arg0: i32, %arg1: i32) -> (i32, i32) {
    %c0_i32 = arith.constant 0 : i32
    %c0_i32_0 = arith.constant 0 : i32
    %c0_i32_1 = arith.constant 0 : i32
    return %c0_i32, %c0_i32_0 : i32, i32
  }
  func.func @transform_3(%arg0: i32, %arg1: i32) -> (i32, i32, i32) {
    %c0_i32 = arith.constant 0 : i32
    %c0_i32_0 = arith.constant 0 : i32
    return %arg0, %arg1, %c0_i32 : i32, i32, i32
  }
}

module attributes {stable_mosaic.version = 11 : i64} {
  func.func @_conv_mm_kernel(%arg0: i32, %arg1: i32, %arg2: memref<1x512x256xbf16, #tpu.memory_space<vmem>>, %arg3: memref<256x128xbf16, #tpu.memory_space<vmem>>, %arg4: memref<1x128xf32, #tpu.memory_space<vmem>>, %arg5: memref<1x512x128xbf16, #tpu.memory_space<vmem>>) attributes {dimension_semantics = [#tpu.dimension_semantics<parallel>, #tpu.dimension_semantics<parallel>], iteration_bounds = array<i64: 2, 1>, scalar_prefetch = 0 : i64, scratch_operands = 0 : i64, tpu.core_type = #tpu.core_type<tc>, window_params = [{transform_indices = @transform_0, window_bounds = array<i64: 1, 512, 256>}, {pipeline_mode = #tpu.pipeline_mode<synchronous>, transform_indices = @transform_1, window_bounds = array<i64: 256, 128>}, {pipeline_mode = #tpu.pipeline_mode<synchronous>, transform_indices = @transform_2, window_bounds = array<i64: 1, 128>}, {transform_indices = @transform_3, window_bounds = array<i64: 1, 512, 128>}]} {
    %c0 = arith.constant 0 : index
    %c0_0 = arith.constant 0 : index
    %c0_1 = arith.constant 0 : index
    %0 = vector.load %arg2[%c0, %c0_0, %c0_1] : memref<1x512x256xbf16, #tpu.memory_space<vmem>>, vector<1x512x256xbf16>
    %1 = vector.shape_cast %0 : vector<1x512x256xbf16> to vector<512x256xbf16>
    %c0_2 = arith.constant 0 : index
    %c0_3 = arith.constant 0 : index
    %2 = vector.load %arg3[%c0_2, %c0_3] : memref<256x128xbf16, #tpu.memory_space<vmem>>, vector<256x128xbf16>
    %cst = arith.constant dense<0.000000e+00> : vector<512x128xf32>
    %3 = tpu.matmul %1, %2, %cst {dimension_numbers = #tpu.dot_dimension_numbers<[1], [0], [0], [1], [0, 0, 1, 1], [], []>} : vector<512x256xbf16>, vector<256x128xbf16>, vector<512x128xf32> -> vector<512x128xf32>
    %c0_4 = arith.constant 0 : index
    %c0_5 = arith.constant 0 : index
    %4 = vector.load %arg4[%c0_4, %c0_5] : memref<1x128xf32, #tpu.memory_space<vmem>>, vector<1x128xf32>
    %5 = vector.broadcast %4 : vector<1x128xf32> to vector<512x128xf32>
    %6 = arith.addf %3, %5 : vector<512x128xf32>
    %cst_6 = arith.constant 0.000000e+00 : f32
    %7 = vector.broadcast %cst_6 : f32 to vector<512x128xf32>
    %8 = arith.maximumf %6, %7 : vector<512x128xf32>
    %9 = arith.truncf %8 : vector<512x128xf32> to vector<512x128xbf16>
    %c0_7 = arith.constant 0 : index
    %c0_8 = arith.constant 0 : index
    %c0_9 = arith.constant 0 : index
    %10 = vector.load %arg5[%c0_7, %c0_8, %c0_9] : memref<1x512x128xbf16, #tpu.memory_space<vmem>>, vector<1x512x128xbf16>
    %11 = vector.shape_cast %10 : vector<1x512x128xbf16> to vector<512x128xbf16>
    %12 = vector.shape_cast %9 : vector<512x128xbf16> to vector<1x512x128xbf16>
    tpu.vector_store %arg5[%c0_7, %c0_8, %c0_9], %12 {strides = array<i32>} : memref<1x512x128xbf16, #tpu.memory_space<vmem>>, vector<1x512x128xbf16>,
    return
  }
  func.func @transform_0(%arg0: i32, %arg1: i32) -> (i32, i32, i32) {
    %c0_i32 = arith.constant 0 : i32
    %c0_i32_0 = arith.constant 0 : i32
    return %arg0, %arg1, %c0_i32 : i32, i32, i32
  }
  func.func @transform_1(%arg0: i32, %arg1: i32) -> (i32, i32) {
    %c0_i32 = arith.constant 0 : i32
    %c0_i32_0 = arith.constant 0 : i32
    %c0_i32_1 = arith.constant 0 : i32
    return %c0_i32, %c0_i32_0 : i32, i32
  }
  func.func @transform_2(%arg0: i32, %arg1: i32) -> (i32, i32) {
    %c0_i32 = arith.constant 0 : i32
    %c0_i32_0 = arith.constant 0 : i32
    %c0_i32_1 = arith.constant 0 : i32
    return %c0_i32, %c0_i32_0 : i32, i32
  }
  func.func @transform_3(%arg0: i32, %arg1: i32) -> (i32, i32, i32) {
    %c0_i32 = arith.constant 0 : i32
    %c0_i32_0 = arith.constant 0 : i32
    return %arg0, %arg1, %c0_i32 : i32, i32, i32
  }
}

module attributes {stable_mosaic.version = 11 : i64} {
  func.func @_conv_mm_kernel(%arg0: i32, %arg1: i32, %arg2: memref<1x128x256xbf16, #tpu.memory_space<vmem>>, %arg3: memref<256x128xbf16, #tpu.memory_space<vmem>>, %arg4: memref<1x128xf32, #tpu.memory_space<vmem>>, %arg5: memref<1x128x128xbf16, #tpu.memory_space<vmem>>) attributes {dimension_semantics = [#tpu.dimension_semantics<parallel>, #tpu.dimension_semantics<parallel>], iteration_bounds = array<i64: 2, 1>, scalar_prefetch = 0 : i64, scratch_operands = 0 : i64, tpu.core_type = #tpu.core_type<tc>, window_params = [{transform_indices = @transform_0, window_bounds = array<i64: 1, 128, 256>}, {pipeline_mode = #tpu.pipeline_mode<synchronous>, transform_indices = @transform_1, window_bounds = array<i64: 256, 128>}, {pipeline_mode = #tpu.pipeline_mode<synchronous>, transform_indices = @transform_2, window_bounds = array<i64: 1, 128>}, {transform_indices = @transform_3, window_bounds = array<i64: 1, 128, 128>}]} {
    %c0 = arith.constant 0 : index
    %c0_0 = arith.constant 0 : index
    %c0_1 = arith.constant 0 : index
    %0 = vector.load %arg2[%c0, %c0_0, %c0_1] : memref<1x128x256xbf16, #tpu.memory_space<vmem>>, vector<1x128x256xbf16>
    %1 = vector.shape_cast %0 : vector<1x128x256xbf16> to vector<128x256xbf16>
    %c0_2 = arith.constant 0 : index
    %c0_3 = arith.constant 0 : index
    %2 = vector.load %arg3[%c0_2, %c0_3] : memref<256x128xbf16, #tpu.memory_space<vmem>>, vector<256x128xbf16>
    %cst = arith.constant dense<0.000000e+00> : vector<128x128xf32>
    %3 = tpu.matmul %1, %2, %cst {dimension_numbers = #tpu.dot_dimension_numbers<[1], [0], [0], [1], [0, 0, 1, 1], [], []>} : vector<128x256xbf16>, vector<256x128xbf16>, vector<128x128xf32> -> vector<128x128xf32>
    %c0_4 = arith.constant 0 : index
    %c0_5 = arith.constant 0 : index
    %4 = vector.load %arg4[%c0_4, %c0_5] : memref<1x128xf32, #tpu.memory_space<vmem>>, vector<1x128xf32>
    %5 = vector.broadcast %4 : vector<1x128xf32> to vector<128x128xf32>
    %6 = arith.addf %3, %5 : vector<128x128xf32>
    %cst_6 = arith.constant 0.000000e+00 : f32
    %7 = vector.broadcast %cst_6 : f32 to vector<128x128xf32>
    %8 = arith.maximumf %6, %7 : vector<128x128xf32>
    %9 = arith.truncf %8 : vector<128x128xf32> to vector<128x128xbf16>
    %c0_7 = arith.constant 0 : index
    %c0_8 = arith.constant 0 : index
    %c0_9 = arith.constant 0 : index
    %10 = vector.load %arg5[%c0_7, %c0_8, %c0_9] : memref<1x128x128xbf16, #tpu.memory_space<vmem>>, vector<1x128x128xbf16>
    %11 = vector.shape_cast %10 : vector<1x128x128xbf16> to vector<128x128xbf16>
    %12 = vector.shape_cast %9 : vector<128x128xbf16> to vector<1x128x128xbf16>
    tpu.vector_store %arg5[%c0_7, %c0_8, %c0_9], %12 {strides = array<i32>} : memref<1x128x128xbf16, #tpu.memory_space<vmem>>, vector<1x128x128xbf16>,
    return
  }
  func.func @transform_0(%arg0: i32, %arg1: i32) -> (i32, i32, i32) {
    %c0_i32 = arith.constant 0 : i32
    %c0_i32_0 = arith.constant 0 : i32
    return %arg0, %arg1, %c0_i32 : i32, i32, i32
  }
  func.func @transform_1(%arg0: i32, %arg1: i32) -> (i32, i32) {
    %c0_i32 = arith.constant 0 : i32
    %c0_i32_0 = arith.constant 0 : i32
    %c0_i32_1 = arith.constant 0 : i32
    return %c0_i32, %c0_i32_0 : i32, i32
  }
  func.func @transform_2(%arg0: i32, %arg1: i32) -> (i32, i32) {
    %c0_i32 = arith.constant 0 : i32
    %c0_i32_0 = arith.constant 0 : i32
    %c0_i32_1 = arith.constant 0 : i32
    return %c0_i32, %c0_i32_0 : i32, i32
  }
  func.func @transform_3(%arg0: i32, %arg1: i32) -> (i32, i32, i32) {
    %c0_i32 = arith.constant 0 : i32
    %c0_i32_0 = arith.constant 0 : i32
    return %arg0, %arg1, %c0_i32 : i32, i32, i32
  }
}

module attributes {stable_mosaic.version = 11 : i64} {
  func.func @_conv_mm_kernel(%arg0: i32, %arg1: i32, %arg2: memref<1x128x384xbf16, #tpu.memory_space<vmem>>, %arg3: memref<384x128xbf16, #tpu.memory_space<vmem>>, %arg4: memref<1x128xf32, #tpu.memory_space<vmem>>, %arg5: memref<1x128x128xbf16, #tpu.memory_space<vmem>>) attributes {dimension_semantics = [#tpu.dimension_semantics<parallel>, #tpu.dimension_semantics<parallel>], iteration_bounds = array<i64: 2, 1>, scalar_prefetch = 0 : i64, scratch_operands = 0 : i64, tpu.core_type = #tpu.core_type<tc>, window_params = [{transform_indices = @transform_0, window_bounds = array<i64: 1, 128, 384>}, {pipeline_mode = #tpu.pipeline_mode<synchronous>, transform_indices = @transform_1, window_bounds = array<i64: 384, 128>}, {pipeline_mode = #tpu.pipeline_mode<synchronous>, transform_indices = @transform_2, window_bounds = array<i64: 1, 128>}, {transform_indices = @transform_3, window_bounds = array<i64: 1, 128, 128>}]} {
    %c0 = arith.constant 0 : index
    %c0_0 = arith.constant 0 : index
    %c0_1 = arith.constant 0 : index
    %0 = vector.load %arg2[%c0, %c0_0, %c0_1] : memref<1x128x384xbf16, #tpu.memory_space<vmem>>, vector<1x128x384xbf16>
    %1 = vector.shape_cast %0 : vector<1x128x384xbf16> to vector<128x384xbf16>
    %c0_2 = arith.constant 0 : index
    %c0_3 = arith.constant 0 : index
    %2 = vector.load %arg3[%c0_2, %c0_3] : memref<384x128xbf16, #tpu.memory_space<vmem>>, vector<384x128xbf16>
    %cst = arith.constant dense<0.000000e+00> : vector<128x128xf32>
    %3 = tpu.matmul %1, %2, %cst {dimension_numbers = #tpu.dot_dimension_numbers<[1], [0], [0], [1], [0, 0, 1, 1], [], []>} : vector<128x384xbf16>, vector<384x128xbf16>, vector<128x128xf32> -> vector<128x128xf32>
    %c0_4 = arith.constant 0 : index
    %c0_5 = arith.constant 0 : index
    %4 = vector.load %arg4[%c0_4, %c0_5] : memref<1x128xf32, #tpu.memory_space<vmem>>, vector<1x128xf32>
    %5 = vector.broadcast %4 : vector<1x128xf32> to vector<128x128xf32>
    %6 = arith.addf %3, %5 : vector<128x128xf32>
    %cst_6 = arith.constant 0.000000e+00 : f32
    %7 = vector.broadcast %cst_6 : f32 to vector<128x128xf32>
    %8 = arith.maximumf %6, %7 : vector<128x128xf32>
    %9 = arith.truncf %8 : vector<128x128xf32> to vector<128x128xbf16>
    %c0_7 = arith.constant 0 : index
    %c0_8 = arith.constant 0 : index
    %c0_9 = arith.constant 0 : index
    %10 = vector.load %arg5[%c0_7, %c0_8, %c0_9] : memref<1x128x128xbf16, #tpu.memory_space<vmem>>, vector<1x128x128xbf16>
    %11 = vector.shape_cast %10 : vector<1x128x128xbf16> to vector<128x128xbf16>
    %12 = vector.shape_cast %9 : vector<128x128xbf16> to vector<1x128x128xbf16>
    tpu.vector_store %arg5[%c0_7, %c0_8, %c0_9], %12 {strides = array<i32>} : memref<1x128x128xbf16, #tpu.memory_space<vmem>>, vector<1x128x128xbf16>,
    return
  }
  func.func @transform_0(%arg0: i32, %arg1: i32) -> (i32, i32, i32) {
    %c0_i32 = arith.constant 0 : i32
    %c0_i32_0 = arith.constant 0 : i32
    return %arg0, %arg1, %c0_i32 : i32, i32, i32
  }
  func.func @transform_1(%arg0: i32, %arg1: i32) -> (i32, i32) {
    %c0_i32 = arith.constant 0 : i32
    %c0_i32_0 = arith.constant 0 : i32
    %c0_i32_1 = arith.constant 0 : i32
    return %c0_i32, %c0_i32_0 : i32, i32
  }
  func.func @transform_2(%arg0: i32, %arg1: i32) -> (i32, i32) {
    %c0_i32 = arith.constant 0 : i32
    %c0_i32_0 = arith.constant 0 : i32
    %c0_i32_1 = arith.constant 0 : i32
    return %c0_i32, %c0_i32_0 : i32, i32
  }
  func.func @transform_3(%arg0: i32, %arg1: i32) -> (i32, i32, i32) {
    %c0_i32 = arith.constant 0 : i32
    %c0_i32_0 = arith.constant 0 : i32
    return %arg0, %arg1, %c0_i32 : i32, i32, i32
  }
}

module attributes {stable_mosaic.version = 11 : i64} {
  func.func @_l2norm_kernel(%arg0: i32, %arg1: memref<1x32x32xbf16, #tpu.memory_space<vmem>>, %arg2: memref<1x32xf32, #tpu.memory_space<vmem>>, %arg3: memref<1x32x32xf32, #tpu.memory_space<vmem>>) attributes {dimension_semantics = [#tpu.dimension_semantics<parallel>], iteration_bounds = array<i64: 2>, scalar_prefetch = 0 : i64, scratch_operands = 0 : i64, tpu.core_type = #tpu.core_type<tc>, window_params = [{transform_indices = @transform_0, window_bounds = array<i64: 1, 32, 32>}, {pipeline_mode = #tpu.pipeline_mode<synchronous>, transform_indices = @transform_1, window_bounds = array<i64: 1, 32>}, {transform_indices = @transform_2, window_bounds = array<i64: 1, 32, 32>}]} {
    %c0 = arith.constant 0 : index
    %c0_0 = arith.constant 0 : index
    %c0_1 = arith.constant 0 : index
    %0 = vector.load %arg1[%c0, %c0_0, %c0_1] : memref<1x32x32xbf16, #tpu.memory_space<vmem>>, vector<1x32x32xbf16>
    %1 = vector.shape_cast %0 : vector<1x32x32xbf16> to vector<32x32xbf16>
    %2 = arith.extf %1 : vector<32x32xbf16> to vector<32x32xf32>
    %3 = arith.mulf %2, %2 : vector<32x32xf32>
    %cst = arith.constant dense<0.000000e+00> : vector<32xf32>
    %4 = vector.multi_reduction <add>, %3, %cst [1] : vector<32x32xf32> to vector<32xf32>
    %5 = vector.shape_cast %4 : vector<32xf32> to vector<32x1xf32>
    %cst_2 = arith.constant 9.99999968E-21 : f32
    %6 = vector.broadcast %cst_2 : f32 to vector<32x1xf32>
    %7 = arith.addf %5, %6 : vector<32x1xf32>
    %8 = math.rsqrt %7 : vector<32x1xf32>
    %9 = vector.broadcast %8 : vector<32x1xf32> to vector<32x32xf32>
    %10 = arith.mulf %2, %9 : vector<32x32xf32>
    %c0_3 = arith.constant 0 : index
    %c0_4 = arith.constant 0 : index
    %11 = vector.load %arg2[%c0_3, %c0_4] : memref<1x32xf32, #tpu.memory_space<vmem>>, vector<1x32xf32>
    %12 = vector.broadcast %11 : vector<1x32xf32> to vector<32x32xf32>
    %13 = arith.mulf %10, %12 : vector<32x32xf32>
    %c0_5 = arith.constant 0 : index
    %c0_6 = arith.constant 0 : index
    %c0_7 = arith.constant 0 : index
    %14 = vector.load %arg3[%c0_5, %c0_6, %c0_7] : memref<1x32x32xf32, #tpu.memory_space<vmem>>, vector<1x32x32xf32>
    %15 = vector.shape_cast %14 : vector<1x32x32xf32> to vector<32x32xf32>
    %16 = vector.shape_cast %13 : vector<32x32xf32> to vector<1x32x32xf32>
    tpu.vector_store %arg3[%c0_5, %c0_6, %c0_7], %16 {strides = array<i32>} : memref<1x32x32xf32, #tpu.memory_space<vmem>>, vector<1x32x32xf32>,
    return
  }
  func.func @transform_0(%arg0: i32) -> (i32, i32, i32) {
    %c0_i32 = arith.constant 0 : i32
    %c0_i32_0 = arith.constant 0 : i32
    %c0_i32_1 = arith.constant 0 : i32
    return %arg0, %c0_i32, %c0_i32_0 : i32, i32, i32
  }
  func.func @transform_1(%arg0: i32) -> (i32, i32) {
    %c0_i32 = arith.constant 0 : i32
    %c0_i32_0 = arith.constant 0 : i32
    %c0_i32_1 = arith.constant 0 : i32
    return %c0_i32, %c0_i32_0 : i32, i32
  }
  func.func @transform_2(%arg0: i32) -> (i32, i32, i32) {
    %c0_i32 = arith.constant 0 : i32
    %c0_i32_0 = arith.constant 0 : i32
    %c0_i32_1 = arith.constant 0 : i32
    return %arg0, %c0_i32, %c0_i32_0 : i32, i32, i32
  }
}

</mosaic_0001>

<llo_original>
// kernel: _lambda_.8
$region0: #{_lambda_.8}
  #allocation0 [shape = 'u32[]', space=smem, size = 0x4, offset = 0x4, fixed_abs, tag = 'smem constant byte address 0x4 - core index']
  #allocation1 [shape = 'u32[144,128]{1,0:T(1,128)}', space=vmem, size = 0x12000, scoped, tag = 'internal scratch']
  %s0 = inlined_call_operand.vmem [shape: bf16[2,2048,128], index: 0, kind: input, shape index: {}]
  %s1 = inlined_call_operand.vmem [shape: bf16[128,128], index: 1, kind: input, shape index: {}]
  %s2 = inlined_call_operand.vmem [shape: f32[1,128], index: 2, kind: input, shape index: {}]
  %s3 = inlined_call_operand.vmem [shape: bf16[2,2048,128], index: 3, kind: output, shape index: {}]
  %s4 = sld [smem:[#allocation0]]
  $region45: #{_lambda_.8} parent=0
    _
  %s6 = ssub.s32 1, %s4
  %s7 = scalar_select 0, %s6, %s4
  loop: start=0, step=1, limit=4
  $region2: #{_lambda_.8} parent=0 // loop_pre_header
    _
  $region3: #{_lambda_.8} parent=0 // loop_header
    %s9 = sphi 0, %s13
    %p10 = scmp.ge.s32.totalorder %s9, 4
    %s16 = sphi 0, %s28
    %s17 = sphi 0, %s24
    %s18 = sphi 0, %s16
    %s19 = sphi 0, %s17
    %s20 = sphi 0, %s18
    %s21 = sphi 0, %s19
    %s33 = sphi 0, %s35
    %s36 = sphi 0, %s33
    %s37 = sphi 0, %s36
    %s53 = sphi 0, %s37
    %s57 = sphi 0, %s57
    %s59 = sphi 0, %s57
    %s60 = sphi 0, %s59
    %s74 = sphi 0, %s60
    %s78 = sphi 0, %s78
    %s80 = sphi 0, %s78
    %s81 = sphi 0, %s80
    %s95 = sphi 0, %s81
    %s103 = sphi 0, %s105
    %s106 = sphi 0, %s103
    %s107 = sphi 0, %s106
    %s123 = sphi 0, %s107
  $region4: #{_lambda_.8} parent=0 // loop_header_branch
    %12 = sbr.rel (%p10) target = $region8
  $region5: #{_lambda_.8} parent=0 // loop_body
    %s14 = ssub.s32 %s9, 1
    %s15 = ssub.s32 %s9, 2
    %s22 = sadd.s32 1, %s17
    %p23 = scmp.ge.s32.totalorder %s22, 1
    %s24 = scalar_select %p23, 0, %s22
    %s25 = sadd.s32 1, %s16
    %s26 = scalar_select %p23, %s25, %s16
    %p27 = scmp.ge.s32.totalorder %s26, 2
    %s28 = scalar_select %p27, 0, %s26
    %s29 = ssub.s32 %s16, %s28
    %s30 = ssub.s32 %s17, %s24
    %s31 = sor.u32 %s29, %s30
    %p32 = scmp.eq.s32.totalorder %s31, 0
    %s34 = sadd.s32 %s33, 1
    %s35 = scalar_select %p32, %s33, %s34
    %p38 = pneg %p32
    %p39 = scmp.eq.s32.totalorder %s9, 1
    %p40 = por %p38, %p39
    %p41 = scmp.ne.s32.totalorder %s33, %s36
    %p42 = scmp.eq.s32.totalorder %s9, 0
    %p43 = por %p41, %p42
    %p44 = scmp.ne.s32.totalorder %s33, %s36
    %p45 = scmp.eq.s32.totalorder %s14, 1
    %p46 = por %p44, %p45
    %p47 = scmp.ne.s32.totalorder %s36, %s37
    %p48 = scmp.eq.s32.totalorder %s14, 0
    %p49 = por %p47, %p48
    %p50 = scmp.ne.s32.totalorder %s36, %s37
    %p51 = scmp.eq.s32.totalorder %s15, 1
    %p52 = por %p50, %p51
    %p54 = scmp.ne.s32.totalorder %s37, %s53
    %p55 = scmp.eq.s32.totalorder %s15, 0
    %p56 = por %p54, %p55
    %s58 = sadd.s32 %s57, 1
    %p61 = scmp.eq.s32.totalorder %s9, 1
    %p62 = scmp.ne.s32.totalorder %s57, %s59
    %p63 = scmp.eq.s32.totalorder %s9, 0
    %p64 = por %p62, %p63
    %p65 = scmp.ne.s32.totalorder %s57, %s59
    %p66 = scmp.eq.s32.totalorder %s14, 1
    %p67 = por %p65, %p66
    %p68 = scmp.ne.s32.totalorder %s59, %s60
    %p69 = scmp.eq.s32.totalorder %s14, 0
    %p70 = por %p68, %p69
    %p71 = scmp.ne.s32.totalorder %s59, %s60
    %p72 = scmp.eq.s32.totalorder %s15, 1
    %p73 = por %p71, %p72
    %p75 = scmp.ne.s32.totalorder %s60, %s74
    %p76 = scmp.eq.s32.totalorder %s15, 0
    %p77 = por %p75, %p76
    %s79 = sadd.s32 %s78, 1
    %p82 = scmp.eq.s32.totalorder %s9, 1
    %p83 = scmp.ne.s32.totalorder %s78, %s80
    %p84 = scmp.eq.s32.totalorder %s9, 0
    %p85 = por %p83, %p84
    %p86 = scmp.ne.s32.totalorder %s78, %s80
    %p87 = scmp.eq.s32.totalorder %s14, 1
    %p88 = por %p86, %p87
    %p89 = scmp.ne.s32.totalorder %s80, %s81
    %p90 = scmp.eq.s32.totalorder %s14, 0
    %p91 = por %p89, %p90
    %p92 = scmp.ne.s32.totalorder %s80, %s81
    %p93 = scmp.eq.s32.totalorder %s15, 1
    %p94 = por %p92, %p93
    %p96 = scmp.ne.s32.totalorder %s81, %s95
    %p97 = scmp.eq.s32.totalorder %s15, 0
    %p98 = por %p96, %p97
    %s99 = ssub.s32 %s16, %s28
    %s100 = ssub.s32 %s17, %s24
    %s101 = sor.u32 %s99, %s100
    %p102 = scmp.eq.s32.totalorder %s101, 0
    %s104 = sadd.s32 %s103, 1
    %s105 = scalar_select %p102, %s103, %s104
    %p108 = pneg %p102
    %p109 = scmp.eq.s32.totalorder %s9, 1
    %p110 = por %p108, %p109
    %p111 = scmp.ne.s32.totalorder %s103, %s106
    %p112 = scmp.eq.s32.totalorder %s9, 0
    %p113 = por %p111, %p112
    %p114 = scmp.ne.s32.totalorder %s103, %s106
    %p115 = scmp.eq.s32.totalorder %s14, 1
    %p116 = por %p114, %p115
    %p117 = scmp.ne.s32.totalorder %s106, %s107
    %p118 = scmp.eq.s32.totalorder %s14, 0
    %p119 = por %p117, %p118
    %p120 = scmp.ne.s32.totalorder %s106, %s107
    %p121 = scmp.eq.s32.totalorder %s15, 1
    %p122 = por %p120, %p121
    %p124 = scmp.ne.s32.totalorder %s107, %s123
    %p125 = scmp.eq.s32.totalorder %s15, 0
    %p126 = por %p124, %p125
    %p127 = scmp.le.s32.totalorder 1, %s9
    %p128 = scmp.lt.s32.totalorder %s9, 3
    %p129 = pnand %p127, %p128
    %p130 = pneg %p129
    // Predicated region
    $region9: #{_lambda_.8} parent=5 // pred_check
      _
    $region10: #{_lambda_.8} parent=5 // pred_check_branch
      %132 = sbr.rel (%p129) target = $region12
    $region11: #{_lambda_.8} parent=5 // pred_region
      %s133 = ssub.s32 %s9, 1
      // Predicated region
      $region13: #{_lambda_.8} parent=11 // pred_check
        %p134 = pneg %p70
      $region14: #{_lambda_.8} parent=11 // pred_check_branch
        %136 = sbr.rel (%p134) target = $region16
      $region15: #{_lambda_.8} parent=11 // pred_region
        _
      $region16: #{_lambda_.8} parent=11 // pred_fallthru
        _
      // Predicated region
      $region17: #{_lambda_.8} parent=11 // pred_check
        %p137 = pneg %p91
      $region18: #{_lambda_.8} parent=11 // pred_check_branch
        %139 = sbr.rel (%p137) target = $region20
      $region19: #{_lambda_.8} parent=11 // pred_region
        _
      $region20: #{_lambda_.8} parent=11 // pred_fallthru
        _
    $region12: #{_lambda_.8} parent=5 // pred_fallthru
      _
    %p140 = scmp.lt.s32.totalorder %s9, 2
    // Predicated region
    $region21: #{_lambda_.8} parent=5 // pred_check
      %p141 = pneg %p140
    $region22: #{_lambda_.8} parent=5 // pred_check_branch
      %143 = sbr.rel (%p141) target = $region24
    $region23: #{_lambda_.8} parent=5 // pred_region
      // Predicated region
      $region25: #{_lambda_.8} parent=23 // pred_check
        %p144 = pneg %p43
      $region26: #{_lambda_.8} parent=23 // pred_check_branch
        %146 = sbr.rel (%p144) target = $region28
      $region27: #{_lambda_.8} parent=23 // pred_region
        %s147 = smul.u32 256, %s17
        %p148 = scmp.lt.s32.totalorder %s16, 1
        %s149 = scalar_select %p148, %s16, 1
        %p150 = scmp.lt.s32.totalorder %s147, 255
        %s151 = scalar_select %p150, %s147, 255
        %s152 = smul.addr %s149, 256
        %s153 = sadd.s32 %s151, %s152
        %s154 = smul.addr %s153, 4
        %s155 = scalar_lea.vmem %s0, %s154
        %s156 = smul.u32 256, %s17
      $region28: #{_lambda_.8} parent=23 // pred_fallthru
        _
    $region24: #{_lambda_.8} parent=5 // pred_fallthru
      _
    %p157 = scmp.le.s32.totalorder 1, %s9
    %p158 = scmp.lt.s32.totalorder %s9, 3
    %p159 = pnand %p157, %p158
    %p160 = pneg %p159
    // Predicated region
    $region29: #{_lambda_.8} parent=5 // pred_check
      _
    $region30: #{_lambda_.8} parent=5 // pred_check_branch
      %162 = sbr.rel (%p159) target = $region32
    $region31: #{_lambda_.8} parent=5 // pred_region
      %s163 = ssub.s32 %s9, 1
      %s164 = smul.u32 256, %s19
      %p165 = scmp.lt.s32.totalorder %s18, 1
      %s166 = scalar_select %p165, %s18, 1
      %p167 = scmp.lt.s32.totalorder %s164, 255
      %s168 = scalar_select %p167, %s164, 255
      %s169 = smul.addr %s166, 256
      %s170 = sadd.s32 %s168, %s169
      %s171 = smul.addr %s170, 4
      %s172 = scalar_lea.vmem %s0, %s171
      %p173 = pneg %p49
      %p174 = pneg %p46
      %p175 = pneg %p70
      %p176 = pneg %p67
      %p177 = pneg %p91
      %p178 = pneg %p88
      %p179 = pneg %p119
      %p180 = pneg %p116
      %s181 = smul.u32 256, %s19
      %p182 = scmp.lt.s32.totalorder %s18, 1
      %s183 = scalar_select %p182, %s18, 1
      %p184 = scmp.lt.s32.totalorder %s181, 255
      %s185 = scalar_select %p184, %s181, 255
      %s186 = smul.addr %s183, 256
      %s187 = sadd.s32 %s185, %s186
      %s188 = smul.addr %s187, 4
      %s189 = scalar_lea.vmem %s3, %s188
      %s190 = smul.u32 256, %s19
      %p191 = scmp.lt.s32.totalorder %s18, 1
      %s192 = scalar_select %p191, %s18, 1
      %p193 = scmp.lt.s32.totalorder %s190, 255
      %s194 = scalar_select %p193, %s190, 255
      %s195 = smul.addr %s192, 256
      %s196 = sadd.s32 %s194, %s195
      %s197 = smul.addr %s196, 4
      %s198 = scalar_lea.vmem %s0, %s197
      %s199 = smul.u32 256, %s19
      %s200 = smul.u32 256, %s19
      %p201 = scmp.lt.s32.totalorder %s18, 1
      %s202 = scalar_select %p201, %s18, 1
      %p203 = scmp.lt.s32.totalorder %s200, 255
      %s204 = scalar_select %p203, %s200, 255
      %s205 = smul.addr %s202, 256
      %s206 = sadd.s32 %s204, %s205
      %s207 = smul.addr %s206, 4
      %s208 = scalar_lea.vmem %s3, %s207
      %s209 = smul.u32 256, %s19
      %v211 = vld [vmem:[%s198] sm:$0xf]
      %v212 = vld [vmem:[%s198 + $0x4] sm:$0xf]
      %v213 = vld [vmem:[%s198 + $0x8] sm:$0xf]
      %v214 = vld [vmem:[%s198 + $0xc] sm:$0xf]
      %v215 = vld [vmem:[%s198 + $0x10] sm:$0xf]
      %v216 = vld [vmem:[%s198 + $0x14] sm:$0xf]
      %v217 = vld [vmem:[%s198 + $0x18] sm:$0xf]
      %v218 = vld [vmem:[%s198 + $0x1c] sm:$0xf]
      %v219 = vld [vmem:[%s198 + $0x20] sm:$0xf]
      %v220 = vld [vmem:[%s198 + $0x24] sm:$0xf]
      %v221 = vld [vmem:[%s198 + $0x28] sm:$0xf]
      %v222 = vld [vmem:[%s198 + $0x2c] sm:$0xf]
      %v223 = vld [vmem:[%s198 + $0x30] sm:$0xf]
      %v224 = vld [vmem:[%s198 + $0x34] sm:$0xf]
      %v225 = vld [vmem:[%s198 + $0x38] sm:$0xf]
      %v226 = vld [vmem:[%s198 + $0x3c] sm:$0xf]
      %v227 = vld [vmem:[%s198 + $0x40] sm:$0xf]
      %v228 = vld [vmem:[%s198 + $0x44] sm:$0xf]
      %v229 = vld [vmem:[%s198 + $0x48] sm:$0xf]
      %v230 = vld [vmem:[%s198 + $0x4c] sm:$0xf]
      %v231 = vld [vmem:[%s198 + $0x50] sm:$0xf]
      %v232 = vld [vmem:[%s198 + $0x54] sm:$0xf]
      %v233 = vld [vmem:[%s198 + $0x58] sm:$0xf]
      %v234 = vld [vmem:[%s198 + $0x5c] sm:$0xf]
      %v235 = vld [vmem:[%s198 + $0x60] sm:$0xf]
      %v236 = vld [vmem:[%s198 + $0x64] sm:$0xf]
      %v237 = vld [vmem:[%s198 + $0x68] sm:$0xf]
      %v238 = vld [vmem:[%s198 + $0x6c] sm:$0xf]
      %v239 = vld [vmem:[%s198 + $0x70] sm:$0xf]
      %v240 = vld [vmem:[%s198 + $0x74] sm:$0xf]
      %v241 = vld [vmem:[%s198 + $0x78] sm:$0xf]
      %v242 = vld [vmem:[%s198 + $0x7c] sm:$0xf]
      %v243 = vld [vmem:[%s198 + $0x80] sm:$0xf]
      %v244 = vld [vmem:[%s198 + $0x84] sm:$0xf]
      %v245 = vld [vmem:[%s198 + $0x88] sm:$0xf]
      %v246 = vld [vmem:[%s198 + $0x8c] sm:$0xf]
      %v247 = vld [vmem:[%s198 + $0x90] sm:$0xf]
      %v248 = vld [vmem:[%s198 + $0x94] sm:$0xf]
      %v249 = vld [vmem:[%s198 + $0x98] sm:$0xf]
      %v250 = vld [vmem:[%s198 + $0x9c] sm:$0xf]
      %v251 = vld [vmem:[%s198 + $0xa0] sm:$0xf]
      %v252 = vld [vmem:[%s198 + $0xa4] sm:$0xf]
      %v253 = vld [vmem:[%s198 + $0xa8] sm:$0xf]
      %v254 = vld [vmem:[%s198 + $0xac] sm:$0xf]
      %v255 = vld [vmem:[%s198 + $0xb0] sm:$0xf]
      %v256 = vld [vmem:[%s198 + $0xb4] sm:$0xf]
      %v257 = vld [vmem:[%s198 + $0xb8] sm:$0xf]
      %v258 = vld [vmem:[%s198 + $0xbc] sm:$0xf]
      %v259 = vld [vmem:[%s198 + $0xc0] sm:$0xf]
      %v260 = vld [vmem:[%s198 + $0xc4] sm:$0xf]
      %v261 = vld [vmem:[%s198 + $0xc8] sm:$0xf]
      %v262 = vld [vmem:[%s198 + $0xcc] sm:$0xf]
      %v263 = vld [vmem:[%s198 + $0xd0] sm:$0xf]
      %v264 = vld [vmem:[%s198 + $0xd4] sm:$0xf]
      %v265 = vld [vmem:[%s198 + $0xd8] sm:$0xf]
      %v266 = vld [vmem:[%s198 + $0xdc] sm:$0xf]
      %v267 = vld [vmem:[%s198 + $0xe0] sm:$0xf]
      %v268 = vld [vmem:[%s198 + $0xe4] sm:$0xf]
      %v269 = vld [vmem:[%s198 + $0xe8] sm:$0xf]
      %v270 = vld [vmem:[%s198 + $0xec] sm:$0xf]
      %v271 = vld [vmem:[%s198 + $0xf0] sm:$0xf]
      %v272 = vld [vmem:[%s198 + $0xf4] sm:$0xf]
      %v273 = vld [vmem:[%s198 + $0xf8] sm:$0xf]
      %v274 = vld [vmem:[%s198 + $0xfc] sm:$0xf]
      %v275 = vld [vmem:[%s198 + $0x100] sm:$0xf]
      %v276 = vld [vmem:[%s198 + $0x104] sm:$0xf]
      %v277 = vld [vmem:[%s198 + $0x108] sm:$0xf]
      %v278 = vld [vmem:[%s198 + $0x10c] sm:$0xf]
      %v279 = vld [vmem:[%s198 + $0x110] sm:$0xf]
      %v280 = vld [vmem:[%s198 + $0x114] sm:$0xf]
      %v281 = vld [vmem:[%s198 + $0x118] sm:$0xf]
      %v282 = vld [vmem:[%s198 + $0x11c] sm:$0xf]
      %v283 = vld [vmem:[%s198 + $0x120] sm:$0xf]
      %v284 = vld [vmem:[%s198 + $0x124] sm:$0xf]
      %v285 = vld [vmem:[%s198 + $0x128] sm:$0xf]
      %v286 = vld [vmem:[%s198 + $0x12c] sm:$0xf]
      %v287 = vld [vmem:[%s198 + $0x130] sm:$0xf]
      %v288 = vld [vmem:[%s198 + $0x134] sm:$0xf]
      %v289 = vld [vmem:[%s198 + $0x138] sm:$0xf]
      %v290 = vld [vmem:[%s198 + $0x13c] sm:$0xf]
      %v291 = vld [vmem:[%s198 + $0x140] sm:$0xf]
      %v292 = vld [vmem:[%s198 + $0x144] sm:$0xf]
      %v293 = vld [vmem:[%s198 + $0x148] sm:$0xf]
      %v294 = vld [vmem:[%s198 + $0x14c] sm:$0xf]
      %v295 = vld [vmem:[%s198 + $0x150] sm:$0xf]
      %v296 = vld [vmem:[%s198 + $0x154] sm:$0xf]
      %v297 = vld [vmem:[%s198 + $0x158] sm:$0xf]
      %v298 = vld [vmem:[%s198 + $0x15c] sm:$0xf]
      %v299 = vld [vmem:[%s198 + $0x160] sm:$0xf]
      %v300 = vld [vmem:[%s198 + $0x164] sm:$0xf]
      %v301 = vld [vmem:[%s198 + $0x168] sm:$0xf]
      %v302 = vld [vmem:[%s198 + $0x16c] sm:$0xf]
      %v303 = vld [vmem:[%s198 + $0x170] sm:$0xf]
      %v304 = vld [vmem:[%s198 + $0x174] sm:$0xf]
      %v305 = vld [vmem:[%s198 + $0x178] sm:$0xf]
      %v306 = vld [vmem:[%s198 + $0x17c] sm:$0xf]
      %v307 = vld [vmem:[%s198 + $0x180] sm:$0xf]
      %v308 = vld [vmem:[%s198 + $0x184] sm:$0xf]
      %v309 = vld [vmem:[%s198 + $0x188] sm:$0xf]
      %v310 = vld [vmem:[%s198 + $0x18c] sm:$0xf]
      %v311 = vld [vmem:[%s198 + $0x190] sm:$0xf]
      %v312 = vld [vmem:[%s198 + $0x194] sm:$0xf]
      %v313 = vld [vmem:[%s198 + $0x198] sm:$0xf]
      %v314 = vld [vmem:[%s198 + $0x19c] sm:$0xf]
      %v315 = vld [vmem:[%s198 + $0x1a0] sm:$0xf]
      %v316 = vld [vmem:[%s198 + $0x1a4] sm:$0xf]
      %v317 = vld [vmem:[%s198 + $0x1a8] sm:$0xf]
      %v318 = vld [vmem:[%s198 + $0x1ac] sm:$0xf]
      %v319 = vld [vmem:[%s198 + $0x1b0] sm:$0xf]
      %v320 = vld [vmem:[%s198 + $0x1b4] sm:$0xf]
      %v321 = vld [vmem:[%s198 + $0x1b8] sm:$0xf]
      %v322 = vld [vmem:[%s198 + $0x1bc] sm:$0xf]
      %v323 = vld [vmem:[%s198 + $0x1c0] sm:$0xf]
      %v324 = vld [vmem:[%s198 + $0x1c4] sm:$0xf]
      %v325 = vld [vmem:[%s198 + $0x1c8] sm:$0xf]
      %v326 = vld [vmem:[%s198 + $0x1cc] sm:$0xf]
      %v327 = vld [vmem:[%s198 + $0x1d0] sm:$0xf]
      %v328 = vld [vmem:[%s198 + $0x1d4] sm:$0xf]
      %v329 = vld [vmem:[%s198 + $0x1d8] sm:$0xf]
      %v330 = vld [vmem:[%s198 + $0x1dc] sm:$0xf]
      %v331 = vld [vmem:[%s198 + $0x1e0] sm:$0xf]
      %v332 = vld [vmem:[%s198 + $0x1e4] sm:$0xf]
      %v333 = vld [vmem:[%s198 + $0x1e8] sm:$0xf]
      %v334 = vld [vmem:[%s198 + $0x1ec] sm:$0xf]
      %v335 = vld [vmem:[%s198 + $0x1f0] sm:$0xf]
      %v336 = vld [vmem:[%s198 + $0x1f4] sm:$0xf]
      %v337 = vld [vmem:[%s198 + $0x1f8] sm:$0xf]
      %v338 = vld [vmem:[%s198 + $0x1fc] sm:$0xf]
      %v339 = vld [vmem:[%s198 + $0x200] sm:$0xf]
      %v340 = vld [vmem:[%s198 + $0x204] sm:$0xf]
      %v341 = vld [vmem:[%s198 + $0x208] sm:$0xf]
      %v342 = vld [vmem:[%s198 + $0x20c] sm:$0xf]
      %v343 = vld [vmem:[%s198 + $0x210] sm:$0xf]
      %v344 = vld [vmem:[%s198 + $0x214] sm:$0xf]
      %v345 = vld [vmem:[%s198 + $0x218] sm:$0xf]
      %v346 = vld [vmem:[%s198 + $0x21c] sm:$0xf]
      %v347 = vld [vmem:[%s198 + $0x220] sm:$0xf]
      %v348 = vld [vmem:[%s198 + $0x224] sm:$0xf]
      %v349 = vld [vmem:[%s198 + $0x228] sm:$0xf]
      %v350 = vld [vmem:[%s198 + $0x22c] sm:$0xf]
      %v351 = vld [vmem:[%s198 + $0x230] sm:$0xf]
      %v352 = vld [vmem:[%s198 + $0x234] sm:$0xf]
      %v353 = vld [vmem:[%s198 + $0x238] sm:$0xf]
      %v354 = vld [vmem:[%s198 + $0x23c] sm:$0xf]
      %v355 = vld [vmem:[%s198 + $0x240] sm:$0xf]
      %v356 = vld [vmem:[%s198 + $0x244] sm:$0xf]
      %v357 = vld [vmem:[%s198 + $0x248] sm:$0xf]
      %v358 = vld [vmem:[%s198 + $0x24c] sm:$0xf]
      %v359 = vld [vmem:[%s198 + $0x250] sm:$0xf]
      %v360 = vld [vmem:[%s198 + $0x254] sm:$0xf]
      %v361 = vld [vmem:[%s198 + $0x258] sm:$0xf]
      %v362 = vld [vmem:[%s198 + $0x25c] sm:$0xf]
      %v363 = vld [vmem:[%s198 + $0x260] sm:$0xf]
      %v364 = vld [vmem:[%s198 + $0x264] sm:$0xf]
      %v365 = vld [vmem:[%s198 + $0x268] sm:$0xf]
      %v366 = vld [vmem:[%s198 + $0x26c] sm:$0xf]
      %v367 = vld [vmem:[%s198 + $0x270] sm:$0xf]
      %v368 = vld [vmem:[%s198 + $0x274] sm:$0xf]
      %v369 = vld [vmem:[%s198 + $0x278] sm:$0xf]
      %v370 = vld [vmem:[%s198 + $0x27c] sm:$0xf]
      %v371 = vld [vmem:[%s198 + $0x280] sm:$0xf]
      %v372 = vld [vmem:[%s198 + $0x284] sm:$0xf]
      %v373 = vld [vmem:[%s198 + $0x288] sm:$0xf]
      %v374 = vld [vmem:[%s198 + $0x28c] sm:$0xf]
      %v375 = vld [vmem:[%s198 + $0x290] sm:$0xf]
      %v376 = vld [vmem:[%s198 + $0x294] sm:$0xf]
      %v377 = vld [vmem:[%s198 + $0x298] sm:$0xf]
      %v378 = vld [vmem:[%s198 + $0x29c] sm:$0xf]
      %v379 = vld [vmem:[%s198 + $0x2a0] sm:$0xf]
      %v380 = vld [vmem:[%s198 + $0x2a4] sm:$0xf]
      %v381 = vld [vmem:[%s198 + $0x2a8] sm:$0xf]
      %v382 = vld [vmem:[%s198 + $0x2ac] sm:$0xf]
      %v383 = vld [vmem:[%s198 + $0x2b0] sm:$0xf]
      %v384 = vld [vmem:[%s198 + $0x2b4] sm:$0xf]
      %v385 = vld [vmem:[%s198 + $0x2b8] sm:$0xf]
      %v386 = vld [vmem:[%s198 + $0x2bc] sm:$0xf]
      %v387 = vld [vmem:[%s198 + $0x2c0] sm:$0xf]
      %v388 = vld [vmem:[%s198 + $0x2c4] sm:$0xf]
      %v389 = vld [vmem:[%s198 + $0x2c8] sm:$0xf]
      %v390 = vld [vmem:[%s198 + $0x2cc] sm:$0xf]
      %v391 = vld [vmem:[%s198 + $0x2d0] sm:$0xf]
      %v392 = vld [vmem:[%s198 + $0x2d4] sm:$0xf]
      %v393 = vld [vmem:[%s198 + $0x2d8] sm:$0xf]
      %v394 = vld [vmem:[%s198 + $0x2dc] sm:$0xf]
      %v395 = vld [vmem:[%s198 + $0x2e0] sm:$0xf]
      %v396 = vld [vmem:[%s198 + $0x2e4] sm:$0xf]
      %v397 = vld [vmem:[%s198 + $0x2e8] sm:$0xf]
      %v398 = vld [vmem:[%s198 + $0x2ec] sm:$0xf]
      %v399 = vld [vmem:[%s198 + $0x2f0] sm:$0xf]
      %v400 = vld [vmem:[%s198 + $0x2f4] sm:$0xf]
      %v401 = vld [vmem:[%s198 + $0x2f8] sm:$0xf]
      %v402 = vld [vmem:[%s198 + $0x2fc] sm:$0xf]
      %v403 = vld [vmem:[%s198 + $0x300] sm:$0xf]
      %v404 = vld [vmem:[%s198 + $0x304] sm:$0xf]
      %v405 = vld [vmem:[%s198 + $0x308] sm:$0xf]
      %v406 = vld [vmem:[%s198 + $0x30c] sm:$0xf]
      %v407 = vld [vmem:[%s198 + $0x310] sm:$0xf]
      %v408 = vld [vmem:[%s198 + $0x314] sm:$0xf]
      %v409 = vld [vmem:[%s198 + $0x318] sm:$0xf]
      %v410 = vld [vmem:[%s198 + $0x31c] sm:$0xf]
      %v411 = vld [vmem:[%s198 + $0x320] sm:$0xf]
      %v412 = vld [vmem:[%s198 + $0x324] sm:$0xf]
      %v413 = vld [vmem:[%s198 + $0x328] sm:$0xf]
      %v414 = vld [vmem:[%s198 + $0x32c] sm:$0xf]
      %v415 = vld [vmem:[%s198 + $0x330] sm:$0xf]
      %v416 = vld [vmem:[%s198 + $0x334] sm:$0xf]
      %v417 = vld [vmem:[%s198 + $0x338] sm:$0xf]
      %v418 = vld [vmem:[%s198 + $0x33c] sm:$0xf]
      %v419 = vld [vmem:[%s198 + $0x340] sm:$0xf]
      %v420 = vld [vmem:[%s198 + $0x344] sm:$0xf]
      %v421 = vld [vmem:[%s198 + $0x348] sm:$0xf]
      %v422 = vld [vmem:[%s198 + $0x34c] sm:$0xf]
      %v423 = vld [vmem:[%s198 + $0x350] sm:$0xf]
      %v424 = vld [vmem:[%s198 + $0x354] sm:$0xf]
      %v425 = vld [vmem:[%s198 + $0x358] sm:$0xf]
      %v426 = vld [vmem:[%s198 + $0x35c] sm:$0xf]
      %v427 = vld [vmem:[%s198 + $0x360] sm:$0xf]
      %v428 = vld [vmem:[%s198 + $0x364] sm:$0xf]
      %v429 = vld [vmem:[%s198 + $0x368] sm:$0xf]
      %v430 = vld [vmem:[%s198 + $0x36c] sm:$0xf]
      %v431 = vld [vmem:[%s198 + $0x370] sm:$0xf]
      %v432 = vld [vmem:[%s198 + $0x374] sm:$0xf]
      %v433 = vld [vmem:[%s198 + $0x378] sm:$0xf]
      %v434 = vld [vmem:[%s198 + $0x37c] sm:$0xf]
      %v435 = vld [vmem:[%s198 + $0x380] sm:$0xf]
      %v436 = vld [vmem:[%s198 + $0x384] sm:$0xf]
      %v437 = vld [vmem:[%s198 + $0x388] sm:$0xf]
      %v438 = vld [vmem:[%s198 + $0x38c] sm:$0xf]
      %v439 = vld [vmem:[%s198 + $0x390] sm:$0xf]
      %v440 = vld [vmem:[%s198 + $0x394] sm:$0xf]
      %v441 = vld [vmem:[%s198 + $0x398] sm:$0xf]
      %v442 = vld [vmem:[%s198 + $0x39c] sm:$0xf]
      %v443 = vld [vmem:[%s198 + $0x3a0] sm:$0xf]
      %v444 = vld [vmem:[%s198 + $0x3a4] sm:$0xf]
      %v445 = vld [vmem:[%s198 + $0x3a8] sm:$0xf]
      %v446 = vld [vmem:[%s198 + $0x3ac] sm:$0xf]
      %v447 = vld [vmem:[%s198 + $0x3b0] sm:$0xf]
      %v448 = vld [vmem:[%s198 + $0x3b4] sm:$0xf]
      %v449 = vld [vmem:[%s198 + $0x3b8] sm:$0xf]
      %v450 = vld [vmem:[%s198 + $0x3bc] sm:$0xf]
      %v451 = vld [vmem:[%s198 + $0x3c0] sm:$0xf]
      %v452 = vld [vmem:[%s198 + $0x3c4] sm:$0xf]
      %v453 = vld [vmem:[%s198 + $0x3c8] sm:$0xf]
      %v454 = vld [vmem:[%s198 + $0x3cc] sm:$0xf]
      %v455 = vld [vmem:[%s198 + $0x3d0] sm:$0xf]
      %v456 = vld [vmem:[%s198 + $0x3d4] sm:$0xf]
      %v457 = vld [vmem:[%s198 + $0x3d8] sm:$0xf]
      %v458 = vld [vmem:[%s198 + $0x3dc] sm:$0xf]
      %v459 = vld [vmem:[%s198 + $0x3e0] sm:$0xf]
      %v460 = vld [vmem:[%s198 + $0x3e4] sm:$0xf]
      %v461 = vld [vmem:[%s198 + $0x3e8] sm:$0xf]
      %v462 = vld [vmem:[%s198 + $0x3ec] sm:$0xf]
      %v463 = vld [vmem:[%s198 + $0x3f0] sm:$0xf]
      %v464 = vld [vmem:[%s198 + $0x3f4] sm:$0xf]
      %v465 = vld [vmem:[%s198 + $0x3f8] sm:$0xf]
      %v466 = vld [vmem:[%s198 + $0x3fc] sm:$0xf]
      %v467 = vld [vmem:[%s1] sm:$0xf]
      %v468 = vld [vmem:[%s1 + $0x4] sm:$0xf]
      %v469 = vld [vmem:[%s1 + $0x8] sm:$0xf]
      %v470 = vld [vmem:[%s1 + $0xc] sm:$0xf]
      %v471 = vld [vmem:[%s1 + $0x10] sm:$0xf]
      %v472 = vld [vmem:[%s1 + $0x14] sm:$0xf]
      %v473 = vld [vmem:[%s1 + $0x18] sm:$0xf]
      %v474 = vld [vmem:[%s1 + $0x1c] sm:$0xf]
      %v475 = vld [vmem:[%s1 + $0x20] sm:$0xf]
      %v476 = vld [vmem:[%s1 + $0x24] sm:$0xf]
      %v477 = vld [vmem:[%s1 + $0x28] sm:$0xf]
      %v478 = vld [vmem:[%s1 + $0x2c] sm:$0xf]
      %v479 = vld [vmem:[%s1 + $0x30] sm:$0xf]
      %v480 = vld [vmem:[%s1 + $0x34] sm:$0xf]
      %v481 = vld [vmem:[%s1 + $0x38] sm:$0xf]
      %v482 = vld [vmem:[%s1 + $0x3c] sm:$0xf]
      %v483 = vld [vmem:[%s2] sm:$0x1]
      %v485 = vlaneseq
      %v486 = vshrl.u32 %v485, 7
      %v487 = vsub.s32 0, %v486
      %v488 = vrot.slane %v483, %v487
      %v746 = vunpack.c.l.b16 %v211
      %v747 = vunpack.c.l.b16 %v212
      %v748 = vunpack.c.l.b16 %v213
      %v749 = vunpack.c.l.b16 %v214
      %v750 = vunpack.c.l.b16 %v215
      %v751 = vunpack.c.l.b16 %v216
      %v752 = vunpack.c.l.b16 %v217
      %v753 = vunpack.c.l.b16 %v218
      %v754 = vunpack.c.l.b16 %v219
      %v755 = vunpack.c.l.b16 %v220
      %v756 = vunpack.c.l.b16 %v221
      %v757 = vunpack.c.l.b16 %v222
      %v758 = vunpack.c.l.b16 %v223
      %v759 = vunpack.c.l.b16 %v224
      %v760 = vunpack.c.l.b16 %v225
      %v761 = vunpack.c.l.b16 %v226
      %v762 = vunpack.c.l.b16 %v227
      %v763 = vunpack.c.l.b16 %v228
      %v764 = vunpack.c.l.b16 %v229
      %v765 = vunpack.c.l.b16 %v230
      %v766 = vunpack.c.l.b16 %v231
      %v767 = vunpack.c.l.b16 %v232
      %v768 = vunpack.c.l.b16 %v233
      %v769 = vunpack.c.l.b16 %v234
      %v770 = vunpack.c.l.b16 %v235
      %v771 = vunpack.c.l.b16 %v236
      %v772 = vunpack.c.l.b16 %v237
      %v773 = vunpack.c.l.b16 %v238
      %v774 = vunpack.c.l.b16 %v239
      %v775 = vunpack.c.l.b16 %v240
      %v776 = vunpack.c.l.b16 %v241
      %v777 = vunpack.c.l.b16 %v242
      %v778 = vunpack.c.l.b16 %v243
      %v779 = vunpack.c.l.b16 %v244
      %v780 = vunpack.c.l.b16 %v245
      %v781 = vunpack.c.l.b16 %v246
      %v782 = vunpack.c.l.b16 %v247
      %v783 = vunpack.c.l.b16 %v248
      %v784 = vunpack.c.l.b16 %v249
      %v785 = vunpack.c.l.b16 %v250
      %v786 = vunpack.c.l.b16 %v251
      %v787 = vunpack.c.l.b16 %v252
      %v788 = vunpack.c.l.b16 %v253
      %v789 = vunpack.c.l.b16 %v254
      %v790 = vunpack.c.l.b16 %v255
      %v791 = vunpack.c.l.b16 %v256
      %v792 = vunpack.c.l.b16 %v257
      %v793 = vunpack.c.l.b16 %v258
      %v794 = vunpack.c.l.b16 %v259
      %v795 = vunpack.c.l.b16 %v260
      %v796 = vunpack.c.l.b16 %v261
      %v797 = vunpack.c.l.b16 %v262
      %v798 = vunpack.c.l.b16 %v263
      %v799 = vunpack.c.l.b16 %v264
      %v800 = vunpack.c.l.b16 %v265
      %v801 = vunpack.c.l.b16 %v266
      %v802 = vunpack.c.l.b16 %v267
      %v803 = vunpack.c.l.b16 %v268
      %v804 = vunpack.c.l.b16 %v269
      %v805 = vunpack.c.l.b16 %v270
      %v806 = vunpack.c.l.b16 %v271
      %v807 = vunpack.c.l.b16 %v272
      %v808 = vunpack.c.l.b16 %v273
      %v809 = vunpack.c.l.b16 %v274
      %v810 = vunpack.c.l.b16 %v275
      %v811 = vunpack.c.l.b16 %v276
      %v812 = vunpack.c.l.b16 %v277
      %v813 = vunpack.c.l.b16 %v278
      %v814 = vunpack.c.l.b16 %v279
      %v815 = vunpack.c.l.b16 %v280
      %v816 = vunpack.c.l.b16 %v281
      %v817 = vunpack.c.l.b16 %v282
      %v818 = vunpack.c.l.b16 %v283
      %v819 = vunpack.c.l.b16 %v284
      %v820 = vunpack.c.l.b16 %v285
      %v821 = vunpack.c.l.b16 %v286
      %v822 = vunpack.c.l.b16 %v287
      %v823 = vunpack.c.l.b16 %v288
      %v824 = vunpack.c.l.b16 %v289
      %v825 = vunpack.c.l.b16 %v290
      %v826 = vunpack.c.l.b16 %v291
      %v827 = vunpack.c.l.b16 %v292
      %v828 = vunpack.c.l.b16 %v293
      %v829 = vunpack.c.l.b16 %v294
      %v830 = vunpack.c.l.b16 %v295
      %v831 = vunpack.c.l.b16 %v296
      %v832 = vunpack.c.l.b16 %v297
      %v833 = vunpack.c.l.b16 %v298
      %v834 = vunpack.c.l.b16 %v299
      %v835 = vunpack.c.l.b16 %v300
      %v836 = vunpack.c.l.b16 %v301
      %v837 = vunpack.c.l.b16 %v302
      %v838 = vunpack.c.l.b16 %v303
      %v839 = vunpack.c.l.b16 %v304
      %v840 = vunpack.c.l.b16 %v305
      %v841 = vunpack.c.l.b16 %v306
      %v842 = vunpack.c.l.b16 %v307
      %v843 = vunpack.c.l.b16 %v308
      %v844 = vunpack.c.l.b16 %v309
      %v845 = vunpack.c.l.b16 %v310
      %v846 = vunpack.c.l.b16 %v311
      %v847 = vunpack.c.l.b16 %v312
      %v848 = vunpack.c.l.b16 %v313
      %v849 = vunpack.c.l.b16 %v314
      %v850 = vunpack.c.l.b16 %v315
      %v851 = vunpack.c.l.b16 %v316
      %v852 = vunpack.c.l.b16 %v317
      %v853 = vunpack.c.l.b16 %v318
      %v854 = vunpack.c.l.b16 %v319
      %v855 = vunpack.c.l.b16 %v320
      %v856 = vunpack.c.l.b16 %v321
      %v857 = vunpack.c.l.b16 %v322
      %v858 = vunpack.c.l.b16 %v323
      %v859 = vunpack.c.l.b16 %v324
      %v860 = vunpack.c.l.b16 %v325
      %v861 = vunpack.c.l.b16 %v326
      %v862 = vunpack.c.l.b16 %v327
      %v863 = vunpack.c.l.b16 %v328
      %v864 = vunpack.c.l.b16 %v329
      %v865 = vunpack.c.l.b16 %v330
      %v866 = vunpack.c.l.b16 %v331
      %v867 = vunpack.c.l.b16 %v332
      %v868 = vunpack.c.l.b16 %v333
      %v869 = vunpack.c.l.b16 %v334
      %v870 = vunpack.c.l.b16 %v335
      %v871 = vunpack.c.l.b16 %v336
      %v872 = vunpack.c.l.b16 %v337
      %v873 = vunpack.c.l.b16 %v338
      %v874 = vunpack.c.l.b16 %v339
      %v875 = vunpack.c.l.b16 %v340
      %v876 = vunpack.c.l.b16 %v341
      %v877 = vunpack.c.l.b16 %v342
      %v878 = vunpack.c.l.b16 %v343
      %v879 = vunpack.c.l.b16 %v344
      %v880 = vunpack.c.l.b16 %v345
      %v881 = vunpack.c.l.b16 %v346
      %v882 = vunpack.c.l.b16 %v347
      %v883 = vunpack.c.l.b16 %v348
      %v884 = vunpack.c.l.b16 %v349
      %v885 = vunpack.c.l.b16 %v350
      %v886 = vunpack.c.l.b16 %v351
      %v887 = vunpack.c.l.b16 %v352
      %v888 = vunpack.c.l.b16 %v353
      %v889 = vunpack.c.l.b16 %v354
      %v890 = vunpack.c.l.b16 %v355
      %v891 = vunpack.c.l.b16 %v356
      %v892 = vunpack.c.l.b16 %v357
      %v893 = vunpack.c.l.b16 %v358
      %v894 = vunpack.c.l.b16 %v359
      %v895 = vunpack.c.l.b16 %v360
      %v896 = vunpack.c.l.b16 %v361
      %v897 = vunpack.c.l.b16 %v362
      %v898 = vunpack.c.l.b16 %v363
      %v899 = vunpack.c.l.b16 %v364
      %v900 = vunpack.c.l.b16 %v365
      %v901 = vunpack.c.l.b16 %v366
      %v902 = vunpack.c.l.b16 %v367
      %v903 = vunpack.c.l.b16 %v368
      %v904 = vunpack.c.l.b16 %v369
      %v905 = vunpack.c.l.b16 %v370
      %v906 = vunpack.c.l.b16 %v371
      %v907 = vunpack.c.l.b16 %v372
      %v908 = vunpack.c.l.b16 %v373
      %v909 = vunpack.c.l.b16 %v374
      %v910 = vunpack.c.l.b16 %v375
      %v911 = vunpack.c.l.b16 %v376
      %v912 = vunpack.c.l.b16 %v377
      %v913 = vunpack.c.l.b16 %v378
      %v914 = vunpack.c.l.b16 %v379
      %v915 = vunpack.c.l.b16 %v380
      %v916 = vunpack.c.l.b16 %v381
      %v917 = vunpack.c.l.b16 %v382
      %v918 = vunpack.c.l.b16 %v383
      %v919 = vunpack.c.l.b16 %v384
      %v920 = vunpack.c.l.b16 %v385
      %v921 = vunpack.c.l.b16 %v386
      %v922 = vunpack.c.l.b16 %v387
      %v923 = vunpack.c.l.b16 %v388
      %v924 = vunpack.c.l.b16 %v389
      %v925 = vunpack.c.l.b16 %v390
      %v926 = vunpack.c.l.b16 %v391
      %v927 = vunpack.c.l.b16 %v392
      %v928 = vunpack.c.l.b16 %v393
      %v929 = vunpack.c.l.b16 %v394
      %v930 = vunpack.c.l.b16 %v395
      %v931 = vunpack.c.l.b16 %v396
      %v932 = vunpack.c.l.b16 %v397
      %v933 = vunpack.c.l.b16 %v398
      %v934 = vunpack.c.l.b16 %v399
      %v935 = vunpack.c.l.b16 %v400
      %v936 = vunpack.c.l.b16 %v401
      %v937 = vunpack.c.l.b16 %v402
      %v938 = vunpack.c.l.b16 %v403
      %v939 = vunpack.c.l.b16 %v404
      %v940 = vunpack.c.l.b16 %v405
      %v941 = vunpack.c.l.b16 %v406
      %v942 = vunpack.c.l.b16 %v407
      %v943 = vunpack.c.l.b16 %v408
      %v944 = vunpack.c.l.b16 %v409
      %v945 = vunpack.c.l.b16 %v410
      %v946 = vunpack.c.l.b16 %v411
      %v947 = vunpack.c.l.b16 %v412
      %v948 = vunpack.c.l.b16 %v413
      %v949 = vunpack.c.l.b16 %v414
      %v950 = vunpack.c.l.b16 %v415
      %v951 = vunpack.c.l.b16 %v416
      %v952 = vunpack.c.l.b16 %v417
      %v953 = vunpack.c.l.b16 %v418
      %v954 = vunpack.c.l.b16 %v419
      %v955 = vunpack.c.l.b16 %v420
      %v956 = vunpack.c.l.b16 %v421
      %v957 = vunpack.c.l.b16 %v422
      %v958 = vunpack.c.l.b16 %v423
      %v959 = vunpack.c.l.b16 %v424
      %v960 = vunpack.c.l.b16 %v425
      %v961 = vunpack.c.l.b16 %v426
      %v962 = vunpack.c.l.b16 %v427
      %v963 = vunpack.c.l.b16 %v428
      %v964 = vunpack.c.l.b16 %v429
      %v965 = vunpack.c.l.b16 %v430
      %v966 = vunpack.c.l.b16 %v431
      %v967 = vunpack.c.l.b16 %v432
      %v968 = vunpack.c.l.b16 %v433
      %v969 = vunpack.c.l.b16 %v434
      %v970 = vunpack.c.l.b16 %v435
      %v971 = vunpack.c.l.b16 %v436
      %v972 = vunpack.c.l.b16 %v437
      %v973 = vunpack.c.l.b16 %v438
      %v974 = vunpack.c.l.b16 %v439
      %v975 = vunpack.c.l.b16 %v440
      %v976 = vunpack.c.l.b16 %v441
      %v977 = vunpack.c.l.b16 %v442
      %v978 = vunpack.c.l.b16 %v443
      %v979 = vunpack.c.l.b16 %v444
      %v980 = vunpack.c.l.b16 %v445
      %v981 = vunpack.c.l.b16 %v446
      %v982 = vunpack.c.l.b16 %v447
      %v983 = vunpack.c.l.b16 %v448
      %v984 = vunpack.c.l.b16 %v449
      %v985 = vunpack.c.l.b16 %v450
      %v986 = vunpack.c.l.b16 %v451
      %v987 = vunpack.c.l.b16 %v452
      %v988 = vunpack.c.l.b16 %v453
      %v989 = vunpack.c.l.b16 %v454
      %v990 = vunpack.c.l.b16 %v455
      %v991 = vunpack.c.l.b16 %v456
      %v992 = vunpack.c.l.b16 %v457
      %v993 = vunpack.c.l.b16 %v458
      %v994 = vunpack.c.l.b16 %v459
      %v995 = vunpack.c.l.b16 %v460
      %v996 = vunpack.c.l.b16 %v461
      %v997 = vunpack.c.l.b16 %v462
      %v998 = vunpack.c.l.b16 %v463
      %v999 = vunpack.c.l.b16 %v464
      %v1000 = vunpack.c.l.b16 %v465
      %v1001 = vunpack.c.l.b16 %v466
      %v1002 = vpack.c.b16 %v747, %v746
      %v1003 = vpack.c.b16 %v749, %v748
      %v1004 = vpack.c.b16 %v751, %v750
      %v1005 = vpack.c.b16 %v753, %v752
      %v1006 = vpack.c.b16 %v755, %v754
      %v1007 = vpack.c.b16 %v757, %v756
      %v1008 = vpack.c.b16 %v759, %v758
      %v1009 = vpack.c.b16 %v761, %v760
      %v1010 = vpack.c.b16 %v763, %v762
      %v1011 = vpack.c.b16 %v765, %v764
      %v1012 = vpack.c.b16 %v767, %v766
      %v1013 = vpack.c.b16 %v769, %v768
      %v1014 = vpack.c.b16 %v771, %v770
      %v1015 = vpack.c.b16 %v773, %v772
      %v1016 = vpack.c.b16 %v775, %v774
      %v1017 = vpack.c.b16 %v777, %v776
      %v1018 = vpack.c.b16 %v779, %v778
      %v1019 = vpack.c.b16 %v781, %v780
      %v1020 = vpack.c.b16 %v783, %v782
      %v1021 = vpack.c.b16 %v785, %v784
      %v1022 = vpack.c.b16 %v787, %v786
      %v1023 = vpack.c.b16 %v789, %v788
      %v1024 = vpack.c.b16 %v791, %v790
      %v1025 = vpack.c.b16 %v793, %v792
      %v1026 = vpack.c.b16 %v795, %v794
      %v1027 = vpack.c.b16 %v797, %v796
      %v1028 = vpack.c.b16 %v799, %v798
      %v1029 = vpack.c.b16 %v801, %v800
      %v1030 = vpack.c.b16 %v803, %v802
      %v1031 = vpack.c.b16 %v805, %v804
      %v1032 = vpack.c.b16 %v807, %v806
      %v1033 = vpack.c.b16 %v809, %v808
      %v1034 = vpack.c.b16 %v811, %v810
      %v1035 = vpack.c.b16 %v813, %v812
      %v1036 = vpack.c.b16 %v815, %v814
      %v1037 = vpack.c.b16 %v817, %v816
      %v1038 = vpack.c.b16 %v819, %v818
      %v1039 = vpack.c.b16 %v821, %v820
      %v1040 = vpack.c.b16 %v823, %v822
      %v1041 = vpack.c.b16 %v825, %v824
      %v1042 = vpack.c.b16 %v827, %v826
      %v1043 = vpack.c.b16 %v829, %v828
      %v1044 = vpack.c.b16 %v831, %v830
      %v1045 = vpack.c.b16 %v833, %v832
      %v1046 = vpack.c.b16 %v835, %v834
      %v1047 = vpack.c.b16 %v837, %v836
      %v1048 = vpack.c.b16 %v839, %v838
      %v1049 = vpack.c.b16 %v841, %v840
      %v1050 = vpack.c.b16 %v843, %v842
      %v1051 = vpack.c.b16 %v845, %v844
      %v1052 = vpack.c.b16 %v847, %v846
      %v1053 = vpack.c.b16 %v849, %v848
      %v1054 = vpack.c.b16 %v851, %v850
      %v1055 = vpack.c.b16 %v853, %v852
      %v1056 = vpack.c.b16 %v855, %v854
      %v1057 = vpack.c.b16 %v857, %v856
      %v1058 = vpack.c.b16 %v859, %v858
      %v1059 = vpack.c.b16 %v861, %v860
      %v1060 = vpack.c.b16 %v863, %v862
      %v1061 = vpack.c.b16 %v865, %v864
      %v1062 = vpack.c.b16 %v867, %v866
      %v1063 = vpack.c.b16 %v869, %v868
      %v1064 = vpack.c.b16 %v871, %v870
      %v1065 = vpack.c.b16 %v873, %v872
      %v1066 = vpack.c.b16 %v875, %v874
      %v1067 = vpack.c.b16 %v877, %v876
      %v1068 = vpack.c.b16 %v879, %v878
      %v1069 = vpack.c.b16 %v881, %v880
      %v1070 = vpack.c.b16 %v883, %v882
      %v1071 = vpack.c.b16 %v885, %v884
      %v1072 = vpack.c.b16 %v887, %v886
      %v1073 = vpack.c.b16 %v889, %v888
      %v1074 = vpack.c.b16 %v891, %v890
      %v1075 = vpack.c.b16 %v893, %v892
      %v1076 = vpack.c.b16 %v895, %v894
      %v1077 = vpack.c.b16 %v897, %v896
      %v1078 = vpack.c.b16 %v899, %v898
      %v1079 = vpack.c.b16 %v901, %v900
      %v1080 = vpack.c.b16 %v903, %v902
      %v1081 = vpack.c.b16 %v905, %v904
      %v1082 = vpack.c.b16 %v907, %v906
      %v1083 = vpack.c.b16 %v909, %v908
      %v1084 = vpack.c.b16 %v911, %v910
      %v1085 = vpack.c.b16 %v913, %v912
      %v1086 = vpack.c.b16 %v915, %v914
      %v1087 = vpack.c.b16 %v917, %v916
      %v1088 = vpack.c.b16 %v919, %v918
      %v1089 = vpack.c.b16 %v921, %v920
      %v1090 = vpack.c.b16 %v923, %v922
      %v1091 = vpack.c.b16 %v925, %v924
      %v1092 = vpack.c.b16 %v927, %v926
      %v1093 = vpack.c.b16 %v929, %v928
      %v1094 = vpack.c.b16 %v931, %v930
      %v1095 = vpack.c.b16 %v933, %v932
      %v1096 = vpack.c.b16 %v935, %v934
      %v1097 = vpack.c.b16 %v937, %v936
      %v1098 = vpack.c.b16 %v939, %v938
      %v1099 = vpack.c.b16 %v941, %v940
      %v1100 = vpack.c.b16 %v943, %v942
      %v1101 = vpack.c.b16 %v945, %v944
      %v1102 = vpack.c.b16 %v947, %v946
      %v1103 = vpack.c.b16 %v949, %v948
      %v1104 = vpack.c.b16 %v951, %v950
      %v1105 = vpack.c.b16 %v953, %v952
      %v1106 = vpack.c.b16 %v955, %v954
      %v1107 = vpack.c.b16 %v957, %v956
      %v1108 = vpack.c.b16 %v959, %v958
      %v1109 = vpack.c.b16 %v961, %v960
      %v1110 = vpack.c.b16 %v963, %v962
      %v1111 = vpack.c.b16 %v965, %v964
      %v1112 = vpack.c.b16 %v967, %v966
      %v1113 = vpack.c.b16 %v969, %v968
      %v1114 = vpack.c.b16 %v971, %v970
      %v1115 = vpack.c.b16 %v973, %v972
      %v1116 = vpack.c.b16 %v975, %v974
      %v1117 = vpack.c.b16 %v977, %v976
      %v1118 = vpack.c.b16 %v979, %v978
      %v1119 = vpack.c.b16 %v981, %v980
      %v1120 = vpack.c.b16 %v983, %v982
      %v1121 = vpack.c.b16 %v985, %v984
      %v1122 = vpack.c.b16 %v987, %v986
      %v1123 = vpack.c.b16 %v989, %v988
      %v1124 = vpack.c.b16 %v991, %v990
      %v1125 = vpack.c.b16 %v993, %v992
      %v1126 = vpack.c.b16 %v995, %v994
      %v1127 = vpack.c.b16 %v997, %v996
      %v1128 = vpack.c.b16 %v999, %v998
      %v1129 = vpack.c.b16 %v1001, %v1000
      %v1274 = vunpack.c.l.b16 %v467
      %v1275 = vunpack.c.l.b16 %v468
      %v1276 = vunpack.c.l.b16 %v469
      %v1277 = vunpack.c.l.b16 %v470
      %v1278 = vunpack.c.l.b16 %v471
      %v1279 = vunpack.c.l.b16 %v472
      %v1280 = vunpack.c.l.b16 %v473
      %v1281 = vunpack.c.l.b16 %v474
      %v1282 = vunpack.c.l.b16 %v475
      %v1283 = vunpack.c.l.b16 %v476
      %v1284 = vunpack.c.l.b16 %v477
      %v1285 = vunpack.c.l.b16 %v478
      %v1286 = vunpack.c.l.b16 %v479
      %v1287 = vunpack.c.l.b16 %v480
      %v1288 = vunpack.c.l.b16 %v481
      %v1289 = vunpack.c.l.b16 %v482
      %v1290 = vpack.c.b16 %v1275, %v1274
      %v1291 = vpack.c.b16 %v1277, %v1276
      %v1292 = vpack.c.b16 %v1279, %v1278
      %v1293 = vpack.c.b16 %v1281, %v1280
      %v1294 = vpack.c.b16 %v1283, %v1282
      %v1295 = vpack.c.b16 %v1285, %v1284
      %v1296 = vpack.c.b16 %v1287, %v1286
      %v1297 = vpack.c.b16 %v1289, %v1288
      %1306 = vmatprep.subr.bf16.mxu0 0
      %1307 = vmatpush1.bf16.msra.mxu0 %v1297
      %1308 = vmatprep.subr.bf16.mxu0 0
      %1309 = vmatpush1.bf16.msra.mxu0 %v1296
      %1310 = vmatprep.subr.bf16.mxu0 0
      %1311 = vmatpush1.bf16.msra.mxu0 %v1295
      %1312 = vmatprep.subr.bf16.mxu0 0
      %1313 = vmatpush1.bf16.msra.mxu0 %v1294
      %1314 = vmatprep.subr.bf16.mxu0 0
      %1315 = vmatpush1.bf16.msra.mxu0 %v1293
      %1316 = vmatprep.subr.bf16.mxu0 0
      %1317 = vmatpush1.bf16.msra.mxu0 %v1292
      %1318 = vmatprep.subr.bf16.mxu0 0
      %1319 = vmatpush1.bf16.msra.mxu0 %v1291
      %1320 = vmatprep.subr.bf16.mxu0 0
      %1321 = vmatpush1.bf16.msra.mxu0 %v1290
      %1322 = vmatprep.subr.bf16.mxu0 0
      %1323 = vmatpush2.bf16.msra.mxu0 0
      %1324 = vmatprep.subr.bf16.mxu0 0
      %1325 = vmatpush2.bf16.msra.mxu0 0
      %1326 = vmatprep.subr.bf16.mxu0 0
      %1327 = vmatpush2.bf16.msra.mxu0 0
      %1328 = vmatprep.subr.bf16.mxu0 0
      %1329 = vmatpush2.bf16.msra.mxu0 0
      %1330 = vmatprep.subr.bf16.mxu0 0
      %1331 = vmatpush2.bf16.msra.mxu0 0
      %1332 = vmatprep.subr.bf16.mxu0 0
      %1333 = vmatpush2.bf16.msra.mxu0 0
      %1334 = vmatprep.subr.bf16.mxu0 0
      %1335 = vmatpush2.bf16.msra.mxu0 0
      %1336 = vmatprep.subr.bf16.mxu0 0
      %1337 = vmatpush2.bf16.msra.mxu0 0
      %1338 = vmatprep.mubr.bf16.mxu0 0
      %1339 = vmatmul.mubr.bf16.gmra.mxu0 %v1002
      %v1340 = vpop.f32.mrf.mxu0
      %v1341 = vadd.f32 %v488, %v1340
      %v1342 = vpop.f32.mrf.mxu0
      %v1343 = vpop.f32.mrf.mxu0
      %v1344 = vadd.f32 %v488, %v1343
      %v1345 = vpop.f32.mrf.mxu0
      %1346 = vmatprep.mubr.bf16.mxu0 0
      %1347 = vmatmul.mubr.bf16.gmra.mxu0 %v1003
      %v1348 = vpop.f32.mrf.mxu0
      %v1349 = vadd.f32 %v488, %v1348
      %v1350 = vpop.f32.mrf.mxu0
      %v1351 = vpop.f32.mrf.mxu0
      %v1352 = vadd.f32 %v488, %v1351
      %v1353 = vpop.f32.mrf.mxu0
      %1354 = vmatprep.mubr.bf16.mxu0 0
      %1355 = vmatmul.mubr.bf16.gmra.mxu0 %v1004
      %v1356 = vpop.f32.mrf.mxu0
      %v1357 = vadd.f32 %v488, %v1356
      %v1358 = vpop.f32.mrf.mxu0
      %v1359 = vpop.f32.mrf.mxu0
      %v1360 = vadd.f32 %v488, %v1359
      %v1361 = vpop.f32.mrf.mxu0
      %1362 = vmatprep.mubr.bf16.mxu0 0
      %1363 = vmatmul.mubr.bf16.gmra.mxu0 %v1005
      %v1364 = vpop.f32.mrf.mxu0
      %v1365 = vadd.f32 %v488, %v1364
      %v1366 = vpop.f32.mrf.mxu0
      %v1367 = vpop.f32.mrf.mxu0
      %v1368 = vadd.f32 %v488, %v1367
      %v1369 = vpop.f32.mrf.mxu0
      %1370 = vmatprep.mubr.bf16.mxu0 0
      %1371 = vmatmul.mubr.bf16.gmra.mxu0 %v1006
      %v1372 = vpop.f32.mrf.mxu0
      %v1373 = vadd.f32 %v488, %v1372
      %v1374 = vpop.f32.mrf.mxu0
      %v1375 = vpop.f32.mrf.mxu0
      %v1376 = vadd.f32 %v488, %v1375
      %v1377 = vpop.f32.mrf.mxu0
      %1378 = vmatprep.mubr.bf16.mxu0 0
      %1379 = vmatmul.mubr.bf16.gmra.mxu0 %v1007
      %v1380 = vpop.f32.mrf.mxu0
      %v1381 = vadd.f32 %v488, %v1380
      %v1382 = vpop.f32.mrf.mxu0
      %v1383 = vpop.f32.mrf.mxu0
      %v1384 = vadd.f32 %v488, %v1383
      %v1385 = vpop.f32.mrf.mxu0
      %1386 = vmatprep.mubr.bf16.mxu0 0
      %1387 = vmatmul.mubr.bf16.gmra.mxu0 %v1008
      %v1388 = vpop.f32.mrf.mxu0
      %v1389 = vadd.f32 %v488, %v1388
      %v1390 = vpop.f32.mrf.mxu0
      %v1391 = vpop.f32.mrf.mxu0
      %v1392 = vadd.f32 %v488, %v1391
      %v1393 = vpop.f32.mrf.mxu0
      %1394 = vmatprep.mubr.bf16.mxu0 0
      %1395 = vmatmul.mubr.bf16.gmra.mxu0 %v1009
      %v1396 = vpop.f32.mrf.mxu0
      %v1397 = vadd.f32 %v488, %v1396
      %v1398 = vpop.f32.mrf.mxu0
      %v1399 = vpop.f32.mrf.mxu0
      %v1400 = vadd.f32 %v488, %v1399
      %v1401 = vpop.f32.mrf.mxu0
      %1402 = vmatprep.mubr.bf16.mxu0 0
      %1403 = vmatmul.mubr.bf16.gmra.mxu0 %v1010
      %v1404 = vpop.f32.mrf.mxu0
      %v1405 = vadd.f32 %v488, %v1404
      %v1406 = vpop.f32.mrf.mxu0
      %v1407 = vpop.f32.mrf.mxu0
      %v1408 = vadd.f32 %v488, %v1407
      %v1409 = vpop.f32.mrf.mxu0
      %1410 = vmatprep.mubr.bf16.mxu0 0
      %1411 = vmatmul.mubr.bf16.gmra.mxu0 %v1011
      %v1412 = vpop.f32.mrf.mxu0
      %v1413 = vadd.f32 %v488, %v1412
      %v1414 = vpop.f32.mrf.mxu0
      %v1415 = vpop.f32.mrf.mxu0
      %v1416 = vadd.f32 %v488, %v1415
      %v1417 = vpop.f32.mrf.mxu0
      %1418 = vmatprep.mubr.bf16.mxu0 0
      %1419 = vmatmul.mubr.bf16.gmra.mxu0 %v1012
      %v1420 = vpop.f32.mrf.mxu0
      %v1421 = vadd.f32 %v488, %v1420
      %v1422 = vpop.f32.mrf.mxu0
      %v1423 = vpop.f32.mrf.mxu0
      %v1424 = vadd.f32 %v488, %v1423
      %v1425 = vpop.f32.mrf.mxu0
      %1426 = vmatprep.mubr.bf16.mxu0 0
      %1427 = vmatmul.mubr.bf16.gmra.mxu0 %v1013
      %v1428 = vpop.f32.mrf.mxu0
      %v1429 = vadd.f32 %v488, %v1428
      %v1430 = vpop.f32.mrf.mxu0
      %v1431 = vpop.f32.mrf.mxu0
      %v1432 = vadd.f32 %v488, %v1431
      %v1433 = vpop.f32.mrf.mxu0
      %1434 = vmatprep.mubr.bf16.mxu0 0
      %1435 = vmatmul.mubr.bf16.gmra.mxu0 %v1014
      %v1436 = vpop.f32.mrf.mxu0
      %v1437 = vadd.f32 %v488, %v1436
      %v1438 = vpop.f32.mrf.mxu0
      %v1439 = vpop.f32.mrf.mxu0
      %v1440 = vadd.f32 %v488, %v1439
      %v1441 = vpop.f32.mrf.mxu0
      %1442 = vmatprep.mubr.bf16.mxu0 0
      %1443 = vmatmul.mubr.bf16.gmra.mxu0 %v1015
      %v1444 = vpop.f32.mrf.mxu0
      %v1445 = vadd.f32 %v488, %v1444
      %v1446 = vpop.f32.mrf.mxu0
      %v1447 = vpop.f32.mrf.mxu0
      %v1448 = vadd.f32 %v488, %v1447
      %v1449 = vpop.f32.mrf.mxu0
      %1450 = vmatprep.mubr.bf16.mxu0 0
      %1451 = vmatmul.mubr.bf16.gmra.mxu0 %v1016
      %v1452 = vpop.f32.mrf.mxu0
      %v1453 = vadd.f32 %v488, %v1452
      %v1454 = vpop.f32.mrf.mxu0
      %v1455 = vpop.f32.mrf.mxu0
      %v1456 = vadd.f32 %v488, %v1455
      %v1457 = vpop.f32.mrf.mxu0
      %1458 = vmatprep.mubr.bf16.mxu0 0
      %1459 = vmatmul.mubr.bf16.gmra.mxu0 %v1017
      %v1460 = vpop.f32.mrf.mxu0
      %v1461 = vadd.f32 %v488, %v1460
      %v1462 = vpop.f32.mrf.mxu0
      %v1463 = vpop.f32.mrf.mxu0
      %v1464 = vadd.f32 %v488, %v1463
      %v1465 = vpop.f32.mrf.mxu0
      %1466 = vmatprep.mubr.bf16.mxu0 0
      %1467 = vmatmul.mubr.bf16.gmra.mxu0 %v1018
      %v1468 = vpop.f32.mrf.mxu0
      %v1469 = vadd.f32 %v488, %v1468
      %v1470 = vpop.f32.mrf.mxu0
      %v1471 = vpop.f32.mrf.mxu0
      %v1472 = vadd.f32 %v488, %v1471
      %v1473 = vpop.f32.mrf.mxu0
      %1474 = vmatprep.mubr.bf16.mxu0 0
      %1475 = vmatmul.mubr.bf16.gmra.mxu0 %v1019
      %v1476 = vpop.f32.mrf.mxu0
      %v1477 = vadd.f32 %v488, %v1476
      %v1478 = vpop.f32.mrf.mxu0
      %v1479 = vpop.f32.mrf.mxu0
      %v1480 = vadd.f32 %v488, %v1479
      %v1481 = vpop.f32.mrf.mxu0
      %1482 = vmatprep.mubr.bf16.mxu0 0
      %1483 = vmatmul.mubr.bf16.gmra.mxu0 %v1020
      %v1484 = vpop.f32.mrf.mxu0
      %v1485 = vadd.f32 %v488, %v1484
      %v1486 = vpop.f32.mrf.mxu0
      %v1487 = vpop.f32.mrf.mxu0
      %v1488 = vadd.f32 %v488, %v1487
      %v1489 = vpop.f32.mrf.mxu0
      %1490 = vmatprep.mubr.bf16.mxu0 0
      %1491 = vmatmul.mubr.bf16.gmra.mxu0 %v1021
      %v1492 = vpop.f32.mrf.mxu0
      %v1493 = vadd.f32 %v488, %v1492
      %v1494 = vpop.f32.mrf.mxu0
      %v1495 = vpop.f32.mrf.mxu0
      %v1496 = vadd.f32 %v488, %v1495
      %v1497 = vpop.f32.mrf.mxu0
      %1498 = vmatprep.mubr.bf16.mxu0 0
      %1499 = vmatmul.mubr.bf16.gmra.mxu0 %v1022
      %v1500 = vpop.f32.mrf.mxu0
      %v1501 = vadd.f32 %v488, %v1500
      %v1502 = vpop.f32.mrf.mxu0
      %v1503 = vpop.f32.mrf.mxu0
      %v1504 = vadd.f32 %v488, %v1503
      %v1505 = vpop.f32.mrf.mxu0
      %1506 = vmatprep.mubr.bf16.mxu0 0
      %1507 = vmatmul.mubr.bf16.gmra.mxu0 %v1023
      %v1508 = vpop.f32.mrf.mxu0
      %v1509 = vadd.f32 %v488, %v1508
      %v1510 = vpop.f32.mrf.mxu0
      %v1511 = vpop.f32.mrf.mxu0
      %v1512 = vadd.f32 %v488, %v1511
      %v1513 = vpop.f32.mrf.mxu0
      %1514 = vmatprep.mubr.bf16.mxu0 0
      %1515 = vmatmul.mubr.bf16.gmra.mxu0 %v1024
      %v1516 = vpop.f32.mrf.mxu0
      %v1517 = vadd.f32 %v488, %v1516
      %v1518 = vpop.f32.mrf.mxu0
      %v1519 = vpop.f32.mrf.mxu0
      %v1520 = vadd.f32 %v488, %v1519
      %v1521 = vpop.f32.mrf.mxu0
      %1522 = vmatprep.mubr.bf16.mxu0 0
      %1523 = vmatmul.mubr.bf16.gmra.mxu0 %v1025
      %v1524 = vpop.f32.mrf.mxu0
      %v1525 = vadd.f32 %v488, %v1524
      %v1526 = vpop.f32.mrf.mxu0
      %v1527 = vpop.f32.mrf.mxu0
      %v1528 = vadd.f32 %v488, %v1527
      %v1529 = vpop.f32.mrf.mxu0
      %1530 = vmatprep.mubr.bf16.mxu0 0
      %1531 = vmatmul.mubr.bf16.gmra.mxu0 %v1026
      %v1532 = vpop.f32.mrf.mxu0
      %v1533 = vadd.f32 %v488, %v1532
      %v1534 = vpop.f32.mrf.mxu0
      %v1535 = vpop.f32.mrf.mxu0
      %v1536 = vadd.f32 %v488, %v1535
      %v1537 = vpop.f32.mrf.mxu0
      %1538 = vmatprep.mubr.bf16.mxu0 0
      %1539 = vmatmul.mubr.bf16.gmra.mxu0 %v1027
      %v1540 = vpop.f32.mrf.mxu0
      %v1541 = vadd.f32 %v488, %v1540
      %v1542 = vpop.f32.mrf.mxu0
      %v1543 = vpop.f32.mrf.mxu0
      %v1544 = vadd.f32 %v488, %v1543
      %v1545 = vpop.f32.mrf.mxu0
      %1546 = vmatprep.mubr.bf16.mxu0 0
      %1547 = vmatmul.mubr.bf16.gmra.mxu0 %v1028
      %v1548 = vpop.f32.mrf.mxu0
      %v1549 = vadd.f32 %v488, %v1548
      %v1550 = vpop.f32.mrf.mxu0
      %v1551 = vpop.f32.mrf.mxu0
      %v1552 = vadd.f32 %v488, %v1551
      %v1553 = vpop.f32.mrf.mxu0
      %1554 = vmatprep.mubr.bf16.mxu0 0
      %1555 = vmatmul.mubr.bf16.gmra.mxu0 %v1029
      %v1556 = vpop.f32.mrf.mxu0
      %v1557 = vadd.f32 %v488, %v1556
      %v1558 = vpop.f32.mrf.mxu0
      %v1559 = vpop.f32.mrf.mxu0
      %v1560 = vadd.f32 %v488, %v1559
      %v1561 = vpop.f32.mrf.mxu0
      %1562 = vmatprep.mubr.bf16.mxu0 0
      %1563 = vmatmul.mubr.bf16.gmra.mxu0 %v1030
      %v1564 = vpop.f32.mrf.mxu0
      %v1565 = vadd.f32 %v488, %v1564
      %v1566 = vpop.f32.mrf.mxu0
      %v1567 = vpop.f32.mrf.mxu0
      %v1568 = vadd.f32 %v488, %v1567
      %v1569 = vpop.f32.mrf.mxu0
      %1570 = vmatprep.mubr.bf16.mxu0 0
      %1571 = vmatmul.mubr.bf16.gmra.mxu0 %v1031
      %v1572 = vpop.f32.mrf.mxu0
      %v1573 = vadd.f32 %v488, %v1572
      %v1574 = vpop.f32.mrf.mxu0
      %v1575 = vpop.f32.mrf.mxu0
      %v1576 = vadd.f32 %v488, %v1575
      %v1577 = vpop.f32.mrf.mxu0
      %1578 = vmatprep.mubr.bf16.mxu0 0
      %1579 = vmatmul.mubr.bf16.gmra.mxu0 %v1032
      %v1580 = vpop.f32.mrf.mxu0
      %v1581 = vadd.f32 %v488, %v1580
      %v1582 = vpop.f32.mrf.mxu0
      %v1583 = vpop.f32.mrf.mxu0
      %v1584 = vadd.f32 %v488, %v1583
      %v1585 = vpop.f32.mrf.mxu0
      %1586 = vmatprep.mubr.bf16.mxu0 0
      %1587 = vmatmul.mubr.bf16.gmra.mxu0 %v1033
      %v1588 = vpop.f32.mrf.mxu0
      %v1589 = vadd.f32 %v488, %v1588
      %v1590 = vpop.f32.mrf.mxu0
      %v1591 = vpop.f32.mrf.mxu0
      %v1592 = vadd.f32 %v488, %v1591
      %v1593 = vpop.f32.mrf.mxu0
      %1594 = vmatprep.mubr.bf16.mxu0 0
      %1595 = vmatmul.mubr.bf16.gmra.mxu0 %v1034
      %v1596 = vpop.f32.mrf.mxu0
      %v1597 = vadd.f32 %v488, %v1596
      %v1598 = vpop.f32.mrf.mxu0
      %v1599 = vpop.f32.mrf.mxu0
      %v1600 = vadd.f32 %v488, %v1599
      %v1601 = vpop.f32.mrf.mxu0
      %1602 = vmatprep.mubr.bf16.mxu0 0
      %1603 = vmatmul.mubr.bf16.gmra.mxu0 %v1035
      %v1604 = vpop.f32.mrf.mxu0
      %v1605 = vadd.f32 %v488, %v1604
      %v1606 = vpop.f32.mrf.mxu0
      %v1607 = vpop.f32.mrf.mxu0
      %v1608 = vadd.f32 %v488, %v1607
      %v1609 = vpop.f32.mrf.mxu0
      %1610 = vmatprep.mubr.bf16.mxu0 0
      %1611 = vmatmul.mubr.bf16.gmra.mxu0 %v1036
      %v1612 = vpop.f32.mrf.mxu0
      %v1613 = vadd.f32 %v488, %v1612
      %v1614 = vpop.f32.mrf.mxu0
      %v1615 = vpop.f32.mrf.mxu0
      %v1616 = vadd.f32 %v488, %v1615
      %v1617 = vpop.f32.mrf.mxu0
      %1618 = vmatprep.mubr.bf16.mxu0 0
      %1619 = vmatmul.mubr.bf16.gmra.mxu0 %v1037
      %v1620 = vpop.f32.mrf.mxu0
      %v1621 = vadd.f32 %v488, %v1620
      %v1622 = vpop.f32.mrf.mxu0
      %v1623 = vpop.f32.mrf.mxu0
      %v1624 = vadd.f32 %v488, %v1623
      %v1625 = vpop.f32.mrf.mxu0
      %1626 = vmatprep.mubr.bf16.mxu0 0
      %1627 = vmatmul.mubr.bf16.gmra.mxu0 %v1038
      %v1628 = vpop.f32.mrf.mxu0
      %v1629 = vadd.f32 %v488, %v1628
      %v1630 = vpop.f32.mrf.mxu0
      %v1631 = vpop.f32.mrf.mxu0
      %v1632 = vadd.f32 %v488, %v1631
      %v1633 = vpop.f32.mrf.mxu0
      %1634 = vmatprep.mubr.bf16.mxu0 0
      %1635 = vmatmul.mubr.bf16.gmra.mxu0 %v1039
      %v1636 = vpop.f32.mrf.mxu0
      %v1637 = vadd.f32 %v488, %v1636
      %v1638 = vpop.f32.mrf.mxu0
      %v1639 = vpop.f32.mrf.mxu0
      %v1640 = vadd.f32 %v488, %v1639
      %v1641 = vpop.f32.mrf.mxu0
      %1642 = vmatprep.mubr.bf16.mxu0 0
      %1643 = vmatmul.mubr.bf16.gmra.mxu0 %v1040
      %v1644 = vpop.f32.mrf.mxu0
      %v1645 = vadd.f32 %v488, %v1644
      %v1646 = vpop.f32.mrf.mxu0
      %v1647 = vpop.f32.mrf.mxu0
      %v1648 = vadd.f32 %v488, %v1647
      %v1649 = vpop.f32.mrf.mxu0
      %1650 = vmatprep.mubr.bf16.mxu0 0
      %1651 = vmatmul.mubr.bf16.gmra.mxu0 %v1041
      %v1652 = vpop.f32.mrf.mxu0
      %v1653 = vadd.f32 %v488, %v1652
      %v1654 = vpop.f32.mrf.mxu0
      %v1655 = vpop.f32.mrf.mxu0
      %v1656 = vadd.f32 %v488, %v1655
      %v1657 = vpop.f32.mrf.mxu0
      %1658 = vmatprep.mubr.bf16.mxu0 0
      %1659 = vmatmul.mubr.bf16.gmra.mxu0 %v1042
      %v1660 = vpop.f32.mrf.mxu0
      %v1661 = vadd.f32 %v488, %v1660
      %v1662 = vpop.f32.mrf.mxu0
      %v1663 = vpop.f32.mrf.mxu0
      %v1664 = vadd.f32 %v488, %v1663
      %v1665 = vpop.f32.mrf.mxu0
      %1666 = vmatprep.mubr.bf16.mxu0 0
      %1667 = vmatmul.mubr.bf16.gmra.mxu0 %v1043
      %v1668 = vpop.f32.mrf.mxu0
      %v1669 = vadd.f32 %v488, %v1668
      %v1670 = vpop.f32.mrf.mxu0
      %v1671 = vpop.f32.mrf.mxu0
      %v1672 = vadd.f32 %v488, %v1671
      %v1673 = vpop.f32.mrf.mxu0
      %1674 = vmatprep.mubr.bf16.mxu0 0
      %1675 = vmatmul.mubr.bf16.gmra.mxu0 %v1044
      %v1676 = vpop.f32.mrf.mxu0
      %v1677 = vadd.f32 %v488, %v1676
      %v1678 = vpop.f32.mrf.mxu0
      %v1679 = vpop.f32.mrf.mxu0
      %v1680 = vadd.f32 %v488, %v1679
      %v1681 = vpop.f32.mrf.mxu0
      %1682 = vmatprep.mubr.bf16.mxu0 0
      %1683 = vmatmul.mubr.bf16.gmra.mxu0 %v1045
      %v1684 = vpop.f32.mrf.mxu0
      %v1685 = vadd.f32 %v488, %v1684
      %v1686 = vpop.f32.mrf.mxu0
      %v1687 = vpop.f32.mrf.mxu0
      %v1688 = vadd.f32 %v488, %v1687
      %v1689 = vpop.f32.mrf.mxu0
      %1690 = vmatprep.mubr.bf16.mxu0 0
      %1691 = vmatmul.mubr.bf16.gmra.mxu0 %v1046
      %v1692 = vpop.f32.mrf.mxu0
      %v1693 = vadd.f32 %v488, %v1692
      %v1694 = vpop.f32.mrf.mxu0
      %v1695 = vpop.f32.mrf.mxu0
      %v1696 = vadd.f32 %v488, %v1695
      %v1697 = vpop.f32.mrf.mxu0
      %1698 = vmatprep.mubr.bf16.mxu0 0
      %1699 = vmatmul.mubr.bf16.gmra.mxu0 %v1047
      %v1700 = vpop.f32.mrf.mxu0
      %v1701 = vadd.f32 %v488, %v1700
      %v1702 = vpop.f32.mrf.mxu0
      %v1703 = vpop.f32.mrf.mxu0
      %v1704 = vadd.f32 %v488, %v1703
      %v1705 = vpop.f32.mrf.mxu0
      %1706 = vmatprep.mubr.bf16.mxu0 0
      %1707 = vmatmul.mubr.bf16.gmra.mxu0 %v1048
      %v1708 = vpop.f32.mrf.mxu0
      %v1709 = vadd.f32 %v488, %v1708
      %v1710 = vpop.f32.mrf.mxu0
      %v1711 = vpop.f32.mrf.mxu0
      %v1712 = vadd.f32 %v488, %v1711
      %v1713 = vpop.f32.mrf.mxu0
      %1714 = vmatprep.mubr.bf16.mxu0 0
      %1715 = vmatmul.mubr.bf16.gmra.mxu0 %v1049
      %v1716 = vpop.f32.mrf.mxu0
      %v1717 = vadd.f32 %v488, %v1716
      %v1718 = vpop.f32.mrf.mxu0
      %v1719 = vpop.f32.mrf.mxu0
      %v1720 = vadd.f32 %v488, %v1719
      %v1721 = vpop.f32.mrf.mxu0
      %1722 = vmatprep.mubr.bf16.mxu0 0
      %1723 = vmatmul.mubr.bf16.gmra.mxu0 %v1050
      %v1724 = vpop.f32.mrf.mxu0
      %v1725 = vadd.f32 %v488, %v1724
      %v1726 = vpop.f32.mrf.mxu0
      %v1727 = vpop.f32.mrf.mxu0
      %v1728 = vadd.f32 %v488, %v1727
      %v1729 = vpop.f32.mrf.mxu0
      %1730 = vmatprep.mubr.bf16.mxu0 0
      %1731 = vmatmul.mubr.bf16.gmra.mxu0 %v1051
      %v1732 = vpop.f32.mrf.mxu0
      %v1733 = vadd.f32 %v488, %v1732
      %v1734 = vpop.f32.mrf.mxu0
      %v1735 = vpop.f32.mrf.mxu0
      %v1736 = vadd.f32 %v488, %v1735
      %v1737 = vpop.f32.mrf.mxu0
      %1738 = vmatprep.mubr.bf16.mxu0 0
      %1739 = vmatmul.mubr.bf16.gmra.mxu0 %v1052
      %v1740 = vpop.f32.mrf.mxu0
      %v1741 = vadd.f32 %v488, %v1740
      %v1742 = vpop.f32.mrf.mxu0
      %v1743 = vpop.f32.mrf.mxu0
      %v1744 = vadd.f32 %v488, %v1743
      %v1745 = vpop.f32.mrf.mxu0
      %1746 = vmatprep.mubr.bf16.mxu0 0
      %1747 = vmatmul.mubr.bf16.gmra.mxu0 %v1053
      %v1748 = vpop.f32.mrf.mxu0
      %v1749 = vadd.f32 %v488, %v1748
      %v1750 = vpop.f32.mrf.mxu0
      %v1751 = vpop.f32.mrf.mxu0
      %v1752 = vadd.f32 %v488, %v1751
      %v1753 = vpop.f32.mrf.mxu0
      %1754 = vmatprep.mubr.bf16.mxu0 0
      %1755 = vmatmul.mubr.bf16.gmra.mxu0 %v1054
      %v1756 = vpop.f32.mrf.mxu0
      %v1757 = vadd.f32 %v488, %v1756
      %v1758 = vpop.f32.mrf.mxu0
      %v1759 = vpop.f32.mrf.mxu0
      %v1760 = vadd.f32 %v488, %v1759
      %v1761 = vpop.f32.mrf.mxu0
      %1762 = vmatprep.mubr.bf16.mxu0 0
      %1763 = vmatmul.mubr.bf16.gmra.mxu0 %v1055
      %v1764 = vpop.f32.mrf.mxu0
      %v1765 = vadd.f32 %v488, %v1764
      %v1766 = vpop.f32.mrf.mxu0
      %v1767 = vpop.f32.mrf.mxu0
      %v1768 = vadd.f32 %v488, %v1767
      %v1769 = vpop.f32.mrf.mxu0
      %1770 = vmatprep.mubr.bf16.mxu0 0
      %1771 = vmatmul.mubr.bf16.gmra.mxu0 %v1056
      %v1772 = vpop.f32.mrf.mxu0
      %v1773 = vadd.f32 %v488, %v1772
      %v1774 = vpop.f32.mrf.mxu0
      %v1775 = vpop.f32.mrf.mxu0
      %v1776 = vadd.f32 %v488, %v1775
      %v1777 = vpop.f32.mrf.mxu0
      %1778 = vmatprep.mubr.bf16.mxu0 0
      %1779 = vmatmul.mubr.bf16.gmra.mxu0 %v1057
      %v1780 = vpop.f32.mrf.mxu0
      %v1781 = vadd.f32 %v488, %v1780
      %v1782 = vpop.f32.mrf.mxu0
      %v1783 = vpop.f32.mrf.mxu0
      %v1784 = vadd.f32 %v488, %v1783
      %v1785 = vpop.f32.mrf.mxu0
      %1786 = vmatprep.mubr.bf16.mxu0 0
      %1787 = vmatmul.mubr.bf16.gmra.mxu0 %v1058
      %v1788 = vpop.f32.mrf.mxu0
      %v1789 = vadd.f32 %v488, %v1788
      %v1790 = vpop.f32.mrf.mxu0
      %v1791 = vpop.f32.mrf.mxu0
      %v1792 = vadd.f32 %v488, %v1791
      %v1793 = vpop.f32.mrf.mxu0
      %1794 = vmatprep.mubr.bf16.mxu0 0
      %1795 = vmatmul.mubr.bf16.gmra.mxu0 %v1059
      %v1796 = vpop.f32.mrf.mxu0
      %v1797 = vadd.f32 %v488, %v1796
      %v1798 = vpop.f32.mrf.mxu0
      %v1799 = vpop.f32.mrf.mxu0
      %v1800 = vadd.f32 %v488, %v1799
      %v1801 = vpop.f32.mrf.mxu0
      %1802 = vmatprep.mubr.bf16.mxu0 0
      %1803 = vmatmul.mubr.bf16.gmra.mxu0 %v1060
      %v1804 = vpop.f32.mrf.mxu0
      %v1805 = vadd.f32 %v488, %v1804
      %v1806 = vpop.f32.mrf.mxu0
      %v1807 = vpop.f32.mrf.mxu0
      %v1808 = vadd.f32 %v488, %v1807
      %v1809 = vpop.f32.mrf.mxu0
      %1810 = vmatprep.mubr.bf16.mxu0 0
      %1811 = vmatmul.mubr.bf16.gmra.mxu0 %v1061
      %v1812 = vpop.f32.mrf.mxu0
      %v1813 = vadd.f32 %v488, %v1812
      %v1814 = vpop.f32.mrf.mxu0
      %v1815 = vpop.f32.mrf.mxu0
      %v1816 = vadd.f32 %v488, %v1815
      %v1817 = vpop.f32.mrf.mxu0
      %1818 = vmatprep.mubr.bf16.mxu0 0
      %1819 = vmatmul.mubr.bf16.gmra.mxu0 %v1062
      %v1820 = vpop.f32.mrf.mxu0
      %v1821 = vadd.f32 %v488, %v1820
      %v1822 = vpop.f32.mrf.mxu0
      %v1823 = vpop.f32.mrf.mxu0
      %v1824 = vadd.f32 %v488, %v1823
      %v1825 = vpop.f32.mrf.mxu0
      %1826 = vmatprep.mubr.bf16.mxu0 0
      %1827 = vmatmul.mubr.bf16.gmra.mxu0 %v1063
      %v1828 = vpop.f32.mrf.mxu0
      %v1829 = vadd.f32 %v488, %v1828
      %v1830 = vpop.f32.mrf.mxu0
      %v1831 = vpop.f32.mrf.mxu0
      %v1832 = vadd.f32 %v488, %v1831
      %v1833 = vpop.f32.mrf.mxu0
      %1834 = vmatprep.mubr.bf16.mxu0 0
      %1835 = vmatmul.mubr.bf16.gmra.mxu0 %v1064
      %v1836 = vpop.f32.mrf.mxu0
      %v1837 = vadd.f32 %v488, %v1836
      %v1838 = vpop.f32.mrf.mxu0
      %v1839 = vpop.f32.mrf.mxu0
      %v1840 = vadd.f32 %v488, %v1839
      %v1841 = vpop.f32.mrf.mxu0
      %1842 = vmatprep.mubr.bf16.mxu0 0
      %1843 = vmatmul.mubr.bf16.gmra.mxu0 %v1065
      %v1844 = vpop.f32.mrf.mxu0
      %v1845 = vadd.f32 %v488, %v1844
      %v1846 = vpop.f32.mrf.mxu0
      %v1847 = vpop.f32.mrf.mxu0
      %v1848 = vadd.f32 %v488, %v1847
      %v1849 = vpop.f32.mrf.mxu0
      %1850 = vmatprep.mubr.bf16.mxu0 0
      %1851 = vmatmul.mubr.bf16.gmra.mxu0 %v1066
      %v1852 = vpop.f32.mrf.mxu0
      %v1853 = vadd.f32 %v488, %v1852
      %v1854 = vpop.f32.mrf.mxu0
      %v1855 = vpop.f32.mrf.mxu0
      %v1856 = vadd.f32 %v488, %v1855
      %v1857 = vpop.f32.mrf.mxu0
      %1858 = vmatprep.mubr.bf16.mxu0 0
      %1859 = vmatmul.mubr.bf16.gmra.mxu0 %v1067
      %v1860 = vpop.f32.mrf.mxu0
      %v1861 = vadd.f32 %v488, %v1860
      %v1862 = vpop.f32.mrf.mxu0
      %v1863 = vpop.f32.mrf.mxu0
      %v1864 = vadd.f32 %v488, %v1863
      %v1865 = vpop.f32.mrf.mxu0
      %1866 = vmatprep.mubr.bf16.mxu0 0
      %1867 = vmatmul.mubr.bf16.gmra.mxu0 %v1068
      %v1868 = vpop.f32.mrf.mxu0
      %v1869 = vadd.f32 %v488, %v1868
      %v1870 = vpop.f32.mrf.mxu0
      %v1871 = vpop.f32.mrf.mxu0
      %v1872 = vadd.f32 %v488, %v1871
      %v1873 = vpop.f32.mrf.mxu0
      %1874 = vmatprep.mubr.bf16.mxu0 0
      %1875 = vmatmul.mubr.bf16.gmra.mxu0 %v1069
      %v1876 = vpop.f32.mrf.mxu0
      %v1877 = vadd.f32 %v488, %v1876
      %v1878 = vpop.f32.mrf.mxu0
      %v1879 = vpop.f32.mrf.mxu0
      %v1880 = vadd.f32 %v488, %v1879
      %v1881 = vpop.f32.mrf.mxu0
      %1882 = vmatprep.mubr.bf16.mxu0 0
      %1883 = vmatmul.mubr.bf16.gmra.mxu0 %v1070
      %v1884 = vpop.f32.mrf.mxu0
      %v1885 = vadd.f32 %v488, %v1884
      %v1886 = vpop.f32.mrf.mxu0
      %v1887 = vpop.f32.mrf.mxu0
      %v1888 = vadd.f32 %v488, %v1887
      %v1889 = vpop.f32.mrf.mxu0
      %1890 = vmatprep.mubr.bf16.mxu0 0
      %1891 = vmatmul.mubr.bf16.gmra.mxu0 %v1071
      %v1892 = vpop.f32.mrf.mxu0
      %v1893 = vadd.f32 %v488, %v1892
      %v1894 = vpop.f32.mrf.mxu0
      %v1895 = vpop.f32.mrf.mxu0
      %v1896 = vadd.f32 %v488, %v1895
      %v1897 = vpop.f32.mrf.mxu0
      %1898 = vmatprep.mubr.bf16.mxu0 0
      %1899 = vmatmul.mubr.bf16.gmra.mxu0 %v1072
      %v1900 = vpop.f32.mrf.mxu0
      %v1901 = vadd.f32 %v488, %v1900
      %v1902 = vpop.f32.mrf.mxu0
      %v1903 = vpop.f32.mrf.mxu0
      %v1904 = vadd.f32 %v488, %v1903
      %v1905 = vpop.f32.mrf.mxu0
      %1906 = vmatprep.mubr.bf16.mxu0 0
      %1907 = vmatmul.mubr.bf16.gmra.mxu0 %v1073
      %v1908 = vpop.f32.mrf.mxu0
      %v1909 = vadd.f32 %v488, %v1908
      %v1910 = vpop.f32.mrf.mxu0
      %v1911 = vpop.f32.mrf.mxu0
      %v1912 = vadd.f32 %v488, %v1911
      %v1913 = vpop.f32.mrf.mxu0
      %1914 = vmatprep.mubr.bf16.mxu0 0
      %1915 = vmatmul.mubr.bf16.gmra.mxu0 %v1074
      %v1916 = vpop.f32.mrf.mxu0
      %v1917 = vadd.f32 %v488, %v1916
      %v1918 = vpop.f32.mrf.mxu0
      %v1919 = vpop.f32.mrf.mxu0
      %v1920 = vadd.f32 %v488, %v1919
      %v1921 = vpop.f32.mrf.mxu0
      %1922 = vmatprep.mubr.bf16.mxu0 0
      %1923 = vmatmul.mubr.bf16.gmra.mxu0 %v1075
      %v1924 = vpop.f32.mrf.mxu0
      %v1925 = vadd.f32 %v488, %v1924
      %v1926 = vpop.f32.mrf.mxu0
      %v1927 = vpop.f32.mrf.mxu0
      %v1928 = vadd.f32 %v488, %v1927
      %v1929 = vpop.f32.mrf.mxu0
      %1930 = vmatprep.mubr.bf16.mxu0 0
      %1931 = vmatmul.mubr.bf16.gmra.mxu0 %v1076
      %v1932 = vpop.f32.mrf.mxu0
      %v1933 = vadd.f32 %v488, %v1932
      %v1934 = vpop.f32.mrf.mxu0
      %v1935 = vpop.f32.mrf.mxu0
      %v1936 = vadd.f32 %v488, %v1935
      %v1937 = vpop.f32.mrf.mxu0
      %1938 = vmatprep.mubr.bf16.mxu0 0
      %1939 = vmatmul.mubr.bf16.gmra.mxu0 %v1077
      %v1940 = vpop.f32.mrf.mxu0
      %v1941 = vadd.f32 %v488, %v1940
      %v1942 = vpop.f32.mrf.mxu0
      %v1943 = vpop.f32.mrf.mxu0
      %v1944 = vadd.f32 %v488, %v1943
      %v1945 = vpop.f32.mrf.mxu0
      %1946 = vmatprep.mubr.bf16.mxu0 0
      %1947 = vmatmul.mubr.bf16.gmra.mxu0 %v1078
      %v1948 = vpop.f32.mrf.mxu0
      %v1949 = vadd.f32 %v488, %v1948
      %v1950 = vpop.f32.mrf.mxu0
      %v1951 = vpop.f32.mrf.mxu0
      %v1952 = vadd.f32 %v488, %v1951
      %v1953 = vpop.f32.mrf.mxu0
      %1954 = vmatprep.mubr.bf16.mxu0 0
      %1955 = vmatmul.mubr.bf16.gmra.mxu0 %v1079
      %v1956 = vpop.f32.mrf.mxu0
      %v1957 = vadd.f32 %v488, %v1956
      %v1958 = vpop.f32.mrf.mxu0
      %v1959 = vpop.f32.mrf.mxu0
      %v1960 = vadd.f32 %v488, %v1959
      %v1961 = vpop.f32.mrf.mxu0
      %1962 = vmatprep.mubr.bf16.mxu0 0
      %1963 = vmatmul.mubr.bf16.gmra.mxu0 %v1080
      %v1964 = vpop.f32.mrf.mxu0
      %v1965 = vadd.f32 %v488, %v1964
      %v1966 = vpop.f32.mrf.mxu0
      %v1967 = vpop.f32.mrf.mxu0
      %v1968 = vadd.f32 %v488, %v1967
      %v1969 = vpop.f32.mrf.mxu0
      %1970 = vmatprep.mubr.bf16.mxu0 0
      %1971 = vmatmul.mubr.bf16.gmra.mxu0 %v1081
      %v1972 = vpop.f32.mrf.mxu0
      %v1973 = vadd.f32 %v488, %v1972
      %v1974 = vpop.f32.mrf.mxu0
      %v1975 = vpop.f32.mrf.mxu0
      %v1976 = vadd.f32 %v488, %v1975
      %v1977 = vpop.f32.mrf.mxu0
      %1978 = vmatprep.mubr.bf16.mxu0 0
      %1979 = vmatmul.mubr.bf16.gmra.mxu0 %v1082
      %v1980 = vpop.f32.mrf.mxu0
      %v1981 = vadd.f32 %v488, %v1980
      %v1982 = vpop.f32.mrf.mxu0
      %v1983 = vpop.f32.mrf.mxu0
      %v1984 = vadd.f32 %v488, %v1983
      %v1985 = vpop.f32.mrf.mxu0
      %1986 = vmatprep.mubr.bf16.mxu0 0
      %1987 = vmatmul.mubr.bf16.gmra.mxu0 %v1083
      %v1988 = vpop.f32.mrf.mxu0
      %v1989 = vadd.f32 %v488, %v1988
      %v1990 = vpop.f32.mrf.mxu0
      %v1991 = vpop.f32.mrf.mxu0
      %v1992 = vadd.f32 %v488, %v1991
      %v1993 = vpop.f32.mrf.mxu0
      %1994 = vmatprep.mubr.bf16.mxu0 0
      %1995 = vmatmul.mubr.bf16.gmra.mxu0 %v1084
      %v1996 = vpop.f32.mrf.mxu0
      %v1997 = vadd.f32 %v488, %v1996
      %v1998 = vpop.f32.mrf.mxu0
      %v1999 = vpop.f32.mrf.mxu0
      %v2000 = vadd.f32 %v488, %v1999
      %v2001 = vpop.f32.mrf.mxu0
      %2002 = vmatprep.mubr.bf16.mxu0 0
      %2003 = vmatmul.mubr.bf16.gmra.mxu0 %v1085
      %v2004 = vpop.f32.mrf.mxu0
      %v2005 = vadd.f32 %v488, %v2004
      %v2006 = vpop.f32.mrf.mxu0
      %v2007 = vpop.f32.mrf.mxu0
      %v2008 = vadd.f32 %v488, %v2007
      %v2009 = vpop.f32.mrf.mxu0
      %2010 = vmatprep.mubr.bf16.mxu0 0
      %2011 = vmatmul.mubr.bf16.gmra.mxu0 %v1086
      %v2012 = vpop.f32.mrf.mxu0
      %v2013 = vadd.f32 %v488, %v2012
      %v2014 = vpop.f32.mrf.mxu0
      %v2015 = vpop.f32.mrf.mxu0
      %v2016 = vadd.f32 %v488, %v2015
      %v2017 = vpop.f32.mrf.mxu0
      %2018 = vmatprep.mubr.bf16.mxu0 0
      %2019 = vmatmul.mubr.bf16.gmra.mxu0 %v1087
      %v2020 = vpop.f32.mrf.mxu0
      %v2021 = vadd.f32 %v488, %v2020
      %v2022 = vpop.f32.mrf.mxu0
      %v2023 = vpop.f32.mrf.mxu0
      %v2024 = vadd.f32 %v488, %v2023
      %v2025 = vpop.f32.mrf.mxu0
      %2026 = vmatprep.mubr.bf16.mxu0 0
      %2027 = vmatmul.mubr.bf16.gmra.mxu0 %v1088
      %v2028 = vpop.f32.mrf.mxu0
      %v2029 = vadd.f32 %v488, %v2028
      %v2030 = vpop.f32.mrf.mxu0
      %v2031 = vpop.f32.mrf.mxu0
      %v2032 = vadd.f32 %v488, %v2031
      %v2033 = vpop.f32.mrf.mxu0
      %2034 = vmatprep.mubr.bf16.mxu0 0
      %2035 = vmatmul.mubr.bf16.gmra.mxu0 %v1089
      %v2036 = vpop.f32.mrf.mxu0
      %v2037 = vadd.f32 %v488, %v2036
      %v2038 = vpop.f32.mrf.mxu0
      %v2039 = vpop.f32.mrf.mxu0
      %v2040 = vadd.f32 %v488, %v2039
      %v2041 = vpop.f32.mrf.mxu0
      %2042 = vmatprep.mubr.bf16.mxu0 0
      %2043 = vmatmul.mubr.bf16.gmra.mxu0 %v1090
      %v2044 = vpop.f32.mrf.mxu0
      %v2045 = vadd.f32 %v488, %v2044
      %v2046 = vpop.f32.mrf.mxu0
      %v2047 = vpop.f32.mrf.mxu0
      %v2048 = vadd.f32 %v488, %v2047
      %v2049 = vpop.f32.mrf.mxu0
      %2050 = vmatprep.mubr.bf16.mxu0 0
      %2051 = vmatmul.mubr.bf16.gmra.mxu0 %v1091
      %v2052 = vpop.f32.mrf.mxu0
      %v2053 = vadd.f32 %v488, %v2052
      %v2054 = vpop.f32.mrf.mxu0
      %v2055 = vpop.f32.mrf.mxu0
      %v2056 = vadd.f32 %v488, %v2055
      %v2057 = vpop.f32.mrf.mxu0
      %2058 = vmatprep.mubr.bf16.mxu0 0
      %2059 = vmatmul.mubr.bf16.gmra.mxu0 %v1092
      %v2060 = vpop.f32.mrf.mxu0
      %v2061 = vadd.f32 %v488, %v2060
      %v2062 = vpop.f32.mrf.mxu0
      %v2063 = vpop.f32.mrf.mxu0
      %v2064 = vadd.f32 %v488, %v2063
      %v2065 = vpop.f32.mrf.mxu0
      %2066 = vmatprep.mubr.bf16.mxu0 0
      %2067 = vmatmul.mubr.bf16.gmra.mxu0 %v1093
      %v2068 = vpop.f32.mrf.mxu0
      %v2069 = vadd.f32 %v488, %v2068
      %v2070 = vpop.f32.mrf.mxu0
      %v2071 = vpop.f32.mrf.mxu0
      %v2072 = vadd.f32 %v488, %v2071
      %v2073 = vpop.f32.mrf.mxu0
      %2074 = vmatprep.mubr.bf16.mxu0 0
      %2075 = vmatmul.mubr.bf16.gmra.mxu0 %v1094
      %v2076 = vpop.f32.mrf.mxu0
      %v2077 = vadd.f32 %v488, %v2076
      %v2078 = vpop.f32.mrf.mxu0
      %v2079 = vpop.f32.mrf.mxu0
      %v2080 = vadd.f32 %v488, %v2079
      %v2081 = vpop.f32.mrf.mxu0
      %2082 = vmatprep.mubr.bf16.mxu0 0
      %2083 = vmatmul.mubr.bf16.gmra.mxu0 %v1095
      %v2084 = vpop.f32.mrf.mxu0
      %v2085 = vadd.f32 %v488, %v2084
      %v2086 = vpop.f32.mrf.mxu0
      %v2087 = vpop.f32.mrf.mxu0
      %v2088 = vadd.f32 %v488, %v2087
      %v2089 = vpop.f32.mrf.mxu0
      %2090 = vmatprep.mubr.bf16.mxu0 0
      %2091 = vmatmul.mubr.bf16.gmra.mxu0 %v1096
      %v2092 = vpop.f32.mrf.mxu0
      %v2093 = vadd.f32 %v488, %v2092
      %v2094 = vpop.f32.mrf.mxu0
      %v2095 = vpop.f32.mrf.mxu0
      %v2096 = vadd.f32 %v488, %v2095
      %v2097 = vpop.f32.mrf.mxu0
      %2098 = vmatprep.mubr.bf16.mxu0 0
      %2099 = vmatmul.mubr.bf16.gmra.mxu0 %v1097
      %v2100 = vpop.f32.mrf.mxu0
      %v2101 = vadd.f32 %v488, %v2100
      %v2102 = vpop.f32.mrf.mxu0
      %v2103 = vpop.f32.mrf.mxu0
      %v2104 = vadd.f32 %v488, %v2103
      %v2105 = vpop.f32.mrf.mxu0
      %2106 = vmatprep.mubr.bf16.mxu0 0
      %2107 = vmatmul.mubr.bf16.gmra.mxu0 %v1098
      %v2108 = vpop.f32.mrf.mxu0
      %v2109 = vadd.f32 %v488, %v2108
      %v2110 = vpop.f32.mrf.mxu0
      %v2111 = vpop.f32.mrf.mxu0
      %v2112 = vadd.f32 %v488, %v2111
      %v2113 = vpop.f32.mrf.mxu0
      %2114 = vmatprep.mubr.bf16.mxu0 0
      %2115 = vmatmul.mubr.bf16.gmra.mxu0 %v1099
      %v2116 = vpop.f32.mrf.mxu0
      %v2117 = vadd.f32 %v488, %v2116
      %v2118 = vpop.f32.mrf.mxu0
      %v2119 = vpop.f32.mrf.mxu0
      %v2120 = vadd.f32 %v488, %v2119
      %v2121 = vpop.f32.mrf.mxu0
      %2122 = vmatprep.mubr.bf16.mxu0 0
      %2123 = vmatmul.mubr.bf16.gmra.mxu0 %v1100
      %v2124 = vpop.f32.mrf.mxu0
      %v2125 = vadd.f32 %v488, %v2124
      %v2126 = vpop.f32.mrf.mxu0
      %v2127 = vpop.f32.mrf.mxu0
      %v2128 = vadd.f32 %v488, %v2127
      %v2129 = vpop.f32.mrf.mxu0
      %2130 = vmatprep.mubr.bf16.mxu0 0
      %2131 = vmatmul.mubr.bf16.gmra.mxu0 %v1101
      %v2132 = vpop.f32.mrf.mxu0
      %v2133 = vadd.f32 %v488, %v2132
      %v2134 = vpop.f32.mrf.mxu0
      %v2135 = vpop.f32.mrf.mxu0
      %v2136 = vadd.f32 %v488, %v2135
      %v2137 = vpop.f32.mrf.mxu0
      %2138 = vmatprep.mubr.bf16.mxu0 0
      %2139 = vmatmul.mubr.bf16.gmra.mxu0 %v1102
      %v2140 = vpop.f32.mrf.mxu0
      %v2141 = vadd.f32 %v488, %v2140
      %v2142 = vpop.f32.mrf.mxu0
      %v2143 = vpop.f32.mrf.mxu0
      %v2144 = vadd.f32 %v488, %v2143
      %v2145 = vpop.f32.mrf.mxu0
      %2146 = vmatprep.mubr.bf16.mxu0 0
      %2147 = vmatmul.mubr.bf16.gmra.mxu0 %v1103
      %v2148 = vpop.f32.mrf.mxu0
      %v2149 = vadd.f32 %v488, %v2148
      %v2150 = vpop.f32.mrf.mxu0
      %v2151 = vpop.f32.mrf.mxu0
      %v2152 = vadd.f32 %v488, %v2151
      %v2153 = vpop.f32.mrf.mxu0
      %2154 = vmatprep.mubr.bf16.mxu0 0
      %2155 = vmatmul.mubr.bf16.gmra.mxu0 %v1104
      %v2156 = vpop.f32.mrf.mxu0
      %v2157 = vadd.f32 %v488, %v2156
      %v2158 = vpop.f32.mrf.mxu0
      %v2159 = vpop.f32.mrf.mxu0
      %v2160 = vadd.f32 %v488, %v2159
      %v2161 = vpop.f32.mrf.mxu0
      %2162 = vmatprep.mubr.bf16.mxu0 0
      %2163 = vmatmul.mubr.bf16.gmra.mxu0 %v1105
      %v2164 = vpop.f32.mrf.mxu0
      %v2165 = vadd.f32 %v488, %v2164
      %v2166 = vpop.f32.mrf.mxu0
      %v2167 = vpop.f32.mrf.mxu0
      %v2168 = vadd.f32 %v488, %v2167
      %v2169 = vpop.f32.mrf.mxu0
      %2170 = vmatprep.mubr.bf16.mxu0 0
      %2171 = vmatmul.mubr.bf16.gmra.mxu0 %v1106
      %v2172 = vpop.f32.mrf.mxu0
      %v2173 = vadd.f32 %v488, %v2172
      %v2174 = vpop.f32.mrf.mxu0
      %v2175 = vpop.f32.mrf.mxu0
      %v2176 = vadd.f32 %v488, %v2175
      %v2177 = vpop.f32.mrf.mxu0
      %2178 = vmatprep.mubr.bf16.mxu0 0
      %2179 = vmatmul.mubr.bf16.gmra.mxu0 %v1107
      %v2180 = vpop.f32.mrf.mxu0
      %v2181 = vadd.f32 %v488, %v2180
      %v2182 = vpop.f32.mrf.mxu0
      %v2183 = vpop.f32.mrf.mxu0
      %v2184 = vadd.f32 %v488, %v2183
      %v2185 = vpop.f32.mrf.mxu0
      %2186 = vmatprep.mubr.bf16.mxu0 0
      %2187 = vmatmul.mubr.bf16.gmra.mxu0 %v1108
      %v2188 = vpop.f32.mrf.mxu0
      %v2189 = vadd.f32 %v488, %v2188
      %v2190 = vpop.f32.mrf.mxu0
      %v2191 = vpop.f32.mrf.mxu0
      %v2192 = vadd.f32 %v488, %v2191
      %v2193 = vpop.f32.mrf.mxu0
      %2194 = vmatprep.mubr.bf16.mxu0 0
      %2195 = vmatmul.mubr.bf16.gmra.mxu0 %v1109
      %v2196 = vpop.f32.mrf.mxu0
      %v2197 = vadd.f32 %v488, %v2196
      %v2198 = vpop.f32.mrf.mxu0
      %v2199 = vpop.f32.mrf.mxu0
      %v2200 = vadd.f32 %v488, %v2199
      %v2201 = vpop.f32.mrf.mxu0
      %2202 = vmatprep.mubr.bf16.mxu0 0
      %2203 = vmatmul.mubr.bf16.gmra.mxu0 %v1110
      %v2204 = vpop.f32.mrf.mxu0
      %v2205 = vadd.f32 %v488, %v2204
      %v2206 = vpop.f32.mrf.mxu0
      %v2207 = vpop.f32.mrf.mxu0
      %v2208 = vadd.f32 %v488, %v2207
      %v2209 = vpop.f32.mrf.mxu0
      %2210 = vmatprep.mubr.bf16.mxu0 0
      %2211 = vmatmul.mubr.bf16.gmra.mxu0 %v1111
      %v2212 = vpop.f32.mrf.mxu0
      %v2213 = vadd.f32 %v488, %v2212
      %v2214 = vpop.f32.mrf.mxu0
      %v2215 = vpop.f32.mrf.mxu0
      %v2216 = vadd.f32 %v488, %v2215
      %v2217 = vpop.f32.mrf.mxu0
      %2218 = vmatprep.mubr.bf16.mxu0 0
      %2219 = vmatmul.mubr.bf16.gmra.mxu0 %v1112
      %v2220 = vpop.f32.mrf.mxu0
      %v2221 = vadd.f32 %v488, %v2220
      %v2222 = vpop.f32.mrf.mxu0
      %v2223 = vpop.f32.mrf.mxu0
      %v2224 = vadd.f32 %v488, %v2223
      %v2225 = vpop.f32.mrf.mxu0
      %2226 = vmatprep.mubr.bf16.mxu0 0
      %2227 = vmatmul.mubr.bf16.gmra.mxu0 %v1113
      %v2228 = vpop.f32.mrf.mxu0
      %v2229 = vadd.f32 %v488, %v2228
      %v2230 = vpop.f32.mrf.mxu0
      %v2231 = vpop.f32.mrf.mxu0
      %v2232 = vadd.f32 %v488, %v2231
      %v2233 = vpop.f32.mrf.mxu0
      %2234 = vmatprep.mubr.bf16.mxu0 0
      %2235 = vmatmul.mubr.bf16.gmra.mxu0 %v1114
      %v2236 = vpop.f32.mrf.mxu0
      %v2237 = vadd.f32 %v488, %v2236
      %v2238 = vpop.f32.mrf.mxu0
      %v2239 = vpop.f32.mrf.mxu0
      %v2240 = vadd.f32 %v488, %v2239
      %v2241 = vpop.f32.mrf.mxu0
      %2242 = vmatprep.mubr.bf16.mxu0 0
      %2243 = vmatmul.mubr.bf16.gmra.mxu0 %v1115
      %v2244 = vpop.f32.mrf.mxu0
      %v2245 = vadd.f32 %v488, %v2244
      %v2246 = vpop.f32.mrf.mxu0
      %v2247 = vpop.f32.mrf.mxu0
      %v2248 = vadd.f32 %v488, %v2247
      %v2249 = vpop.f32.mrf.mxu0
      %2250 = vmatprep.mubr.bf16.mxu0 0
      %2251 = vmatmul.mubr.bf16.gmra.mxu0 %v1116
      %v2252 = vpop.f32.mrf.mxu0
      %v2253 = vadd.f32 %v488, %v2252
      %v2254 = vpop.f32.mrf.mxu0
      %v2255 = vpop.f32.mrf.mxu0
      %v2256 = vadd.f32 %v488, %v2255
      %v2257 = vpop.f32.mrf.mxu0
      %2258 = vmatprep.mubr.bf16.mxu0 0
      %2259 = vmatmul.mubr.bf16.gmra.mxu0 %v1117
      %v2260 = vpop.f32.mrf.mxu0
      %v2261 = vadd.f32 %v488, %v2260
      %v2262 = vpop.f32.mrf.mxu0
      %v2263 = vpop.f32.mrf.mxu0
      %v2264 = vadd.f32 %v488, %v2263
      %v2265 = vpop.f32.mrf.mxu0
      %2266 = vmatprep.mubr.bf16.mxu0 0
      %2267 = vmatmul.mubr.bf16.gmra.mxu0 %v1118
      %v2268 = vpop.f32.mrf.mxu0
      %v2269 = vadd.f32 %v488, %v2268
      %v2270 = vpop.f32.mrf.mxu0
      %v2271 = vpop.f32.mrf.mxu0
      %v2272 = vadd.f32 %v488, %v2271
      %v2273 = vpop.f32.mrf.mxu0
      %2274 = vmatprep.mubr.bf16.mxu0 0
      %2275 = vmatmul.mubr.bf16.gmra.mxu0 %v1119
      %v2276 = vpop.f32.mrf.mxu0
      %v2277 = vadd.f32 %v488, %v2276
      %v2278 = vpop.f32.mrf.mxu0
      %v2279 = vpop.f32.mrf.mxu0
      %v2280 = vadd.f32 %v488, %v2279
      %v2281 = vpop.f32.mrf.mxu0
      %2282 = vmatprep.mubr.bf16.mxu0 0
      %2283 = vmatmul.mubr.bf16.gmra.mxu0 %v1120
      %v2284 = vpop.f32.mrf.mxu0
      %v2285 = vadd.f32 %v488, %v2284
      %v2286 = vpop.f32.mrf.mxu0
      %v2287 = vpop.f32.mrf.mxu0
      %v2288 = vadd.f32 %v488, %v2287
      %v2289 = vpop.f32.mrf.mxu0
      %2290 = vmatprep.mubr.bf16.mxu0 0
      %2291 = vmatmul.mubr.bf16.gmra.mxu0 %v1121
      %v2292 = vpop.f32.mrf.mxu0
      %v2293 = vadd.f32 %v488, %v2292
      %v2294 = vpop.f32.mrf.mxu0
      %v2295 = vpop.f32.mrf.mxu0
      %v2296 = vadd.f32 %v488, %v2295
      %v2297 = vpop.f32.mrf.mxu0
      %2298 = vmatprep.mubr.bf16.mxu0 0
      %2299 = vmatmul.mubr.bf16.gmra.mxu0 %v1122
      %v2300 = vpop.f32.mrf.mxu0
      %v2301 = vadd.f32 %v488, %v2300
      %v2302 = vpop.f32.mrf.mxu0
      %v2303 = vpop.f32.mrf.mxu0
      %v2304 = vadd.f32 %v488, %v2303
      %v2305 = vpop.f32.mrf.mxu0
      %2306 = vmatprep.mubr.bf16.mxu0 0
      %2307 = vmatmul.mubr.bf16.gmra.mxu0 %v1123
      %v2308 = vpop.f32.mrf.mxu0
      %v2309 = vadd.f32 %v488, %v2308
      %v2310 = vpop.f32.mrf.mxu0
      %v2311 = vpop.f32.mrf.mxu0
      %v2312 = vadd.f32 %v488, %v2311
      %v2313 = vpop.f32.mrf.mxu0
      %2314 = vmatprep.mubr.bf16.mxu0 0
      %2315 = vmatmul.mubr.bf16.gmra.mxu0 %v1124
      %v2316 = vpop.f32.mrf.mxu0
      %v2317 = vadd.f32 %v488, %v2316
      %v2318 = vpop.f32.mrf.mxu0
      %v2319 = vpop.f32.mrf.mxu0
      %v2320 = vadd.f32 %v488, %v2319
      %v2321 = vpop.f32.mrf.mxu0
      %2322 = vmatprep.mubr.bf16.mxu0 0
      %2323 = vmatmul.mubr.bf16.gmra.mxu0 %v1125
      %v2324 = vpop.f32.mrf.mxu0
      %v2325 = vadd.f32 %v488, %v2324
      %v2326 = vpop.f32.mrf.mxu0
      %v2327 = vpop.f32.mrf.mxu0
      %v2328 = vadd.f32 %v488, %v2327
      %v2329 = vpop.f32.mrf.mxu0
      %2330 = vmatprep.mubr.bf16.mxu0 0
      %2331 = vmatmul.mubr.bf16.gmra.mxu0 %v1126
      %v2332 = vpop.f32.mrf.mxu0
      %v2333 = vadd.f32 %v488, %v2332
      %v2334 = vpop.f32.mrf.mxu0
      %v2335 = vpop.f32.mrf.mxu0
      %v2336 = vadd.f32 %v488, %v2335
      %v2337 = vpop.f32.mrf.mxu0
      %2338 = vmatprep.mubr.bf16.mxu0 0
      %2339 = vmatmul.mubr.bf16.gmra.mxu0 %v1127
      %v2340 = vpop.f32.mrf.mxu0
      %v2341 = vadd.f32 %v488, %v2340
      %v2342 = vpop.f32.mrf.mxu0
      %v2343 = vpop.f32.mrf.mxu0
      %v2344 = vadd.f32 %v488, %v2343
      %v2345 = vpop.f32.mrf.mxu0
      %2346 = vmatprep.mubr.bf16.mxu0 0
      %2347 = vmatmul.mubr.bf16.gmra.mxu0 %v1128
      %v2348 = vpop.f32.mrf.mxu0
      %v2349 = vadd.f32 %v488, %v2348
      %v2350 = vpop.f32.mrf.mxu0
      %v2351 = vpop.f32.mrf.mxu0
      %v2352 = vadd.f32 %v488, %v2351
      %v2353 = vpop.f32.mrf.mxu0
      %2354 = vmatprep.mubr.bf16.mxu0 0
      %2355 = vmatmul.mubr.bf16.gmra.mxu0 %v1129
      %v2356 = vpop.f32.mrf.mxu0
      %v2357 = vadd.f32 %v488, %v2356
      %v2358 = vpop.f32.mrf.mxu0
      %v2359 = vpop.f32.mrf.mxu0
      %v2360 = vadd.f32 %v488, %v2359
      %v2361 = vpop.f32.mrf.mxu0
      %2362 = vdwg.mxu0
      %v2363 = vmax.f32 %v1341, 0.0
      %v2364 = vmax.f32 %v1344, 0.0
      %v2365 = vmax.f32 %v1349, 0.0
      %v2366 = vmax.f32 %v1352, 0.0
      %v2367 = vmax.f32 %v1357, 0.0
      %v2368 = vmax.f32 %v1360, 0.0
      %v2369 = vmax.f32 %v1365, 0.0
      %v2370 = vmax.f32 %v1368, 0.0
      %v2371 = vmax.f32 %v1373, 0.0
      %v2372 = vmax.f32 %v1376, 0.0
      %v2373 = vmax.f32 %v1381, 0.0
      %v2374 = vmax.f32 %v1384, 0.0
      %v2375 = vmax.f32 %v1389, 0.0
      %v2376 = vmax.f32 %v1392, 0.0
      %v2377 = vmax.f32 %v1397, 0.0
      %v2378 = vmax.f32 %v1400, 0.0
      %v2379 = vmax.f32 %v1405, 0.0
      %v2380 = vmax.f32 %v1408, 0.0
      %v2381 = vmax.f32 %v1413, 0.0
      %v2382 = vmax.f32 %v1416, 0.0
      %v2383 = vmax.f32 %v1421, 0.0
      %v2384 = vmax.f32 %v1424, 0.0
      %v2385 = vmax.f32 %v1429, 0.0
      %v2386 = vmax.f32 %v1432, 0.0
      %v2387 = vmax.f32 %v1437, 0.0
      %v2388 = vmax.f32 %v1440, 0.0
      %v2389 = vmax.f32 %v1445, 0.0
      %v2390 = vmax.f32 %v1448, 0.0
      %v2391 = vmax.f32 %v1453, 0.0
      %v2392 = vmax.f32 %v1456, 0.0
      %v2393 = vmax.f32 %v1461, 0.0
      %v2394 = vmax.f32 %v1464, 0.0
      %v2395 = vmax.f32 %v1469, 0.0
      %v2396 = vmax.f32 %v1472, 0.0
      %v2397 = vmax.f32 %v1477, 0.0
      %v2398 = vmax.f32 %v1480, 0.0
      %v2399 = vmax.f32 %v1485, 0.0
      %v2400 = vmax.f32 %v1488, 0.0
      %v2401 = vmax.f32 %v1493, 0.0
      %v2402 = vmax.f32 %v1496, 0.0
      %v2403 = vmax.f32 %v1501, 0.0
      %v2404 = vmax.f32 %v1504, 0.0
      %v2405 = vmax.f32 %v1509, 0.0
      %v2406 = vmax.f32 %v1512, 0.0
      %v2407 = vmax.f32 %v1517, 0.0
      %v2408 = vmax.f32 %v1520, 0.0
      %v2409 = vmax.f32 %v1525, 0.0
      %v2410 = vmax.f32 %v1528, 0.0
      %v2411 = vmax.f32 %v1533, 0.0
      %v2412 = vmax.f32 %v1536, 0.0
      %v2413 = vmax.f32 %v1541, 0.0
      %v2414 = vmax.f32 %v1544, 0.0
      %v2415 = vmax.f32 %v1549, 0.0
      %v2416 = vmax.f32 %v1552, 0.0
      %v2417 = vmax.f32 %v1557, 0.0
      %v2418 = vmax.f32 %v1560, 0.0
      %v2419 = vmax.f32 %v1565, 0.0
      %v2420 = vmax.f32 %v1568, 0.0
      %v2421 = vmax.f32 %v1573, 0.0
      %v2422 = vmax.f32 %v1576, 0.0
      %v2423 = vmax.f32 %v1581, 0.0
      %v2424 = vmax.f32 %v1584, 0.0
      %v2425 = vmax.f32 %v1589, 0.0
      %v2426 = vmax.f32 %v1592, 0.0
      %v2427 = vmax.f32 %v1597, 0.0
      %v2428 = vmax.f32 %v1600, 0.0
      %v2429 = vmax.f32 %v1605, 0.0
      %v2430 = vmax.f32 %v1608, 0.0
      %v2431 = vmax.f32 %v1613, 0.0
      %v2432 = vmax.f32 %v1616, 0.0
      %v2433 = vmax.f32 %v1621, 0.0
      %v2434 = vmax.f32 %v1624, 0.0
      %v2435 = vmax.f32 %v1629, 0.0
      %v2436 = vmax.f32 %v1632, 0.0
      %v2437 = vmax.f32 %v1637, 0.0
      %v2438 = vmax.f32 %v1640, 0.0
      %v2439 = vmax.f32 %v1645, 0.0
      %v2440 = vmax.f32 %v1648, 0.0
      %v2441 = vmax.f32 %v1653, 0.0
      %v2442 = vmax.f32 %v1656, 0.0
      %v2443 = vmax.f32 %v1661, 0.0
      %v2444 = vmax.f32 %v1664, 0.0
      %v2445 = vmax.f32 %v1669, 0.0
      %v2446 = vmax.f32 %v1672, 0.0
      %v2447 = vmax.f32 %v1677, 0.0
      %v2448 = vmax.f32 %v1680, 0.0
      %v2449 = vmax.f32 %v1685, 0.0
      %v2450 = vmax.f32 %v1688, 0.0
      %v2451 = vmax.f32 %v1693, 0.0
      %v2452 = vmax.f32 %v1696, 0.0
      %v2453 = vmax.f32 %v1701, 0.0
      %v2454 = vmax.f32 %v1704, 0.0
      %v2455 = vmax.f32 %v1709, 0.0
      %v2456 = vmax.f32 %v1712, 0.0
      %v2457 = vmax.f32 %v1717, 0.0
      %v2458 = vmax.f32 %v1720, 0.0
      %v2459 = vmax.f32 %v1725, 0.0
      %v2460 = vmax.f32 %v1728, 0.0
      %v2461 = vmax.f32 %v1733, 0.0
      %v2462 = vmax.f32 %v1736, 0.0
      %v2463 = vmax.f32 %v1741, 0.0
      %v2464 = vmax.f32 %v1744, 0.0
      %v2465 = vmax.f32 %v1749, 0.0
      %v2466 = vmax.f32 %v1752, 0.0
      %v2467 = vmax.f32 %v1757, 0.0
      %v2468 = vmax.f32 %v1760, 0.0
      %v2469 = vmax.f32 %v1765, 0.0
      %v2470 = vmax.f32 %v1768, 0.0
      %v2471 = vmax.f32 %v1773, 0.0
      %v2472 = vmax.f32 %v1776, 0.0
      %v2473 = vmax.f32 %v1781, 0.0
      %v2474 = vmax.f32 %v1784, 0.0
      %v2475 = vmax.f32 %v1789, 0.0
      %v2476 = vmax.f32 %v1792, 0.0
      %v2477 = vmax.f32 %v1797, 0.0
      %v2478 = vmax.f32 %v1800, 0.0
      %v2479 = vmax.f32 %v1805, 0.0
      %v2480 = vmax.f32 %v1808, 0.0
      %v2481 = vmax.f32 %v1813, 0.0
      %v2482 = vmax.f32 %v1816, 0.0
      %v2483 = vmax.f32 %v1821, 0.0
      %v2484 = vmax.f32 %v1824, 0.0
      %v2485 = vmax.f32 %v1829, 0.0
      %v2486 = vmax.f32 %v1832, 0.0
      %v2487 = vmax.f32 %v1837, 0.0
      %v2488 = vmax.f32 %v1840, 0.0
      %v2489 = vmax.f32 %v1845, 0.0
      %v2490 = vmax.f32 %v1848, 0.0
      %v2491 = vmax.f32 %v1853, 0.0
      %v2492 = vmax.f32 %v1856, 0.0
      %v2493 = vmax.f32 %v1861, 0.0
      %v2494 = vmax.f32 %v1864, 0.0
      %v2495 = vmax.f32 %v1869, 0.0
      %v2496 = vmax.f32 %v1872, 0.0
      %v2497 = vmax.f32 %v1877, 0.0
      %v2498 = vmax.f32 %v1880, 0.0
      %v2499 = vmax.f32 %v1885, 0.0
      %v2500 = vmax.f32 %v1888, 0.0
      %v2501 = vmax.f32 %v1893, 0.0
      %v2502 = vmax.f32 %v1896, 0.0
      %v2503 = vmax.f32 %v1901, 0.0
      %v2504 = vmax.f32 %v1904, 0.0
      %v2505 = vmax.f32 %v1909, 0.0
      %v2506 = vmax.f32 %v1912, 0.0
      %v2507 = vmax.f32 %v1917, 0.0
      %v2508 = vmax.f32 %v1920, 0.0
      %v2509 = vmax.f32 %v1925, 0.0
      %v2510 = vmax.f32 %v1928, 0.0
      %v2511 = vmax.f32 %v1933, 0.0
      %v2512 = vmax.f32 %v1936, 0.0
      %v2513 = vmax.f32 %v1941, 0.0
      %v2514 = vmax.f32 %v1944, 0.0
      %v2515 = vmax.f32 %v1949, 0.0
      %v2516 = vmax.f32 %v1952, 0.0
      %v2517 = vmax.f32 %v1957, 0.0
      %v2518 = vmax.f32 %v1960, 0.0
      %v2519 = vmax.f32 %v1965, 0.0
      %v2520 = vmax.f32 %v1968, 0.0
      %v2521 = vmax.f32 %v1973, 0.0
      %v2522 = vmax.f32 %v1976, 0.0
      %v2523 = vmax.f32 %v1981, 0.0
      %v2524 = vmax.f32 %v1984, 0.0
      %v2525 = vmax.f32 %v1989, 0.0
      %v2526 = vmax.f32 %v1992, 0.0
      %v2527 = vmax.f32 %v1997, 0.0
      %v2528 = vmax.f32 %v2000, 0.0
      %v2529 = vmax.f32 %v2005, 0.0
      %v2530 = vmax.f32 %v2008, 0.0
      %v2531 = vmax.f32 %v2013, 0.0
      %v2532 = vmax.f32 %v2016, 0.0
      %v2533 = vmax.f32 %v2021, 0.0
      %v2534 = vmax.f32 %v2024, 0.0
      %v2535 = vmax.f32 %v2029, 0.0
      %v2536 = vmax.f32 %v2032, 0.0
      %v2537 = vmax.f32 %v2037, 0.0
      %v2538 = vmax.f32 %v2040, 0.0
      %v2539 = vmax.f32 %v2045, 0.0
      %v2540 = vmax.f32 %v2048, 0.0
      %v2541 = vmax.f32 %v2053, 0.0
      %v2542 = vmax.f32 %v2056, 0.0
      %v2543 = vmax.f32 %v2061, 0.0
      %v2544 = vmax.f32 %v2064, 0.0
      %v2545 = vmax.f32 %v2069, 0.0
      %v2546 = vmax.f32 %v2072, 0.0
      %v2547 = vmax.f32 %v2077, 0.0
      %v2548 = vmax.f32 %v2080, 0.0
      %v2549 = vmax.f32 %v2085, 0.0
      %v2550 = vmax.f32 %v2088, 0.0
      %v2551 = vmax.f32 %v2093, 0.0
      %v2552 = vmax.f32 %v2096, 0.0
      %v2553 = vmax.f32 %v2101, 0.0
      %v2554 = vmax.f32 %v2104, 0.0
      %v2555 = vmax.f32 %v2109, 0.0
      %v2556 = vmax.f32 %v2112, 0.0
      %v2557 = vmax.f32 %v2117, 0.0
      %v2558 = vmax.f32 %v2120, 0.0
      %v2559 = vmax.f32 %v2125, 0.0
      %v2560 = vmax.f32 %v2128, 0.0
      %v2561 = vmax.f32 %v2133, 0.0
      %v2562 = vmax.f32 %v2136, 0.0
      %v2563 = vmax.f32 %v2141, 0.0
      %v2564 = vmax.f32 %v2144, 0.0
      %v2565 = vmax.f32 %v2149, 0.0
      %v2566 = vmax.f32 %v2152, 0.0
      %v2567 = vmax.f32 %v2157, 0.0
      %v2568 = vmax.f32 %v2160, 0.0
      %v2569 = vmax.f32 %v2165, 0.0
      %v2570 = vmax.f32 %v2168, 0.0
      %v2571 = vmax.f32 %v2173, 0.0
      %v2572 = vmax.f32 %v2176, 0.0
      %v2573 = vmax.f32 %v2181, 0.0
      %v2574 = vmax.f32 %v2184, 0.0
      %v2575 = vmax.f32 %v2189, 0.0
      %v2576 = vmax.f32 %v2192, 0.0
      %v2577 = vmax.f32 %v2197, 0.0
      %v2578 = vmax.f32 %v2200, 0.0
      %v2579 = vmax.f32 %v2205, 0.0
      %v2580 = vmax.f32 %v2208, 0.0
      %v2581 = vmax.f32 %v2213, 0.0
      %v2582 = vmax.f32 %v2216, 0.0
      %v2583 = vmax.f32 %v2221, 0.0
      %v2584 = vmax.f32 %v2224, 0.0
      %v2585 = vmax.f32 %v2229, 0.0
      %v2586 = vmax.f32 %v2232, 0.0
      %v2587 = vmax.f32 %v2237, 0.0
      %v2588 = vmax.f32 %v2240, 0.0
      %v2589 = vmax.f32 %v2245, 0.0
      %v2590 = vmax.f32 %v2248, 0.0
      %v2591 = vmax.f32 %v2253, 0.0
      %v2592 = vmax.f32 %v2256, 0.0
      %v2593 = vmax.f32 %v2261, 0.0
      %v2594 = vmax.f32 %v2264, 0.0
      %v2595 = vmax.f32 %v2269, 0.0
      %v2596 = vmax.f32 %v2272, 0.0
      %v2597 = vmax.f32 %v2277, 0.0
      %v2598 = vmax.f32 %v2280, 0.0
      %v2599 = vmax.f32 %v2285, 0.0
      %v2600 = vmax.f32 %v2288, 0.0
      %v2601 = vmax.f32 %v2293, 0.0
      %v2602 = vmax.f32 %v2296, 0.0
      %v2603 = vmax.f32 %v2301, 0.0
      %v2604 = vmax.f32 %v2304, 0.0
      %v2605 = vmax.f32 %v2309, 0.0
      %v2606 = vmax.f32 %v2312, 0.0
      %v2607 = vmax.f32 %v2317, 0.0
      %v2608 = vmax.f32 %v2320, 0.0
      %v2609 = vmax.f32 %v2325, 0.0
      %v2610 = vmax.f32 %v2328, 0.0
      %v2611 = vmax.f32 %v2333, 0.0
      %v2612 = vmax.f32 %v2336, 0.0
      %v2613 = vmax.f32 %v2341, 0.0
      %v2614 = vmax.f32 %v2344, 0.0
      %v2615 = vmax.f32 %v2349, 0.0
      %v2616 = vmax.f32 %v2352, 0.0
      %v2617 = vmax.f32 %v2357, 0.0
      %v2618 = vmax.f32 %v2360, 0.0
      %v2619 = vpack.c.bf16 %v2364, %v2363
      %v2620 = vpack.c.bf16 %v2366, %v2365
      %v2621 = vpack.c.bf16 %v2368, %v2367
      %v2622 = vpack.c.bf16 %v2370, %v2369
      %v2623 = vpack.c.bf16 %v2372, %v2371
      %v2624 = vpack.c.bf16 %v2374, %v2373
      %v2625 = vpack.c.bf16 %v2376, %v2375
      %v2626 = vpack.c.bf16 %v2378, %v2377
      %v2627 = vpack.c.bf16 %v2380, %v2379
      %v2628 = vpack.c.bf16 %v2382, %v2381
      %v2629 = vpack.c.bf16 %v2384, %v2383
      %v2630 = vpack.c.bf16 %v2386, %v2385
      %v2631 = vpack.c.bf16 %v2388, %v2387
      %v2632 = vpack.c.bf16 %v2390, %v2389
      %v2633 = vpack.c.bf16 %v2392, %v2391
      %v2634 = vpack.c.bf16 %v2394, %v2393
      %v2635 = vpack.c.bf16 %v2396, %v2395
      %v2636 = vpack.c.bf16 %v2398, %v2397
      %v2637 = vpack.c.bf16 %v2400, %v2399
      %v2638 = vpack.c.bf16 %v2402, %v2401
      %v2639 = vpack.c.bf16 %v2404, %v2403
      %v2640 = vpack.c.bf16 %v2406, %v2405
      %v2641 = vpack.c.bf16 %v2408, %v2407
      %v2642 = vpack.c.bf16 %v2410, %v2409
      %v2643 = vpack.c.bf16 %v2412, %v2411
      %v2644 = vpack.c.bf16 %v2414, %v2413
      %v2645 = vpack.c.bf16 %v2416, %v2415
      %v2646 = vpack.c.bf16 %v2418, %v2417
      %v2647 = vpack.c.bf16 %v2420, %v2419
      %v2648 = vpack.c.bf16 %v2422, %v2421
      %v2649 = vpack.c.bf16 %v2424, %v2423
      %v2650 = vpack.c.bf16 %v2426, %v2425
      %v2651 = vpack.c.bf16 %v2428, %v2427
      %v2652 = vpack.c.bf16 %v2430, %v2429
      %v2653 = vpack.c.bf16 %v2432, %v2431
      %v2654 = vpack.c.bf16 %v2434, %v2433
      %v2655 = vpack.c.bf16 %v2436, %v2435
      %v2656 = vpack.c.bf16 %v2438, %v2437
      %v2657 = vpack.c.bf16 %v2440, %v2439
      %v2658 = vpack.c.bf16 %v2442, %v2441
      %v2659 = vpack.c.bf16 %v2444, %v2443
      %v2660 = vpack.c.bf16 %v2446, %v2445
      %v2661 = vpack.c.bf16 %v2448, %v2447
      %v2662 = vpack.c.bf16 %v2450, %v2449
      %v2663 = vpack.c.bf16 %v2452, %v2451
      %v2664 = vpack.c.bf16 %v2454, %v2453
      %v2665 = vpack.c.bf16 %v2456, %v2455
      %v2666 = vpack.c.bf16 %v2458, %v2457
      %v2667 = vpack.c.bf16 %v2460, %v2459
      %v2668 = vpack.c.bf16 %v2462, %v2461
      %v2669 = vpack.c.bf16 %v2464, %v2463
      %v2670 = vpack.c.bf16 %v2466, %v2465
      %v2671 = vpack.c.bf16 %v2468, %v2467
      %v2672 = vpack.c.bf16 %v2470, %v2469
      %v2673 = vpack.c.bf16 %v2472, %v2471
      %v2674 = vpack.c.bf16 %v2474, %v2473
      %v2675 = vpack.c.bf16 %v2476, %v2475
      %v2676 = vpack.c.bf16 %v2478, %v2477
      %v2677 = vpack.c.bf16 %v2480, %v2479
      %v2678 = vpack.c.bf16 %v2482, %v2481
      %v2679 = vpack.c.bf16 %v2484, %v2483
      %v2680 = vpack.c.bf16 %v2486, %v2485
      %v2681 = vpack.c.bf16 %v2488, %v2487
      %v2682 = vpack.c.bf16 %v2490, %v2489
      %v2683 = vpack.c.bf16 %v2492, %v2491
      %v2684 = vpack.c.bf16 %v2494, %v2493
      %v2685 = vpack.c.bf16 %v2496, %v2495
      %v2686 = vpack.c.bf16 %v2498, %v2497
      %v2687 = vpack.c.bf16 %v2500, %v2499
      %v2688 = vpack.c.bf16 %v2502, %v2501
      %v2689 = vpack.c.bf16 %v2504, %v2503
      %v2690 = vpack.c.bf16 %v2506, %v2505
      %v2691 = vpack.c.bf16 %v2508, %v2507
      %v2692 = vpack.c.bf16 %v2510, %v2509
      %v2693 = vpack.c.bf16 %v2512, %v2511
      %v2694 = vpack.c.bf16 %v2514, %v2513
      %v2695 = vpack.c.bf16 %v2516, %v2515
      %v2696 = vpack.c.bf16 %v2518, %v2517
      %v2697 = vpack.c.bf16 %v2520, %v2519
      %v2698 = vpack.c.bf16 %v2522, %v2521
      %v2699 = vpack.c.bf16 %v2524, %v2523
      %v2700 = vpack.c.bf16 %v2526, %v2525
      %v2701 = vpack.c.bf16 %v2528, %v2527
      %v2702 = vpack.c.bf16 %v2530, %v2529
      %v2703 = vpack.c.bf16 %v2532, %v2531
      %v2704 = vpack.c.bf16 %v2534, %v2533
      %v2705 = vpack.c.bf16 %v2536, %v2535
      %v2706 = vpack.c.bf16 %v2538, %v2537
      %v2707 = vpack.c.bf16 %v2540, %v2539
      %v2708 = vpack.c.bf16 %v2542, %v2541
      %v2709 = vpack.c.bf16 %v2544, %v2543
      %v2710 = vpack.c.bf16 %v2546, %v2545
      %v2711 = vpack.c.bf16 %v2548, %v2547
      %v2712 = vpack.c.bf16 %v2550, %v2549
      %v2713 = vpack.c.bf16 %v2552, %v2551
      %v2714 = vpack.c.bf16 %v2554, %v2553
      %v2715 = vpack.c.bf16 %v2556, %v2555
      %v2716 = vpack.c.bf16 %v2558, %v2557
      %v2717 = vpack.c.bf16 %v2560, %v2559
      %v2718 = vpack.c.bf16 %v2562, %v2561
      %v2719 = vpack.c.bf16 %v2564, %v2563
      %v2720 = vpack.c.bf16 %v2566, %v2565
      %v2721 = vpack.c.bf16 %v2568, %v2567
      %v2722 = vpack.c.bf16 %v2570, %v2569
      %v2723 = vpack.c.bf16 %v2572, %v2571
      %v2724 = vpack.c.bf16 %v2574, %v2573
      %v2725 = vpack.c.bf16 %v2576, %v2575
      %v2726 = vpack.c.bf16 %v2578, %v2577
      %v2727 = vpack.c.bf16 %v2580, %v2579
      %v2728 = vpack.c.bf16 %v2582, %v2581
      %v2729 = vpack.c.bf16 %v2584, %v2583
      %v2730 = vpack.c.bf16 %v2586, %v2585
      %v2731 = vpack.c.bf16 %v2588, %v2587
      %v2732 = vpack.c.bf16 %v2590, %v2589
      %v2733 = vpack.c.bf16 %v2592, %v2591
      %v2734 = vpack.c.bf16 %v2594, %v2593
      %v2735 = vpack.c.bf16 %v2596, %v2595
      %v2736 = vpack.c.bf16 %v2598, %v2597
      %v2737 = vpack.c.bf16 %v2600, %v2599
      %v2738 = vpack.c.bf16 %v2602, %v2601
      %v2739 = vpack.c.bf16 %v2604, %v2603
      %v2740 = vpack.c.bf16 %v2606, %v2605
      %v2741 = vpack.c.bf16 %v2608, %v2607
      %v2742 = vpack.c.bf16 %v2610, %v2609
      %v2743 = vpack.c.bf16 %v2612, %v2611
      %v2744 = vpack.c.bf16 %v2614, %v2613
      %v2745 = vpack.c.bf16 %v2616, %v2615
      %v2746 = vpack.c.bf16 %v2618, %v2617
      %v2875 = vunpack.c.l.b16 %v2619
      %v2876 = vunpack.c.h.b16 %v2619
      %v2877 = vunpack.c.l.b16 %v2620
      %v2878 = vunpack.c.h.b16 %v2620
      %v2879 = vunpack.c.l.b16 %v2621
      %v2880 = vunpack.c.h.b16 %v2621
      %v2881 = vunpack.c.l.b16 %v2622
      %v2882 = vunpack.c.h.b16 %v2622
      %v2883 = vunpack.c.l.b16 %v2623
      %v2884 = vunpack.c.h.b16 %v2623
      %v2885 = vunpack.c.l.b16 %v2624
      %v2886 = vunpack.c.h.b16 %v2624
      %v2887 = vunpack.c.l.b16 %v2625
      %v2888 = vunpack.c.h.b16 %v2625
      %v2889 = vunpack.c.l.b16 %v2626
      %v2890 = vunpack.c.h.b16 %v2626
      %v2891 = vunpack.c.l.b16 %v2627
      %v2892 = vunpack.c.h.b16 %v2627
      %v2893 = vunpack.c.l.b16 %v2628
      %v2894 = vunpack.c.h.b16 %v2628
      %v2895 = vunpack.c.l.b16 %v2629
      %v2896 = vunpack.c.h.b16 %v2629
      %v2897 = vunpack.c.l.b16 %v2630
      %v2898 = vunpack.c.h.b16 %v2630
      %v2899 = vunpack.c.l.b16 %v2631
      %v2900 = vunpack.c.h.b16 %v2631
      %v2901 = vunpack.c.l.b16 %v2632
      %v2902 = vunpack.c.h.b16 %v2632
      %v2903 = vunpack.c.l.b16 %v2633
      %v2904 = vunpack.c.h.b16 %v2633
      %v2905 = vunpack.c.l.b16 %v2634
      %v2906 = vunpack.c.h.b16 %v2634
      %v2907 = vunpack.c.l.b16 %v2635
      %v2908 = vunpack.c.h.b16 %v2635
      %v2909 = vunpack.c.l.b16 %v2636
      %v2910 = vunpack.c.h.b16 %v2636
      %v2911 = vunpack.c.l.b16 %v2637
      %v2912 = vunpack.c.h.b16 %v2637
      %v2913 = vunpack.c.l.b16 %v2638
      %v2914 = vunpack.c.h.b16 %v2638
      %v2915 = vunpack.c.l.b16 %v2639
      %v2916 = vunpack.c.h.b16 %v2639
      %v2917 = vunpack.c.l.b16 %v2640
      %v2918 = vunpack.c.h.b16 %v2640
      %v2919 = vunpack.c.l.b16 %v2641
      %v2920 = vunpack.c.h.b16 %v2641
      %v2921 = vunpack.c.l.b16 %v2642
      %v2922 = vunpack.c.h.b16 %v2642
      %v2923 = vunpack.c.l.b16 %v2643
      %v2924 = vunpack.c.h.b16 %v2643
      %v2925 = vunpack.c.l.b16 %v2644
      %v2926 = vunpack.c.h.b16 %v2644
      %v2927 = vunpack.c.l.b16 %v2645
      %v2928 = vunpack.c.h.b16 %v2645
      %v2929 = vunpack.c.l.b16 %v2646
      %v2930 = vunpack.c.h.b16 %v2646
      %v2931 = vunpack.c.l.b16 %v2647
      %v2932 = vunpack.c.h.b16 %v2647
      %v2933 = vunpack.c.l.b16 %v2648
      %v2934 = vunpack.c.h.b16 %v2648
      %v2935 = vunpack.c.l.b16 %v2649
      %v2936 = vunpack.c.h.b16 %v2649
      %v2937 = vunpack.c.l.b16 %v2650
      %v2938 = vunpack.c.h.b16 %v2650
      %v2939 = vunpack.c.l.b16 %v2651
      %v2940 = vunpack.c.h.b16 %v2651
      %v2941 = vunpack.c.l.b16 %v2652
      %v2942 = vunpack.c.h.b16 %v2652
      %v2943 = vunpack.c.l.b16 %v2653
      %v2944 = vunpack.c.h.b16 %v2653
      %v2945 = vunpack.c.l.b16 %v2654
      %v2946 = vunpack.c.h.b16 %v2654
      %v2947 = vunpack.c.l.b16 %v2655
      %v2948 = vunpack.c.h.b16 %v2655
      %v2949 = vunpack.c.l.b16 %v2656
      %v2950 = vunpack.c.h.b16 %v2656
      %v2951 = vunpack.c.l.b16 %v2657
      %v2952 = vunpack.c.h.b16 %v2657
      %v2953 = vunpack.c.l.b16 %v2658
      %v2954 = vunpack.c.h.b16 %v2658
      %v2955 = vunpack.c.l.b16 %v2659
      %v2956 = vunpack.c.h.b16 %v2659
      %v2957 = vunpack.c.l.b16 %v2660
      %v2958 = vunpack.c.h.b16 %v2660
      %v2959 = vunpack.c.l.b16 %v2661
      %v2960 = vunpack.c.h.b16 %v2661
      %v2961 = vunpack.c.l.b16 %v2662
      %v2962 = vunpack.c.h.b16 %v2662
      %v2963 = vunpack.c.l.b16 %v2663
      %v2964 = vunpack.c.h.b16 %v2663
      %v2965 = vunpack.c.l.b16 %v2664
      %v2966 = vunpack.c.h.b16 %v2664
      %v2967 = vunpack.c.l.b16 %v2665
      %v2968 = vunpack.c.h.b16 %v2665
      %v2969 = vunpack.c.l.b16 %v2666
      %v2970 = vunpack.c.h.b16 %v2666
      %v2971 = vunpack.c.l.b16 %v2667
      %v2972 = vunpack.c.h.b16 %v2667
      %v2973 = vunpack.c.l.b16 %v2668
      %v2974 = vunpack.c.h.b16 %v2668
      %v2975 = vunpack.c.l.b16 %v2669
      %v2976 = vunpack.c.h.b16 %v2669
      %v2977 = vunpack.c.l.b16 %v2670
      %v2978 = vunpack.c.h.b16 %v2670
      %v2979 = vunpack.c.l.b16 %v2671
      %v2980 = vunpack.c.h.b16 %v2671
      %v2981 = vunpack.c.l.b16 %v2672
      %v2982 = vunpack.c.h.b16 %v2672
      %v2983 = vunpack.c.l.b16 %v2673
      %v2984 = vunpack.c.h.b16 %v2673
      %v2985 = vunpack.c.l.b16 %v2674
      %v2986 = vunpack.c.h.b16 %v2674
      %v2987 = vunpack.c.l.b16 %v2675
      %v2988 = vunpack.c.h.b16 %v2675
      %v2989 = vunpack.c.l.b16 %v2676
      %v2990 = vunpack.c.h.b16 %v2676
      %v2991 = vunpack.c.l.b16 %v2677
      %v2992 = vunpack.c.h.b16 %v2677
      %v2993 = vunpack.c.l.b16 %v2678
      %v2994 = vunpack.c.h.b16 %v2678
      %v2995 = vunpack.c.l.b16 %v2679
      %v2996 = vunpack.c.h.b16 %v2679
      %v2997 = vunpack.c.l.b16 %v2680
      %v2998 = vunpack.c.h.b16 %v2680
      %v2999 = vunpack.c.l.b16 %v2681
      %v3000 = vunpack.c.h.b16 %v2681
      %v3001 = vunpack.c.l.b16 %v2682
      %v3002 = vunpack.c.h.b16 %v2682
      %v3003 = vunpack.c.l.b16 %v2683
      %v3004 = vunpack.c.h.b16 %v2683
      %v3005 = vunpack.c.l.b16 %v2684
      %v3006 = vunpack.c.h.b16 %v2684
      %v3007 = vunpack.c.l.b16 %v2685
      %v3008 = vunpack.c.h.b16 %v2685
      %v3009 = vunpack.c.l.b16 %v2686
      %v3010 = vunpack.c.h.b16 %v2686
      %v3011 = vunpack.c.l.b16 %v2687
      %v3012 = vunpack.c.h.b16 %v2687
      %v3013 = vunpack.c.l.b16 %v2688
      %v3014 = vunpack.c.h.b16 %v2688
      %v3015 = vunpack.c.l.b16 %v2689
      %v3016 = vunpack.c.h.b16 %v2689
      %v3017 = vunpack.c.l.b16 %v2690
      %v3018 = vunpack.c.h.b16 %v2690
      %v3019 = vunpack.c.l.b16 %v2691
      %v3020 = vunpack.c.h.b16 %v2691
      %v3021 = vunpack.c.l.b16 %v2692
      %v3022 = vunpack.c.h.b16 %v2692
      %v3023 = vunpack.c.l.b16 %v2693
      %v3024 = vunpack.c.h.b16 %v2693
      %v3025 = vunpack.c.l.b16 %v2694
      %v3026 = vunpack.c.h.b16 %v2694
      %v3027 = vunpack.c.l.b16 %v2695
      %v3028 = vunpack.c.h.b16 %v2695
      %v3029 = vunpack.c.l.b16 %v2696
      %v3030 = vunpack.c.h.b16 %v2696
      %v3031 = vunpack.c.l.b16 %v2697
      %v3032 = vunpack.c.h.b16 %v2697
      %v3033 = vunpack.c.l.b16 %v2698
      %v3034 = vunpack.c.h.b16 %v2698
      %v3035 = vunpack.c.l.b16 %v2699
      %v3036 = vunpack.c.h.b16 %v2699
      %v3037 = vunpack.c.l.b16 %v2700
      %v3038 = vunpack.c.h.b16 %v2700
      %v3039 = vunpack.c.l.b16 %v2701
      %v3040 = vunpack.c.h.b16 %v2701
      %v3041 = vunpack.c.l.b16 %v2702
      %v3042 = vunpack.c.h.b16 %v2702
      %v3043 = vunpack.c.l.b16 %v2703
      %v3044 = vunpack.c.h.b16 %v2703
      %v3045 = vunpack.c.l.b16 %v2704
      %v3046 = vunpack.c.h.b16 %v2704
      %v3047 = vunpack.c.l.b16 %v2705
      %v3048 = vunpack.c.h.b16 %v2705
      %v3049 = vunpack.c.l.b16 %v2706
      %v3050 = vunpack.c.h.b16 %v2706
      %v3051 = vunpack.c.l.b16 %v2707
      %v3052 = vunpack.c.h.b16 %v2707
      %v3053 = vunpack.c.l.b16 %v2708
      %v3054 = vunpack.c.h.b16 %v2708
      %v3055 = vunpack.c.l.b16 %v2709
      %v3056 = vunpack.c.h.b16 %v2709
      %v3057 = vunpack.c.l.b16 %v2710
      %v3058 = vunpack.c.h.b16 %v2710
      %v3059 = vunpack.c.l.b16 %v2711
      %v3060 = vunpack.c.h.b16 %v2711
      %v3061 = vunpack.c.l.b16 %v2712
      %v3062 = vunpack.c.h.b16 %v2712
      %v3063 = vunpack.c.l.b16 %v2713
      %v3064 = vunpack.c.h.b16 %v2713
      %v3065 = vunpack.c.l.b16 %v2714
      %v3066 = vunpack.c.h.b16 %v2714
      %v3067 = vunpack.c.l.b16 %v2715
      %v3068 = vunpack.c.h.b16 %v2715
      %v3069 = vunpack.c.l.b16 %v2716
      %v3070 = vunpack.c.h.b16 %v2716
      %v3071 = vunpack.c.l.b16 %v2717
      %v3072 = vunpack.c.h.b16 %v2717
      %v3073 = vunpack.c.l.b16 %v2718
      %v3074 = vunpack.c.h.b16 %v2718
      %v3075 = vunpack.c.l.b16 %v2719
      %v3076 = vunpack.c.h.b16 %v2719
      %v3077 = vunpack.c.l.b16 %v2720
      %v3078 = vunpack.c.h.b16 %v2720
      %v3079 = vunpack.c.l.b16 %v2721
      %v3080 = vunpack.c.h.b16 %v2721
      %v3081 = vunpack.c.l.b16 %v2722
      %v3082 = vunpack.c.h.b16 %v2722
      %v3083 = vunpack.c.l.b16 %v2723
      %v3084 = vunpack.c.h.b16 %v2723
      %v3085 = vunpack.c.l.b16 %v2724
      %v3086 = vunpack.c.h.b16 %v2724
      %v3087 = vunpack.c.l.b16 %v2725
      %v3088 = vunpack.c.h.b16 %v2725
      %v3089 = vunpack.c.l.b16 %v2726
      %v3090 = vunpack.c.h.b16 %v2726
      %v3091 = vunpack.c.l.b16 %v2727
      %v3092 = vunpack.c.h.b16 %v2727
      %v3093 = vunpack.c.l.b16 %v2728
      %v3094 = vunpack.c.h.b16 %v2728
      %v3095 = vunpack.c.l.b16 %v2729
      %v3096 = vunpack.c.h.b16 %v2729
      %v3097 = vunpack.c.l.b16 %v2730
      %v3098 = vunpack.c.h.b16 %v2730
      %v3099 = vunpack.c.l.b16 %v2731
      %v3100 = vunpack.c.h.b16 %v2731
      %v3101 = vunpack.c.l.b16 %v2732
      %v3102 = vunpack.c.h.b16 %v2732
      %v3103 = vunpack.c.l.b16 %v2733
      %v3104 = vunpack.c.h.b16 %v2733
      %v3105 = vunpack.c.l.b16 %v2734
      %v3106 = vunpack.c.h.b16 %v2734
      %v3107 = vunpack.c.l.b16 %v2735
      %v3108 = vunpack.c.h.b16 %v2735
      %v3109 = vunpack.c.l.b16 %v2736
      %v3110 = vunpack.c.h.b16 %v2736
      %v3111 = vunpack.c.l.b16 %v2737
      %v3112 = vunpack.c.h.b16 %v2737
      %v3113 = vunpack.c.l.b16 %v2738
      %v3114 = vunpack.c.h.b16 %v2738
      %v3115 = vunpack.c.l.b16 %v2739
      %v3116 = vunpack.c.h.b16 %v2739
      %v3117 = vunpack.c.l.b16 %v2740
      %v3118 = vunpack.c.h.b16 %v2740
      %v3119 = vunpack.c.l.b16 %v2741
      %v3120 = vunpack.c.h.b16 %v2741
      %v3121 = vunpack.c.l.b16 %v2742
      %v3122 = vunpack.c.h.b16 %v2742
      %v3123 = vunpack.c.l.b16 %v2743
      %v3124 = vunpack.c.h.b16 %v2743
      %v3125 = vunpack.c.l.b16 %v2744
      %v3126 = vunpack.c.h.b16 %v2744
      %v3127 = vunpack.c.l.b16 %v2745
      %v3128 = vunpack.c.h.b16 %v2745
      %v3129 = vunpack.c.l.b16 %v2746
      %v3130 = vunpack.c.h.b16 %v2746
      %v3131 = vpack.c.b16 %v2875, %v2875
      %v3132 = vpack.c.b16 %v2876, %v2876
      %v3133 = vpack.c.b16 %v2877, %v2877
      %v3134 = vpack.c.b16 %v2878, %v2878
      %v3135 = vpack.c.b16 %v2879, %v2879
      %v3136 = vpack.c.b16 %v2880, %v2880
      %v3137 = vpack.c.b16 %v2881, %v2881
      %v3138 = vpack.c.b16 %v2882, %v2882
      %v3139 = vpack.c.b16 %v2883, %v2883
      %v3140 = vpack.c.b16 %v2884, %v2884
      %v3141 = vpack.c.b16 %v2885, %v2885
      %v3142 = vpack.c.b16 %v2886, %v2886
      %v3143 = vpack.c.b16 %v2887, %v2887
      %v3144 = vpack.c.b16 %v2888, %v2888
      %v3145 = vpack.c.b16 %v2889, %v2889
      %v3146 = vpack.c.b16 %v2890, %v2890
      %v3147 = vpack.c.b16 %v2891, %v2891
      %v3148 = vpack.c.b16 %v2892, %v2892
      %v3149 = vpack.c.b16 %v2893, %v2893
      %v3150 = vpack.c.b16 %v2894, %v2894
      %v3151 = vpack.c.b16 %v2895, %v2895
      %v3152 = vpack.c.b16 %v2896, %v2896
      %v3153 = vpack.c.b16 %v2897, %v2897
      %v3154 = vpack.c.b16 %v2898, %v2898
      %v3155 = vpack.c.b16 %v2899, %v2899
      %v3156 = vpack.c.b16 %v2900, %v2900
      %v3157 = vpack.c.b16 %v2901, %v2901
      %v3158 = vpack.c.b16 %v2902, %v2902
      %v3159 = vpack.c.b16 %v2903, %v2903
      %v3160 = vpack.c.b16 %v2904, %v2904
      %v3161 = vpack.c.b16 %v2905, %v2905
      %v3162 = vpack.c.b16 %v2906, %v2906
      %v3163 = vpack.c.b16 %v2907, %v2907
      %v3164 = vpack.c.b16 %v2908, %v2908
      %v3165 = vpack.c.b16 %v2909, %v2909
      %v3166 = vpack.c.b16 %v2910, %v2910
      %v3167 = vpack.c.b16 %v2911, %v2911
      %v3168 = vpack.c.b16 %v2912, %v2912
      %v3169 = vpack.c.b16 %v2913, %v2913
      %v3170 = vpack.c.b16 %v2914, %v2914
      %v3171 = vpack.c.b16 %v2915, %v2915
      %v3172 = vpack.c.b16 %v2916, %v2916
      %v3173 = vpack.c.b16 %v2917, %v2917
      %v3174 = vpack.c.b16 %v2918, %v2918
      %v3175 = vpack.c.b16 %v2919, %v2919
      %v3176 = vpack.c.b16 %v2920, %v2920
      %v3177 = vpack.c.b16 %v2921, %v2921
      %v3178 = vpack.c.b16 %v2922, %v2922
      %v3179 = vpack.c.b16 %v2923, %v2923
      %v3180 = vpack.c.b16 %v2924, %v2924
      %v3181 = vpack.c.b16 %v2925, %v2925
      %v3182 = vpack.c.b16 %v2926, %v2926
      %v3183 = vpack.c.b16 %v2927, %v2927
      %v3184 = vpack.c.b16 %v2928, %v2928
      %v3185 = vpack.c.b16 %v2929, %v2929
      %v3186 = vpack.c.b16 %v2930, %v2930
      %v3187 = vpack.c.b16 %v2931, %v2931
      %v3188 = vpack.c.b16 %v2932, %v2932
      %v3189 = vpack.c.b16 %v2933, %v2933
      %v3190 = vpack.c.b16 %v2934, %v2934
      %v3191 = vpack.c.b16 %v2935, %v2935
      %v3192 = vpack.c.b16 %v2936, %v2936
      %v3193 = vpack.c.b16 %v2937, %v2937
      %v3194 = vpack.c.b16 %v2938, %v2938
      %v3195 = vpack.c.b16 %v2939, %v2939
      %v3196 = vpack.c.b16 %v2940, %v2940
      %v3197 = vpack.c.b16 %v2941, %v2941
      %v3198 = vpack.c.b16 %v2942, %v2942
      %v3199 = vpack.c.b16 %v2943, %v2943
      %v3200 = vpack.c.b16 %v2944, %v2944
      %v3201 = vpack.c.b16 %v2945, %v2945
      %v3202 = vpack.c.b16 %v2946, %v2946
      %v3203 = vpack.c.b16 %v2947, %v2947
      %v3204 = vpack.c.b16 %v2948, %v2948
      %v3205 = vpack.c.b16 %v2949, %v2949
      %v3206 = vpack.c.b16 %v2950, %v2950
      %v3207 = vpack.c.b16 %v2951, %v2951
      %v3208 = vpack.c.b16 %v2952, %v2952
      %v3209 = vpack.c.b16 %v2953, %v2953
      %v3210 = vpack.c.b16 %v2954, %v2954
      %v3211 = vpack.c.b16 %v2955, %v2955
      %v3212 = vpack.c.b16 %v2956, %v2956
      %v3213 = vpack.c.b16 %v2957, %v2957
      %v3214 = vpack.c.b16 %v2958, %v2958
      %v3215 = vpack.c.b16 %v2959, %v2959
      %v3216 = vpack.c.b16 %v2960, %v2960
      %v3217 = vpack.c.b16 %v2961, %v2961
      %v3218 = vpack.c.b16 %v2962, %v2962
      %v3219 = vpack.c.b16 %v2963, %v2963
      %v3220 = vpack.c.b16 %v2964, %v2964
      %v3221 = vpack.c.b16 %v2965, %v2965
      %v3222 = vpack.c.b16 %v2966, %v2966
      %v3223 = vpack.c.b16 %v2967, %v2967
      %v3224 = vpack.c.b16 %v2968, %v2968
      %v3225 = vpack.c.b16 %v2969, %v2969
      %v3226 = vpack.c.b16 %v2970, %v2970
      %v3227 = vpack.c.b16 %v2971, %v2971
      %v3228 = vpack.c.b16 %v2972, %v2972
      %v3229 = vpack.c.b16 %v2973, %v2973
      %v3230 = vpack.c.b16 %v2974, %v2974
      %v3231 = vpack.c.b16 %v2975, %v2975
      %v3232 = vpack.c.b16 %v2976, %v2976
      %v3233 = vpack.c.b16 %v2977, %v2977
      %v3234 = vpack.c.b16 %v2978, %v2978
      %v3235 = vpack.c.b16 %v2979, %v2979
      %v3236 = vpack.c.b16 %v2980, %v2980
      %v3237 = vpack.c.b16 %v2981, %v2981
      %v3238 = vpack.c.b16 %v2982, %v2982
      %v3239 = vpack.c.b16 %v2983, %v2983
      %v3240 = vpack.c.b16 %v2984, %v2984
      %v3241 = vpack.c.b16 %v2985, %v2985
      %v3242 = vpack.c.b16 %v2986, %v2986
      %v3243 = vpack.c.b16 %v2987, %v2987
      %v3244 = vpack.c.b16 %v2988, %v2988
      %v3245 = vpack.c.b16 %v2989, %v2989
      %v3246 = vpack.c.b16 %v2990, %v2990
      %v3247 = vpack.c.b16 %v2991, %v2991
      %v3248 = vpack.c.b16 %v2992, %v2992
      %v3249 = vpack.c.b16 %v2993, %v2993
      %v3250 = vpack.c.b16 %v2994, %v2994
      %v3251 = vpack.c.b16 %v2995, %v2995
      %v3252 = vpack.c.b16 %v2996, %v2996
      %v3253 = vpack.c.b16 %v2997, %v2997
      %v3254 = vpack.c.b16 %v2998, %v2998
      %v3255 = vpack.c.b16 %v2999, %v2999
      %v3256 = vpack.c.b16 %v3000, %v3000
      %v3257 = vpack.c.b16 %v3001, %v3001
      %v3258 = vpack.c.b16 %v3002, %v3002
      %v3259 = vpack.c.b16 %v3003, %v3003
      %v3260 = vpack.c.b16 %v3004, %v3004
      %v3261 = vpack.c.b16 %v3005, %v3005
      %v3262 = vpack.c.b16 %v3006, %v3006
      %v3263 = vpack.c.b16 %v3007, %v3007
      %v3264 = vpack.c.b16 %v3008, %v3008
      %v3265 = vpack.c.b16 %v3009, %v3009
      %v3266 = vpack.c.b16 %v3010, %v3010
      %v3267 = vpack.c.b16 %v3011, %v3011
      %v3268 = vpack.c.b16 %v3012, %v3012
      %v3269 = vpack.c.b16 %v3013, %v3013
      %v3270 = vpack.c.b16 %v3014, %v3014
      %v3271 = vpack.c.b16 %v3015, %v3015
      %v3272 = vpack.c.b16 %v3016, %v3016
      %v3273 = vpack.c.b16 %v3017, %v3017
      %v3274 = vpack.c.b16 %v3018, %v3018
      %v3275 = vpack.c.b16 %v3019, %v3019
      %v3276 = vpack.c.b16 %v3020, %v3020
      %v3277 = vpack.c.b16 %v3021, %v3021
      %v3278 = vpack.c.b16 %v3022, %v3022
      %v3279 = vpack.c.b16 %v3023, %v3023
      %v3280 = vpack.c.b16 %v3024, %v3024
      %v3281 = vpack.c.b16 %v3025, %v3025
      %v3282 = vpack.c.b16 %v3026, %v3026
      %v3283 = vpack.c.b16 %v3027, %v3027
      %v3284 = vpack.c.b16 %v3028, %v3028
      %v3285 = vpack.c.b16 %v3029, %v3029
      %v3286 = vpack.c.b16 %v3030, %v3030
      %v3287 = vpack.c.b16 %v3031, %v3031
      %v3288 = vpack.c.b16 %v3032, %v3032
      %v3289 = vpack.c.b16 %v3033, %v3033
      %v3290 = vpack.c.b16 %v3034, %v3034
      %v3291 = vpack.c.b16 %v3035, %v3035
      %v3292 = vpack.c.b16 %v3036, %v3036
      %v3293 = vpack.c.b16 %v3037, %v3037
      %v3294 = vpack.c.b16 %v3038, %v3038
      %v3295 = vpack.c.b16 %v3039, %v3039
      %v3296 = vpack.c.b16 %v3040, %v3040
      %v3297 = vpack.c.b16 %v3041, %v3041
      %v3298 = vpack.c.b16 %v3042, %v3042
      %v3299 = vpack.c.b16 %v3043, %v3043
      %v3300 = vpack.c.b16 %v3044, %v3044
      %v3301 = vpack.c.b16 %v3045, %v3045
      %v3302 = vpack.c.b16 %v3046, %v3046
      %v3303 = vpack.c.b16 %v3047, %v3047
      %v3304 = vpack.c.b16 %v3048, %v3048
      %v3305 = vpack.c.b16 %v3049, %v3049
      %v3306 = vpack.c.b16 %v3050, %v3050
      %v3307 = vpack.c.b16 %v3051, %v3051
      %v3308 = vpack.c.b16 %v3052, %v3052
      %v3309 = vpack.c.b16 %v3053, %v3053
      %v3310 = vpack.c.b16 %v3054, %v3054
      %v3311 = vpack.c.b16 %v3055, %v3055
      %v3312 = vpack.c.b16 %v3056, %v3056
      %v3313 = vpack.c.b16 %v3057, %v3057
      %v3314 = vpack.c.b16 %v3058, %v3058
      %v3315 = vpack.c.b16 %v3059, %v3059
      %v3316 = vpack.c.b16 %v3060, %v3060
      %v3317 = vpack.c.b16 %v3061, %v3061
      %v3318 = vpack.c.b16 %v3062, %v3062
      %v3319 = vpack.c.b16 %v3063, %v3063
      %v3320 = vpack.c.b16 %v3064, %v3064
      %v3321 = vpack.c.b16 %v3065, %v3065
      %v3322 = vpack.c.b16 %v3066, %v3066
      %v3323 = vpack.c.b16 %v3067, %v3067
      %v3324 = vpack.c.b16 %v3068, %v3068
      %v3325 = vpack.c.b16 %v3069, %v3069
      %v3326 = vpack.c.b16 %v3070, %v3070
      %v3327 = vpack.c.b16 %v3071, %v3071
      %v3328 = vpack.c.b16 %v3072, %v3072
      %v3329 = vpack.c.b16 %v3073, %v3073
      %v3330 = vpack.c.b16 %v3074, %v3074
      %v3331 = vpack.c.b16 %v3075, %v3075
      %v3332 = vpack.c.b16 %v3076, %v3076
      %v3333 = vpack.c.b16 %v3077, %v3077
      %v3334 = vpack.c.b16 %v3078, %v3078
      %v3335 = vpack.c.b16 %v3079, %v3079
      %v3336 = vpack.c.b16 %v3080, %v3080
      %v3337 = vpack.c.b16 %v3081, %v3081
      %v3338 = vpack.c.b16 %v3082, %v3082
      %v3339 = vpack.c.b16 %v3083, %v3083
      %v3340 = vpack.c.b16 %v3084, %v3084
      %v3341 = vpack.c.b16 %v3085, %v3085
      %v3342 = vpack.c.b16 %v3086, %v3086
      %v3343 = vpack.c.b16 %v3087, %v3087
      %v3344 = vpack.c.b16 %v3088, %v3088
      %v3345 = vpack.c.b16 %v3089, %v3089
      %v3346 = vpack.c.b16 %v3090, %v3090
      %v3347 = vpack.c.b16 %v3091, %v3091
      %v3348 = vpack.c.b16 %v3092, %v3092
      %v3349 = vpack.c.b16 %v3093, %v3093
      %v3350 = vpack.c.b16 %v3094, %v3094
      %v3351 = vpack.c.b16 %v3095, %v3095
      %v3352 = vpack.c.b16 %v3096, %v3096
      %v3353 = vpack.c.b16 %v3097, %v3097
      %v3354 = vpack.c.b16 %v3098, %v3098
      %v3355 = vpack.c.b16 %v3099, %v3099
      %v3356 = vpack.c.b16 %v3100, %v3100
      %v3357 = vpack.c.b16 %v3101, %v3101
      %v3358 = vpack.c.b16 %v3102, %v3102
      %v3359 = vpack.c.b16 %v3103, %v3103
      %v3360 = vpack.c.b16 %v3104, %v3104
      %v3361 = vpack.c.b16 %v3105, %v3105
      %v3362 = vpack.c.b16 %v3106, %v3106
      %v3363 = vpack.c.b16 %v3107, %v3107
      %v3364 = vpack.c.b16 %v3108, %v3108
      %v3365 = vpack.c.b16 %v3109, %v3109
      %v3366 = vpack.c.b16 %v3110, %v3110
      %v3367 = vpack.c.b16 %v3111, %v3111
      %v3368 = vpack.c.b16 %v3112, %v3112
      %v3369 = vpack.c.b16 %v3113, %v3113
      %v3370 = vpack.c.b16 %v3114, %v3114
      %v3371 = vpack.c.b16 %v3115, %v3115
      %v3372 = vpack.c.b16 %v3116, %v3116
      %v3373 = vpack.c.b16 %v3117, %v3117
      %v3374 = vpack.c.b16 %v3118, %v3118
      %v3375 = vpack.c.b16 %v3119, %v3119
      %v3376 = vpack.c.b16 %v3120, %v3120
      %v3377 = vpack.c.b16 %v3121, %v3121
      %v3378 = vpack.c.b16 %v3122, %v3122
      %v3379 = vpack.c.b16 %v3123, %v3123
      %v3380 = vpack.c.b16 %v3124, %v3124
      %v3381 = vpack.c.b16 %v3125, %v3125
      %v3382 = vpack.c.b16 %v3126, %v3126
      %v3383 = vpack.c.b16 %v3127, %v3127
      %v3384 = vpack.c.b16 %v3128, %v3128
      %v3385 = vpack.c.b16 %v3129, %v3129
      %v3386 = vpack.c.b16 %v3130, %v3130
      %3643 = vst [vmem:[%s208] sm:$0xf] %v3131
      %3644 = vst [vmem:[%s208 + $0x4] sm:$0xf] %v3132
      %3645 = vst [vmem:[%s208 + $0x8] sm:$0xf] %v3133
      %3646 = vst [vmem:[%s208 + $0xc] sm:$0xf] %v3134
      %3647 = vst [vmem:[%s208 + $0x10] sm:$0xf] %v3135
      %3648 = vst [vmem:[%s208 + $0x14] sm:$0xf] %v3136
      %3649 = vst [vmem:[%s208 + $0x18] sm:$0xf] %v3137
      %3650 = vst [vmem:[%s208 + $0x1c] sm:$0xf] %v3138
      %3651 = vst [vmem:[%s208 + $0x20] sm:$0xf] %v3139
      %3652 = vst [vmem:[%s208 + $0x24] sm:$0xf] %v3140
      %3653 = vst [vmem:[%s208 + $0x28] sm:$0xf] %v3141
      %3654 = vst [vmem:[%s208 + $0x2c] sm:$0xf] %v3142
      %3655 = vst [vmem:[%s208 + $0x30] sm:$0xf] %v3143
      %3656 = vst [vmem:[%s208 + $0x34] sm:$0xf] %v3144
      %3657 = vst [vmem:[%s208 + $0x38] sm:$0xf] %v3145
      %3658 = vst [vmem:[%s208 + $0x3c] sm:$0xf] %v3146
      %3659 = vst [vmem:[%s208 + $0x40] sm:$0xf] %v3147
      %3660 = vst [vmem:[%s208 + $0x44] sm:$0xf] %v3148
      %3661 = vst [vmem:[%s208 + $0x48] sm:$0xf] %v3149
      %3662 = vst [vmem:[%s208 + $0x4c] sm:$0xf] %v3150
      %3663 = vst [vmem:[%s208 + $0x50] sm:$0xf] %v3151
      %3664 = vst [vmem:[%s208 + $0x54] sm:$0xf] %v3152
      %3665 = vst [vmem:[%s208 + $0x58] sm:$0xf] %v3153
      %3666 = vst [vmem:[%s208 + $0x5c] sm:$0xf] %v3154
      %3667 = vst [vmem:[%s208 + $0x60] sm:$0xf] %v3155
      %3668 = vst [vmem:[%s208 + $0x64] sm:$0xf] %v3156
      %3669 = vst [vmem:[%s208 + $0x68] sm:$0xf] %v3157
      %3670 = vst [vmem:[%s208 + $0x6c] sm:$0xf] %v3158
      %3671 = vst [vmem:[%s208 + $0x70] sm:$0xf] %v3159
      %3672 = vst [vmem:[%s208 + $0x74] sm:$0xf] %v3160
      %3673 = vst [vmem:[%s208 + $0x78] sm:$0xf] %v3161
      %3674 = vst [vmem:[%s208 + $0x7c] sm:$0xf] %v3162
      %3675 = vst [vmem:[%s208 + $0x80] sm:$0xf] %v3163
      %3676 = vst [vmem:[%s208 + $0x84] sm:$0xf] %v3164
      %3677 = vst [vmem:[%s208 + $0x88] sm:$0xf] %v3165
      %3678 = vst [vmem:[%s208 + $0x8c] sm:$0xf] %v3166
      %3679 = vst [vmem:[%s208 + $0x90] sm:$0xf] %v3167
      %3680 = vst [vmem:[%s208 + $0x94] sm:$0xf] %v3168
      %3681 = vst [vmem:[%s208 + $0x98] sm:$0xf] %v3169
      %3682 = vst [vmem:[%s208 + $0x9c] sm:$0xf] %v3170
      %3683 = vst [vmem:[%s208 + $0xa0] sm:$0xf] %v3171
      %3684 = vst [vmem:[%s208 + $0xa4] sm:$0xf] %v3172
      %3685 = vst [vmem:[%s208 + $0xa8] sm:$0xf] %v3173
      %3686 = vst [vmem:[%s208 + $0xac] sm:$0xf] %v3174
      %3687 = vst [vmem:[%s208 + $0xb0] sm:$0xf] %v3175
      %3688 = vst [vmem:[%s208 + $0xb4] sm:$0xf] %v3176
      %3689 = vst [vmem:[%s208 + $0xb8] sm:$0xf] %v3177
      %3690 = vst [vmem:[%s208 + $0xbc] sm:$0xf] %v3178
      %3691 = vst [vmem:[%s208 + $0xc0] sm:$0xf] %v3179
      %3692 = vst [vmem:[%s208 + $0xc4] sm:$0xf] %v3180
      %3693 = vst [vmem:[%s208 + $0xc8] sm:$0xf] %v3181
      %3694 = vst [vmem:[%s208 + $0xcc] sm:$0xf] %v3182
      %3695 = vst [vmem:[%s208 + $0xd0] sm:$0xf] %v3183
      %3696 = vst [vmem:[%s208 + $0xd4] sm:$0xf] %v3184
      %3697 = vst [vmem:[%s208 + $0xd8] sm:$0xf] %v3185
      %3698 = vst [vmem:[%s208 + $0xdc] sm:$0xf] %v3186
      %3699 = vst [vmem:[%s208 + $0xe0] sm:$0xf] %v3187
      %3700 = vst [vmem:[%s208 + $0xe4] sm:$0xf] %v3188
      %3701 = vst [vmem:[%s208 + $0xe8] sm:$0xf] %v3189
      %3702 = vst [vmem:[%s208 + $0xec] sm:$0xf] %v3190
      %3703 = vst [vmem:[%s208 + $0xf0] sm:$0xf] %v3191
      %3704 = vst [vmem:[%s208 + $0xf4] sm:$0xf] %v3192
      %3705 = vst [vmem:[%s208 + $0xf8] sm:$0xf] %v3193
      %3706 = vst [vmem:[%s208 + $0xfc] sm:$0xf] %v3194
      %3707 = vst [vmem:[%s208 + $0x100] sm:$0xf] %v3195
      %3708 = vst [vmem:[%s208 + $0x104] sm:$0xf] %v3196
      %3709 = vst [vmem:[%s208 + $0x108] sm:$0xf] %v3197
      %3710 = vst [vmem:[%s208 + $0x10c] sm:$0xf] %v3198
      %3711 = vst [vmem:[%s208 + $0x110] sm:$0xf] %v3199
      %3712 = vst [vmem:[%s208 + $0x114] sm:$0xf] %v3200
      %3713 = vst [vmem:[%s208 + $0x118] sm:$0xf] %v3201
      %3714 = vst [vmem:[%s208 + $0x11c] sm:$0xf] %v3202
      %3715 = vst [vmem:[%s208 + $0x120] sm:$0xf] %v3203
      %3716 = vst [vmem:[%s208 + $0x124] sm:$0xf] %v3204
      %3717 = vst [vmem:[%s208 + $0x128] sm:$0xf] %v3205
      %3718 = vst [vmem:[%s208 + $0x12c] sm:$0xf] %v3206
      %3719 = vst [vmem:[%s208 + $0x130] sm:$0xf] %v3207
      %3720 = vst [vmem:[%s208 + $0x134] sm:$0xf] %v3208
      %3721 = vst [vmem:[%s208 + $0x138] sm:$0xf] %v3209
      %3722 = vst [vmem:[%s208 + $0x13c] sm:$0xf] %v3210
      %3723 = vst [vmem:[%s208 + $0x140] sm:$0xf] %v3211
      %3724 = vst [vmem:[%s208 + $0x144] sm:$0xf] %v3212
      %3725 = vst [vmem:[%s208 + $0x148] sm:$0xf] %v3213
      %3726 = vst [vmem:[%s208 + $0x14c] sm:$0xf] %v3214
      %3727 = vst [vmem:[%s208 + $0x150] sm:$0xf] %v3215
      %3728 = vst [vmem:[%s208 + $0x154] sm:$0xf] %v3216
      %3729 = vst [vmem:[%s208 + $0x158] sm:$0xf] %v3217
      %3730 = vst [vmem:[%s208 + $0x15c] sm:$0xf] %v3218
      %3731 = vst [vmem:[%s208 + $0x160] sm:$0xf] %v3219
      %3732 = vst [vmem:[%s208 + $0x164] sm:$0xf] %v3220
      %3733 = vst [vmem:[%s208 + $0x168] sm:$0xf] %v3221
      %3734 = vst [vmem:[%s208 + $0x16c] sm:$0xf] %v3222
      %3735 = vst [vmem:[%s208 + $0x170] sm:$0xf] %v3223
      %3736 = vst [vmem:[%s208 + $0x174] sm:$0xf] %v3224
      %3737 = vst [vmem:[%s208 + $0x178] sm:$0xf] %v3225
      %3738 = vst [vmem:[%s208 + $0x17c] sm:$0xf] %v3226
      %3739 = vst [vmem:[%s208 + $0x180] sm:$0xf] %v3227
      %3740 = vst [vmem:[%s208 + $0x184] sm:$0xf] %v3228
      %3741 = vst [vmem:[%s208 + $0x188] sm:$0xf] %v3229
      %3742 = vst [vmem:[%s208 + $0x18c] sm:$0xf] %v3230
      %3743 = vst [vmem:[%s208 + $0x190] sm:$0xf] %v3231
      %3744 = vst [vmem:[%s208 + $0x194] sm:$0xf] %v3232
      %3745 = vst [vmem:[%s208 + $0x198] sm:$0xf] %v3233
      %3746 = vst [vmem:[%s208 + $0x19c] sm:$0xf] %v3234
      %3747 = vst [vmem:[%s208 + $0x1a0] sm:$0xf] %v3235
      %3748 = vst [vmem:[%s208 + $0x1a4] sm:$0xf] %v3236
      %3749 = vst [vmem:[%s208 + $0x1a8] sm:$0xf] %v3237
      %3750 = vst [vmem:[%s208 + $0x1ac] sm:$0xf] %v3238
      %3751 = vst [vmem:[%s208 + $0x1b0] sm:$0xf] %v3239
      %3752 = vst [vmem:[%s208 + $0x1b4] sm:$0xf] %v3240
      %3753 = vst [vmem:[%s208 + $0x1b8] sm:$0xf] %v3241
      %3754 = vst [vmem:[%s208 + $0x1bc] sm:$0xf] %v3242
      %3755 = vst [vmem:[%s208 + $0x1c0] sm:$0xf] %v3243
      %3756 = vst [vmem:[%s208 + $0x1c4] sm:$0xf] %v3244
      %3757 = vst [vmem:[%s208 + $0x1c8] sm:$0xf] %v3245
      %3758 = vst [vmem:[%s208 + $0x1cc] sm:$0xf] %v3246
      %3759 = vst [vmem:[%s208 + $0x1d0] sm:$0xf] %v3247
      %3760 = vst [vmem:[%s208 + $0x1d4] sm:$0xf] %v3248
      %3761 = vst [vmem:[%s208 + $0x1d8] sm:$0xf] %v3249
      %3762 = vst [vmem:[%s208 + $0x1dc] sm:$0xf] %v3250
      %3763 = vst [vmem:[%s208 + $0x1e0] sm:$0xf] %v3251
      %3764 = vst [vmem:[%s208 + $0x1e4] sm:$0xf] %v3252
      %3765 = vst [vmem:[%s208 + $0x1e8] sm:$0xf] %v3253
      %3766 = vst [vmem:[%s208 + $0x1ec] sm:$0xf] %v3254
      %3767 = vst [vmem:[%s208 + $0x1f0] sm:$0xf] %v3255
      %3768 = vst [vmem:[%s208 + $0x1f4] sm:$0xf] %v3256
      %3769 = vst [vmem:[%s208 + $0x1f8] sm:$0xf] %v3257
      %3770 = vst [vmem:[%s208 + $0x1fc] sm:$0xf] %v3258
      %3771 = vst [vmem:[%s208 + $0x200] sm:$0xf] %v3259
      %3772 = vst [vmem:[%s208 + $0x204] sm:$0xf] %v3260
      %3773 = vst [vmem:[%s208 + $0x208] sm:$0xf] %v3261
      %3774 = vst [vmem:[%s208 + $0x20c] sm:$0xf] %v3262
      %3775 = vst [vmem:[%s208 + $0x210] sm:$0xf] %v3263
      %3776 = vst [vmem:[%s208 + $0x214] sm:$0xf] %v3264
      %3777 = vst [vmem:[%s208 + $0x218] sm:$0xf] %v3265
      %3778 = vst [vmem:[%s208 + $0x21c] sm:$0xf] %v3266
      %3779 = vst [vmem:[%s208 + $0x220] sm:$0xf] %v3267
      %3780 = vst [vmem:[%s208 + $0x224] sm:$0xf] %v3268
      %3781 = vst [vmem:[%s208 + $0x228] sm:$0xf] %v3269
      %3782 = vst [vmem:[%s208 + $0x22c] sm:$0xf] %v3270
      %3783 = vst [vmem:[%s208 + $0x230] sm:$0xf] %v3271
      %3784 = vst [vmem:[%s208 + $0x234] sm:$0xf] %v3272
      %3785 = vst [vmem:[%s208 + $0x238] sm:$0xf] %v3273
      %3786 = vst [vmem:[%s208 + $0x23c] sm:$0xf] %v3274
      %3787 = vst [vmem:[%s208 + $0x240] sm:$0xf] %v3275
      %3788 = vst [vmem:[%s208 + $0x244] sm:$0xf] %v3276
      %3789 = vst [vmem:[%s208 + $0x248] sm:$0xf] %v3277
      %3790 = vst [vmem:[%s208 + $0x24c] sm:$0xf] %v3278
      %3791 = vst [vmem:[%s208 + $0x250] sm:$0xf] %v3279
      %3792 = vst [vmem:[%s208 + $0x254] sm:$0xf] %v3280
      %3793 = vst [vmem:[%s208 + $0x258] sm:$0xf] %v3281
      %3794 = vst [vmem:[%s208 + $0x25c] sm:$0xf] %v3282
      %3795 = vst [vmem:[%s208 + $0x260] sm:$0xf] %v3283
      %3796 = vst [vmem:[%s208 + $0x264] sm:$0xf] %v3284
      %3797 = vst [vmem:[%s208 + $0x268] sm:$0xf] %v3285
      %3798 = vst [vmem:[%s208 + $0x26c] sm:$0xf] %v3286
      %3799 = vst [vmem:[%s208 + $0x270] sm:$0xf] %v3287
      %3800 = vst [vmem:[%s208 + $0x274] sm:$0xf] %v3288
      %3801 = vst [vmem:[%s208 + $0x278] sm:$0xf] %v3289
      %3802 = vst [vmem:[%s208 + $0x27c] sm:$0xf] %v3290
      %3803 = vst [vmem:[%s208 + $0x280] sm:$0xf] %v3291
      %3804 = vst [vmem:[%s208 + $0x284] sm:$0xf] %v3292
      %3805 = vst [vmem:[%s208 + $0x288] sm:$0xf] %v3293
      %3806 = vst [vmem:[%s208 + $0x28c] sm:$0xf] %v3294
      %3807 = vst [vmem:[%s208 + $0x290] sm:$0xf] %v3295
      %3808 = vst [vmem:[%s208 + $0x294] sm:$0xf] %v3296
      %3809 = vst [vmem:[%s208 + $0x298] sm:$0xf] %v3297
      %3810 = vst [vmem:[%s208 + $0x29c] sm:$0xf] %v3298
      %3811 = vst [vmem:[%s208 + $0x2a0] sm:$0xf] %v3299
      %3812 = vst [vmem:[%s208 + $0x2a4] sm:$0xf] %v3300
      %3813 = vst [vmem:[%s208 + $0x2a8] sm:$0xf] %v3301
      %3814 = vst [vmem:[%s208 + $0x2ac] sm:$0xf] %v3302
      %3815 = vst [vmem:[%s208 + $0x2b0] sm:$0xf] %v3303
      %3816 = vst [vmem:[%s208 + $0x2b4] sm:$0xf] %v3304
      %3817 = vst [vmem:[%s208 + $0x2b8] sm:$0xf] %v3305
      %3818 = vst [vmem:[%s208 + $0x2bc] sm:$0xf] %v3306
      %3819 = vst [vmem:[%s208 + $0x2c0] sm:$0xf] %v3307
      %3820 = vst [vmem:[%s208 + $0x2c4] sm:$0xf] %v3308
      %3821 = vst [vmem:[%s208 + $0x2c8] sm:$0xf] %v3309
      %3822 = vst [vmem:[%s208 + $0x2cc] sm:$0xf] %v3310
      %3823 = vst [vmem:[%s208 + $0x2d0] sm:$0xf] %v3311
      %3824 = vst [vmem:[%s208 + $0x2d4] sm:$0xf] %v3312
      %3825 = vst [vmem:[%s208 + $0x2d8] sm:$0xf] %v3313
      %3826 = vst [vmem:[%s208 + $0x2dc] sm:$0xf] %v3314
      %3827 = vst [vmem:[%s208 + $0x2e0] sm:$0xf] %v3315
      %3828 = vst [vmem:[%s208 + $0x2e4] sm:$0xf] %v3316
      %3829 = vst [vmem:[%s208 + $0x2e8] sm:$0xf] %v3317
      %3830 = vst [vmem:[%s208 + $0x2ec] sm:$0xf] %v3318
      %3831 = vst [vmem:[%s208 + $0x2f0] sm:$0xf] %v3319
      %3832 = vst [vmem:[%s208 + $0x2f4] sm:$0xf] %v3320
      %3833 = vst [vmem:[%s208 + $0x2f8] sm:$0xf] %v3321
      %3834 = vst [vmem:[%s208 + $0x2fc] sm:$0xf] %v3322
      %3835 = vst [vmem:[%s208 + $0x300] sm:$0xf] %v3323
      %3836 = vst [vmem:[%s208 + $0x304] sm:$0xf] %v3324
      %3837 = vst [vmem:[%s208 + $0x308] sm:$0xf] %v3325
      %3838 = vst [vmem:[%s208 + $0x30c] sm:$0xf] %v3326
      %3839 = vst [vmem:[%s208 + $0x310] sm:$0xf] %v3327
      %3840 = vst [vmem:[%s208 + $0x314] sm:$0xf] %v3328
      %3841 = vst [vmem:[%s208 + $0x318] sm:$0xf] %v3329
      %3842 = vst [vmem:[%s208 + $0x31c] sm:$0xf] %v3330
      %3843 = vst [vmem:[%s208 + $0x320] sm:$0xf] %v3331
      %3844 = vst [vmem:[%s208 + $0x324] sm:$0xf] %v3332
      %3845 = vst [vmem:[%s208 + $0x328] sm:$0xf] %v3333
      %3846 = vst [vmem:[%s208 + $0x32c] sm:$0xf] %v3334
      %3847 = vst [vmem:[%s208 + $0x330] sm:$0xf] %v3335
      %3848 = vst [vmem:[%s208 + $0x334] sm:$0xf] %v3336
      %3849 = vst [vmem:[%s208 + $0x338] sm:$0xf] %v3337
      %3850 = vst [vmem:[%s208 + $0x33c] sm:$0xf] %v3338
      %3851 = vst [vmem:[%s208 + $0x340] sm:$0xf] %v3339
      %3852 = vst [vmem:[%s208 + $0x344] sm:$0xf] %v3340
      %3853 = vst [vmem:[%s208 + $0x348] sm:$0xf] %v3341
      %3854 = vst [vmem:[%s208 + $0x34c] sm:$0xf] %v3342
      %3855 = vst [vmem:[%s208 + $0x350] sm:$0xf] %v3343
      %3856 = vst [vmem:[%s208 + $0x354] sm:$0xf] %v3344
      %3857 = vst [vmem:[%s208 + $0x358] sm:$0xf] %v3345
      %3858 = vst [vmem:[%s208 + $0x35c] sm:$0xf] %v3346
      %3859 = vst [vmem:[%s208 + $0x360] sm:$0xf] %v3347
      %3860 = vst [vmem:[%s208 + $0x364] sm:$0xf] %v3348
      %3861 = vst [vmem:[%s208 + $0x368] sm:$0xf] %v3349
      %3862 = vst [vmem:[%s208 + $0x36c] sm:$0xf] %v3350
      %3863 = vst [vmem:[%s208 + $0x370] sm:$0xf] %v3351
      %3864 = vst [vmem:[%s208 + $0x374] sm:$0xf] %v3352
      %3865 = vst [vmem:[%s208 + $0x378] sm:$0xf] %v3353
      %3866 = vst [vmem:[%s208 + $0x37c] sm:$0xf] %v3354
      %3867 = vst [vmem:[%s208 + $0x380] sm:$0xf] %v3355
      %3868 = vst [vmem:[%s208 + $0x384] sm:$0xf] %v3356
      %3869 = vst [vmem:[%s208 + $0x388] sm:$0xf] %v3357
      %3870 = vst [vmem:[%s208 + $0x38c] sm:$0xf] %v3358
      %3871 = vst [vmem:[%s208 + $0x390] sm:$0xf] %v3359
      %3872 = vst [vmem:[%s208 + $0x394] sm:$0xf] %v3360
      %3873 = vst [vmem:[%s208 + $0x398] sm:$0xf] %v3361
      %3874 = vst [vmem:[%s208 + $0x39c] sm:$0xf] %v3362
      %3875 = vst [vmem:[%s208 + $0x3a0] sm:$0xf] %v3363
      %3876 = vst [vmem:[%s208 + $0x3a4] sm:$0xf] %v3364
      %3877 = vst [vmem:[%s208 + $0x3a8] sm:$0xf] %v3365
      %3878 = vst [vmem:[%s208 + $0x3ac] sm:$0xf] %v3366
      %3879 = vst [vmem:[%s208 + $0x3b0] sm:$0xf] %v3367
      %3880 = vst [vmem:[%s208 + $0x3b4] sm:$0xf] %v3368
      %3881 = vst [vmem:[%s208 + $0x3b8] sm:$0xf] %v3369
      %3882 = vst [vmem:[%s208 + $0x3bc] sm:$0xf] %v3370
      %3883 = vst [vmem:[%s208 + $0x3c0] sm:$0xf] %v3371
      %3884 = vst [vmem:[%s208 + $0x3c4] sm:$0xf] %v3372
      %3885 = vst [vmem:[%s208 + $0x3c8] sm:$0xf] %v3373
      %3886 = vst [vmem:[%s208 + $0x3cc] sm:$0xf] %v3374
      %3887 = vst [vmem:[%s208 + $0x3d0] sm:$0xf] %v3375
      %3888 = vst [vmem:[%s208 + $0x3d4] sm:$0xf] %v3376
      %3889 = vst [vmem:[%s208 + $0x3d8] sm:$0xf] %v3377
      %3890 = vst [vmem:[%s208 + $0x3dc] sm:$0xf] %v3378
      %3891 = vst [vmem:[%s208 + $0x3e0] sm:$0xf] %v3379
      %3892 = vst [vmem:[%s208 + $0x3e4] sm:$0xf] %v3380
      %3893 = vst [vmem:[%s208 + $0x3e8] sm:$0xf] %v3381
      %3894 = vst [vmem:[%s208 + $0x3ec] sm:$0xf] %v3382
      %3895 = vst [vmem:[%s208 + $0x3f0] sm:$0xf] %v3383
      %3896 = vst [vmem:[%s208 + $0x3f4] sm:$0xf] %v3384
      %3897 = vst [vmem:[%s208 + $0x3f8] sm:$0xf] %v3385
      %3898 = vst [vmem:[%s208 + $0x3fc] sm:$0xf] %v3386
      %s3899 = smul.u32 256, %s19
      %p3900 = scmp.lt.s32.totalorder %s18, 1
      %s3901 = scalar_select %p3900, %s18, 1
      %p3902 = scmp.lt.s32.totalorder %s3899, 255
      %s3903 = scalar_select %p3902, %s3899, 255
      %s3904 = smul.addr %s3901, 256
      %s3905 = sadd.s32 %s3903, %s3904
      %s3906 = smul.addr %s3905, 4
      %s3907 = scalar_lea.vmem %s3, %s3906
      // Predicated region
      $region33: #{_lambda_.8} parent=31 // pred_check
        %p3908 = pneg %p116
      $region34: #{_lambda_.8} parent=31 // pred_check_branch
        %3910 = sbr.rel (%p3908) target = $region36
      $region35: #{_lambda_.8} parent=31 // pred_region
        %s3911 = smul.u32 256, %s19
      $region36: #{_lambda_.8} parent=31 // pred_fallthru
        _
    $region32: #{_lambda_.8} parent=5 // pred_fallthru
      _
    %p3912 = scmp.le.s32.totalorder 2, %s9
    // Predicated region
    $region37: #{_lambda_.8} parent=5 // pred_check
      %p3913 = pneg %p3912
    $region38: #{_lambda_.8} parent=5 // pred_check_branch
      %3915 = sbr.rel (%p3913) target = $region40
    $region39: #{_lambda_.8} parent=5 // pred_region
      %s3916 = ssub.s32 %s9, 2
      // Predicated region
      $region41: #{_lambda_.8} parent=39 // pred_check
        %p3917 = pneg %p122
      $region42: #{_lambda_.8} parent=39 // pred_check_branch
        %3919 = sbr.rel (%p3917) target = $region44
      $region43: #{_lambda_.8} parent=39 // pred_region
        %s3920 = smul.u32 256, %s21
        %p3921 = scmp.lt.s32.totalorder %s20, 1
        %s3922 = scalar_select %p3921, %s20, 1
        %p3923 = scmp.lt.s32.totalorder %s3920, 255
        %s3924 = scalar_select %p3923, %s3920, 255
        %s3925 = smul.addr %s3922, 256
        %s3926 = sadd.s32 %s3924, %s3925
        %s3927 = smul.addr %s3926, 4
        %s3928 = scalar_lea.vmem %s3, %s3927
      $region44: #{_lambda_.8} parent=39 // pred_fallthru
        _
    $region40: #{_lambda_.8} parent=5 // pred_fallthru
      _
  $region6: #{_lambda_.8} parent=0 // loop_footer
    %s13 = sadd.s32 1, %s9
  $region7: #{_lambda_.8} parent=0 // loop_footer_branch
    %8 = sbr.rel target = $region3
  $region8: #{_lambda_.8} parent=0 // loop_exit
    _

// kernel: _lambda_.10
$region0: #{_lambda_.10}
  #allocation0 [shape = 'u32[]', space=smem, size = 0x4, offset = 0x4, fixed_abs, tag = 'smem constant byte address 0x4 - core index']
  #allocation1 [shape = 'u32[144,128]{1,0:T(1,128)}', space=vmem, size = 0x12000, scoped, tag = 'internal scratch']
  %s0 = inlined_call_operand.vmem [shape: bf16[2,512,128], index: 0, kind: input, shape index: {}]
  %s1 = inlined_call_operand.vmem [shape: bf16[128,128], index: 1, kind: input, shape index: {}]
  %s2 = inlined_call_operand.vmem [shape: f32[1,128], index: 2, kind: input, shape index: {}]
  %s3 = inlined_call_operand.vmem [shape: bf16[2,512,128], index: 3, kind: output, shape index: {}]
  %s4 = sld [smem:[#allocation0]]
  $region45: #{_lambda_.10} parent=0
    _
  %s6 = ssub.s32 1, %s4
  %s7 = scalar_select 0, %s6, %s4
  loop: start=0, step=1, limit=4
  $region2: #{_lambda_.10} parent=0 // loop_pre_header
    _
  $region3: #{_lambda_.10} parent=0 // loop_header
    %s9 = sphi 0, %s13
    %p10 = scmp.ge.s32.totalorder %s9, 4
    %s16 = sphi 0, %s28
    %s17 = sphi 0, %s24
    %s18 = sphi 0, %s16
    %s19 = sphi 0, %s17
    %s20 = sphi 0, %s18
    %s21 = sphi 0, %s19
    %s33 = sphi 0, %s35
    %s36 = sphi 0, %s33
    %s37 = sphi 0, %s36
    %s53 = sphi 0, %s37
    %s57 = sphi 0, %s57
    %s59 = sphi 0, %s57
    %s60 = sphi 0, %s59
    %s74 = sphi 0, %s60
    %s78 = sphi 0, %s78
    %s80 = sphi 0, %s78
    %s81 = sphi 0, %s80
    %s95 = sphi 0, %s81
    %s103 = sphi 0, %s105
    %s106 = sphi 0, %s103
    %s107 = sphi 0, %s106
    %s123 = sphi 0, %s107
  $region4: #{_lambda_.10} parent=0 // loop_header_branch
    %12 = sbr.rel (%p10) target = $region8
  $region5: #{_lambda_.10} parent=0 // loop_body
    %s14 = ssub.s32 %s9, 1
    %s15 = ssub.s32 %s9, 2
    %s22 = sadd.s32 1, %s17
    %p23 = scmp.ge.s32.totalorder %s22, 1
    %s24 = scalar_select %p23, 0, %s22
    %s25 = sadd.s32 1, %s16
    %s26 = scalar_select %p23, %s25, %s16
    %p27 = scmp.ge.s32.totalorder %s26, 2
    %s28 = scalar_select %p27, 0, %s26
    %s29 = ssub.s32 %s16, %s28
    %s30 = ssub.s32 %s17, %s24
    %s31 = sor.u32 %s29, %s30
    %p32 = scmp.eq.s32.totalorder %s31, 0
    %s34 = sadd.s32 %s33, 1
    %s35 = scalar_select %p32, %s33, %s34
    %p38 = pneg %p32
    %p39 = scmp.eq.s32.totalorder %s9, 1
    %p40 = por %p38, %p39
    %p41 = scmp.ne.s32.totalorder %s33, %s36
    %p42 = scmp.eq.s32.totalorder %s9, 0
    %p43 = por %p41, %p42
    %p44 = scmp.ne.s32.totalorder %s33, %s36
    %p45 = scmp.eq.s32.totalorder %s14, 1
    %p46 = por %p44, %p45
    %p47 = scmp.ne.s32.totalorder %s36, %s37
    %p48 = scmp.eq.s32.totalorder %s14, 0
    %p49 = por %p47, %p48
    %p50 = scmp.ne.s32.totalorder %s36, %s37
    %p51 = scmp.eq.s32.totalorder %s15, 1
    %p52 = por %p50, %p51
    %p54 = scmp.ne.s32.totalorder %s37, %s53
    %p55 = scmp.eq.s32.totalorder %s15, 0
    %p56 = por %p54, %p55
    %s58 = sadd.s32 %s57, 1
    %p61 = scmp.eq.s32.totalorder %s9, 1
    %p62 = scmp.ne.s32.totalorder %s57, %s59
    %p63 = scmp.eq.s32.totalorder %s9, 0
    %p64 = por %p62, %p63
    %p65 = scmp.ne.s32.totalorder %s57, %s59
    %p66 = scmp.eq.s32.totalorder %s14, 1
    %p67 = por %p65, %p66
    %p68 = scmp.ne.s32.totalorder %s59, %s60
    %p69 = scmp.eq.s32.totalorder %s14, 0
    %p70 = por %p68, %p69
    %p71 = scmp.ne.s32.totalorder %s59, %s60
    %p72 = scmp.eq.s32.totalorder %s15, 1
    %p73 = por %p71, %p72
    %p75 = scmp.ne.s32.totalorder %s60, %s74
    %p76 = scmp.eq.s32.totalorder %s15, 0
    %p77 = por %p75, %p76
    %s79 = sadd.s32 %s78, 1
    %p82 = scmp.eq.s32.totalorder %s9, 1
    %p83 = scmp.ne.s32.totalorder %s78, %s80
    %p84 = scmp.eq.s32.totalorder %s9, 0
    %p85 = por %p83, %p84
    %p86 = scmp.ne.s32.totalorder %s78, %s80
    %p87 = scmp.eq.s32.totalorder %s14, 1
    %p88 = por %p86, %p87
    %p89 = scmp.ne.s32.totalorder %s80, %s81
    %p90 = scmp.eq.s32.totalorder %s14, 0
    %p91 = por %p89, %p90
    %p92 = scmp.ne.s32.totalorder %s80, %s81
    %p93 = scmp.eq.s32.totalorder %s15, 1
    %p94 = por %p92, %p93
    %p96 = scmp.ne.s32.totalorder %s81, %s95
    %p97 = scmp.eq.s32.totalorder %s15, 0
    %p98 = por %p96, %p97
    %s99 = ssub.s32 %s16, %s28
    %s100 = ssub.s32 %s17, %s24
    %s101 = sor.u32 %s99, %s100
    %p102 = scmp.eq.s32.totalorder %s101, 0
    %s104 = sadd.s32 %s103, 1
    %s105 = scalar_select %p102, %s103, %s104
    %p108 = pneg %p102
    %p109 = scmp.eq.s32.totalorder %s9, 1
    %p110 = por %p108, %p109
    %p111 = scmp.ne.s32.totalorder %s103, %s106
    %p112 = scmp.eq.s32.totalorder %s9, 0
    %p113 = por %p111, %p112
    %p114 = scmp.ne.s32.totalorder %s103, %s106
    %p115 = scmp.eq.s32.totalorder %s14, 1
    %p116 = por %p114, %p115
    %p117 = scmp.ne.s32.totalorder %s106, %s107
    %p118 = scmp.eq.s32.totalorder %s14, 0
    %p119 = por %p117, %p118
    %p120 = scmp.ne.s32.totalorder %s106, %s107
    %p121 = scmp.eq.s32.totalorder %s15, 1
    %p122 = por %p120, %p121
    %p124 = scmp.ne.s32.totalorder %s107, %s123
    %p125 = scmp.eq.s32.totalorder %s15, 0
    %p126 = por %p124, %p125
    %p127 = scmp.le.s32.totalorder 1, %s9
    %p128 = scmp.lt.s32.totalorder %s9, 3
    %p129 = pnand %p127, %p128
    %p130 = pneg %p129
    // Predicated region
    $region9: #{_lambda_.10} parent=5 // pred_check
      _
    $region10: #{_lambda_.10} parent=5 // pred_check_branch
      %132 = sbr.rel (%p129) target = $region12
    $region11: #{_lambda_.10} parent=5 // pred_region
      %s133 = ssub.s32 %s9, 1
      // Predicated region
      $region13: #{_lambda_.10} parent=11 // pred_check
        %p134 = pneg %p70
      $region14: #{_lambda_.10} parent=11 // pred_check_branch
        %136 = sbr.rel (%p134) target = $region16
      $region15: #{_lambda_.10} parent=11 // pred_region
        _
      $region16: #{_lambda_.10} parent=11 // pred_fallthru
        _
      // Predicated region
      $region17: #{_lambda_.10} parent=11 // pred_check
        %p137 = pneg %p91
      $region18: #{_lambda_.10} parent=11 // pred_check_branch
        %139 = sbr.rel (%p137) target = $region20
      $region19: #{_lambda_.10} parent=11 // pred_region
        _
      $region20: #{_lambda_.10} parent=11 // pred_fallthru
        _
    $region12: #{_lambda_.10} parent=5 // pred_fallthru
      _
    %p140 = scmp.lt.s32.totalorder %s9, 2
    // Predicated region
    $region21: #{_lambda_.10} parent=5 // pred_check
      %p141 = pneg %p140
    $region22: #{_lambda_.10} parent=5 // pred_check_branch
      %143 = sbr.rel (%p141) target = $region24
    $region23: #{_lambda_.10} parent=5 // pred_region
      // Predicated region
      $region25: #{_lambda_.10} parent=23 // pred_check
        %p144 = pneg %p43
      $region26: #{_lambda_.10} parent=23 // pred_check_branch
        %146 = sbr.rel (%p144) target = $region28
      $region27: #{_lambda_.10} parent=23 // pred_region
        %s147 = smul.u32 64, %s17
        %p148 = scmp.lt.s32.totalorder %s16, 1
        %s149 = scalar_select %p148, %s16, 1
        %p150 = scmp.lt.s32.totalorder %s147, 63
        %s151 = scalar_select %p150, %s147, 63
        %s152 = smul.addr %s149, 64
        %s153 = sadd.s32 %s151, %s152
        %s154 = smul.addr %s153, 4
        %s155 = scalar_lea.vmem %s0, %s154
        %s156 = smul.u32 64, %s17
      $region28: #{_lambda_.10} parent=23 // pred_fallthru
        _
    $region24: #{_lambda_.10} parent=5 // pred_fallthru
      _
    %p157 = scmp.le.s32.totalorder 1, %s9
    %p158 = scmp.lt.s32.totalorder %s9, 3
    %p159 = pnand %p157, %p158
    %p160 = pneg %p159
    // Predicated region
    $region29: #{_lambda_.10} parent=5 // pred_check
      _
    $region30: #{_lambda_.10} parent=5 // pred_check_branch
      %162 = sbr.rel (%p159) target = $region32
    $region31: #{_lambda_.10} parent=5 // pred_region
      %s163 = ssub.s32 %s9, 1
      %s164 = smul.u32 64, %s19
      %p165 = scmp.lt.s32.totalorder %s18, 1
      %s166 = scalar_select %p165, %s18, 1
      %p167 = scmp.lt.s32.totalorder %s164, 63
      %s168 = scalar_select %p167, %s164, 63
      %s169 = smul.addr %s166, 64
      %s170 = sadd.s32 %s168, %s169
      %s171 = smul.addr %s170, 4
      %s172 = scalar_lea.vmem %s0, %s171
      %p173 = pneg %p49
      %p174 = pneg %p46
      %p175 = pneg %p70
      %p176 = pneg %p67
      %p177 = pneg %p91
      %p178 = pneg %p88
      %p179 = pneg %p119
      %p180 = pneg %p116
      %s181 = smul.u32 64, %s19
      %p182 = scmp.lt.s32.totalorder %s18, 1
      %s183 = scalar_select %p182, %s18, 1
      %p184 = scmp.lt.s32.totalorder %s181, 63
      %s185 = scalar_select %p184, %s181, 63
      %s186 = smul.addr %s183, 64
      %s187 = sadd.s32 %s185, %s186
      %s188 = smul.addr %s187, 4
      %s189 = scalar_lea.vmem %s3, %s188
      %s190 = smul.u32 64, %s19
      %p191 = scmp.lt.s32.totalorder %s18, 1
      %s192 = scalar_select %p191, %s18, 1
      %p193 = scmp.lt.s32.totalorder %s190, 63
      %s194 = scalar_select %p193, %s190, 63
      %s195 = smul.addr %s192, 64
      %s196 = sadd.s32 %s194, %s195
      %s197 = smul.addr %s196, 4
      %s198 = scalar_lea.vmem %s0, %s197
      %s199 = smul.u32 64, %s19
      %s200 = smul.u32 64, %s19
      %p201 = scmp.lt.s32.totalorder %s18, 1
      %s202 = scalar_select %p201, %s18, 1
      %p203 = scmp.lt.s32.totalorder %s200, 63
      %s204 = scalar_select %p203, %s200, 63
      %s205 = smul.addr %s202, 64
      %s206 = sadd.s32 %s204, %s205
      %s207 = smul.addr %s206, 4
      %s208 = scalar_lea.vmem %s3, %s207
      %s209 = smul.u32 64, %s19
      %v211 = vld [vmem:[%s198] sm:$0xf]
      %v212 = vld [vmem:[%s198 + $0x4] sm:$0xf]
      %v213 = vld [vmem:[%s198 + $0x8] sm:$0xf]
      %v214 = vld [vmem:[%s198 + $0xc] sm:$0xf]
      %v215 = vld [vmem:[%s198 + $0x10] sm:$0xf]
      %v216 = vld [vmem:[%s198 + $0x14] sm:$0xf]
      %v217 = vld [vmem:[%s198 + $0x18] sm:$0xf]
      %v218 = vld [vmem:[%s198 + $0x1c] sm:$0xf]
      %v219 = vld [vmem:[%s198 + $0x20] sm:$0xf]
      %v220 = vld [vmem:[%s198 + $0x24] sm:$0xf]
      %v221 = vld [vmem:[%s198 + $0x28] sm:$0xf]
      %v222 = vld [vmem:[%s198 + $0x2c] sm:$0xf]
      %v223 = vld [vmem:[%s198 + $0x30] sm:$0xf]
      %v224 = vld [vmem:[%s198 + $0x34] sm:$0xf]
      %v225 = vld [vmem:[%s198 + $0x38] sm:$0xf]
      %v226 = vld [vmem:[%s198 + $0x3c] sm:$0xf]
      %v227 = vld [vmem:[%s198 + $0x40] sm:$0xf]
      %v228 = vld [vmem:[%s198 + $0x44] sm:$0xf]
      %v229 = vld [vmem:[%s198 + $0x48] sm:$0xf]
      %v230 = vld [vmem:[%s198 + $0x4c] sm:$0xf]
      %v231 = vld [vmem:[%s198 + $0x50] sm:$0xf]
      %v232 = vld [vmem:[%s198 + $0x54] sm:$0xf]
      %v233 = vld [vmem:[%s198 + $0x58] sm:$0xf]
      %v234 = vld [vmem:[%s198 + $0x5c] sm:$0xf]
      %v235 = vld [vmem:[%s198 + $0x60] sm:$0xf]
      %v236 = vld [vmem:[%s198 + $0x64] sm:$0xf]
      %v237 = vld [vmem:[%s198 + $0x68] sm:$0xf]
      %v238 = vld [vmem:[%s198 + $0x6c] sm:$0xf]
      %v239 = vld [vmem:[%s198 + $0x70] sm:$0xf]
      %v240 = vld [vmem:[%s198 + $0x74] sm:$0xf]
      %v241 = vld [vmem:[%s198 + $0x78] sm:$0xf]
      %v242 = vld [vmem:[%s198 + $0x7c] sm:$0xf]
      %v243 = vld [vmem:[%s198 + $0x80] sm:$0xf]
      %v244 = vld [vmem:[%s198 + $0x84] sm:$0xf]
      %v245 = vld [vmem:[%s198 + $0x88] sm:$0xf]
      %v246 = vld [vmem:[%s198 + $0x8c] sm:$0xf]
      %v247 = vld [vmem:[%s198 + $0x90] sm:$0xf]
      %v248 = vld [vmem:[%s198 + $0x94] sm:$0xf]
      %v249 = vld [vmem:[%s198 + $0x98] sm:$0xf]
      %v250 = vld [vmem:[%s198 + $0x9c] sm:$0xf]
      %v251 = vld [vmem:[%s198 + $0xa0] sm:$0xf]
      %v252 = vld [vmem:[%s198 + $0xa4] sm:$0xf]
      %v253 = vld [vmem:[%s198 + $0xa8] sm:$0xf]
      %v254 = vld [vmem:[%s198 + $0xac] sm:$0xf]
      %v255 = vld [vmem:[%s198 + $0xb0] sm:$0xf]
      %v256 = vld [vmem:[%s198 + $0xb4] sm:$0xf]
      %v257 = vld [vmem:[%s198 + $0xb8] sm:$0xf]
      %v258 = vld [vmem:[%s198 + $0xbc] sm:$0xf]
      %v259 = vld [vmem:[%s198 + $0xc0] sm:$0xf]
      %v260 = vld [vmem:[%s198 + $0xc4] sm:$0xf]
      %v261 = vld [vmem:[%s198 + $0xc8] sm:$0xf]
      %v262 = vld [vmem:[%s198 + $0xcc] sm:$0xf]
      %v263 = vld [vmem:[%s198 + $0xd0] sm:$0xf]
      %v264 = vld [vmem:[%s198 + $0xd4] sm:$0xf]
      %v265 = vld [vmem:[%s198 + $0xd8] sm:$0xf]
      %v266 = vld [vmem:[%s198 + $0xdc] sm:$0xf]
      %v267 = vld [vmem:[%s198 + $0xe0] sm:$0xf]
      %v268 = vld [vmem:[%s198 + $0xe4] sm:$0xf]
      %v269 = vld [vmem:[%s198 + $0xe8] sm:$0xf]
      %v270 = vld [vmem:[%s198 + $0xec] sm:$0xf]
      %v271 = vld [vmem:[%s198 + $0xf0] sm:$0xf]
      %v272 = vld [vmem:[%s198 + $0xf4] sm:$0xf]
      %v273 = vld [vmem:[%s198 + $0xf8] sm:$0xf]
      %v274 = vld [vmem:[%s198 + $0xfc] sm:$0xf]
      %v275 = vld [vmem:[%s1] sm:$0xf]
      %v276 = vld [vmem:[%s1 + $0x4] sm:$0xf]
      %v277 = vld [vmem:[%s1 + $0x8] sm:$0xf]
      %v278 = vld [vmem:[%s1 + $0xc] sm:$0xf]
      %v279 = vld [vmem:[%s1 + $0x10] sm:$0xf]
      %v280 = vld [vmem:[%s1 + $0x14] sm:$0xf]
      %v281 = vld [vmem:[%s1 + $0x18] sm:$0xf]
      %v282 = vld [vmem:[%s1 + $0x1c] sm:$0xf]
      %v283 = vld [vmem:[%s1 + $0x20] sm:$0xf]
      %v284 = vld [vmem:[%s1 + $0x24] sm:$0xf]
      %v285 = vld [vmem:[%s1 + $0x28] sm:$0xf]
      %v286 = vld [vmem:[%s1 + $0x2c] sm:$0xf]
      %v287 = vld [vmem:[%s1 + $0x30] sm:$0xf]
      %v288 = vld [vmem:[%s1 + $0x34] sm:$0xf]
      %v289 = vld [vmem:[%s1 + $0x38] sm:$0xf]
      %v290 = vld [vmem:[%s1 + $0x3c] sm:$0xf]
      %v291 = vld [vmem:[%s2] sm:$0x1]
      %v293 = vlaneseq
      %v294 = vshrl.u32 %v293, 7
      %v295 = vsub.s32 0, %v294
      %v296 = vrot.slane %v291, %v295
      %v362 = vunpack.c.l.b16 %v211
      %v363 = vunpack.c.l.b16 %v212
      %v364 = vunpack.c.l.b16 %v213
      %v365 = vunpack.c.l.b16 %v214
      %v366 = vunpack.c.l.b16 %v215
      %v367 = vunpack.c.l.b16 %v216
      %v368 = vunpack.c.l.b16 %v217
      %v369 = vunpack.c.l.b16 %v218
      %v370 = vunpack.c.l.b16 %v219
      %v371 = vunpack.c.l.b16 %v220
      %v372 = vunpack.c.l.b16 %v221
      %v373 = vunpack.c.l.b16 %v222
      %v374 = vunpack.c.l.b16 %v223
      %v375 = vunpack.c.l.b16 %v224
      %v376 = vunpack.c.l.b16 %v225
      %v377 = vunpack.c.l.b16 %v226
      %v378 = vunpack.c.l.b16 %v227
      %v379 = vunpack.c.l.b16 %v228
      %v380 = vunpack.c.l.b16 %v229
      %v381 = vunpack.c.l.b16 %v230
      %v382 = vunpack.c.l.b16 %v231
      %v383 = vunpack.c.l.b16 %v232
      %v384 = vunpack.c.l.b16 %v233
      %v385 = vunpack.c.l.b16 %v234
      %v386 = vunpack.c.l.b16 %v235
      %v387 = vunpack.c.l.b16 %v236
      %v388 = vunpack.c.l.b16 %v237
      %v389 = vunpack.c.l.b16 %v238
      %v390 = vunpack.c.l.b16 %v239
      %v391 = vunpack.c.l.b16 %v240
      %v392 = vunpack.c.l.b16 %v241
      %v393 = vunpack.c.l.b16 %v242
      %v394 = vunpack.c.l.b16 %v243
      %v395 = vunpack.c.l.b16 %v244
      %v396 = vunpack.c.l.b16 %v245
      %v397 = vunpack.c.l.b16 %v246
      %v398 = vunpack.c.l.b16 %v247
      %v399 = vunpack.c.l.b16 %v248
      %v400 = vunpack.c.l.b16 %v249
      %v401 = vunpack.c.l.b16 %v250
      %v402 = vunpack.c.l.b16 %v251
      %v403 = vunpack.c.l.b16 %v252
      %v404 = vunpack.c.l.b16 %v253
      %v405 = vunpack.c.l.b16 %v254
      %v406 = vunpack.c.l.b16 %v255
      %v407 = vunpack.c.l.b16 %v256
      %v408 = vunpack.c.l.b16 %v257
      %v409 = vunpack.c.l.b16 %v258
      %v410 = vunpack.c.l.b16 %v259
      %v411 = vunpack.c.l.b16 %v260
      %v412 = vunpack.c.l.b16 %v261
      %v413 = vunpack.c.l.b16 %v262
      %v414 = vunpack.c.l.b16 %v263
      %v415 = vunpack.c.l.b16 %v264
      %v416 = vunpack.c.l.b16 %v265
      %v417 = vunpack.c.l.b16 %v266
      %v418 = vunpack.c.l.b16 %v267
      %v419 = vunpack.c.l.b16 %v268
      %v420 = vunpack.c.l.b16 %v269
      %v421 = vunpack.c.l.b16 %v270
      %v422 = vunpack.c.l.b16 %v271
      %v423 = vunpack.c.l.b16 %v272
      %v424 = vunpack.c.l.b16 %v273
      %v425 = vunpack.c.l.b16 %v274
      %v426 = vpack.c.b16 %v363, %v362
      %v427 = vpack.c.b16 %v365, %v364
      %v428 = vpack.c.b16 %v367, %v366
      %v429 = vpack.c.b16 %v369, %v368
      %v430 = vpack.c.b16 %v371, %v370
      %v431 = vpack.c.b16 %v373, %v372
      %v432 = vpack.c.b16 %v375, %v374
      %v433 = vpack.c.b16 %v377, %v376
      %v434 = vpack.c.b16 %v379, %v378
      %v435 = vpack.c.b16 %v381, %v380
      %v436 = vpack.c.b16 %v383, %v382
      %v437 = vpack.c.b16 %v385, %v384
      %v438 = vpack.c.b16 %v387, %v386
      %v439 = vpack.c.b16 %v389, %v388
      %v440 = vpack.c.b16 %v391, %v390
      %v441 = vpack.c.b16 %v393, %v392
      %v442 = vpack.c.b16 %v395, %v394
      %v443 = vpack.c.b16 %v397, %v396
      %v444 = vpack.c.b16 %v399, %v398
      %v445 = vpack.c.b16 %v401, %v400
      %v446 = vpack.c.b16 %v403, %v402
      %v447 = vpack.c.b16 %v405, %v404
      %v448 = vpack.c.b16 %v407, %v406
      %v449 = vpack.c.b16 %v409, %v408
      %v450 = vpack.c.b16 %v411, %v410
      %v451 = vpack.c.b16 %v413, %v412
      %v452 = vpack.c.b16 %v415, %v414
      %v453 = vpack.c.b16 %v417, %v416
      %v454 = vpack.c.b16 %v419, %v418
      %v455 = vpack.c.b16 %v421, %v420
      %v456 = vpack.c.b16 %v423, %v422
      %v457 = vpack.c.b16 %v425, %v424
      %v506 = vunpack.c.l.b16 %v275
      %v507 = vunpack.c.l.b16 %v276
      %v508 = vunpack.c.l.b16 %v277
      %v509 = vunpack.c.l.b16 %v278
      %v510 = vunpack.c.l.b16 %v279
      %v511 = vunpack.c.l.b16 %v280
      %v512 = vunpack.c.l.b16 %v281
      %v513 = vunpack.c.l.b16 %v282
      %v514 = vunpack.c.l.b16 %v283
      %v515 = vunpack.c.l.b16 %v284
      %v516 = vunpack.c.l.b16 %v285
      %v517 = vunpack.c.l.b16 %v286
      %v518 = vunpack.c.l.b16 %v287
      %v519 = vunpack.c.l.b16 %v288
      %v520 = vunpack.c.l.b16 %v289
      %v521 = vunpack.c.l.b16 %v290
      %v522 = vpack.c.b16 %v507, %v506
      %v523 = vpack.c.b16 %v509, %v508
      %v524 = vpack.c.b16 %v511, %v510
      %v525 = vpack.c.b16 %v513, %v512
      %v526 = vpack.c.b16 %v515, %v514
      %v527 = vpack.c.b16 %v517, %v516
      %v528 = vpack.c.b16 %v519, %v518
      %v529 = vpack.c.b16 %v521, %v520
      %538 = vmatprep.subr.bf16.mxu0 0
      %539 = vmatpush1.bf16.msra.mxu0 %v529
      %540 = vmatprep.subr.bf16.mxu0 0
      %541 = vmatpush1.bf16.msra.mxu0 %v528
      %542 = vmatprep.subr.bf16.mxu0 0
      %543 = vmatpush1.bf16.msra.mxu0 %v527
      %544 = vmatprep.subr.bf16.mxu0 0
      %545 = vmatpush1.bf16.msra.mxu0 %v526
      %546 = vmatprep.subr.bf16.mxu0 0
      %547 = vmatpush1.bf16.msra.mxu0 %v525
      %548 = vmatprep.subr.bf16.mxu0 0
      %549 = vmatpush1.bf16.msra.mxu0 %v524
      %550 = vmatprep.subr.bf16.mxu0 0
      %551 = vmatpush1.bf16.msra.mxu0 %v523
      %552 = vmatprep.subr.bf16.mxu0 0
      %553 = vmatpush1.bf16.msra.mxu0 %v522
      %554 = vmatprep.subr.bf16.mxu0 0
      %555 = vmatpush2.bf16.msra.mxu0 0
      %556 = vmatprep.subr.bf16.mxu0 0
      %557 = vmatpush2.bf16.msra.mxu0 0
      %558 = vmatprep.subr.bf16.mxu0 0
      %559 = vmatpush2.bf16.msra.mxu0 0
      %560 = vmatprep.subr.bf16.mxu0 0
      %561 = vmatpush2.bf16.msra.mxu0 0
      %562 = vmatprep.subr.bf16.mxu0 0
      %563 = vmatpush2.bf16.msra.mxu0 0
      %564 = vmatprep.subr.bf16.mxu0 0
      %565 = vmatpush2.bf16.msra.mxu0 0
      %566 = vmatprep.subr.bf16.mxu0 0
      %567 = vmatpush2.bf16.msra.mxu0 0
      %568 = vmatprep.subr.bf16.mxu0 0
      %569 = vmatpush2.bf16.msra.mxu0 0
      %570 = vmatprep.mubr.bf16.mxu0 0
      %571 = vmatmul.mubr.bf16.gmra.mxu0 %v426
      %v572 = vpop.f32.mrf.mxu0
      %v573 = vadd.f32 %v296, %v572
      %v574 = vpop.f32.mrf.mxu0
      %v575 = vpop.f32.mrf.mxu0
      %v576 = vadd.f32 %v296, %v575
      %v577 = vpop.f32.mrf.mxu0
      %578 = vmatprep.mubr.bf16.mxu0 0
      %579 = vmatmul.mubr.bf16.gmra.mxu0 %v427
      %v580 = vpop.f32.mrf.mxu0
      %v581 = vadd.f32 %v296, %v580
      %v582 = vpop.f32.mrf.mxu0
      %v583 = vpop.f32.mrf.mxu0
      %v584 = vadd.f32 %v296, %v583
      %v585 = vpop.f32.mrf.mxu0
      %586 = vmatprep.mubr.bf16.mxu0 0
      %587 = vmatmul.mubr.bf16.gmra.mxu0 %v428
      %v588 = vpop.f32.mrf.mxu0
      %v589 = vadd.f32 %v296, %v588
      %v590 = vpop.f32.mrf.mxu0
      %v591 = vpop.f32.mrf.mxu0
      %v592 = vadd.f32 %v296, %v591
      %v593 = vpop.f32.mrf.mxu0
      %594 = vmatprep.mubr.bf16.mxu0 0
      %595 = vmatmul.mubr.bf16.gmra.mxu0 %v429
      %v596 = vpop.f32.mrf.mxu0
      %v597 = vadd.f32 %v296, %v596
      %v598 = vpop.f32.mrf.mxu0
      %v599 = vpop.f32.mrf.mxu0
      %v600 = vadd.f32 %v296, %v599
      %v601 = vpop.f32.mrf.mxu0
      %602 = vmatprep.mubr.bf16.mxu0 0
      %603 = vmatmul.mubr.bf16.gmra.mxu0 %v430
      %v604 = vpop.f32.mrf.mxu0
      %v605 = vadd.f32 %v296, %v604
      %v606 = vpop.f32.mrf.mxu0
      %v607 = vpop.f32.mrf.mxu0
      %v608 = vadd.f32 %v296, %v607
      %v609 = vpop.f32.mrf.mxu0
      %610 = vmatprep.mubr.bf16.mxu0 0
      %611 = vmatmul.mubr.bf16.gmra.mxu0 %v431
      %v612 = vpop.f32.mrf.mxu0
      %v613 = vadd.f32 %v296, %v612
      %v614 = vpop.f32.mrf.mxu0
      %v615 = vpop.f32.mrf.mxu0
      %v616 = vadd.f32 %v296, %v615
      %v617 = vpop.f32.mrf.mxu0
      %618 = vmatprep.mubr.bf16.mxu0 0
      %619 = vmatmul.mubr.bf16.gmra.mxu0 %v432
      %v620 = vpop.f32.mrf.mxu0
      %v621 = vadd.f32 %v296, %v620
      %v622 = vpop.f32.mrf.mxu0
      %v623 = vpop.f32.mrf.mxu0
      %v624 = vadd.f32 %v296, %v623
      %v625 = vpop.f32.mrf.mxu0
      %626 = vmatprep.mubr.bf16.mxu0 0
      %627 = vmatmul.mubr.bf16.gmra.mxu0 %v433
      %v628 = vpop.f32.mrf.mxu0
      %v629 = vadd.f32 %v296, %v628
      %v630 = vpop.f32.mrf.mxu0
      %v631 = vpop.f32.mrf.mxu0
      %v632 = vadd.f32 %v296, %v631
      %v633 = vpop.f32.mrf.mxu0
      %634 = vmatprep.mubr.bf16.mxu0 0
      %635 = vmatmul.mubr.bf16.gmra.mxu0 %v434
      %v636 = vpop.f32.mrf.mxu0
      %v637 = vadd.f32 %v296, %v636
      %v638 = vpop.f32.mrf.mxu0
      %v639 = vpop.f32.mrf.mxu0
      %v640 = vadd.f32 %v296, %v639
      %v641 = vpop.f32.mrf.mxu0
      %642 = vmatprep.mubr.bf16.mxu0 0
      %643 = vmatmul.mubr.bf16.gmra.mxu0 %v435
      %v644 = vpop.f32.mrf.mxu0
      %v645 = vadd.f32 %v296, %v644
      %v646 = vpop.f32.mrf.mxu0
      %v647 = vpop.f32.mrf.mxu0
      %v648 = vadd.f32 %v296, %v647
      %v649 = vpop.f32.mrf.mxu0
      %650 = vmatprep.mubr.bf16.mxu0 0
      %651 = vmatmul.mubr.bf16.gmra.mxu0 %v436
      %v652 = vpop.f32.mrf.mxu0
      %v653 = vadd.f32 %v296, %v652
      %v654 = vpop.f32.mrf.mxu0
      %v655 = vpop.f32.mrf.mxu0
      %v656 = vadd.f32 %v296, %v655
      %v657 = vpop.f32.mrf.mxu0
      %658 = vmatprep.mubr.bf16.mxu0 0
      %659 = vmatmul.mubr.bf16.gmra.mxu0 %v437
      %v660 = vpop.f32.mrf.mxu0
      %v661 = vadd.f32 %v296, %v660
      %v662 = vpop.f32.mrf.mxu0
      %v663 = vpop.f32.mrf.mxu0
      %v664 = vadd.f32 %v296, %v663
      %v665 = vpop.f32.mrf.mxu0
      %666 = vmatprep.mubr.bf16.mxu0 0
      %667 = vmatmul.mubr.bf16.gmra.mxu0 %v438
      %v668 = vpop.f32.mrf.mxu0
      %v669 = vadd.f32 %v296, %v668
      %v670 = vpop.f32.mrf.mxu0
      %v671 = vpop.f32.mrf.mxu0
      %v672 = vadd.f32 %v296, %v671
      %v673 = vpop.f32.mrf.mxu0
      %674 = vmatprep.mubr.bf16.mxu0 0
      %675 = vmatmul.mubr.bf16.gmra.mxu0 %v439
      %v676 = vpop.f32.mrf.mxu0
      %v677 = vadd.f32 %v296, %v676
      %v678 = vpop.f32.mrf.mxu0
      %v679 = vpop.f32.mrf.mxu0
      %v680 = vadd.f32 %v296, %v679
      %v681 = vpop.f32.mrf.mxu0
      %682 = vmatprep.mubr.bf16.mxu0 0
      %683 = vmatmul.mubr.bf16.gmra.mxu0 %v440
      %v684 = vpop.f32.mrf.mxu0
      %v685 = vadd.f32 %v296, %v684
      %v686 = vpop.f32.mrf.mxu0
      %v687 = vpop.f32.mrf.mxu0
      %v688 = vadd.f32 %v296, %v687
      %v689 = vpop.f32.mrf.mxu0
      %690 = vmatprep.mubr.bf16.mxu0 0
      %691 = vmatmul.mubr.bf16.gmra.mxu0 %v441
      %v692 = vpop.f32.mrf.mxu0
      %v693 = vadd.f32 %v296, %v692
      %v694 = vpop.f32.mrf.mxu0
      %v695 = vpop.f32.mrf.mxu0
      %v696 = vadd.f32 %v296, %v695
      %v697 = vpop.f32.mrf.mxu0
      %698 = vmatprep.mubr.bf16.mxu0 0
      %699 = vmatmul.mubr.bf16.gmra.mxu0 %v442
      %v700 = vpop.f32.mrf.mxu0
      %v701 = vadd.f32 %v296, %v700
      %v702 = vpop.f32.mrf.mxu0
      %v703 = vpop.f32.mrf.mxu0
      %v704 = vadd.f32 %v296, %v703
      %v705 = vpop.f32.mrf.mxu0
      %706 = vmatprep.mubr.bf16.mxu0 0
      %707 = vmatmul.mubr.bf16.gmra.mxu0 %v443
      %v708 = vpop.f32.mrf.mxu0
      %v709 = vadd.f32 %v296, %v708
      %v710 = vpop.f32.mrf.mxu0
      %v711 = vpop.f32.mrf.mxu0
      %v712 = vadd.f32 %v296, %v711
      %v713 = vpop.f32.mrf.mxu0
      %714 = vmatprep.mubr.bf16.mxu0 0
      %715 = vmatmul.mubr.bf16.gmra.mxu0 %v444
      %v716 = vpop.f32.mrf.mxu0
      %v717 = vadd.f32 %v296, %v716
      %v718 = vpop.f32.mrf.mxu0
      %v719 = vpop.f32.mrf.mxu0
      %v720 = vadd.f32 %v296, %v719
      %v721 = vpop.f32.mrf.mxu0
      %722 = vmatprep.mubr.bf16.mxu0 0
      %723 = vmatmul.mubr.bf16.gmra.mxu0 %v445
      %v724 = vpop.f32.mrf.mxu0
      %v725 = vadd.f32 %v296, %v724
      %v726 = vpop.f32.mrf.mxu0
      %v727 = vpop.f32.mrf.mxu0
      %v728 = vadd.f32 %v296, %v727
      %v729 = vpop.f32.mrf.mxu0
      %730 = vmatprep.mubr.bf16.mxu0 0
      %731 = vmatmul.mubr.bf16.gmra.mxu0 %v446
      %v732 = vpop.f32.mrf.mxu0
      %v733 = vadd.f32 %v296, %v732
      %v734 = vpop.f32.mrf.mxu0
      %v735 = vpop.f32.mrf.mxu0
      %v736 = vadd.f32 %v296, %v735
      %v737 = vpop.f32.mrf.mxu0
      %738 = vmatprep.mubr.bf16.mxu0 0
      %739 = vmatmul.mubr.bf16.gmra.mxu0 %v447
      %v740 = vpop.f32.mrf.mxu0
      %v741 = vadd.f32 %v296, %v740
      %v742 = vpop.f32.mrf.mxu0
      %v743 = vpop.f32.mrf.mxu0
      %v744 = vadd.f32 %v296, %v743
      %v745 = vpop.f32.mrf.mxu0
      %746 = vmatprep.mubr.bf16.mxu0 0
      %747 = vmatmul.mubr.bf16.gmra.mxu0 %v448
      %v748 = vpop.f32.mrf.mxu0
      %v749 = vadd.f32 %v296, %v748
      %v750 = vpop.f32.mrf.mxu0
      %v751 = vpop.f32.mrf.mxu0
      %v752 = vadd.f32 %v296, %v751
      %v753 = vpop.f32.mrf.mxu0
      %754 = vmatprep.mubr.bf16.mxu0 0
      %755 = vmatmul.mubr.bf16.gmra.mxu0 %v449
      %v756 = vpop.f32.mrf.mxu0
      %v757 = vadd.f32 %v296, %v756
      %v758 = vpop.f32.mrf.mxu0
      %v759 = vpop.f32.mrf.mxu0
      %v760 = vadd.f32 %v296, %v759
      %v761 = vpop.f32.mrf.mxu0
      %762 = vmatprep.mubr.bf16.mxu0 0
      %763 = vmatmul.mubr.bf16.gmra.mxu0 %v450
      %v764 = vpop.f32.mrf.mxu0
      %v765 = vadd.f32 %v296, %v764
      %v766 = vpop.f32.mrf.mxu0
      %v767 = vpop.f32.mrf.mxu0
      %v768 = vadd.f32 %v296, %v767
      %v769 = vpop.f32.mrf.mxu0
      %770 = vmatprep.mubr.bf16.mxu0 0
      %771 = vmatmul.mubr.bf16.gmra.mxu0 %v451
      %v772 = vpop.f32.mrf.mxu0
      %v773 = vadd.f32 %v296, %v772
      %v774 = vpop.f32.mrf.mxu0
      %v775 = vpop.f32.mrf.mxu0
      %v776 = vadd.f32 %v296, %v775
      %v777 = vpop.f32.mrf.mxu0
      %778 = vmatprep.mubr.bf16.mxu0 0
      %779 = vmatmul.mubr.bf16.gmra.mxu0 %v452
      %v780 = vpop.f32.mrf.mxu0
      %v781 = vadd.f32 %v296, %v780
      %v782 = vpop.f32.mrf.mxu0
      %v783 = vpop.f32.mrf.mxu0
      %v784 = vadd.f32 %v296, %v783
      %v785 = vpop.f32.mrf.mxu0
      %786 = vmatprep.mubr.bf16.mxu0 0
      %787 = vmatmul.mubr.bf16.gmra.mxu0 %v453
      %v788 = vpop.f32.mrf.mxu0
      %v789 = vadd.f32 %v296, %v788
      %v790 = vpop.f32.mrf.mxu0
      %v791 = vpop.f32.mrf.mxu0
      %v792 = vadd.f32 %v296, %v791
      %v793 = vpop.f32.mrf.mxu0
      %794 = vmatprep.mubr.bf16.mxu0 0
      %795 = vmatmul.mubr.bf16.gmra.mxu0 %v454
      %v796 = vpop.f32.mrf.mxu0
      %v797 = vadd.f32 %v296, %v796
      %v798 = vpop.f32.mrf.mxu0
      %v799 = vpop.f32.mrf.mxu0
      %v800 = vadd.f32 %v296, %v799
      %v801 = vpop.f32.mrf.mxu0
      %802 = vmatprep.mubr.bf16.mxu0 0
      %803 = vmatmul.mubr.bf16.gmra.mxu0 %v455
      %v804 = vpop.f32.mrf.mxu0
      %v805 = vadd.f32 %v296, %v804
      %v806 = vpop.f32.mrf.mxu0
      %v807 = vpop.f32.mrf.mxu0
      %v808 = vadd.f32 %v296, %v807
      %v809 = vpop.f32.mrf.mxu0
      %810 = vmatprep.mubr.bf16.mxu0 0
      %811 = vmatmul.mubr.bf16.gmra.mxu0 %v456
      %v812 = vpop.f32.mrf.mxu0
      %v813 = vadd.f32 %v296, %v812
      %v814 = vpop.f32.mrf.mxu0
      %v815 = vpop.f32.mrf.mxu0
      %v816 = vadd.f32 %v296, %v815
      %v817 = vpop.f32.mrf.mxu0
      %818 = vmatprep.mubr.bf16.mxu0 0
      %819 = vmatmul.mubr.bf16.gmra.mxu0 %v457
      %v820 = vpop.f32.mrf.mxu0
      %v821 = vadd.f32 %v296, %v820
      %v822 = vpop.f32.mrf.mxu0
      %v823 = vpop.f32.mrf.mxu0
      %v824 = vadd.f32 %v296, %v823
      %v825 = vpop.f32.mrf.mxu0
      %826 = vdwg.mxu0
      %v827 = vmax.f32 %v573, 0.0
      %v828 = vmax.f32 %v576, 0.0
      %v829 = vmax.f32 %v581, 0.0
      %v830 = vmax.f32 %v584, 0.0
      %v831 = vmax.f32 %v589, 0.0
      %v832 = vmax.f32 %v592, 0.0
      %v833 = vmax.f32 %v597, 0.0
      %v834 = vmax.f32 %v600, 0.0
      %v835 = vmax.f32 %v605, 0.0
      %v836 = vmax.f32 %v608, 0.0
      %v837 = vmax.f32 %v613, 0.0
      %v838 = vmax.f32 %v616, 0.0
      %v839 = vmax.f32 %v621, 0.0
      %v840 = vmax.f32 %v624, 0.0
      %v841 = vmax.f32 %v629, 0.0
      %v842 = vmax.f32 %v632, 0.0
      %v843 = vmax.f32 %v637, 0.0
      %v844 = vmax.f32 %v640, 0.0
      %v845 = vmax.f32 %v645, 0.0
      %v846 = vmax.f32 %v648, 0.0
      %v847 = vmax.f32 %v653, 0.0
      %v848 = vmax.f32 %v656, 0.0
      %v849 = vmax.f32 %v661, 0.0
      %v850 = vmax.f32 %v664, 0.0
      %v851 = vmax.f32 %v669, 0.0
      %v852 = vmax.f32 %v672, 0.0
      %v853 = vmax.f32 %v677, 0.0
      %v854 = vmax.f32 %v680, 0.0
      %v855 = vmax.f32 %v685, 0.0
      %v856 = vmax.f32 %v688, 0.0
      %v857 = vmax.f32 %v693, 0.0
      %v858 = vmax.f32 %v696, 0.0
      %v859 = vmax.f32 %v701, 0.0
      %v860 = vmax.f32 %v704, 0.0
      %v861 = vmax.f32 %v709, 0.0
      %v862 = vmax.f32 %v712, 0.0
      %v863 = vmax.f32 %v717, 0.0
      %v864 = vmax.f32 %v720, 0.0
      %v865 = vmax.f32 %v725, 0.0
      %v866 = vmax.f32 %v728, 0.0
      %v867 = vmax.f32 %v733, 0.0
      %v868 = vmax.f32 %v736, 0.0
      %v869 = vmax.f32 %v741, 0.0
      %v870 = vmax.f32 %v744, 0.0
      %v871 = vmax.f32 %v749, 0.0
      %v872 = vmax.f32 %v752, 0.0
      %v873 = vmax.f32 %v757, 0.0
      %v874 = vmax.f32 %v760, 0.0
      %v875 = vmax.f32 %v765, 0.0
      %v876 = vmax.f32 %v768, 0.0
      %v877 = vmax.f32 %v773, 0.0
      %v878 = vmax.f32 %v776, 0.0
      %v879 = vmax.f32 %v781, 0.0
      %v880 = vmax.f32 %v784, 0.0
      %v881 = vmax.f32 %v789, 0.0
      %v882 = vmax.f32 %v792, 0.0
      %v883 = vmax.f32 %v797, 0.0
      %v884 = vmax.f32 %v800, 0.0
      %v885 = vmax.f32 %v805, 0.0
      %v886 = vmax.f32 %v808, 0.0
      %v887 = vmax.f32 %v813, 0.0
      %v888 = vmax.f32 %v816, 0.0
      %v889 = vmax.f32 %v821, 0.0
      %v890 = vmax.f32 %v824, 0.0
      %v891 = vpack.c.bf16 %v828, %v827
      %v892 = vpack.c.bf16 %v830, %v829
      %v893 = vpack.c.bf16 %v832, %v831
      %v894 = vpack.c.bf16 %v834, %v833
      %v895 = vpack.c.bf16 %v836, %v835
      %v896 = vpack.c.bf16 %v838, %v837
      %v897 = vpack.c.bf16 %v840, %v839
      %v898 = vpack.c.bf16 %v842, %v841
      %v899 = vpack.c.bf16 %v844, %v843
      %v900 = vpack.c.bf16 %v846, %v845
      %v901 = vpack.c.bf16 %v848, %v847
      %v902 = vpack.c.bf16 %v850, %v849
      %v903 = vpack.c.bf16 %v852, %v851
      %v904 = vpack.c.bf16 %v854, %v853
      %v905 = vpack.c.bf16 %v856, %v855
      %v906 = vpack.c.bf16 %v858, %v857
      %v907 = vpack.c.bf16 %v860, %v859
      %v908 = vpack.c.bf16 %v862, %v861
      %v909 = vpack.c.bf16 %v864, %v863
      %v910 = vpack.c.bf16 %v866, %v865
      %v911 = vpack.c.bf16 %v868, %v867
      %v912 = vpack.c.bf16 %v870, %v869
      %v913 = vpack.c.bf16 %v872, %v871
      %v914 = vpack.c.bf16 %v874, %v873
      %v915 = vpack.c.bf16 %v876, %v875
      %v916 = vpack.c.bf16 %v878, %v877
      %v917 = vpack.c.bf16 %v880, %v879
      %v918 = vpack.c.bf16 %v882, %v881
      %v919 = vpack.c.bf16 %v884, %v883
      %v920 = vpack.c.bf16 %v886, %v885
      %v921 = vpack.c.bf16 %v888, %v887
      %v922 = vpack.c.bf16 %v890, %v889
      %v955 = vunpack.c.l.b16 %v891
      %v956 = vunpack.c.h.b16 %v891
      %v957 = vunpack.c.l.b16 %v892
      %v958 = vunpack.c.h.b16 %v892
      %v959 = vunpack.c.l.b16 %v893
      %v960 = vunpack.c.h.b16 %v893
      %v961 = vunpack.c.l.b16 %v894
      %v962 = vunpack.c.h.b16 %v894
      %v963 = vunpack.c.l.b16 %v895
      %v964 = vunpack.c.h.b16 %v895
      %v965 = vunpack.c.l.b16 %v896
      %v966 = vunpack.c.h.b16 %v896
      %v967 = vunpack.c.l.b16 %v897
      %v968 = vunpack.c.h.b16 %v897
      %v969 = vunpack.c.l.b16 %v898
      %v970 = vunpack.c.h.b16 %v898
      %v971 = vunpack.c.l.b16 %v899
      %v972 = vunpack.c.h.b16 %v899
      %v973 = vunpack.c.l.b16 %v900
      %v974 = vunpack.c.h.b16 %v900
      %v975 = vunpack.c.l.b16 %v901
      %v976 = vunpack.c.h.b16 %v901
      %v977 = vunpack.c.l.b16 %v902
      %v978 = vunpack.c.h.b16 %v902
      %v979 = vunpack.c.l.b16 %v903
      %v980 = vunpack.c.h.b16 %v903
      %v981 = vunpack.c.l.b16 %v904
      %v982 = vunpack.c.h.b16 %v904
      %v983 = vunpack.c.l.b16 %v905
      %v984 = vunpack.c.h.b16 %v905
      %v985 = vunpack.c.l.b16 %v906
      %v986 = vunpack.c.h.b16 %v906
      %v987 = vunpack.c.l.b16 %v907
      %v988 = vunpack.c.h.b16 %v907
      %v989 = vunpack.c.l.b16 %v908
      %v990 = vunpack.c.h.b16 %v908
      %v991 = vunpack.c.l.b16 %v909
      %v992 = vunpack.c.h.b16 %v909
      %v993 = vunpack.c.l.b16 %v910
      %v994 = vunpack.c.h.b16 %v910
      %v995 = vunpack.c.l.b16 %v911
      %v996 = vunpack.c.h.b16 %v911
      %v997 = vunpack.c.l.b16 %v912
      %v998 = vunpack.c.h.b16 %v912
      %v999 = vunpack.c.l.b16 %v913
      %v1000 = vunpack.c.h.b16 %v913
      %v1001 = vunpack.c.l.b16 %v914
      %v1002 = vunpack.c.h.b16 %v914
      %v1003 = vunpack.c.l.b16 %v915
      %v1004 = vunpack.c.h.b16 %v915
      %v1005 = vunpack.c.l.b16 %v916
      %v1006 = vunpack.c.h.b16 %v916
      %v1007 = vunpack.c.l.b16 %v917
      %v1008 = vunpack.c.h.b16 %v917
      %v1009 = vunpack.c.l.b16 %v918
      %v1010 = vunpack.c.h.b16 %v918
      %v1011 = vunpack.c.l.b16 %v919
      %v1012 = vunpack.c.h.b16 %v919
      %v1013 = vunpack.c.l.b16 %v920
      %v1014 = vunpack.c.h.b16 %v920
      %v1015 = vunpack.c.l.b16 %v921
      %v1016 = vunpack.c.h.b16 %v921
      %v1017 = vunpack.c.l.b16 %v922
      %v1018 = vunpack.c.h.b16 %v922
      %v1019 = vpack.c.b16 %v955, %v955
      %v1020 = vpack.c.b16 %v956, %v956
      %v1021 = vpack.c.b16 %v957, %v957
      %v1022 = vpack.c.b16 %v958, %v958
      %v1023 = vpack.c.b16 %v959, %v959
      %v1024 = vpack.c.b16 %v960, %v960
      %v1025 = vpack.c.b16 %v961, %v961
      %v1026 = vpack.c.b16 %v962, %v962
      %v1027 = vpack.c.b16 %v963, %v963
      %v1028 = vpack.c.b16 %v964, %v964
      %v1029 = vpack.c.b16 %v965, %v965
      %v1030 = vpack.c.b16 %v966, %v966
      %v1031 = vpack.c.b16 %v967, %v967
      %v1032 = vpack.c.b16 %v968, %v968
      %v1033 = vpack.c.b16 %v969, %v969
      %v1034 = vpack.c.b16 %v970, %v970
      %v1035 = vpack.c.b16 %v971, %v971
      %v1036 = vpack.c.b16 %v972, %v972
      %v1037 = vpack.c.b16 %v973, %v973
      %v1038 = vpack.c.b16 %v974, %v974
      %v1039 = vpack.c.b16 %v975, %v975
      %v1040 = vpack.c.b16 %v976, %v976
      %v1041 = vpack.c.b16 %v977, %v977
      %v1042 = vpack.c.b16 %v978, %v978
      %v1043 = vpack.c.b16 %v979, %v979
      %v1044 = vpack.c.b16 %v980, %v980
      %v1045 = vpack.c.b16 %v981, %v981
      %v1046 = vpack.c.b16 %v982, %v982
      %v1047 = vpack.c.b16 %v983, %v983
      %v1048 = vpack.c.b16 %v984, %v984
      %v1049 = vpack.c.b16 %v985, %v985
      %v1050 = vpack.c.b16 %v986, %v986
      %v1051 = vpack.c.b16 %v987, %v987
      %v1052 = vpack.c.b16 %v988, %v988
      %v1053 = vpack.c.b16 %v989, %v989
      %v1054 = vpack.c.b16 %v990, %v990
      %v1055 = vpack.c.b16 %v991, %v991
      %v1056 = vpack.c.b16 %v992, %v992
      %v1057 = vpack.c.b16 %v993, %v993
      %v1058 = vpack.c.b16 %v994, %v994
      %v1059 = vpack.c.b16 %v995, %v995
      %v1060 = vpack.c.b16 %v996, %v996
      %v1061 = vpack.c.b16 %v997, %v997
      %v1062 = vpack.c.b16 %v998, %v998
      %v1063 = vpack.c.b16 %v999, %v999
      %v1064 = vpack.c.b16 %v1000, %v1000
      %v1065 = vpack.c.b16 %v1001, %v1001
      %v1066 = vpack.c.b16 %v1002, %v1002
      %v1067 = vpack.c.b16 %v1003, %v1003
      %v1068 = vpack.c.b16 %v1004, %v1004
      %v1069 = vpack.c.b16 %v1005, %v1005
      %v1070 = vpack.c.b16 %v1006, %v1006
      %v1071 = vpack.c.b16 %v1007, %v1007
      %v1072 = vpack.c.b16 %v1008, %v1008
      %v1073 = vpack.c.b16 %v1009, %v1009
      %v1074 = vpack.c.b16 %v1010, %v1010
      %v1075 = vpack.c.b16 %v1011, %v1011
      %v1076 = vpack.c.b16 %v1012, %v1012
      %v1077 = vpack.c.b16 %v1013, %v1013
      %v1078 = vpack.c.b16 %v1014, %v1014
      %v1079 = vpack.c.b16 %v1015, %v1015
      %v1080 = vpack.c.b16 %v1016, %v1016
      %v1081 = vpack.c.b16 %v1017, %v1017
      %v1082 = vpack.c.b16 %v1018, %v1018
      %1147 = vst [vmem:[%s208] sm:$0xf] %v1019
      %1148 = vst [vmem:[%s208 + $0x4] sm:$0xf] %v1020
      %1149 = vst [vmem:[%s208 + $0x8] sm:$0xf] %v1021
      %1150 = vst [vmem:[%s208 + $0xc] sm:$0xf] %v1022
      %1151 = vst [vmem:[%s208 + $0x10] sm:$0xf] %v1023
      %1152 = vst [vmem:[%s208 + $0x14] sm:$0xf] %v1024
      %1153 = vst [vmem:[%s208 + $0x18] sm:$0xf] %v1025
      %1154 = vst [vmem:[%s208 + $0x1c] sm:$0xf] %v1026
      %1155 = vst [vmem:[%s208 + $0x20] sm:$0xf] %v1027
      %1156 = vst [vmem:[%s208 + $0x24] sm:$0xf] %v1028
      %1157 = vst [vmem:[%s208 + $0x28] sm:$0xf] %v1029
      %1158 = vst [vmem:[%s208 + $0x2c] sm:$0xf] %v1030
      %1159 = vst [vmem:[%s208 + $0x30] sm:$0xf] %v1031
      %1160 = vst [vmem:[%s208 + $0x34] sm:$0xf] %v1032
      %1161 = vst [vmem:[%s208 + $0x38] sm:$0xf] %v1033
      %1162 = vst [vmem:[%s208 + $0x3c] sm:$0xf] %v1034
      %1163 = vst [vmem:[%s208 + $0x40] sm:$0xf] %v1035
      %1164 = vst [vmem:[%s208 + $0x44] sm:$0xf] %v1036
      %1165 = vst [vmem:[%s208 + $0x48] sm:$0xf] %v1037
      %1166 = vst [vmem:[%s208 + $0x4c] sm:$0xf] %v1038
      %1167 = vst [vmem:[%s208 + $0x50] sm:$0xf] %v1039
      %1168 = vst [vmem:[%s208 + $0x54] sm:$0xf] %v1040
      %1169 = vst [vmem:[%s208 + $0x58] sm:$0xf] %v1041
      %1170 = vst [vmem:[%s208 + $0x5c] sm:$0xf] %v1042
      %1171 = vst [vmem:[%s208 + $0x60] sm:$0xf] %v1043
      %1172 = vst [vmem:[%s208 + $0x64] sm:$0xf] %v1044
      %1173 = vst [vmem:[%s208 + $0x68] sm:$0xf] %v1045
      %1174 = vst [vmem:[%s208 + $0x6c] sm:$0xf] %v1046
      %1175 = vst [vmem:[%s208 + $0x70] sm:$0xf] %v1047
      %1176 = vst [vmem:[%s208 + $0x74] sm:$0xf] %v1048
      %1177 = vst [vmem:[%s208 + $0x78] sm:$0xf] %v1049
      %1178 = vst [vmem:[%s208 + $0x7c] sm:$0xf] %v1050
      %1179 = vst [vmem:[%s208 + $0x80] sm:$0xf] %v1051
      %1180 = vst [vmem:[%s208 + $0x84] sm:$0xf] %v1052
      %1181 = vst [vmem:[%s208 + $0x88] sm:$0xf] %v1053
      %1182 = vst [vmem:[%s208 + $0x8c] sm:$0xf] %v1054
      %1183 = vst [vmem:[%s208 + $0x90] sm:$0xf] %v1055
      %1184 = vst [vmem:[%s208 + $0x94] sm:$0xf] %v1056
      %1185 = vst [vmem:[%s208 + $0x98] sm:$0xf] %v1057
      %1186 = vst [vmem:[%s208 + $0x9c] sm:$0xf] %v1058
      %1187 = vst [vmem:[%s208 + $0xa0] sm:$0xf] %v1059
      %1188 = vst [vmem:[%s208 + $0xa4] sm:$0xf] %v1060
      %1189 = vst [vmem:[%s208 + $0xa8] sm:$0xf] %v1061
      %1190 = vst [vmem:[%s208 + $0xac] sm:$0xf] %v1062
      %1191 = vst [vmem:[%s208 + $0xb0] sm:$0xf] %v1063
      %1192 = vst [vmem:[%s208 + $0xb4] sm:$0xf] %v1064
      %1193 = vst [vmem:[%s208 + $0xb8] sm:$0xf] %v1065
      %1194 = vst [vmem:[%s208 + $0xbc] sm:$0xf] %v1066
      %1195 = vst [vmem:[%s208 + $0xc0] sm:$0xf] %v1067
      %1196 = vst [vmem:[%s208 + $0xc4] sm:$0xf] %v1068
      %1197 = vst [vmem:[%s208 + $0xc8] sm:$0xf] %v1069
      %1198 = vst [vmem:[%s208 + $0xcc] sm:$0xf] %v1070
      %1199 = vst [vmem:[%s208 + $0xd0] sm:$0xf] %v1071
      %1200 = vst [vmem:[%s208 + $0xd4] sm:$0xf] %v1072
      %1201 = vst [vmem:[%s208 + $0xd8] sm:$0xf] %v1073
      %1202 = vst [vmem:[%s208 + $0xdc] sm:$0xf] %v1074
      %1203 = vst [vmem:[%s208 + $0xe0] sm:$0xf] %v1075
      %1204 = vst [vmem:[%s208 + $0xe4] sm:$0xf] %v1076
      %1205 = vst [vmem:[%s208 + $0xe8] sm:$0xf] %v1077
      %1206 = vst [vmem:[%s208 + $0xec] sm:$0xf] %v1078
      %1207 = vst [vmem:[%s208 + $0xf0] sm:$0xf] %v1079
      %1208 = vst [vmem:[%s208 + $0xf4] sm:$0xf] %v1080
      %1209 = vst [vmem:[%s208 + $0xf8] sm:$0xf] %v1081
      %1210 = vst [vmem:[%s208 + $0xfc] sm:$0xf] %v1082
      %s1211 = smul.u32 64, %s19
      %p1212 = scmp.lt.s32.totalorder %s18, 1
      %s1213 = scalar_select %p1212, %s18, 1
      %p1214 = scmp.lt.s32.totalorder %s1211, 63
      %s1215 = scalar_select %p1214, %s1211, 63
      %s1216 = smul.addr %s1213, 64
      %s1217 = sadd.s32 %s1215, %s1216
      %s1218 = smul.addr %s1217, 4
      %s1219 = scalar_lea.vmem %s3, %s1218
      // Predicated region
      $region33: #{_lambda_.10} parent=31 // pred_check
        %p1220 = pneg %p116
      $region34: #{_lambda_.10} parent=31 // pred_check_branch
        %1222 = sbr.rel (%p1220) target = $region36
      $region35: #{_lambda_.10} parent=31 // pred_region
        %s1223 = smul.u32 64, %s19
      $region36: #{_lambda_.10} parent=31 // pred_fallthru
        _
    $region32: #{_lambda_.10} parent=5 // pred_fallthru
      _
    %p1224 = scmp.le.s32.totalorder 2, %s9
    // Predicated region
    $region37: #{_lambda_.10} parent=5 // pred_check
      %p1225 = pneg %p1224
    $region38: #{_lambda_.10} parent=5 // pred_check_branch
      %1227 = sbr.rel (%p1225) target = $region40
    $region39: #{_lambda_.10} parent=5 // pred_region
      %s1228 = ssub.s32 %s9, 2
      // Predicated region
      $region41: #{_lambda_.10} parent=39 // pred_check
        %p1229 = pneg %p122
      $region42: #{_lambda_.10} parent=39 // pred_check_branch
        %1231 = sbr.rel (%p1229) target = $region44
      $region43: #{_lambda_.10} parent=39 // pred_region
        %s1232 = smul.u32 64, %s21
        %p1233 = scmp.lt.s32.totalorder %s20, 1
        %s1234 = scalar_select %p1233, %s20, 1
        %p1235 = scmp.lt.s32.totalorder %s1232, 63
        %s1236 = scalar_select %p1235, %s1232, 63
        %s1237 = smul.addr %s1234, 64
        %s1238 = sadd.s32 %s1236, %s1237
        %s1239 = smul.addr %s1238, 4
        %s1240 = scalar_lea.vmem %s3, %s1239
      $region44: #{_lambda_.10} parent=39 // pred_fallthru
        _
    $region40: #{_lambda_.10} parent=5 // pred_fallthru
      _
  $region6: #{_lambda_.10} parent=0 // loop_footer
    %s13 = sadd.s32 1, %s9
  $region7: #{_lambda_.10} parent=0 // loop_footer_branch
    %8 = sbr.rel target = $region3
  $region8: #{_lambda_.10} parent=0 // loop_exit
    _

// kernel: _lambda_.11
$region0: #{_lambda_.11}
  #allocation0 [shape = 'u32[]', space=smem, size = 0x4, offset = 0x4, fixed_abs, tag = 'smem constant byte address 0x4 - core index']
  #allocation1 [shape = 'u32[144,128]{1,0:T(1,128)}', space=vmem, size = 0x12000, scoped, tag = 'internal scratch']
  %s0 = inlined_call_operand.vmem [shape: bf16[2,512,256], index: 0, kind: input, shape index: {}]
  %s1 = inlined_call_operand.vmem [shape: bf16[256,128], index: 1, kind: input, shape index: {}]
  %s2 = inlined_call_operand.vmem [shape: f32[1,128], index: 2, kind: input, shape index: {}]
  %s3 = inlined_call_operand.vmem [shape: bf16[2,512,128], index: 3, kind: output, shape index: {}]
  %s4 = sld [smem:[#allocation0]]
  $region45: #{_lambda_.11} parent=0
    _
  %s6 = ssub.s32 1, %s4
  %s7 = scalar_select 0, %s6, %s4
  loop: start=0, step=1, limit=4
  $region2: #{_lambda_.11} parent=0 // loop_pre_header
    _
  $region3: #{_lambda_.11} parent=0 // loop_header
    %s9 = sphi 0, %s13
    %p10 = scmp.ge.s32.totalorder %s9, 4
    %s16 = sphi 0, %s28
    %s17 = sphi 0, %s24
    %s18 = sphi 0, %s16
    %s19 = sphi 0, %s17
    %s20 = sphi 0, %s18
    %s21 = sphi 0, %s19
    %s33 = sphi 0, %s35
    %s36 = sphi 0, %s33
    %s37 = sphi 0, %s36
    %s53 = sphi 0, %s37
    %s57 = sphi 0, %s57
    %s59 = sphi 0, %s57
    %s60 = sphi 0, %s59
    %s74 = sphi 0, %s60
    %s78 = sphi 0, %s78
    %s80 = sphi 0, %s78
    %s81 = sphi 0, %s80
    %s95 = sphi 0, %s81
    %s103 = sphi 0, %s105
    %s106 = sphi 0, %s103
    %s107 = sphi 0, %s106
    %s123 = sphi 0, %s107
  $region4: #{_lambda_.11} parent=0 // loop_header_branch
    %12 = sbr.rel (%p10) target = $region8
  $region5: #{_lambda_.11} parent=0 // loop_body
    %s14 = ssub.s32 %s9, 1
    %s15 = ssub.s32 %s9, 2
    %s22 = sadd.s32 1, %s17
    %p23 = scmp.ge.s32.totalorder %s22, 1
    %s24 = scalar_select %p23, 0, %s22
    %s25 = sadd.s32 1, %s16
    %s26 = scalar_select %p23, %s25, %s16
    %p27 = scmp.ge.s32.totalorder %s26, 2
    %s28 = scalar_select %p27, 0, %s26
    %s29 = ssub.s32 %s16, %s28
    %s30 = ssub.s32 %s17, %s24
    %s31 = sor.u32 %s29, %s30
    %p32 = scmp.eq.s32.totalorder %s31, 0
    %s34 = sadd.s32 %s33, 1
    %s35 = scalar_select %p32, %s33, %s34
    %p38 = pneg %p32
    %p39 = scmp.eq.s32.totalorder %s9, 1
    %p40 = por %p38, %p39
    %p41 = scmp.ne.s32.totalorder %s33, %s36
    %p42 = scmp.eq.s32.totalorder %s9, 0
    %p43 = por %p41, %p42
    %p44 = scmp.ne.s32.totalorder %s33, %s36
    %p45 = scmp.eq.s32.totalorder %s14, 1
    %p46 = por %p44, %p45
    %p47 = scmp.ne.s32.totalorder %s36, %s37
    %p48 = scmp.eq.s32.totalorder %s14, 0
    %p49 = por %p47, %p48
    %p50 = scmp.ne.s32.totalorder %s36, %s37
    %p51 = scmp.eq.s32.totalorder %s15, 1
    %p52 = por %p50, %p51
    %p54 = scmp.ne.s32.totalorder %s37, %s53
    %p55 = scmp.eq.s32.totalorder %s15, 0
    %p56 = por %p54, %p55
    %s58 = sadd.s32 %s57, 1
    %p61 = scmp.eq.s32.totalorder %s9, 1
    %p62 = scmp.ne.s32.totalorder %s57, %s59
    %p63 = scmp.eq.s32.totalorder %s9, 0
    %p64 = por %p62, %p63
    %p65 = scmp.ne.s32.totalorder %s57, %s59
    %p66 = scmp.eq.s32.totalorder %s14, 1
    %p67 = por %p65, %p66
    %p68 = scmp.ne.s32.totalorder %s59, %s60
    %p69 = scmp.eq.s32.totalorder %s14, 0
    %p70 = por %p68, %p69
    %p71 = scmp.ne.s32.totalorder %s59, %s60
    %p72 = scmp.eq.s32.totalorder %s15, 1
    %p73 = por %p71, %p72
    %p75 = scmp.ne.s32.totalorder %s60, %s74
    %p76 = scmp.eq.s32.totalorder %s15, 0
    %p77 = por %p75, %p76
    %s79 = sadd.s32 %s78, 1
    %p82 = scmp.eq.s32.totalorder %s9, 1
    %p83 = scmp.ne.s32.totalorder %s78, %s80
    %p84 = scmp.eq.s32.totalorder %s9, 0
    %p85 = por %p83, %p84
    %p86 = scmp.ne.s32.totalorder %s78, %s80
    %p87 = scmp.eq.s32.totalorder %s14, 1
    %p88 = por %p86, %p87
    %p89 = scmp.ne.s32.totalorder %s80, %s81
    %p90 = scmp.eq.s32.totalorder %s14, 0
    %p91 = por %p89, %p90
    %p92 = scmp.ne.s32.totalorder %s80, %s81
    %p93 = scmp.eq.s32.totalorder %s15, 1
    %p94 = por %p92, %p93
    %p96 = scmp.ne.s32.totalorder %s81, %s95
    %p97 = scmp.eq.s32.totalorder %s15, 0
    %p98 = por %p96, %p97
    %s99 = ssub.s32 %s16, %s28
    %s100 = ssub.s32 %s17, %s24
    %s101 = sor.u32 %s99, %s100
    %p102 = scmp.eq.s32.totalorder %s101, 0
    %s104 = sadd.s32 %s103, 1
    %s105 = scalar_select %p102, %s103, %s104
    %p108 = pneg %p102
    %p109 = scmp.eq.s32.totalorder %s9, 1
    %p110 = por %p108, %p109
    %p111 = scmp.ne.s32.totalorder %s103, %s106
    %p112 = scmp.eq.s32.totalorder %s9, 0
    %p113 = por %p111, %p112
    %p114 = scmp.ne.s32.totalorder %s103, %s106
    %p115 = scmp.eq.s32.totalorder %s14, 1
    %p116 = por %p114, %p115
    %p117 = scmp.ne.s32.totalorder %s106, %s107
    %p118 = scmp.eq.s32.totalorder %s14, 0
    %p119 = por %p117, %p118
    %p120 = scmp.ne.s32.totalorder %s106, %s107
    %p121 = scmp.eq.s32.totalorder %s15, 1
    %p122 = por %p120, %p121
    %p124 = scmp.ne.s32.totalorder %s107, %s123
    %p125 = scmp.eq.s32.totalorder %s15, 0
    %p126 = por %p124, %p125
    %p127 = scmp.le.s32.totalorder 1, %s9
    %p128 = scmp.lt.s32.totalorder %s9, 3
    %p129 = pnand %p127, %p128
    %p130 = pneg %p129
    // Predicated region
    $region9: #{_lambda_.11} parent=5 // pred_check
      _
    $region10: #{_lambda_.11} parent=5 // pred_check_branch
      %132 = sbr.rel (%p129) target = $region12
    $region11: #{_lambda_.11} parent=5 // pred_region
      %s133 = ssub.s32 %s9, 1
      // Predicated region
      $region13: #{_lambda_.11} parent=11 // pred_check
        %p134 = pneg %p70
      $region14: #{_lambda_.11} parent=11 // pred_check_branch
        %136 = sbr.rel (%p134) target = $region16
      $region15: #{_lambda_.11} parent=11 // pred_region
        _
      $region16: #{_lambda_.11} parent=11 // pred_fallthru
        _
      // Predicated region
      $region17: #{_lambda_.11} parent=11 // pred_check
        %p137 = pneg %p91
      $region18: #{_lambda_.11} parent=11 // pred_check_branch
        %139 = sbr.rel (%p137) target = $region20
      $region19: #{_lambda_.11} parent=11 // pred_region
        _
      $region20: #{_lambda_.11} parent=11 // pred_fallthru
        _
    $region12: #{_lambda_.11} parent=5 // pred_fallthru
      _
    %p140 = scmp.lt.s32.totalorder %s9, 2
    // Predicated region
    $region21: #{_lambda_.11} parent=5 // pred_check
      %p141 = pneg %p140
    $region22: #{_lambda_.11} parent=5 // pred_check_branch
      %143 = sbr.rel (%p141) target = $region24
    $region23: #{_lambda_.11} parent=5 // pred_region
      // Predicated region
      $region25: #{_lambda_.11} parent=23 // pred_check
        %p144 = pneg %p43
      $region26: #{_lambda_.11} parent=23 // pred_check_branch
        %146 = sbr.rel (%p144) target = $region28
      $region27: #{_lambda_.11} parent=23 // pred_region
        %s147 = smul.u32 64, %s17
        %p148 = scmp.lt.s32.totalorder %s16, 1
        %s149 = scalar_select %p148, %s16, 1
        %p150 = scmp.lt.s32.totalorder %s147, 63
        %s151 = scalar_select %p150, %s147, 63
        %s152 = smul.addr %s151, 2
        %s153 = smul.addr %s149, 128
        %s154 = sadd.s32 %s152, %s153
        %s155 = smul.addr %s154, 4
        %s156 = scalar_lea.vmem %s0, %s155
        %s157 = smul.u32 64, %s17
      $region28: #{_lambda_.11} parent=23 // pred_fallthru
        _
    $region24: #{_lambda_.11} parent=5 // pred_fallthru
      _
    %p158 = scmp.le.s32.totalorder 1, %s9
    %p159 = scmp.lt.s32.totalorder %s9, 3
    %p160 = pnand %p158, %p159
    %p161 = pneg %p160
    // Predicated region
    $region29: #{_lambda_.11} parent=5 // pred_check
      _
    $region30: #{_lambda_.11} parent=5 // pred_check_branch
      %163 = sbr.rel (%p160) target = $region32
    $region31: #{_lambda_.11} parent=5 // pred_region
      %s164 = ssub.s32 %s9, 1
      %s165 = smul.u32 64, %s19
      %p166 = scmp.lt.s32.totalorder %s18, 1
      %s167 = scalar_select %p166, %s18, 1
      %p168 = scmp.lt.s32.totalorder %s165, 63
      %s169 = scalar_select %p168, %s165, 63
      %s170 = smul.addr %s169, 2
      %s171 = smul.addr %s167, 128
      %s172 = sadd.s32 %s170, %s171
      %s173 = smul.addr %s172, 4
      %s174 = scalar_lea.vmem %s0, %s173
      %p175 = pneg %p49
      %p176 = pneg %p46
      %p177 = pneg %p70
      %p178 = pneg %p67
      %p179 = pneg %p91
      %p180 = pneg %p88
      %p181 = pneg %p119
      %p182 = pneg %p116
      %s183 = smul.u32 64, %s19
      %p184 = scmp.lt.s32.totalorder %s18, 1
      %s185 = scalar_select %p184, %s18, 1
      %p186 = scmp.lt.s32.totalorder %s183, 63
      %s187 = scalar_select %p186, %s183, 63
      %s188 = smul.addr %s185, 64
      %s189 = sadd.s32 %s187, %s188
      %s190 = smul.addr %s189, 4
      %s191 = scalar_lea.vmem %s3, %s190
      %s192 = smul.u32 64, %s19
      %p193 = scmp.lt.s32.totalorder %s18, 1
      %s194 = scalar_select %p193, %s18, 1
      %p195 = scmp.lt.s32.totalorder %s192, 63
      %s196 = scalar_select %p195, %s192, 63
      %s197 = smul.addr %s196, 2
      %s198 = smul.addr %s194, 128
      %s199 = sadd.s32 %s197, %s198
      %s200 = smul.addr %s199, 4
      %s201 = scalar_lea.vmem %s0, %s200
      %s202 = smul.u32 64, %s19
      %s203 = smul.u32 64, %s19
      %p204 = scmp.lt.s32.totalorder %s18, 1
      %s205 = scalar_select %p204, %s18, 1
      %p206 = scmp.lt.s32.totalorder %s203, 63
      %s207 = scalar_select %p206, %s203, 63
      %s208 = smul.addr %s205, 64
      %s209 = sadd.s32 %s207, %s208
      %s210 = smul.addr %s209, 4
      %s211 = scalar_lea.vmem %s3, %s210
      %s212 = smul.u32 64, %s19
      %v214 = vld [vmem:[%s201] sm:$0xff]
      %v215 = vld [vmem:[%s201 + $0x8] sm:$0xff]
      %v216 = vld [vmem:[%s201 + $0x10] sm:$0xff]
      %v217 = vld [vmem:[%s201 + $0x18] sm:$0xff]
      %v218 = vld [vmem:[%s201 + $0x20] sm:$0xff]
      %v219 = vld [vmem:[%s201 + $0x28] sm:$0xff]
      %v220 = vld [vmem:[%s201 + $0x30] sm:$0xff]
      %v221 = vld [vmem:[%s201 + $0x38] sm:$0xff]
      %v222 = vld [vmem:[%s201 + $0x40] sm:$0xff]
      %v223 = vld [vmem:[%s201 + $0x48] sm:$0xff]
      %v224 = vld [vmem:[%s201 + $0x50] sm:$0xff]
      %v225 = vld [vmem:[%s201 + $0x58] sm:$0xff]
      %v226 = vld [vmem:[%s201 + $0x60] sm:$0xff]
      %v227 = vld [vmem:[%s201 + $0x68] sm:$0xff]
      %v228 = vld [vmem:[%s201 + $0x70] sm:$0xff]
      %v229 = vld [vmem:[%s201 + $0x78] sm:$0xff]
      %v230 = vld [vmem:[%s201 + $0x80] sm:$0xff]
      %v231 = vld [vmem:[%s201 + $0x88] sm:$0xff]
      %v232 = vld [vmem:[%s201 + $0x90] sm:$0xff]
      %v233 = vld [vmem:[%s201 + $0x98] sm:$0xff]
      %v234 = vld [vmem:[%s201 + $0xa0] sm:$0xff]
      %v235 = vld [vmem:[%s201 + $0xa8] sm:$0xff]
      %v236 = vld [vmem:[%s201 + $0xb0] sm:$0xff]
      %v237 = vld [vmem:[%s201 + $0xb8] sm:$0xff]
      %v238 = vld [vmem:[%s201 + $0xc0] sm:$0xff]
      %v239 = vld [vmem:[%s201 + $0xc8] sm:$0xff]
      %v240 = vld [vmem:[%s201 + $0xd0] sm:$0xff]
      %v241 = vld [vmem:[%s201 + $0xd8] sm:$0xff]
      %v242 = vld [vmem:[%s201 + $0xe0] sm:$0xff]
      %v243 = vld [vmem:[%s201 + $0xe8] sm:$0xff]
      %v244 = vld [vmem:[%s201 + $0xf0] sm:$0xff]
      %v245 = vld [vmem:[%s201 + $0xf8] sm:$0xff]
      %v246 = vld [vmem:[%s201 + $0x100] sm:$0xff]
      %v247 = vld [vmem:[%s201 + $0x108] sm:$0xff]
      %v248 = vld [vmem:[%s201 + $0x110] sm:$0xff]
      %v249 = vld [vmem:[%s201 + $0x118] sm:$0xff]
      %v250 = vld [vmem:[%s201 + $0x120] sm:$0xff]
      %v251 = vld [vmem:[%s201 + $0x128] sm:$0xff]
      %v252 = vld [vmem:[%s201 + $0x130] sm:$0xff]
      %v253 = vld [vmem:[%s201 + $0x138] sm:$0xff]
      %v254 = vld [vmem:[%s201 + $0x140] sm:$0xff]
      %v255 = vld [vmem:[%s201 + $0x148] sm:$0xff]
      %v256 = vld [vmem:[%s201 + $0x150] sm:$0xff]
      %v257 = vld [vmem:[%s201 + $0x158] sm:$0xff]
      %v258 = vld [vmem:[%s201 + $0x160] sm:$0xff]
      %v259 = vld [vmem:[%s201 + $0x168] sm:$0xff]
      %v260 = vld [vmem:[%s201 + $0x170] sm:$0xff]
      %v261 = vld [vmem:[%s201 + $0x178] sm:$0xff]
      %v262 = vld [vmem:[%s201 + $0x180] sm:$0xff]
      %v263 = vld [vmem:[%s201 + $0x188] sm:$0xff]
      %v264 = vld [vmem:[%s201 + $0x190] sm:$0xff]
      %v265 = vld [vmem:[%s201 + $0x198] sm:$0xff]
      %v266 = vld [vmem:[%s201 + $0x1a0] sm:$0xff]
      %v267 = vld [vmem:[%s201 + $0x1a8] sm:$0xff]
      %v268 = vld [vmem:[%s201 + $0x1b0] sm:$0xff]
      %v269 = vld [vmem:[%s201 + $0x1b8] sm:$0xff]
      %v270 = vld [vmem:[%s201 + $0x1c0] sm:$0xff]
      %v271 = vld [vmem:[%s201 + $0x1c8] sm:$0xff]
      %v272 = vld [vmem:[%s201 + $0x1d0] sm:$0xff]
      %v273 = vld [vmem:[%s201 + $0x1d8] sm:$0xff]
      %v274 = vld [vmem:[%s201 + $0x1e0] sm:$0xff]
      %v275 = vld [vmem:[%s201 + $0x1e8] sm:$0xff]
      %v276 = vld [vmem:[%s201 + $0x1f0] sm:$0xff]
      %v277 = vld [vmem:[%s201 + $0x1f8] sm:$0xff]
      %v278 = vld [vmem:[%s1] sm:$0xf]
      %v279 = vld [vmem:[%s1 + $0x4] sm:$0xf]
      %v280 = vld [vmem:[%s1 + $0x8] sm:$0xf]
      %v281 = vld [vmem:[%s1 + $0xc] sm:$0xf]
      %v282 = vld [vmem:[%s1 + $0x10] sm:$0xf]
      %v283 = vld [vmem:[%s1 + $0x14] sm:$0xf]
      %v284 = vld [vmem:[%s1 + $0x18] sm:$0xf]
      %v285 = vld [vmem:[%s1 + $0x1c] sm:$0xf]
      %v286 = vld [vmem:[%s1 + $0x20] sm:$0xf]
      %v287 = vld [vmem:[%s1 + $0x24] sm:$0xf]
      %v288 = vld [vmem:[%s1 + $0x28] sm:$0xf]
      %v289 = vld [vmem:[%s1 + $0x2c] sm:$0xf]
      %v290 = vld [vmem:[%s1 + $0x30] sm:$0xf]
      %v291 = vld [vmem:[%s1 + $0x34] sm:$0xf]
      %v292 = vld [vmem:[%s1 + $0x38] sm:$0xf]
      %v293 = vld [vmem:[%s1 + $0x3c] sm:$0xf]
      %v294 = vld [vmem:[%s1 + $0x40] sm:$0xf]
      %v295 = vld [vmem:[%s1 + $0x44] sm:$0xf]
      %v296 = vld [vmem:[%s1 + $0x48] sm:$0xf]
      %v297 = vld [vmem:[%s1 + $0x4c] sm:$0xf]
      %v298 = vld [vmem:[%s1 + $0x50] sm:$0xf]
      %v299 = vld [vmem:[%s1 + $0x54] sm:$0xf]
      %v300 = vld [vmem:[%s1 + $0x58] sm:$0xf]
      %v301 = vld [vmem:[%s1 + $0x5c] sm:$0xf]
      %v302 = vld [vmem:[%s1 + $0x60] sm:$0xf]
      %v303 = vld [vmem:[%s1 + $0x64] sm:$0xf]
      %v304 = vld [vmem:[%s1 + $0x68] sm:$0xf]
      %v305 = vld [vmem:[%s1 + $0x6c] sm:$0xf]
      %v306 = vld [vmem:[%s1 + $0x70] sm:$0xf]
      %v307 = vld [vmem:[%s1 + $0x74] sm:$0xf]
      %v308 = vld [vmem:[%s1 + $0x78] sm:$0xf]
      %v309 = vld [vmem:[%s1 + $0x7c] sm:$0xf]
      %v310 = vld [vmem:[%s2] sm:$0x1]
      %v312 = vlaneseq
      %v313 = vshrl.u32 %v312, 7
      %v314 = vsub.s32 0, %v313
      %v315 = vrot.slane %v310, %v314
      %v381 = vunpack.c.l.b16 %v214
      %v382 = vunpack.c.h.b16 %v214
      %v383 = vunpack.c.l.b16 %v215
      %v384 = vunpack.c.h.b16 %v215
      %v385 = vunpack.c.l.b16 %v216
      %v386 = vunpack.c.h.b16 %v216
      %v387 = vunpack.c.l.b16 %v217
      %v388 = vunpack.c.h.b16 %v217
      %v389 = vunpack.c.l.b16 %v218
      %v390 = vunpack.c.h.b16 %v218
      %v391 = vunpack.c.l.b16 %v219
      %v392 = vunpack.c.h.b16 %v219
      %v393 = vunpack.c.l.b16 %v220
      %v394 = vunpack.c.h.b16 %v220
      %v395 = vunpack.c.l.b16 %v221
      %v396 = vunpack.c.h.b16 %v221
      %v397 = vunpack.c.l.b16 %v222
      %v398 = vunpack.c.h.b16 %v222
      %v399 = vunpack.c.l.b16 %v223
      %v400 = vunpack.c.h.b16 %v223
      %v401 = vunpack.c.l.b16 %v224
      %v402 = vunpack.c.h.b16 %v224
      %v403 = vunpack.c.l.b16 %v225
      %v404 = vunpack.c.h.b16 %v225
      %v405 = vunpack.c.l.b16 %v226
      %v406 = vunpack.c.h.b16 %v226
      %v407 = vunpack.c.l.b16 %v227
      %v408 = vunpack.c.h.b16 %v227
      %v409 = vunpack.c.l.b16 %v228
      %v410 = vunpack.c.h.b16 %v228
      %v411 = vunpack.c.l.b16 %v229
      %v412 = vunpack.c.h.b16 %v229
      %v413 = vunpack.c.l.b16 %v230
      %v414 = vunpack.c.h.b16 %v230
      %v415 = vunpack.c.l.b16 %v231
      %v416 = vunpack.c.h.b16 %v231
      %v417 = vunpack.c.l.b16 %v232
      %v418 = vunpack.c.h.b16 %v232
      %v419 = vunpack.c.l.b16 %v233
      %v420 = vunpack.c.h.b16 %v233
      %v421 = vunpack.c.l.b16 %v234
      %v422 = vunpack.c.h.b16 %v234
      %v423 = vunpack.c.l.b16 %v235
      %v424 = vunpack.c.h.b16 %v235
      %v425 = vunpack.c.l.b16 %v236
      %v426 = vunpack.c.h.b16 %v236
      %v427 = vunpack.c.l.b16 %v237
      %v428 = vunpack.c.h.b16 %v237
      %v429 = vunpack.c.l.b16 %v238
      %v430 = vunpack.c.h.b16 %v238
      %v431 = vunpack.c.l.b16 %v239
      %v432 = vunpack.c.h.b16 %v239
      %v433 = vunpack.c.l.b16 %v240
      %v434 = vunpack.c.h.b16 %v240
      %v435 = vunpack.c.l.b16 %v241
      %v436 = vunpack.c.h.b16 %v241
      %v437 = vunpack.c.l.b16 %v242
      %v438 = vunpack.c.h.b16 %v242
      %v439 = vunpack.c.l.b16 %v243
      %v440 = vunpack.c.h.b16 %v243
      %v441 = vunpack.c.l.b16 %v244
      %v442 = vunpack.c.h.b16 %v244
      %v443 = vunpack.c.l.b16 %v245
      %v444 = vunpack.c.h.b16 %v245
      %v445 = vunpack.c.l.b16 %v246
      %v446 = vunpack.c.h.b16 %v246
      %v447 = vunpack.c.l.b16 %v247
      %v448 = vunpack.c.h.b16 %v247
      %v449 = vunpack.c.l.b16 %v248
      %v450 = vunpack.c.h.b16 %v248
      %v451 = vunpack.c.l.b16 %v249
      %v452 = vunpack.c.h.b16 %v249
      %v453 = vunpack.c.l.b16 %v250
      %v454 = vunpack.c.h.b16 %v250
      %v455 = vunpack.c.l.b16 %v251
      %v456 = vunpack.c.h.b16 %v251
      %v457 = vunpack.c.l.b16 %v252
      %v458 = vunpack.c.h.b16 %v252
      %v459 = vunpack.c.l.b16 %v253
      %v460 = vunpack.c.h.b16 %v253
      %v461 = vunpack.c.l.b16 %v254
      %v462 = vunpack.c.h.b16 %v254
      %v463 = vunpack.c.l.b16 %v255
      %v464 = vunpack.c.h.b16 %v255
      %v465 = vunpack.c.l.b16 %v256
      %v466 = vunpack.c.h.b16 %v256
      %v467 = vunpack.c.l.b16 %v257
      %v468 = vunpack.c.h.b16 %v257
      %v469 = vunpack.c.l.b16 %v258
      %v470 = vunpack.c.h.b16 %v258
      %v471 = vunpack.c.l.b16 %v259
      %v472 = vunpack.c.h.b16 %v259
      %v473 = vunpack.c.l.b16 %v260
      %v474 = vunpack.c.h.b16 %v260
      %v475 = vunpack.c.l.b16 %v261
      %v476 = vunpack.c.h.b16 %v261
      %v477 = vunpack.c.l.b16 %v262
      %v478 = vunpack.c.h.b16 %v262
      %v479 = vunpack.c.l.b16 %v263
      %v480 = vunpack.c.h.b16 %v263
      %v481 = vunpack.c.l.b16 %v264
      %v482 = vunpack.c.h.b16 %v264
      %v483 = vunpack.c.l.b16 %v265
      %v484 = vunpack.c.h.b16 %v265
      %v485 = vunpack.c.l.b16 %v266
      %v486 = vunpack.c.h.b16 %v266
      %v487 = vunpack.c.l.b16 %v267
      %v488 = vunpack.c.h.b16 %v267
      %v489 = vunpack.c.l.b16 %v268
      %v490 = vunpack.c.h.b16 %v268
      %v491 = vunpack.c.l.b16 %v269
      %v492 = vunpack.c.h.b16 %v269
      %v493 = vunpack.c.l.b16 %v270
      %v494 = vunpack.c.h.b16 %v270
      %v495 = vunpack.c.l.b16 %v271
      %v496 = vunpack.c.h.b16 %v271
      %v497 = vunpack.c.l.b16 %v272
      %v498 = vunpack.c.h.b16 %v272
      %v499 = vunpack.c.l.b16 %v273
      %v500 = vunpack.c.h.b16 %v273
      %v501 = vunpack.c.l.b16 %v274
      %v502 = vunpack.c.h.b16 %v274
      %v503 = vunpack.c.l.b16 %v275
      %v504 = vunpack.c.h.b16 %v275
      %v505 = vunpack.c.l.b16 %v276
      %v506 = vunpack.c.h.b16 %v276
      %v507 = vunpack.c.l.b16 %v277
      %v508 = vunpack.c.h.b16 %v277
      %v509 = vpack.c.b16 %v383, %v381
      %v510 = vpack.c.b16 %v384, %v382
      %v511 = vpack.c.b16 %v387, %v385
      %v512 = vpack.c.b16 %v388, %v386
      %v513 = vpack.c.b16 %v391, %v389
      %v514 = vpack.c.b16 %v392, %v390
      %v515 = vpack.c.b16 %v395, %v393
      %v516 = vpack.c.b16 %v396, %v394
      %v517 = vpack.c.b16 %v399, %v397
      %v518 = vpack.c.b16 %v400, %v398
      %v519 = vpack.c.b16 %v403, %v401
      %v520 = vpack.c.b16 %v404, %v402
      %v521 = vpack.c.b16 %v407, %v405
      %v522 = vpack.c.b16 %v408, %v406
      %v523 = vpack.c.b16 %v411, %v409
      %v524 = vpack.c.b16 %v412, %v410
      %v525 = vpack.c.b16 %v415, %v413
      %v526 = vpack.c.b16 %v416, %v414
      %v527 = vpack.c.b16 %v419, %v417
      %v528 = vpack.c.b16 %v420, %v418
      %v529 = vpack.c.b16 %v423, %v421
      %v530 = vpack.c.b16 %v424, %v422
      %v531 = vpack.c.b16 %v427, %v425
      %v532 = vpack.c.b16 %v428, %v426
      %v533 = vpack.c.b16 %v431, %v429
      %v534 = vpack.c.b16 %v432, %v430
      %v535 = vpack.c.b16 %v435, %v433
      %v536 = vpack.c.b16 %v436, %v434
      %v537 = vpack.c.b16 %v439, %v437
      %v538 = vpack.c.b16 %v440, %v438
      %v539 = vpack.c.b16 %v443, %v441
      %v540 = vpack.c.b16 %v444, %v442
      %v541 = vpack.c.b16 %v447, %v445
      %v542 = vpack.c.b16 %v448, %v446
      %v543 = vpack.c.b16 %v451, %v449
      %v544 = vpack.c.b16 %v452, %v450
      %v545 = vpack.c.b16 %v455, %v453
      %v546 = vpack.c.b16 %v456, %v454
      %v547 = vpack.c.b16 %v459, %v457
      %v548 = vpack.c.b16 %v460, %v458
      %v549 = vpack.c.b16 %v463, %v461
      %v550 = vpack.c.b16 %v464, %v462
      %v551 = vpack.c.b16 %v467, %v465
      %v552 = vpack.c.b16 %v468, %v466
      %v553 = vpack.c.b16 %v471, %v469
      %v554 = vpack.c.b16 %v472, %v470
      %v555 = vpack.c.b16 %v475, %v473
      %v556 = vpack.c.b16 %v476, %v474
      %v557 = vpack.c.b16 %v479, %v477
      %v558 = vpack.c.b16 %v480, %v478
      %v559 = vpack.c.b16 %v483, %v481
      %v560 = vpack.c.b16 %v484, %v482
      %v561 = vpack.c.b16 %v487, %v485
      %v562 = vpack.c.b16 %v488, %v486
      %v563 = vpack.c.b16 %v491, %v489
      %v564 = vpack.c.b16 %v492, %v490
      %v565 = vpack.c.b16 %v495, %v493
      %v566 = vpack.c.b16 %v496, %v494
      %v567 = vpack.c.b16 %v499, %v497
      %v568 = vpack.c.b16 %v500, %v498
      %v569 = vpack.c.b16 %v503, %v501
      %v570 = vpack.c.b16 %v504, %v502
      %v571 = vpack.c.b16 %v507, %v505
      %v572 = vpack.c.b16 %v508, %v506
      %v669 = vunpack.c.l.b16 %v278
      %v670 = vunpack.c.l.b16 %v279
      %v671 = vunpack.c.l.b16 %v280
      %v672 = vunpack.c.l.b16 %v281
      %v673 = vunpack.c.l.b16 %v282
      %v674 = vunpack.c.l.b16 %v283
      %v675 = vunpack.c.l.b16 %v284
      %v676 = vunpack.c.l.b16 %v285
      %v677 = vunpack.c.l.b16 %v286
      %v678 = vunpack.c.l.b16 %v287
      %v679 = vunpack.c.l.b16 %v288
      %v680 = vunpack.c.l.b16 %v289
      %v681 = vunpack.c.l.b16 %v290
      %v682 = vunpack.c.l.b16 %v291
      %v683 = vunpack.c.l.b16 %v292
      %v684 = vunpack.c.l.b16 %v293
      %v685 = vunpack.c.l.b16 %v294
      %v686 = vunpack.c.l.b16 %v295
      %v687 = vunpack.c.l.b16 %v296
      %v688 = vunpack.c.l.b16 %v297
      %v689 = vunpack.c.l.b16 %v298
      %v690 = vunpack.c.l.b16 %v299
      %v691 = vunpack.c.l.b16 %v300
      %v692 = vunpack.c.l.b16 %v301
      %v693 = vunpack.c.l.b16 %v302
      %v694 = vunpack.c.l.b16 %v303
      %v695 = vunpack.c.l.b16 %v304
      %v696 = vunpack.c.l.b16 %v305
      %v697 = vunpack.c.l.b16 %v306
      %v698 = vunpack.c.l.b16 %v307
      %v699 = vunpack.c.l.b16 %v308
      %v700 = vunpack.c.l.b16 %v309
      %v701 = vpack.c.b16 %v670, %v669
      %v702 = vpack.c.b16 %v672, %v671
      %v703 = vpack.c.b16 %v674, %v673
      %v704 = vpack.c.b16 %v676, %v675
      %v705 = vpack.c.b16 %v678, %v677
      %v706 = vpack.c.b16 %v680, %v679
      %v707 = vpack.c.b16 %v682, %v681
      %v708 = vpack.c.b16 %v684, %v683
      %v709 = vpack.c.b16 %v686, %v685
      %v710 = vpack.c.b16 %v688, %v687
      %v711 = vpack.c.b16 %v690, %v689
      %v712 = vpack.c.b16 %v692, %v691
      %v713 = vpack.c.b16 %v694, %v693
      %v714 = vpack.c.b16 %v696, %v695
      %v715 = vpack.c.b16 %v698, %v697
      %v716 = vpack.c.b16 %v700, %v699
      %733 = vmatprep.subr.bf16.mxu0 0
      %734 = vmatpush1.bf16.msra.mxu0 %v708
      %735 = vmatprep.subr.bf16.mxu0 0
      %736 = vmatpush1.bf16.msra.mxu0 %v707
      %737 = vmatprep.subr.bf16.mxu0 0
      %738 = vmatpush1.bf16.msra.mxu0 %v706
      %739 = vmatprep.subr.bf16.mxu0 0
      %740 = vmatpush1.bf16.msra.mxu0 %v705
      %741 = vmatprep.subr.bf16.mxu0 0
      %742 = vmatpush1.bf16.msra.mxu0 %v704
      %743 = vmatprep.subr.bf16.mxu0 0
      %744 = vmatpush1.bf16.msra.mxu0 %v703
      %745 = vmatprep.subr.bf16.mxu0 0
      %746 = vmatpush1.bf16.msra.mxu0 %v702
      %747 = vmatprep.subr.bf16.mxu0 0
      %748 = vmatpush1.bf16.msra.mxu0 %v701
      %749 = vmatprep.subr.bf16.mxu0 0
      %750 = vmatpush2.bf16.msra.mxu0 %v716
      %751 = vmatprep.subr.bf16.mxu0 0
      %752 = vmatpush2.bf16.msra.mxu0 %v715
      %753 = vmatprep.subr.bf16.mxu0 0
      %754 = vmatpush2.bf16.msra.mxu0 %v714
      %755 = vmatprep.subr.bf16.mxu0 0
      %756 = vmatpush2.bf16.msra.mxu0 %v713
      %757 = vmatprep.subr.bf16.mxu0 0
      %758 = vmatpush2.bf16.msra.mxu0 %v712
      %759 = vmatprep.subr.bf16.mxu0 0
      %760 = vmatpush2.bf16.msra.mxu0 %v711
      %761 = vmatprep.subr.bf16.mxu0 0
      %762 = vmatpush2.bf16.msra.mxu0 %v710
      %763 = vmatprep.subr.bf16.mxu0 0
      %764 = vmatpush2.bf16.msra.mxu0 %v709
      %765 = vmatprep.mubr.bf16.mxu0 %v510
      %766 = vmatmul.mubr.bf16.gmra.mxu0 %v509
      %v767 = vpop.f32.mrf.mxu0
      %v768 = vadd.f32 %v315, %v767
      %v769 = vpop.f32.mrf.mxu0
      %v770 = vpop.f32.mrf.mxu0
      %v771 = vadd.f32 %v315, %v770
      %v772 = vpop.f32.mrf.mxu0
      %773 = vmatprep.mubr.bf16.mxu0 %v512
      %774 = vmatmul.mubr.bf16.gmra.mxu0 %v511
      %v775 = vpop.f32.mrf.mxu0
      %v776 = vadd.f32 %v315, %v775
      %v777 = vpop.f32.mrf.mxu0
      %v778 = vpop.f32.mrf.mxu0
      %v779 = vadd.f32 %v315, %v778
      %v780 = vpop.f32.mrf.mxu0
      %781 = vmatprep.mubr.bf16.mxu0 %v514
      %782 = vmatmul.mubr.bf16.gmra.mxu0 %v513
      %v783 = vpop.f32.mrf.mxu0
      %v784 = vadd.f32 %v315, %v783
      %v785 = vpop.f32.mrf.mxu0
      %v786 = vpop.f32.mrf.mxu0
      %v787 = vadd.f32 %v315, %v786
      %v788 = vpop.f32.mrf.mxu0
      %789 = vmatprep.mubr.bf16.mxu0 %v516
      %790 = vmatmul.mubr.bf16.gmra.mxu0 %v515
      %v791 = vpop.f32.mrf.mxu0
      %v792 = vadd.f32 %v315, %v791
      %v793 = vpop.f32.mrf.mxu0
      %v794 = vpop.f32.mrf.mxu0
      %v795 = vadd.f32 %v315, %v794
      %v796 = vpop.f32.mrf.mxu0
      %797 = vmatprep.mubr.bf16.mxu0 %v518
      %798 = vmatmul.mubr.bf16.gmra.mxu0 %v517
      %v799 = vpop.f32.mrf.mxu0
      %v800 = vadd.f32 %v315, %v799
      %v801 = vpop.f32.mrf.mxu0
      %v802 = vpop.f32.mrf.mxu0
      %v803 = vadd.f32 %v315, %v802
      %v804 = vpop.f32.mrf.mxu0
      %805 = vmatprep.mubr.bf16.mxu0 %v520
      %806 = vmatmul.mubr.bf16.gmra.mxu0 %v519
      %v807 = vpop.f32.mrf.mxu0
      %v808 = vadd.f32 %v315, %v807
      %v809 = vpop.f32.mrf.mxu0
      %v810 = vpop.f32.mrf.mxu0
      %v811 = vadd.f32 %v315, %v810
      %v812 = vpop.f32.mrf.mxu0
      %813 = vmatprep.mubr.bf16.mxu0 %v522
      %814 = vmatmul.mubr.bf16.gmra.mxu0 %v521
      %v815 = vpop.f32.mrf.mxu0
      %v816 = vadd.f32 %v315, %v815
      %v817 = vpop.f32.mrf.mxu0
      %v818 = vpop.f32.mrf.mxu0
      %v819 = vadd.f32 %v315, %v818
      %v820 = vpop.f32.mrf.mxu0
      %821 = vmatprep.mubr.bf16.mxu0 %v524
      %822 = vmatmul.mubr.bf16.gmra.mxu0 %v523
      %v823 = vpop.f32.mrf.mxu0
      %v824 = vadd.f32 %v315, %v823
      %v825 = vpop.f32.mrf.mxu0
      %v826 = vpop.f32.mrf.mxu0
      %v827 = vadd.f32 %v315, %v826
      %v828 = vpop.f32.mrf.mxu0
      %829 = vmatprep.mubr.bf16.mxu0 %v526
      %830 = vmatmul.mubr.bf16.gmra.mxu0 %v525
      %v831 = vpop.f32.mrf.mxu0
      %v832 = vadd.f32 %v315, %v831
      %v833 = vpop.f32.mrf.mxu0
      %v834 = vpop.f32.mrf.mxu0
      %v835 = vadd.f32 %v315, %v834
      %v836 = vpop.f32.mrf.mxu0
      %837 = vmatprep.mubr.bf16.mxu0 %v528
      %838 = vmatmul.mubr.bf16.gmra.mxu0 %v527
      %v839 = vpop.f32.mrf.mxu0
      %v840 = vadd.f32 %v315, %v839
      %v841 = vpop.f32.mrf.mxu0
      %v842 = vpop.f32.mrf.mxu0
      %v843 = vadd.f32 %v315, %v842
      %v844 = vpop.f32.mrf.mxu0
      %845 = vmatprep.mubr.bf16.mxu0 %v530
      %846 = vmatmul.mubr.bf16.gmra.mxu0 %v529
      %v847 = vpop.f32.mrf.mxu0
      %v848 = vadd.f32 %v315, %v847
      %v849 = vpop.f32.mrf.mxu0
      %v850 = vpop.f32.mrf.mxu0
      %v851 = vadd.f32 %v315, %v850
      %v852 = vpop.f32.mrf.mxu0
      %853 = vmatprep.mubr.bf16.mxu0 %v532
      %854 = vmatmul.mubr.bf16.gmra.mxu0 %v531
      %v855 = vpop.f32.mrf.mxu0
      %v856 = vadd.f32 %v315, %v855
      %v857 = vpop.f32.mrf.mxu0
      %v858 = vpop.f32.mrf.mxu0
      %v859 = vadd.f32 %v315, %v858
      %v860 = vpop.f32.mrf.mxu0
      %861 = vmatprep.mubr.bf16.mxu0 %v534
      %862 = vmatmul.mubr.bf16.gmra.mxu0 %v533
      %v863 = vpop.f32.mrf.mxu0
      %v864 = vadd.f32 %v315, %v863
      %v865 = vpop.f32.mrf.mxu0
      %v866 = vpop.f32.mrf.mxu0
      %v867 = vadd.f32 %v315, %v866
      %v868 = vpop.f32.mrf.mxu0
      %869 = vmatprep.mubr.bf16.mxu0 %v536
      %870 = vmatmul.mubr.bf16.gmra.mxu0 %v535
      %v871 = vpop.f32.mrf.mxu0
      %v872 = vadd.f32 %v315, %v871
      %v873 = vpop.f32.mrf.mxu0
      %v874 = vpop.f32.mrf.mxu0
      %v875 = vadd.f32 %v315, %v874
      %v876 = vpop.f32.mrf.mxu0
      %877 = vmatprep.mubr.bf16.mxu0 %v538
      %878 = vmatmul.mubr.bf16.gmra.mxu0 %v537
      %v879 = vpop.f32.mrf.mxu0
      %v880 = vadd.f32 %v315, %v879
      %v881 = vpop.f32.mrf.mxu0
      %v882 = vpop.f32.mrf.mxu0
      %v883 = vadd.f32 %v315, %v882
      %v884 = vpop.f32.mrf.mxu0
      %885 = vmatprep.mubr.bf16.mxu0 %v540
      %886 = vmatmul.mubr.bf16.gmra.mxu0 %v539
      %v887 = vpop.f32.mrf.mxu0
      %v888 = vadd.f32 %v315, %v887
      %v889 = vpop.f32.mrf.mxu0
      %v890 = vpop.f32.mrf.mxu0
      %v891 = vadd.f32 %v315, %v890
      %v892 = vpop.f32.mrf.mxu0
      %893 = vmatprep.mubr.bf16.mxu0 %v542
      %894 = vmatmul.mubr.bf16.gmra.mxu0 %v541
      %v895 = vpop.f32.mrf.mxu0
      %v896 = vadd.f32 %v315, %v895
      %v897 = vpop.f32.mrf.mxu0
      %v898 = vpop.f32.mrf.mxu0
      %v899 = vadd.f32 %v315, %v898
      %v900 = vpop.f32.mrf.mxu0
      %901 = vmatprep.mubr.bf16.mxu0 %v544
      %902 = vmatmul.mubr.bf16.gmra.mxu0 %v543
      %v903 = vpop.f32.mrf.mxu0
      %v904 = vadd.f32 %v315, %v903
      %v905 = vpop.f32.mrf.mxu0
      %v906 = vpop.f32.mrf.mxu0
      %v907 = vadd.f32 %v315, %v906
      %v908 = vpop.f32.mrf.mxu0
      %909 = vmatprep.mubr.bf16.mxu0 %v546
      %910 = vmatmul.mubr.bf16.gmra.mxu0 %v545
      %v911 = vpop.f32.mrf.mxu0
      %v912 = vadd.f32 %v315, %v911
      %v913 = vpop.f32.mrf.mxu0
      %v914 = vpop.f32.mrf.mxu0
      %v915 = vadd.f32 %v315, %v914
      %v916 = vpop.f32.mrf.mxu0
      %917 = vmatprep.mubr.bf16.mxu0 %v548
      %918 = vmatmul.mubr.bf16.gmra.mxu0 %v547
      %v919 = vpop.f32.mrf.mxu0
      %v920 = vadd.f32 %v315, %v919
      %v921 = vpop.f32.mrf.mxu0
      %v922 = vpop.f32.mrf.mxu0
      %v923 = vadd.f32 %v315, %v922
      %v924 = vpop.f32.mrf.mxu0
      %925 = vmatprep.mubr.bf16.mxu0 %v550
      %926 = vmatmul.mubr.bf16.gmra.mxu0 %v549
      %v927 = vpop.f32.mrf.mxu0
      %v928 = vadd.f32 %v315, %v927
      %v929 = vpop.f32.mrf.mxu0
      %v930 = vpop.f32.mrf.mxu0
      %v931 = vadd.f32 %v315, %v930
      %v932 = vpop.f32.mrf.mxu0
      %933 = vmatprep.mubr.bf16.mxu0 %v552
      %934 = vmatmul.mubr.bf16.gmra.mxu0 %v551
      %v935 = vpop.f32.mrf.mxu0
      %v936 = vadd.f32 %v315, %v935
      %v937 = vpop.f32.mrf.mxu0
      %v938 = vpop.f32.mrf.mxu0
      %v939 = vadd.f32 %v315, %v938
      %v940 = vpop.f32.mrf.mxu0
      %941 = vmatprep.mubr.bf16.mxu0 %v554
      %942 = vmatmul.mubr.bf16.gmra.mxu0 %v553
      %v943 = vpop.f32.mrf.mxu0
      %v944 = vadd.f32 %v315, %v943
      %v945 = vpop.f32.mrf.mxu0
      %v946 = vpop.f32.mrf.mxu0
      %v947 = vadd.f32 %v315, %v946
      %v948 = vpop.f32.mrf.mxu0
      %949 = vmatprep.mubr.bf16.mxu0 %v556
      %950 = vmatmul.mubr.bf16.gmra.mxu0 %v555
      %v951 = vpop.f32.mrf.mxu0
      %v952 = vadd.f32 %v315, %v951
      %v953 = vpop.f32.mrf.mxu0
      %v954 = vpop.f32.mrf.mxu0
      %v955 = vadd.f32 %v315, %v954
      %v956 = vpop.f32.mrf.mxu0
      %957 = vmatprep.mubr.bf16.mxu0 %v558
      %958 = vmatmul.mubr.bf16.gmra.mxu0 %v557
      %v959 = vpop.f32.mrf.mxu0
      %v960 = vadd.f32 %v315, %v959
      %v961 = vpop.f32.mrf.mxu0
      %v962 = vpop.f32.mrf.mxu0
      %v963 = vadd.f32 %v315, %v962
      %v964 = vpop.f32.mrf.mxu0
      %965 = vmatprep.mubr.bf16.mxu0 %v560
      %966 = vmatmul.mubr.bf16.gmra.mxu0 %v559
      %v967 = vpop.f32.mrf.mxu0
      %v968 = vadd.f32 %v315, %v967
      %v969 = vpop.f32.mrf.mxu0
      %v970 = vpop.f32.mrf.mxu0
      %v971 = vadd.f32 %v315, %v970
      %v972 = vpop.f32.mrf.mxu0
      %973 = vmatprep.mubr.bf16.mxu0 %v562
      %974 = vmatmul.mubr.bf16.gmra.mxu0 %v561
      %v975 = vpop.f32.mrf.mxu0
      %v976 = vadd.f32 %v315, %v975
      %v977 = vpop.f32.mrf.mxu0
      %v978 = vpop.f32.mrf.mxu0
      %v979 = vadd.f32 %v315, %v978
      %v980 = vpop.f32.mrf.mxu0
      %981 = vmatprep.mubr.bf16.mxu0 %v564
      %982 = vmatmul.mubr.bf16.gmra.mxu0 %v563
      %v983 = vpop.f32.mrf.mxu0
      %v984 = vadd.f32 %v315, %v983
      %v985 = vpop.f32.mrf.mxu0
      %v986 = vpop.f32.mrf.mxu0
      %v987 = vadd.f32 %v315, %v986
      %v988 = vpop.f32.mrf.mxu0
      %989 = vmatprep.mubr.bf16.mxu0 %v566
      %990 = vmatmul.mubr.bf16.gmra.mxu0 %v565
      %v991 = vpop.f32.mrf.mxu0
      %v992 = vadd.f32 %v315, %v991
      %v993 = vpop.f32.mrf.mxu0
      %v994 = vpop.f32.mrf.mxu0
      %v995 = vadd.f32 %v315, %v994
      %v996 = vpop.f32.mrf.mxu0
      %997 = vmatprep.mubr.bf16.mxu0 %v568
      %998 = vmatmul.mubr.bf16.gmra.mxu0 %v567
      %v999 = vpop.f32.mrf.mxu0
      %v1000 = vadd.f32 %v315, %v999
      %v1001 = vpop.f32.mrf.mxu0
      %v1002 = vpop.f32.mrf.mxu0
      %v1003 = vadd.f32 %v315, %v1002
      %v1004 = vpop.f32.mrf.mxu0
      %1005 = vmatprep.mubr.bf16.mxu0 %v570
      %1006 = vmatmul.mubr.bf16.gmra.mxu0 %v569
      %v1007 = vpop.f32.mrf.mxu0
      %v1008 = vadd.f32 %v315, %v1007
      %v1009 = vpop.f32.mrf.mxu0
      %v1010 = vpop.f32.mrf.mxu0
      %v1011 = vadd.f32 %v315, %v1010
      %v1012 = vpop.f32.mrf.mxu0
      %1013 = vmatprep.mubr.bf16.mxu0 %v572
      %1014 = vmatmul.mubr.bf16.gmra.mxu0 %v571
      %v1015 = vpop.f32.mrf.mxu0
      %v1016 = vadd.f32 %v315, %v1015
      %v1017 = vpop.f32.mrf.mxu0
      %v1018 = vpop.f32.mrf.mxu0
      %v1019 = vadd.f32 %v315, %v1018
      %v1020 = vpop.f32.mrf.mxu0
      %1021 = vdwg.mxu0
      %v1022 = vmax.f32 %v768, 0.0
      %v1023 = vmax.f32 %v771, 0.0
      %v1024 = vmax.f32 %v776, 0.0
      %v1025 = vmax.f32 %v779, 0.0
      %v1026 = vmax.f32 %v784, 0.0
      %v1027 = vmax.f32 %v787, 0.0
      %v1028 = vmax.f32 %v792, 0.0
      %v1029 = vmax.f32 %v795, 0.0
      %v1030 = vmax.f32 %v800, 0.0
      %v1031 = vmax.f32 %v803, 0.0
      %v1032 = vmax.f32 %v808, 0.0
      %v1033 = vmax.f32 %v811, 0.0
      %v1034 = vmax.f32 %v816, 0.0
      %v1035 = vmax.f32 %v819, 0.0
      %v1036 = vmax.f32 %v824, 0.0
      %v1037 = vmax.f32 %v827, 0.0
      %v1038 = vmax.f32 %v832, 0.0
      %v1039 = vmax.f32 %v835, 0.0
      %v1040 = vmax.f32 %v840, 0.0
      %v1041 = vmax.f32 %v843, 0.0
      %v1042 = vmax.f32 %v848, 0.0
      %v1043 = vmax.f32 %v851, 0.0
      %v1044 = vmax.f32 %v856, 0.0
      %v1045 = vmax.f32 %v859, 0.0
      %v1046 = vmax.f32 %v864, 0.0
      %v1047 = vmax.f32 %v867, 0.0
      %v1048 = vmax.f32 %v872, 0.0
      %v1049 = vmax.f32 %v875, 0.0
      %v1050 = vmax.f32 %v880, 0.0
      %v1051 = vmax.f32 %v883, 0.0
      %v1052 = vmax.f32 %v888, 0.0
      %v1053 = vmax.f32 %v891, 0.0
      %v1054 = vmax.f32 %v896, 0.0
      %v1055 = vmax.f32 %v899, 0.0
      %v1056 = vmax.f32 %v904, 0.0
      %v1057 = vmax.f32 %v907, 0.0
      %v1058 = vmax.f32 %v912, 0.0
      %v1059 = vmax.f32 %v915, 0.0
      %v1060 = vmax.f32 %v920, 0.0
      %v1061 = vmax.f32 %v923, 0.0
      %v1062 = vmax.f32 %v928, 0.0
      %v1063 = vmax.f32 %v931, 0.0
      %v1064 = vmax.f32 %v936, 0.0
      %v1065 = vmax.f32 %v939, 0.0
      %v1066 = vmax.f32 %v944, 0.0
      %v1067 = vmax.f32 %v947, 0.0
      %v1068 = vmax.f32 %v952, 0.0
      %v1069 = vmax.f32 %v955, 0.0
      %v1070 = vmax.f32 %v960, 0.0
      %v1071 = vmax.f32 %v963, 0.0
      %v1072 = vmax.f32 %v968, 0.0
      %v1073 = vmax.f32 %v971, 0.0
      %v1074 = vmax.f32 %v976, 0.0
      %v1075 = vmax.f32 %v979, 0.0
      %v1076 = vmax.f32 %v984, 0.0
      %v1077 = vmax.f32 %v987, 0.0
      %v1078 = vmax.f32 %v992, 0.0
      %v1079 = vmax.f32 %v995, 0.0
      %v1080 = vmax.f32 %v1000, 0.0
      %v1081 = vmax.f32 %v1003, 0.0
      %v1082 = vmax.f32 %v1008, 0.0
      %v1083 = vmax.f32 %v1011, 0.0
      %v1084 = vmax.f32 %v1016, 0.0
      %v1085 = vmax.f32 %v1019, 0.0
      %v1086 = vpack.c.bf16 %v1023, %v1022
      %v1087 = vpack.c.bf16 %v1025, %v1024
      %v1088 = vpack.c.bf16 %v1027, %v1026
      %v1089 = vpack.c.bf16 %v1029, %v1028
      %v1090 = vpack.c.bf16 %v1031, %v1030
      %v1091 = vpack.c.bf16 %v1033, %v1032
      %v1092 = vpack.c.bf16 %v1035, %v1034
      %v1093 = vpack.c.bf16 %v1037, %v1036
      %v1094 = vpack.c.bf16 %v1039, %v1038
      %v1095 = vpack.c.bf16 %v1041, %v1040
      %v1096 = vpack.c.bf16 %v1043, %v1042
      %v1097 = vpack.c.bf16 %v1045, %v1044
      %v1098 = vpack.c.bf16 %v1047, %v1046
      %v1099 = vpack.c.bf16 %v1049, %v1048
      %v1100 = vpack.c.bf16 %v1051, %v1050
      %v1101 = vpack.c.bf16 %v1053, %v1052
      %v1102 = vpack.c.bf16 %v1055, %v1054
      %v1103 = vpack.c.bf16 %v1057, %v1056
      %v1104 = vpack.c.bf16 %v1059, %v1058
      %v1105 = vpack.c.bf16 %v1061, %v1060
      %v1106 = vpack.c.bf16 %v1063, %v1062
      %v1107 = vpack.c.bf16 %v1065, %v1064
      %v1108 = vpack.c.bf16 %v1067, %v1066
      %v1109 = vpack.c.bf16 %v1069, %v1068
      %v1110 = vpack.c.bf16 %v1071, %v1070
      %v1111 = vpack.c.bf16 %v1073, %v1072
      %v1112 = vpack.c.bf16 %v1075, %v1074
      %v1113 = vpack.c.bf16 %v1077, %v1076
      %v1114 = vpack.c.bf16 %v1079, %v1078
      %v1115 = vpack.c.bf16 %v1081, %v1080
      %v1116 = vpack.c.bf16 %v1083, %v1082
      %v1117 = vpack.c.bf16 %v1085, %v1084
      %v1150 = vunpack.c.l.b16 %v1086
      %v1151 = vunpack.c.h.b16 %v1086
      %v1152 = vunpack.c.l.b16 %v1087
      %v1153 = vunpack.c.h.b16 %v1087
      %v1154 = vunpack.c.l.b16 %v1088
      %v1155 = vunpack.c.h.b16 %v1088
      %v1156 = vunpack.c.l.b16 %v1089
      %v1157 = vunpack.c.h.b16 %v1089
      %v1158 = vunpack.c.l.b16 %v1090
      %v1159 = vunpack.c.h.b16 %v1090
      %v1160 = vunpack.c.l.b16 %v1091
      %v1161 = vunpack.c.h.b16 %v1091
      %v1162 = vunpack.c.l.b16 %v1092
      %v1163 = vunpack.c.h.b16 %v1092
      %v1164 = vunpack.c.l.b16 %v1093
      %v1165 = vunpack.c.h.b16 %v1093
      %v1166 = vunpack.c.l.b16 %v1094
      %v1167 = vunpack.c.h.b16 %v1094
      %v1168 = vunpack.c.l.b16 %v1095
      %v1169 = vunpack.c.h.b16 %v1095
      %v1170 = vunpack.c.l.b16 %v1096
      %v1171 = vunpack.c.h.b16 %v1096
      %v1172 = vunpack.c.l.b16 %v1097
      %v1173 = vunpack.c.h.b16 %v1097
      %v1174 = vunpack.c.l.b16 %v1098
      %v1175 = vunpack.c.h.b16 %v1098
      %v1176 = vunpack.c.l.b16 %v1099
      %v1177 = vunpack.c.h.b16 %v1099
      %v1178 = vunpack.c.l.b16 %v1100
      %v1179 = vunpack.c.h.b16 %v1100
      %v1180 = vunpack.c.l.b16 %v1101
      %v1181 = vunpack.c.h.b16 %v1101
      %v1182 = vunpack.c.l.b16 %v1102
      %v1183 = vunpack.c.h.b16 %v1102
      %v1184 = vunpack.c.l.b16 %v1103
      %v1185 = vunpack.c.h.b16 %v1103
      %v1186 = vunpack.c.l.b16 %v1104
      %v1187 = vunpack.c.h.b16 %v1104
      %v1188 = vunpack.c.l.b16 %v1105
      %v1189 = vunpack.c.h.b16 %v1105
      %v1190 = vunpack.c.l.b16 %v1106
      %v1191 = vunpack.c.h.b16 %v1106
      %v1192 = vunpack.c.l.b16 %v1107
      %v1193 = vunpack.c.h.b16 %v1107
      %v1194 = vunpack.c.l.b16 %v1108
      %v1195 = vunpack.c.h.b16 %v1108
      %v1196 = vunpack.c.l.b16 %v1109
      %v1197 = vunpack.c.h.b16 %v1109
      %v1198 = vunpack.c.l.b16 %v1110
      %v1199 = vunpack.c.h.b16 %v1110
      %v1200 = vunpack.c.l.b16 %v1111
      %v1201 = vunpack.c.h.b16 %v1111
      %v1202 = vunpack.c.l.b16 %v1112
      %v1203 = vunpack.c.h.b16 %v1112
      %v1204 = vunpack.c.l.b16 %v1113
      %v1205 = vunpack.c.h.b16 %v1113
      %v1206 = vunpack.c.l.b16 %v1114
      %v1207 = vunpack.c.h.b16 %v1114
      %v1208 = vunpack.c.l.b16 %v1115
      %v1209 = vunpack.c.h.b16 %v1115
      %v1210 = vunpack.c.l.b16 %v1116
      %v1211 = vunpack.c.h.b16 %v1116
      %v1212 = vunpack.c.l.b16 %v1117
      %v1213 = vunpack.c.h.b16 %v1117
      %v1214 = vpack.c.b16 %v1150, %v1150
      %v1215 = vpack.c.b16 %v1151, %v1151
      %v1216 = vpack.c.b16 %v1152, %v1152
      %v1217 = vpack.c.b16 %v1153, %v1153
      %v1218 = vpack.c.b16 %v1154, %v1154
      %v1219 = vpack.c.b16 %v1155, %v1155
      %v1220 = vpack.c.b16 %v1156, %v1156
      %v1221 = vpack.c.b16 %v1157, %v1157
      %v1222 = vpack.c.b16 %v1158, %v1158
      %v1223 = vpack.c.b16 %v1159, %v1159
      %v1224 = vpack.c.b16 %v1160, %v1160
      %v1225 = vpack.c.b16 %v1161, %v1161
      %v1226 = vpack.c.b16 %v1162, %v1162
      %v1227 = vpack.c.b16 %v1163, %v1163
      %v1228 = vpack.c.b16 %v1164, %v1164
      %v1229 = vpack.c.b16 %v1165, %v1165
      %v1230 = vpack.c.b16 %v1166, %v1166
      %v1231 = vpack.c.b16 %v1167, %v1167
      %v1232 = vpack.c.b16 %v1168, %v1168
      %v1233 = vpack.c.b16 %v1169, %v1169
      %v1234 = vpack.c.b16 %v1170, %v1170
      %v1235 = vpack.c.b16 %v1171, %v1171
      %v1236 = vpack.c.b16 %v1172, %v1172
      %v1237 = vpack.c.b16 %v1173, %v1173
      %v1238 = vpack.c.b16 %v1174, %v1174
      %v1239 = vpack.c.b16 %v1175, %v1175
      %v1240 = vpack.c.b16 %v1176, %v1176
      %v1241 = vpack.c.b16 %v1177, %v1177
      %v1242 = vpack.c.b16 %v1178, %v1178
      %v1243 = vpack.c.b16 %v1179, %v1179
      %v1244 = vpack.c.b16 %v1180, %v1180
      %v1245 = vpack.c.b16 %v1181, %v1181
      %v1246 = vpack.c.b16 %v1182, %v1182
      %v1247 = vpack.c.b16 %v1183, %v1183
      %v1248 = vpack.c.b16 %v1184, %v1184
      %v1249 = vpack.c.b16 %v1185, %v1185
      %v1250 = vpack.c.b16 %v1186, %v1186
      %v1251 = vpack.c.b16 %v1187, %v1187
      %v1252 = vpack.c.b16 %v1188, %v1188
      %v1253 = vpack.c.b16 %v1189, %v1189
      %v1254 = vpack.c.b16 %v1190, %v1190
      %v1255 = vpack.c.b16 %v1191, %v1191
      %v1256 = vpack.c.b16 %v1192, %v1192
      %v1257 = vpack.c.b16 %v1193, %v1193
      %v1258 = vpack.c.b16 %v1194, %v1194
      %v1259 = vpack.c.b16 %v1195, %v1195
      %v1260 = vpack.c.b16 %v1196, %v1196
      %v1261 = vpack.c.b16 %v1197, %v1197
      %v1262 = vpack.c.b16 %v1198, %v1198
      %v1263 = vpack.c.b16 %v1199, %v1199
      %v1264 = vpack.c.b16 %v1200, %v1200
      %v1265 = vpack.c.b16 %v1201, %v1201
      %v1266 = vpack.c.b16 %v1202, %v1202
      %v1267 = vpack.c.b16 %v1203, %v1203
      %v1268 = vpack.c.b16 %v1204, %v1204
      %v1269 = vpack.c.b16 %v1205, %v1205
      %v1270 = vpack.c.b16 %v1206, %v1206
      %v1271 = vpack.c.b16 %v1207, %v1207
      %v1272 = vpack.c.b16 %v1208, %v1208
      %v1273 = vpack.c.b16 %v1209, %v1209
      %v1274 = vpack.c.b16 %v1210, %v1210
      %v1275 = vpack.c.b16 %v1211, %v1211
      %v1276 = vpack.c.b16 %v1212, %v1212
      %v1277 = vpack.c.b16 %v1213, %v1213
      %1342 = vst [vmem:[%s211] sm:$0xf] %v1214
      %1343 = vst [vmem:[%s211 + $0x4] sm:$0xf] %v1215
      %1344 = vst [vmem:[%s211 + $0x8] sm:$0xf] %v1216
      %1345 = vst [vmem:[%s211 + $0xc] sm:$0xf] %v1217
      %1346 = vst [vmem:[%s211 + $0x10] sm:$0xf] %v1218
      %1347 = vst [vmem:[%s211 + $0x14] sm:$0xf] %v1219
      %1348 = vst [vmem:[%s211 + $0x18] sm:$0xf] %v1220
      %1349 = vst [vmem:[%s211 + $0x1c] sm:$0xf] %v1221
      %1350 = vst [vmem:[%s211 + $0x20] sm:$0xf] %v1222
      %1351 = vst [vmem:[%s211 + $0x24] sm:$0xf] %v1223
      %1352 = vst [vmem:[%s211 + $0x28] sm:$0xf] %v1224
      %1353 = vst [vmem:[%s211 + $0x2c] sm:$0xf] %v1225
      %1354 = vst [vmem:[%s211 + $0x30] sm:$0xf] %v1226
      %1355 = vst [vmem:[%s211 + $0x34] sm:$0xf] %v1227
      %1356 = vst [vmem:[%s211 + $0x38] sm:$0xf] %v1228
      %1357 = vst [vmem:[%s211 + $0x3c] sm:$0xf] %v1229
      %1358 = vst [vmem:[%s211 + $0x40] sm:$0xf] %v1230
      %1359 = vst [vmem:[%s211 + $0x44] sm:$0xf] %v1231
      %1360 = vst [vmem:[%s211 + $0x48] sm:$0xf] %v1232
      %1361 = vst [vmem:[%s211 + $0x4c] sm:$0xf] %v1233
      %1362 = vst [vmem:[%s211 + $0x50] sm:$0xf] %v1234
      %1363 = vst [vmem:[%s211 + $0x54] sm:$0xf] %v1235
      %1364 = vst [vmem:[%s211 + $0x58] sm:$0xf] %v1236
      %1365 = vst [vmem:[%s211 + $0x5c] sm:$0xf] %v1237
      %1366 = vst [vmem:[%s211 + $0x60] sm:$0xf] %v1238
      %1367 = vst [vmem:[%s211 + $0x64] sm:$0xf] %v1239
      %1368 = vst [vmem:[%s211 + $0x68] sm:$0xf] %v1240
      %1369 = vst [vmem:[%s211 + $0x6c] sm:$0xf] %v1241
      %1370 = vst [vmem:[%s211 + $0x70] sm:$0xf] %v1242
      %1371 = vst [vmem:[%s211 + $0x74] sm:$0xf] %v1243
      %1372 = vst [vmem:[%s211 + $0x78] sm:$0xf] %v1244
      %1373 = vst [vmem:[%s211 + $0x7c] sm:$0xf] %v1245
      %1374 = vst [vmem:[%s211 + $0x80] sm:$0xf] %v1246
      %1375 = vst [vmem:[%s211 + $0x84] sm:$0xf] %v1247
      %1376 = vst [vmem:[%s211 + $0x88] sm:$0xf] %v1248
      %1377 = vst [vmem:[%s211 + $0x8c] sm:$0xf] %v1249
      %1378 = vst [vmem:[%s211 + $0x90] sm:$0xf] %v1250
      %1379 = vst [vmem:[%s211 + $0x94] sm:$0xf] %v1251
      %1380 = vst [vmem:[%s211 + $0x98] sm:$0xf] %v1252
      %1381 = vst [vmem:[%s211 + $0x9c] sm:$0xf] %v1253
      %1382 = vst [vmem:[%s211 + $0xa0] sm:$0xf] %v1254
      %1383 = vst [vmem:[%s211 + $0xa4] sm:$0xf] %v1255
      %1384 = vst [vmem:[%s211 + $0xa8] sm:$0xf] %v1256
      %1385 = vst [vmem:[%s211 + $0xac] sm:$0xf] %v1257
      %1386 = vst [vmem:[%s211 + $0xb0] sm:$0xf] %v1258
      %1387 = vst [vmem:[%s211 + $0xb4] sm:$0xf] %v1259
      %1388 = vst [vmem:[%s211 + $0xb8] sm:$0xf] %v1260
      %1389 = vst [vmem:[%s211 + $0xbc] sm:$0xf] %v1261
      %1390 = vst [vmem:[%s211 + $0xc0] sm:$0xf] %v1262
      %1391 = vst [vmem:[%s211 + $0xc4] sm:$0xf] %v1263
      %1392 = vst [vmem:[%s211 + $0xc8] sm:$0xf] %v1264
      %1393 = vst [vmem:[%s211 + $0xcc] sm:$0xf] %v1265
      %1394 = vst [vmem:[%s211 + $0xd0] sm:$0xf] %v1266
      %1395 = vst [vmem:[%s211 + $0xd4] sm:$0xf] %v1267
      %1396 = vst [vmem:[%s211 + $0xd8] sm:$0xf] %v1268
      %1397 = vst [vmem:[%s211 + $0xdc] sm:$0xf] %v1269
      %1398 = vst [vmem:[%s211 + $0xe0] sm:$0xf] %v1270
      %1399 = vst [vmem:[%s211 + $0xe4] sm:$0xf] %v1271
      %1400 = vst [vmem:[%s211 + $0xe8] sm:$0xf] %v1272
      %1401 = vst [vmem:[%s211 + $0xec] sm:$0xf] %v1273
      %1402 = vst [vmem:[%s211 + $0xf0] sm:$0xf] %v1274
      %1403 = vst [vmem:[%s211 + $0xf4] sm:$0xf] %v1275
      %1404 = vst [vmem:[%s211 + $0xf8] sm:$0xf] %v1276
      %1405 = vst [vmem:[%s211 + $0xfc] sm:$0xf] %v1277
      %s1406 = smul.u32 64, %s19
      %p1407 = scmp.lt.s32.totalorder %s18, 1
      %s1408 = scalar_select %p1407, %s18, 1
      %p1409 = scmp.lt.s32.totalorder %s1406, 63
      %s1410 = scalar_select %p1409, %s1406, 63
      %s1411 = smul.addr %s1408, 64
      %s1412 = sadd.s32 %s1410, %s1411
      %s1413 = smul.addr %s1412, 4
      %s1414 = scalar_lea.vmem %s3, %s1413
      // Predicated region
      $region33: #{_lambda_.11} parent=31 // pred_check
        %p1415 = pneg %p116
      $region34: #{_lambda_.11} parent=31 // pred_check_branch
        %1417 = sbr.rel (%p1415) target = $region36
      $region35: #{_lambda_.11} parent=31 // pred_region
        %s1418 = smul.u32 64, %s19
      $region36: #{_lambda_.11} parent=31 // pred_fallthru
        _
    $region32: #{_lambda_.11} parent=5 // pred_fallthru
      _
    %p1419 = scmp.le.s32.totalorder 2, %s9
    // Predicated region
    $region37: #{_lambda_.11} parent=5 // pred_check
      %p1420 = pneg %p1419
    $region38: #{_lambda_.11} parent=5 // pred_check_branch
      %1422 = sbr.rel (%p1420) target = $region40
    $region39: #{_lambda_.11} parent=5 // pred_region
      %s1423 = ssub.s32 %s9, 2
      // Predicated region
      $region41: #{_lambda_.11} parent=39 // pred_check
        %p1424 = pneg %p122
      $region42: #{_lambda_.11} parent=39 // pred_check_branch
        %1426 = sbr.rel (%p1424) target = $region44
      $region43: #{_lambda_.11} parent=39 // pred_region
        %s1427 = smul.u32 64, %s21
        %p1428 = scmp.lt.s32.totalorder %s20, 1
        %s1429 = scalar_select %p1428, %s20, 1
        %p1430 = scmp.lt.s32.totalorder %s1427, 63
        %s1431 = scalar_select %p1430, %s1427, 63
        %s1432 = smul.addr %s1429, 64
        %s1433 = sadd.s32 %s1431, %s1432
        %s1434 = smul.addr %s1433, 4
        %s1435 = scalar_lea.vmem %s3, %s1434
      $region44: #{_lambda_.11} parent=39 // pred_fallthru
        _
    $region40: #{_lambda_.11} parent=5 // pred_fallthru
      _
  $region6: #{_lambda_.11} parent=0 // loop_footer
    %s13 = sadd.s32 1, %s9
  $region7: #{_lambda_.11} parent=0 // loop_footer_branch
    %8 = sbr.rel target = $region3
  $region8: #{_lambda_.11} parent=0 // loop_exit
    _

// kernel: _lambda_.12
$region0: #{_lambda_.12}
  #allocation0 [shape = 'u32[]', space=smem, size = 0x4, offset = 0x4, fixed_abs, tag = 'smem constant byte address 0x4 - core index']
  #allocation1 [shape = 'u32[144,128]{1,0:T(1,128)}', space=vmem, size = 0x12000, scoped, tag = 'internal scratch']
  %s0 = inlined_call_operand.vmem [shape: bf16[2,128,256], index: 0, kind: input, shape index: {}]
  %s1 = inlined_call_operand.vmem [shape: bf16[256,128], index: 1, kind: input, shape index: {}]
  %s2 = inlined_call_operand.vmem [shape: f32[1,128], index: 2, kind: input, shape index: {}]
  %s3 = inlined_call_operand.vmem [shape: bf16[2,128,128], index: 3, kind: output, shape index: {}]
  %s4 = sld [smem:[#allocation0]]
  $region45: #{_lambda_.12} parent=0
    _
  %s6 = ssub.s32 1, %s4
  %s7 = scalar_select 0, %s6, %s4
  loop: start=0, step=1, limit=4
  $region2: #{_lambda_.12} parent=0 // loop_pre_header
    _
  $region3: #{_lambda_.12} parent=0 // loop_header
    %s9 = sphi 0, %s13
    %p10 = scmp.ge.s32.totalorder %s9, 4
    %s16 = sphi 0, %s28
    %s17 = sphi 0, %s24
    %s18 = sphi 0, %s16
    %s19 = sphi 0, %s17
    %s20 = sphi 0, %s18
    %s21 = sphi 0, %s19
    %s33 = sphi 0, %s35
    %s36 = sphi 0, %s33
    %s37 = sphi 0, %s36
    %s53 = sphi 0, %s37
    %s57 = sphi 0, %s57
    %s59 = sphi 0, %s57
    %s60 = sphi 0, %s59
    %s74 = sphi 0, %s60
    %s78 = sphi 0, %s78
    %s80 = sphi 0, %s78
    %s81 = sphi 0, %s80
    %s95 = sphi 0, %s81
    %s103 = sphi 0, %s105
    %s106 = sphi 0, %s103
    %s107 = sphi 0, %s106
    %s123 = sphi 0, %s107
  $region4: #{_lambda_.12} parent=0 // loop_header_branch
    %12 = sbr.rel (%p10) target = $region8
  $region5: #{_lambda_.12} parent=0 // loop_body
    %s14 = ssub.s32 %s9, 1
    %s15 = ssub.s32 %s9, 2
    %s22 = sadd.s32 1, %s17
    %p23 = scmp.ge.s32.totalorder %s22, 1
    %s24 = scalar_select %p23, 0, %s22
    %s25 = sadd.s32 1, %s16
    %s26 = scalar_select %p23, %s25, %s16
    %p27 = scmp.ge.s32.totalorder %s26, 2
    %s28 = scalar_select %p27, 0, %s26
    %s29 = ssub.s32 %s16, %s28
    %s30 = ssub.s32 %s17, %s24
    %s31 = sor.u32 %s29, %s30
    %p32 = scmp.eq.s32.totalorder %s31, 0
    %s34 = sadd.s32 %s33, 1
    %s35 = scalar_select %p32, %s33, %s34
    %p38 = pneg %p32
    %p39 = scmp.eq.s32.totalorder %s9, 1
    %p40 = por %p38, %p39
    %p41 = scmp.ne.s32.totalorder %s33, %s36
    %p42 = scmp.eq.s32.totalorder %s9, 0
    %p43 = por %p41, %p42
    %p44 = scmp.ne.s32.totalorder %s33, %s36
    %p45 = scmp.eq.s32.totalorder %s14, 1
    %p46 = por %p44, %p45
    %p47 = scmp.ne.s32.totalorder %s36, %s37
    %p48 = scmp.eq.s32.totalorder %s14, 0
    %p49 = por %p47, %p48
    %p50 = scmp.ne.s32.totalorder %s36, %s37
    %p51 = scmp.eq.s32.totalorder %s15, 1
    %p52 = por %p50, %p51
    %p54 = scmp.ne.s32.totalorder %s37, %s53
    %p55 = scmp.eq.s32.totalorder %s15, 0
    %p56 = por %p54, %p55
    %s58 = sadd.s32 %s57, 1
    %p61 = scmp.eq.s32.totalorder %s9, 1
    %p62 = scmp.ne.s32.totalorder %s57, %s59
    %p63 = scmp.eq.s32.totalorder %s9, 0
    %p64 = por %p62, %p63
    %p65 = scmp.ne.s32.totalorder %s57, %s59
    %p66 = scmp.eq.s32.totalorder %s14, 1
    %p67 = por %p65, %p66
    %p68 = scmp.ne.s32.totalorder %s59, %s60
    %p69 = scmp.eq.s32.totalorder %s14, 0
    %p70 = por %p68, %p69
    %p71 = scmp.ne.s32.totalorder %s59, %s60
    %p72 = scmp.eq.s32.totalorder %s15, 1
    %p73 = por %p71, %p72
    %p75 = scmp.ne.s32.totalorder %s60, %s74
    %p76 = scmp.eq.s32.totalorder %s15, 0
    %p77 = por %p75, %p76
    %s79 = sadd.s32 %s78, 1
    %p82 = scmp.eq.s32.totalorder %s9, 1
    %p83 = scmp.ne.s32.totalorder %s78, %s80
    %p84 = scmp.eq.s32.totalorder %s9, 0
    %p85 = por %p83, %p84
    %p86 = scmp.ne.s32.totalorder %s78, %s80
    %p87 = scmp.eq.s32.totalorder %s14, 1
    %p88 = por %p86, %p87
    %p89 = scmp.ne.s32.totalorder %s80, %s81
    %p90 = scmp.eq.s32.totalorder %s14, 0
    %p91 = por %p89, %p90
    %p92 = scmp.ne.s32.totalorder %s80, %s81
    %p93 = scmp.eq.s32.totalorder %s15, 1
    %p94 = por %p92, %p93
    %p96 = scmp.ne.s32.totalorder %s81, %s95
    %p97 = scmp.eq.s32.totalorder %s15, 0
    %p98 = por %p96, %p97
    %s99 = ssub.s32 %s16, %s28
    %s100 = ssub.s32 %s17, %s24
    %s101 = sor.u32 %s99, %s100
    %p102 = scmp.eq.s32.totalorder %s101, 0
    %s104 = sadd.s32 %s103, 1
    %s105 = scalar_select %p102, %s103, %s104
    %p108 = pneg %p102
    %p109 = scmp.eq.s32.totalorder %s9, 1
    %p110 = por %p108, %p109
    %p111 = scmp.ne.s32.totalorder %s103, %s106
    %p112 = scmp.eq.s32.totalorder %s9, 0
    %p113 = por %p111, %p112
    %p114 = scmp.ne.s32.totalorder %s103, %s106
    %p115 = scmp.eq.s32.totalorder %s14, 1
    %p116 = por %p114, %p115
    %p117 = scmp.ne.s32.totalorder %s106, %s107
    %p118 = scmp.eq.s32.totalorder %s14, 0
    %p119 = por %p117, %p118
    %p120 = scmp.ne.s32.totalorder %s106, %s107
    %p121 = scmp.eq.s32.totalorder %s15, 1
    %p122 = por %p120, %p121
    %p124 = scmp.ne.s32.totalorder %s107, %s123
    %p125 = scmp.eq.s32.totalorder %s15, 0
    %p126 = por %p124, %p125
    %p127 = scmp.le.s32.totalorder 1, %s9
    %p128 = scmp.lt.s32.totalorder %s9, 3
    %p129 = pnand %p127, %p128
    %p130 = pneg %p129
    // Predicated region
    $region9: #{_lambda_.12} parent=5 // pred_check
      _
    $region10: #{_lambda_.12} parent=5 // pred_check_branch
      %132 = sbr.rel (%p129) target = $region12
    $region11: #{_lambda_.12} parent=5 // pred_region
      %s133 = ssub.s32 %s9, 1
      // Predicated region
      $region13: #{_lambda_.12} parent=11 // pred_check
        %p134 = pneg %p70
      $region14: #{_lambda_.12} parent=11 // pred_check_branch
        %136 = sbr.rel (%p134) target = $region16
      $region15: #{_lambda_.12} parent=11 // pred_region
        _
      $region16: #{_lambda_.12} parent=11 // pred_fallthru
        _
      // Predicated region
      $region17: #{_lambda_.12} parent=11 // pred_check
        %p137 = pneg %p91
      $region18: #{_lambda_.12} parent=11 // pred_check_branch
        %139 = sbr.rel (%p137) target = $region20
      $region19: #{_lambda_.12} parent=11 // pred_region
        _
      $region20: #{_lambda_.12} parent=11 // pred_fallthru
        _
    $region12: #{_lambda_.12} parent=5 // pred_fallthru
      _
    %p140 = scmp.lt.s32.totalorder %s9, 2
    // Predicated region
    $region21: #{_lambda_.12} parent=5 // pred_check
      %p141 = pneg %p140
    $region22: #{_lambda_.12} parent=5 // pred_check_branch
      %143 = sbr.rel (%p141) target = $region24
    $region23: #{_lambda_.12} parent=5 // pred_region
      // Predicated region
      $region25: #{_lambda_.12} parent=23 // pred_check
        %p144 = pneg %p43
      $region26: #{_lambda_.12} parent=23 // pred_check_branch
        %146 = sbr.rel (%p144) target = $region28
      $region27: #{_lambda_.12} parent=23 // pred_region
        %s147 = smul.u32 16, %s17
        %p148 = scmp.lt.s32.totalorder %s16, 1
        %s149 = scalar_select %p148, %s16, 1
        %p150 = scmp.lt.s32.totalorder %s147, 15
        %s151 = scalar_select %p150, %s147, 15
        %s152 = smul.addr %s151, 2
        %s153 = smul.addr %s149, 32
        %s154 = sadd.s32 %s152, %s153
        %s155 = smul.addr %s154, 4
        %s156 = scalar_lea.vmem %s0, %s155
        %s157 = smul.u32 16, %s17
      $region28: #{_lambda_.12} parent=23 // pred_fallthru
        _
    $region24: #{_lambda_.12} parent=5 // pred_fallthru
      _
    %p158 = scmp.le.s32.totalorder 1, %s9
    %p159 = scmp.lt.s32.totalorder %s9, 3
    %p160 = pnand %p158, %p159
    %p161 = pneg %p160
    // Predicated region
    $region29: #{_lambda_.12} parent=5 // pred_check
      _
    $region30: #{_lambda_.12} parent=5 // pred_check_branch
      %163 = sbr.rel (%p160) target = $region32
    $region31: #{_lambda_.12} parent=5 // pred_region
      %s164 = ssub.s32 %s9, 1
      %s165 = smul.u32 16, %s19
      %p166 = scmp.lt.s32.totalorder %s18, 1
      %s167 = scalar_select %p166, %s18, 1
      %p168 = scmp.lt.s32.totalorder %s165, 15
      %s169 = scalar_select %p168, %s165, 15
      %s170 = smul.addr %s169, 2
      %s171 = smul.addr %s167, 32
      %s172 = sadd.s32 %s170, %s171
      %s173 = smul.addr %s172, 4
      %s174 = scalar_lea.vmem %s0, %s173
      %p175 = pneg %p49
      %p176 = pneg %p46
      %p177 = pneg %p70
      %p178 = pneg %p67
      %p179 = pneg %p91
      %p180 = pneg %p88
      %p181 = pneg %p119
      %p182 = pneg %p116
      %s183 = smul.u32 16, %s19
      %p184 = scmp.lt.s32.totalorder %s18, 1
      %s185 = scalar_select %p184, %s18, 1
      %p186 = scmp.lt.s32.totalorder %s183, 15
      %s187 = scalar_select %p186, %s183, 15
      %s188 = smul.addr %s185, 16
      %s189 = sadd.s32 %s187, %s188
      %s190 = smul.addr %s189, 4
      %s191 = scalar_lea.vmem %s3, %s190
      %s192 = smul.u32 16, %s19
      %p193 = scmp.lt.s32.totalorder %s18, 1
      %s194 = scalar_select %p193, %s18, 1
      %p195 = scmp.lt.s32.totalorder %s192, 15
      %s196 = scalar_select %p195, %s192, 15
      %s197 = smul.addr %s196, 2
      %s198 = smul.addr %s194, 32
      %s199 = sadd.s32 %s197, %s198
      %s200 = smul.addr %s199, 4
      %s201 = scalar_lea.vmem %s0, %s200
      %s202 = smul.u32 16, %s19
      %s203 = smul.u32 16, %s19
      %p204 = scmp.lt.s32.totalorder %s18, 1
      %s205 = scalar_select %p204, %s18, 1
      %p206 = scmp.lt.s32.totalorder %s203, 15
      %s207 = scalar_select %p206, %s203, 15
      %s208 = smul.addr %s205, 16
      %s209 = sadd.s32 %s207, %s208
      %s210 = smul.addr %s209, 4
      %s211 = scalar_lea.vmem %s3, %s210
      %s212 = smul.u32 16, %s19
      %v214 = vld [vmem:[%s201] sm:$0xff]
      %v215 = vld [vmem:[%s201 + $0x8] sm:$0xff]
      %v216 = vld [vmem:[%s201 + $0x10] sm:$0xff]
      %v217 = vld [vmem:[%s201 + $0x18] sm:$0xff]
      %v218 = vld [vmem:[%s201 + $0x20] sm:$0xff]
      %v219 = vld [vmem:[%s201 + $0x28] sm:$0xff]
      %v220 = vld [vmem:[%s201 + $0x30] sm:$0xff]
      %v221 = vld [vmem:[%s201 + $0x38] sm:$0xff]
      %v222 = vld [vmem:[%s201 + $0x40] sm:$0xff]
      %v223 = vld [vmem:[%s201 + $0x48] sm:$0xff]
      %v224 = vld [vmem:[%s201 + $0x50] sm:$0xff]
      %v225 = vld [vmem:[%s201 + $0x58] sm:$0xff]
      %v226 = vld [vmem:[%s201 + $0x60] sm:$0xff]
      %v227 = vld [vmem:[%s201 + $0x68] sm:$0xff]
      %v228 = vld [vmem:[%s201 + $0x70] sm:$0xff]
      %v229 = vld [vmem:[%s201 + $0x78] sm:$0xff]
      %v230 = vld [vmem:[%s1] sm:$0xf]
      %v231 = vld [vmem:[%s1 + $0x4] sm:$0xf]
      %v232 = vld [vmem:[%s1 + $0x8] sm:$0xf]
      %v233 = vld [vmem:[%s1 + $0xc] sm:$0xf]
      %v234 = vld [vmem:[%s1 + $0x10] sm:$0xf]
      %v235 = vld [vmem:[%s1 + $0x14] sm:$0xf]
      %v236 = vld [vmem:[%s1 + $0x18] sm:$0xf]
      %v237 = vld [vmem:[%s1 + $0x1c] sm:$0xf]
      %v238 = vld [vmem:[%s1 + $0x20] sm:$0xf]
      %v239 = vld [vmem:[%s1 + $0x24] sm:$0xf]
      %v240 = vld [vmem:[%s1 + $0x28] sm:$0xf]
      %v241 = vld [vmem:[%s1 + $0x2c] sm:$0xf]
      %v242 = vld [vmem:[%s1 + $0x30] sm:$0xf]
      %v243 = vld [vmem:[%s1 + $0x34] sm:$0xf]
      %v244 = vld [vmem:[%s1 + $0x38] sm:$0xf]
      %v245 = vld [vmem:[%s1 + $0x3c] sm:$0xf]
      %v246 = vld [vmem:[%s1 + $0x40] sm:$0xf]
      %v247 = vld [vmem:[%s1 + $0x44] sm:$0xf]
      %v248 = vld [vmem:[%s1 + $0x48] sm:$0xf]
      %v249 = vld [vmem:[%s1 + $0x4c] sm:$0xf]
      %v250 = vld [vmem:[%s1 + $0x50] sm:$0xf]
      %v251 = vld [vmem:[%s1 + $0x54] sm:$0xf]
      %v252 = vld [vmem:[%s1 + $0x58] sm:$0xf]
      %v253 = vld [vmem:[%s1 + $0x5c] sm:$0xf]
      %v254 = vld [vmem:[%s1 + $0x60] sm:$0xf]
      %v255 = vld [vmem:[%s1 + $0x64] sm:$0xf]
      %v256 = vld [vmem:[%s1 + $0x68] sm:$0xf]
      %v257 = vld [vmem:[%s1 + $0x6c] sm:$0xf]
      %v258 = vld [vmem:[%s1 + $0x70] sm:$0xf]
      %v259 = vld [vmem:[%s1 + $0x74] sm:$0xf]
      %v260 = vld [vmem:[%s1 + $0x78] sm:$0xf]
      %v261 = vld [vmem:[%s1 + $0x7c] sm:$0xf]
      %v262 = vld [vmem:[%s2] sm:$0x1]
      %v264 = vlaneseq
      %v265 = vshrl.u32 %v264, 7
      %v266 = vsub.s32 0, %v265
      %v267 = vrot.slane %v262, %v266
      %v285 = vunpack.c.l.b16 %v214
      %v286 = vunpack.c.h.b16 %v214
      %v287 = vunpack.c.l.b16 %v215
      %v288 = vunpack.c.h.b16 %v215
      %v289 = vunpack.c.l.b16 %v216
      %v290 = vunpack.c.h.b16 %v216
      %v291 = vunpack.c.l.b16 %v217
      %v292 = vunpack.c.h.b16 %v217
      %v293 = vunpack.c.l.b16 %v218
      %v294 = vunpack.c.h.b16 %v218
      %v295 = vunpack.c.l.b16 %v219
      %v296 = vunpack.c.h.b16 %v219
      %v297 = vunpack.c.l.b16 %v220
      %v298 = vunpack.c.h.b16 %v220
      %v299 = vunpack.c.l.b16 %v221
      %v300 = vunpack.c.h.b16 %v221
      %v301 = vunpack.c.l.b16 %v222
      %v302 = vunpack.c.h.b16 %v222
      %v303 = vunpack.c.l.b16 %v223
      %v304 = vunpack.c.h.b16 %v223
      %v305 = vunpack.c.l.b16 %v224
      %v306 = vunpack.c.h.b16 %v224
      %v307 = vunpack.c.l.b16 %v225
      %v308 = vunpack.c.h.b16 %v225
      %v309 = vunpack.c.l.b16 %v226
      %v310 = vunpack.c.h.b16 %v226
      %v311 = vunpack.c.l.b16 %v227
      %v312 = vunpack.c.h.b16 %v227
      %v313 = vunpack.c.l.b16 %v228
      %v314 = vunpack.c.h.b16 %v228
      %v315 = vunpack.c.l.b16 %v229
      %v316 = vunpack.c.h.b16 %v229
      %v317 = vpack.c.b16 %v287, %v285
      %v318 = vpack.c.b16 %v288, %v286
      %v319 = vpack.c.b16 %v291, %v289
      %v320 = vpack.c.b16 %v292, %v290
      %v321 = vpack.c.b16 %v295, %v293
      %v322 = vpack.c.b16 %v296, %v294
      %v323 = vpack.c.b16 %v299, %v297
      %v324 = vpack.c.b16 %v300, %v298
      %v325 = vpack.c.b16 %v303, %v301
      %v326 = vpack.c.b16 %v304, %v302
      %v327 = vpack.c.b16 %v307, %v305
      %v328 = vpack.c.b16 %v308, %v306
      %v329 = vpack.c.b16 %v311, %v309
      %v330 = vpack.c.b16 %v312, %v310
      %v331 = vpack.c.b16 %v315, %v313
      %v332 = vpack.c.b16 %v316, %v314
      %v381 = vunpack.c.l.b16 %v230
      %v382 = vunpack.c.l.b16 %v231
      %v383 = vunpack.c.l.b16 %v232
      %v384 = vunpack.c.l.b16 %v233
      %v385 = vunpack.c.l.b16 %v234
      %v386 = vunpack.c.l.b16 %v235
      %v387 = vunpack.c.l.b16 %v236
      %v388 = vunpack.c.l.b16 %v237
      %v389 = vunpack.c.l.b16 %v238
      %v390 = vunpack.c.l.b16 %v239
      %v391 = vunpack.c.l.b16 %v240
      %v392 = vunpack.c.l.b16 %v241
      %v393 = vunpack.c.l.b16 %v242
      %v394 = vunpack.c.l.b16 %v243
      %v395 = vunpack.c.l.b16 %v244
      %v396 = vunpack.c.l.b16 %v245
      %v397 = vunpack.c.l.b16 %v246
      %v398 = vunpack.c.l.b16 %v247
      %v399 = vunpack.c.l.b16 %v248
      %v400 = vunpack.c.l.b16 %v249
      %v401 = vunpack.c.l.b16 %v250
      %v402 = vunpack.c.l.b16 %v251
      %v403 = vunpack.c.l.b16 %v252
      %v404 = vunpack.c.l.b16 %v253
      %v405 = vunpack.c.l.b16 %v254
      %v406 = vunpack.c.l.b16 %v255
      %v407 = vunpack.c.l.b16 %v256
      %v408 = vunpack.c.l.b16 %v257
      %v409 = vunpack.c.l.b16 %v258
      %v410 = vunpack.c.l.b16 %v259
      %v411 = vunpack.c.l.b16 %v260
      %v412 = vunpack.c.l.b16 %v261
      %v413 = vpack.c.b16 %v382, %v381
      %v414 = vpack.c.b16 %v384, %v383
      %v415 = vpack.c.b16 %v386, %v385
      %v416 = vpack.c.b16 %v388, %v387
      %v417 = vpack.c.b16 %v390, %v389
      %v418 = vpack.c.b16 %v392, %v391
      %v419 = vpack.c.b16 %v394, %v393
      %v420 = vpack.c.b16 %v396, %v395
      %v421 = vpack.c.b16 %v398, %v397
      %v422 = vpack.c.b16 %v400, %v399
      %v423 = vpack.c.b16 %v402, %v401
      %v424 = vpack.c.b16 %v404, %v403
      %v425 = vpack.c.b16 %v406, %v405
      %v426 = vpack.c.b16 %v408, %v407
      %v427 = vpack.c.b16 %v410, %v409
      %v428 = vpack.c.b16 %v412, %v411
      %445 = vmatprep.subr.bf16.mxu0 0
      %446 = vmatpush1.bf16.msra.mxu0 %v420
      %447 = vmatprep.subr.bf16.mxu0 0
      %448 = vmatpush1.bf16.msra.mxu0 %v419
      %449 = vmatprep.subr.bf16.mxu0 0
      %450 = vmatpush1.bf16.msra.mxu0 %v418
      %451 = vmatprep.subr.bf16.mxu0 0
      %452 = vmatpush1.bf16.msra.mxu0 %v417
      %453 = vmatprep.subr.bf16.mxu0 0
      %454 = vmatpush1.bf16.msra.mxu0 %v416
      %455 = vmatprep.subr.bf16.mxu0 0
      %456 = vmatpush1.bf16.msra.mxu0 %v415
      %457 = vmatprep.subr.bf16.mxu0 0
      %458 = vmatpush1.bf16.msra.mxu0 %v414
      %459 = vmatprep.subr.bf16.mxu0 0
      %460 = vmatpush1.bf16.msra.mxu0 %v413
      %461 = vmatprep.subr.bf16.mxu0 0
      %462 = vmatpush2.bf16.msra.mxu0 %v428
      %463 = vmatprep.subr.bf16.mxu0 0
      %464 = vmatpush2.bf16.msra.mxu0 %v427
      %465 = vmatprep.subr.bf16.mxu0 0
      %466 = vmatpush2.bf16.msra.mxu0 %v426
      %467 = vmatprep.subr.bf16.mxu0 0
      %468 = vmatpush2.bf16.msra.mxu0 %v425
      %469 = vmatprep.subr.bf16.mxu0 0
      %470 = vmatpush2.bf16.msra.mxu0 %v424
      %471 = vmatprep.subr.bf16.mxu0 0
      %472 = vmatpush2.bf16.msra.mxu0 %v423
      %473 = vmatprep.subr.bf16.mxu0 0
      %474 = vmatpush2.bf16.msra.mxu0 %v422
      %475 = vmatprep.subr.bf16.mxu0 0
      %476 = vmatpush2.bf16.msra.mxu0 %v421
      %477 = vmatprep.mubr.bf16.mxu0 %v318
      %478 = vmatmul.mubr.bf16.gmra.mxu0 %v317
      %v479 = vpop.f32.mrf.mxu0
      %v480 = vadd.f32 %v267, %v479
      %v481 = vpop.f32.mrf.mxu0
      %v482 = vpop.f32.mrf.mxu0
      %v483 = vadd.f32 %v267, %v482
      %v484 = vpop.f32.mrf.mxu0
      %485 = vmatprep.mubr.bf16.mxu0 %v320
      %486 = vmatmul.mubr.bf16.gmra.mxu0 %v319
      %v487 = vpop.f32.mrf.mxu0
      %v488 = vadd.f32 %v267, %v487
      %v489 = vpop.f32.mrf.mxu0
      %v490 = vpop.f32.mrf.mxu0
      %v491 = vadd.f32 %v267, %v490
      %v492 = vpop.f32.mrf.mxu0
      %493 = vmatprep.mubr.bf16.mxu0 %v322
      %494 = vmatmul.mubr.bf16.gmra.mxu0 %v321
      %v495 = vpop.f32.mrf.mxu0
      %v496 = vadd.f32 %v267, %v495
      %v497 = vpop.f32.mrf.mxu0
      %v498 = vpop.f32.mrf.mxu0
      %v499 = vadd.f32 %v267, %v498
      %v500 = vpop.f32.mrf.mxu0
      %501 = vmatprep.mubr.bf16.mxu0 %v324
      %502 = vmatmul.mubr.bf16.gmra.mxu0 %v323
      %v503 = vpop.f32.mrf.mxu0
      %v504 = vadd.f32 %v267, %v503
      %v505 = vpop.f32.mrf.mxu0
      %v506 = vpop.f32.mrf.mxu0
      %v507 = vadd.f32 %v267, %v506
      %v508 = vpop.f32.mrf.mxu0
      %509 = vmatprep.mubr.bf16.mxu0 %v326
      %510 = vmatmul.mubr.bf16.gmra.mxu0 %v325
      %v511 = vpop.f32.mrf.mxu0
      %v512 = vadd.f32 %v267, %v511
      %v513 = vpop.f32.mrf.mxu0
      %v514 = vpop.f32.mrf.mxu0
      %v515 = vadd.f32 %v267, %v514
      %v516 = vpop.f32.mrf.mxu0
      %517 = vmatprep.mubr.bf16.mxu0 %v328
      %518 = vmatmul.mubr.bf16.gmra.mxu0 %v327
      %v519 = vpop.f32.mrf.mxu0
      %v520 = vadd.f32 %v267, %v519
      %v521 = vpop.f32.mrf.mxu0
      %v522 = vpop.f32.mrf.mxu0
      %v523 = vadd.f32 %v267, %v522
      %v524 = vpop.f32.mrf.mxu0
      %525 = vmatprep.mubr.bf16.mxu0 %v330
      %526 = vmatmul.mubr.bf16.gmra.mxu0 %v329
      %v527 = vpop.f32.mrf.mxu0
      %v528 = vadd.f32 %v267, %v527
      %v529 = vpop.f32.mrf.mxu0
      %v530 = vpop.f32.mrf.mxu0
      %v531 = vadd.f32 %v267, %v530
      %v532 = vpop.f32.mrf.mxu0
      %533 = vmatprep.mubr.bf16.mxu0 %v332
      %534 = vmatmul.mubr.bf16.gmra.mxu0 %v331
      %v535 = vpop.f32.mrf.mxu0
      %v536 = vadd.f32 %v267, %v535
      %v537 = vpop.f32.mrf.mxu0
      %v538 = vpop.f32.mrf.mxu0
      %v539 = vadd.f32 %v267, %v538
      %v540 = vpop.f32.mrf.mxu0
      %541 = vdwg.mxu0
      %v542 = vmax.f32 %v480, 0.0
      %v543 = vmax.f32 %v483, 0.0
      %v544 = vmax.f32 %v488, 0.0
      %v545 = vmax.f32 %v491, 0.0
      %v546 = vmax.f32 %v496, 0.0
      %v547 = vmax.f32 %v499, 0.0
      %v548 = vmax.f32 %v504, 0.0
      %v549 = vmax.f32 %v507, 0.0
      %v550 = vmax.f32 %v512, 0.0
      %v551 = vmax.f32 %v515, 0.0
      %v552 = vmax.f32 %v520, 0.0
      %v553 = vmax.f32 %v523, 0.0
      %v554 = vmax.f32 %v528, 0.0
      %v555 = vmax.f32 %v531, 0.0
      %v556 = vmax.f32 %v536, 0.0
      %v557 = vmax.f32 %v539, 0.0
      %v558 = vpack.c.bf16 %v543, %v542
      %v559 = vpack.c.bf16 %v545, %v544
      %v560 = vpack.c.bf16 %v547, %v546
      %v561 = vpack.c.bf16 %v549, %v548
      %v562 = vpack.c.bf16 %v551, %v550
      %v563 = vpack.c.bf16 %v553, %v552
      %v564 = vpack.c.bf16 %v555, %v554
      %v565 = vpack.c.bf16 %v557, %v556
      %v574 = vunpack.c.l.b16 %v558
      %v575 = vunpack.c.h.b16 %v558
      %v576 = vunpack.c.l.b16 %v559
      %v577 = vunpack.c.h.b16 %v559
      %v578 = vunpack.c.l.b16 %v560
      %v579 = vunpack.c.h.b16 %v560
      %v580 = vunpack.c.l.b16 %v561
      %v581 = vunpack.c.h.b16 %v561
      %v582 = vunpack.c.l.b16 %v562
      %v583 = vunpack.c.h.b16 %v562
      %v584 = vunpack.c.l.b16 %v563
      %v585 = vunpack.c.h.b16 %v563
      %v586 = vunpack.c.l.b16 %v564
      %v587 = vunpack.c.h.b16 %v564
      %v588 = vunpack.c.l.b16 %v565
      %v589 = vunpack.c.h.b16 %v565
      %v590 = vpack.c.b16 %v574, %v574
      %v591 = vpack.c.b16 %v575, %v575
      %v592 = vpack.c.b16 %v576, %v576
      %v593 = vpack.c.b16 %v577, %v577
      %v594 = vpack.c.b16 %v578, %v578
      %v595 = vpack.c.b16 %v579, %v579
      %v596 = vpack.c.b16 %v580, %v580
      %v597 = vpack.c.b16 %v581, %v581
      %v598 = vpack.c.b16 %v582, %v582
      %v599 = vpack.c.b16 %v583, %v583
      %v600 = vpack.c.b16 %v584, %v584
      %v601 = vpack.c.b16 %v585, %v585
      %v602 = vpack.c.b16 %v586, %v586
      %v603 = vpack.c.b16 %v587, %v587
      %v604 = vpack.c.b16 %v588, %v588
      %v605 = vpack.c.b16 %v589, %v589
      %622 = vst [vmem:[%s211] sm:$0xf] %v590
      %623 = vst [vmem:[%s211 + $0x4] sm:$0xf] %v591
      %624 = vst [vmem:[%s211 + $0x8] sm:$0xf] %v592
      %625 = vst [vmem:[%s211 + $0xc] sm:$0xf] %v593
      %626 = vst [vmem:[%s211 + $0x10] sm:$0xf] %v594
      %627 = vst [vmem:[%s211 + $0x14] sm:$0xf] %v595
      %628 = vst [vmem:[%s211 + $0x18] sm:$0xf] %v596
      %629 = vst [vmem:[%s211 + $0x1c] sm:$0xf] %v597
      %630 = vst [vmem:[%s211 + $0x20] sm:$0xf] %v598
      %631 = vst [vmem:[%s211 + $0x24] sm:$0xf] %v599
      %632 = vst [vmem:[%s211 + $0x28] sm:$0xf] %v600
      %633 = vst [vmem:[%s211 + $0x2c] sm:$0xf] %v601
      %634 = vst [vmem:[%s211 + $0x30] sm:$0xf] %v602
      %635 = vst [vmem:[%s211 + $0x34] sm:$0xf] %v603
      %636 = vst [vmem:[%s211 + $0x38] sm:$0xf] %v604
      %637 = vst [vmem:[%s211 + $0x3c] sm:$0xf] %v605
      %s638 = smul.u32 16, %s19
      %p639 = scmp.lt.s32.totalorder %s18, 1
      %s640 = scalar_select %p639, %s18, 1
      %p641 = scmp.lt.s32.totalorder %s638, 15
      %s642 = scalar_select %p641, %s638, 15
      %s643 = smul.addr %s640, 16
      %s644 = sadd.s32 %s642, %s643
      %s645 = smul.addr %s644, 4
      %s646 = scalar_lea.vmem %s3, %s645
      // Predicated region
      $region33: #{_lambda_.12} parent=31 // pred_check
        %p647 = pneg %p116
      $region34: #{_lambda_.12} parent=31 // pred_check_branch
        %649 = sbr.rel (%p647) target = $region36
      $region35: #{_lambda_.12} parent=31 // pred_region
        %s650 = smul.u32 16, %s19
      $region36: #{_lambda_.12} parent=31 // pred_fallthru
        _
    $region32: #{_lambda_.12} parent=5 // pred_fallthru
      _
    %p651 = scmp.le.s32.totalorder 2, %s9
    // Predicated region
    $region37: #{_lambda_.12} parent=5 // pred_check
      %p652 = pneg %p651
    $region38: #{_lambda_.12} parent=5 // pred_check_branch
      %654 = sbr.rel (%p652) target = $region40
    $region39: #{_lambda_.12} parent=5 // pred_region
      %s655 = ssub.s32 %s9, 2
      // Predicated region
      $region41: #{_lambda_.12} parent=39 // pred_check
        %p656 = pneg %p122
      $region42: #{_lambda_.12} parent=39 // pred_check_branch
        %658 = sbr.rel (%p656) target = $region44
      $region43: #{_lambda_.12} parent=39 // pred_region
        %s659 = smul.u32 16, %s21
        %p660 = scmp.lt.s32.totalorder %s20, 1
        %s661 = scalar_select %p660, %s20, 1
        %p662 = scmp.lt.s32.totalorder %s659, 15
        %s663 = scalar_select %p662, %s659, 15
        %s664 = smul.addr %s661, 16
        %s665 = sadd.s32 %s663, %s664
        %s666 = smul.addr %s665, 4
        %s667 = scalar_lea.vmem %s3, %s666
      $region44: #{_lambda_.12} parent=39 // pred_fallthru
        _
    $region40: #{_lambda_.12} parent=5 // pred_fallthru
      _
  $region6: #{_lambda_.12} parent=0 // loop_footer
    %s13 = sadd.s32 1, %s9
  $region7: #{_lambda_.12} parent=0 // loop_footer_branch
    %8 = sbr.rel target = $region3
  $region8: #{_lambda_.12} parent=0 // loop_exit
    _

// kernel: _lambda_.13
$region0: #{_lambda_.13}
  #allocation0 [shape = 'u32[]', space=smem, size = 0x4, offset = 0x4, fixed_abs, tag = 'smem constant byte address 0x4 - core index']
  #allocation1 [shape = 'u32[144,128]{1,0:T(1,128)}', space=vmem, size = 0x12000, scoped, tag = 'internal scratch']
  %s0 = inlined_call_operand.vmem [shape: bf16[2,128,384], index: 0, kind: input, shape index: {}]
  %s1 = inlined_call_operand.vmem [shape: bf16[384,128], index: 1, kind: input, shape index: {}]
  %s2 = inlined_call_operand.vmem [shape: f32[1,128], index: 2, kind: input, shape index: {}]
  %s3 = inlined_call_operand.vmem [shape: bf16[2,128,128], index: 3, kind: output, shape index: {}]
  %s4 = sld [smem:[#allocation0]]
  $region45: #{_lambda_.13} parent=0
    _
  %s6 = ssub.s32 1, %s4
  %s7 = scalar_select 0, %s6, %s4
  loop: start=0, step=1, limit=4
  $region2: #{_lambda_.13} parent=0 // loop_pre_header
    _
  $region3: #{_lambda_.13} parent=0 // loop_header
    %s9 = sphi 0, %s13
    %p10 = scmp.ge.s32.totalorder %s9, 4
    %s16 = sphi 0, %s28
    %s17 = sphi 0, %s24
    %s18 = sphi 0, %s16
    %s19 = sphi 0, %s17
    %s20 = sphi 0, %s18
    %s21 = sphi 0, %s19
    %s33 = sphi 0, %s35
    %s36 = sphi 0, %s33
    %s37 = sphi 0, %s36
    %s53 = sphi 0, %s37
    %s57 = sphi 0, %s57
    %s59 = sphi 0, %s57
    %s60 = sphi 0, %s59
    %s74 = sphi 0, %s60
    %s78 = sphi 0, %s78
    %s80 = sphi 0, %s78
    %s81 = sphi 0, %s80
    %s95 = sphi 0, %s81
    %s103 = sphi 0, %s105
    %s106 = sphi 0, %s103
    %s107 = sphi 0, %s106
    %s123 = sphi 0, %s107
  $region4: #{_lambda_.13} parent=0 // loop_header_branch
    %12 = sbr.rel (%p10) target = $region8
  $region5: #{_lambda_.13} parent=0 // loop_body
    %s14 = ssub.s32 %s9, 1
    %s15 = ssub.s32 %s9, 2
    %s22 = sadd.s32 1, %s17
    %p23 = scmp.ge.s32.totalorder %s22, 1
    %s24 = scalar_select %p23, 0, %s22
    %s25 = sadd.s32 1, %s16
    %s26 = scalar_select %p23, %s25, %s16
    %p27 = scmp.ge.s32.totalorder %s26, 2
    %s28 = scalar_select %p27, 0, %s26
    %s29 = ssub.s32 %s16, %s28
    %s30 = ssub.s32 %s17, %s24
    %s31 = sor.u32 %s29, %s30
    %p32 = scmp.eq.s32.totalorder %s31, 0
    %s34 = sadd.s32 %s33, 1
    %s35 = scalar_select %p32, %s33, %s34
    %p38 = pneg %p32
    %p39 = scmp.eq.s32.totalorder %s9, 1
    %p40 = por %p38, %p39
    %p41 = scmp.ne.s32.totalorder %s33, %s36
    %p42 = scmp.eq.s32.totalorder %s9, 0
    %p43 = por %p41, %p42
    %p44 = scmp.ne.s32.totalorder %s33, %s36
    %p45 = scmp.eq.s32.totalorder %s14, 1
    %p46 = por %p44, %p45
    %p47 = scmp.ne.s32.totalorder %s36, %s37
    %p48 = scmp.eq.s32.totalorder %s14, 0
    %p49 = por %p47, %p48
    %p50 = scmp.ne.s32.totalorder %s36, %s37
    %p51 = scmp.eq.s32.totalorder %s15, 1
    %p52 = por %p50, %p51
    %p54 = scmp.ne.s32.totalorder %s37, %s53
    %p55 = scmp.eq.s32.totalorder %s15, 0
    %p56 = por %p54, %p55
    %s58 = sadd.s32 %s57, 1
    %p61 = scmp.eq.s32.totalorder %s9, 1
    %p62 = scmp.ne.s32.totalorder %s57, %s59
    %p63 = scmp.eq.s32.totalorder %s9, 0
    %p64 = por %p62, %p63
    %p65 = scmp.ne.s32.totalorder %s57, %s59
    %p66 = scmp.eq.s32.totalorder %s14, 1
    %p67 = por %p65, %p66
    %p68 = scmp.ne.s32.totalorder %s59, %s60
    %p69 = scmp.eq.s32.totalorder %s14, 0
    %p70 = por %p68, %p69
    %p71 = scmp.ne.s32.totalorder %s59, %s60
    %p72 = scmp.eq.s32.totalorder %s15, 1
    %p73 = por %p71, %p72
    %p75 = scmp.ne.s32.totalorder %s60, %s74
    %p76 = scmp.eq.s32.totalorder %s15, 0
    %p77 = por %p75, %p76
    %s79 = sadd.s32 %s78, 1
    %p82 = scmp.eq.s32.totalorder %s9, 1
    %p83 = scmp.ne.s32.totalorder %s78, %s80
    %p84 = scmp.eq.s32.totalorder %s9, 0
    %p85 = por %p83, %p84
    %p86 = scmp.ne.s32.totalorder %s78, %s80
    %p87 = scmp.eq.s32.totalorder %s14, 1
    %p88 = por %p86, %p87
    %p89 = scmp.ne.s32.totalorder %s80, %s81
    %p90 = scmp.eq.s32.totalorder %s14, 0
    %p91 = por %p89, %p90
    %p92 = scmp.ne.s32.totalorder %s80, %s81
    %p93 = scmp.eq.s32.totalorder %s15, 1
    %p94 = por %p92, %p93
    %p96 = scmp.ne.s32.totalorder %s81, %s95
    %p97 = scmp.eq.s32.totalorder %s15, 0
    %p98 = por %p96, %p97
    %s99 = ssub.s32 %s16, %s28
    %s100 = ssub.s32 %s17, %s24
    %s101 = sor.u32 %s99, %s100
    %p102 = scmp.eq.s32.totalorder %s101, 0
    %s104 = sadd.s32 %s103, 1
    %s105 = scalar_select %p102, %s103, %s104
    %p108 = pneg %p102
    %p109 = scmp.eq.s32.totalorder %s9, 1
    %p110 = por %p108, %p109
    %p111 = scmp.ne.s32.totalorder %s103, %s106
    %p112 = scmp.eq.s32.totalorder %s9, 0
    %p113 = por %p111, %p112
    %p114 = scmp.ne.s32.totalorder %s103, %s106
    %p115 = scmp.eq.s32.totalorder %s14, 1
    %p116 = por %p114, %p115
    %p117 = scmp.ne.s32.totalorder %s106, %s107
    %p118 = scmp.eq.s32.totalorder %s14, 0
    %p119 = por %p117, %p118
    %p120 = scmp.ne.s32.totalorder %s106, %s107
    %p121 = scmp.eq.s32.totalorder %s15, 1
    %p122 = por %p120, %p121
    %p124 = scmp.ne.s32.totalorder %s107, %s123
    %p125 = scmp.eq.s32.totalorder %s15, 0
    %p126 = por %p124, %p125
    %p127 = scmp.le.s32.totalorder 1, %s9
    %p128 = scmp.lt.s32.totalorder %s9, 3
    %p129 = pnand %p127, %p128
    %p130 = pneg %p129
    // Predicated region
    $region9: #{_lambda_.13} parent=5 // pred_check
      _
    $region10: #{_lambda_.13} parent=5 // pred_check_branch
      %132 = sbr.rel (%p129) target = $region12
    $region11: #{_lambda_.13} parent=5 // pred_region
      %s133 = ssub.s32 %s9, 1
      // Predicated region
      $region13: #{_lambda_.13} parent=11 // pred_check
        %p134 = pneg %p70
      $region14: #{_lambda_.13} parent=11 // pred_check_branch
        %136 = sbr.rel (%p134) target = $region16
      $region15: #{_lambda_.13} parent=11 // pred_region
        _
      $region16: #{_lambda_.13} parent=11 // pred_fallthru
        _
      // Predicated region
      $region17: #{_lambda_.13} parent=11 // pred_check
        %p137 = pneg %p91
      $region18: #{_lambda_.13} parent=11 // pred_check_branch
        %139 = sbr.rel (%p137) target = $region20
      $region19: #{_lambda_.13} parent=11 // pred_region
        _
      $region20: #{_lambda_.13} parent=11 // pred_fallthru
        _
    $region12: #{_lambda_.13} parent=5 // pred_fallthru
      _
    %p140 = scmp.lt.s32.totalorder %s9, 2
    // Predicated region
    $region21: #{_lambda_.13} parent=5 // pred_check
      %p141 = pneg %p140
    $region22: #{_lambda_.13} parent=5 // pred_check_branch
      %143 = sbr.rel (%p141) target = $region24
    $region23: #{_lambda_.13} parent=5 // pred_region
      // Predicated region
      $region25: #{_lambda_.13} parent=23 // pred_check
        %p144 = pneg %p43
      $region26: #{_lambda_.13} parent=23 // pred_check_branch
        %146 = sbr.rel (%p144) target = $region28
      $region27: #{_lambda_.13} parent=23 // pred_region
        %s147 = smul.u32 16, %s17
        %p148 = scmp.lt.s32.totalorder %s16, 1
        %s149 = scalar_select %p148, %s16, 1
        %p150 = scmp.lt.s32.totalorder %s147, 15
        %s151 = scalar_select %p150, %s147, 15
        %s152 = smul.addr %s151, 3
        %s153 = smul.addr %s149, 48
        %s154 = sadd.s32 %s152, %s153
        %s155 = smul.addr %s154, 4
        %s156 = scalar_lea.vmem %s0, %s155
        %s157 = smul.u32 16, %s17
      $region28: #{_lambda_.13} parent=23 // pred_fallthru
        _
    $region24: #{_lambda_.13} parent=5 // pred_fallthru
      _
    %p158 = scmp.le.s32.totalorder 1, %s9
    %p159 = scmp.lt.s32.totalorder %s9, 3
    %p160 = pnand %p158, %p159
    %p161 = pneg %p160
    // Predicated region
    $region29: #{_lambda_.13} parent=5 // pred_check
      _
    $region30: #{_lambda_.13} parent=5 // pred_check_branch
      %163 = sbr.rel (%p160) target = $region32
    $region31: #{_lambda_.13} parent=5 // pred_region
      %s164 = ssub.s32 %s9, 1
      %s165 = smul.u32 16, %s19
      %p166 = scmp.lt.s32.totalorder %s18, 1
      %s167 = scalar_select %p166, %s18, 1
      %p168 = scmp.lt.s32.totalorder %s165, 15
      %s169 = scalar_select %p168, %s165, 15
      %s170 = smul.addr %s169, 3
      %s171 = smul.addr %s167, 48
      %s172 = sadd.s32 %s170, %s171
      %s173 = smul.addr %s172, 4
      %s174 = scalar_lea.vmem %s0, %s173
      %p175 = pneg %p49
      %p176 = pneg %p46
      %p177 = pneg %p70
      %p178 = pneg %p67
      %p179 = pneg %p91
      %p180 = pneg %p88
      %p181 = pneg %p119
      %p182 = pneg %p116
      %s183 = smul.u32 16, %s19
      %p184 = scmp.lt.s32.totalorder %s18, 1
      %s185 = scalar_select %p184, %s18, 1
      %p186 = scmp.lt.s32.totalorder %s183, 15
      %s187 = scalar_select %p186, %s183, 15
      %s188 = smul.addr %s185, 16
      %s189 = sadd.s32 %s187, %s188
      %s190 = smul.addr %s189, 4
      %s191 = scalar_lea.vmem %s3, %s190
      %s192 = smul.u32 16, %s19
      %p193 = scmp.lt.s32.totalorder %s18, 1
      %s194 = scalar_select %p193, %s18, 1
      %p195 = scmp.lt.s32.totalorder %s192, 15
      %s196 = scalar_select %p195, %s192, 15
      %s197 = smul.addr %s196, 3
      %s198 = smul.addr %s194, 48
      %s199 = sadd.s32 %s197, %s198
      %s200 = smul.addr %s199, 4
      %s201 = scalar_lea.vmem %s0, %s200
      %s202 = smul.u32 16, %s19
      %s203 = smul.u32 16, %s19
      %p204 = scmp.lt.s32.totalorder %s18, 1
      %s205 = scalar_select %p204, %s18, 1
      %p206 = scmp.lt.s32.totalorder %s203, 15
      %s207 = scalar_select %p206, %s203, 15
      %s208 = smul.addr %s205, 16
      %s209 = sadd.s32 %s207, %s208
      %s210 = smul.addr %s209, 4
      %s211 = scalar_lea.vmem %s3, %s210
      %s212 = smul.u32 16, %s19
      %v214 = vld [vmem:[%s201] sm:$0xff]
      %v215 = vld [vmem:[%s201 + $0x8] sm:$0xf]
      %v216 = vld [vmem:[%s201 + $0xc] sm:$0xff]
      %v217 = vld [vmem:[%s201 + $0x14] sm:$0xf]
      %v218 = vld [vmem:[%s201 + $0x18] sm:$0xff]
      %v219 = vld [vmem:[%s201 + $0x20] sm:$0xf]
      %v220 = vld [vmem:[%s201 + $0x24] sm:$0xff]
      %v221 = vld [vmem:[%s201 + $0x2c] sm:$0xf]
      %v222 = vld [vmem:[%s201 + $0x30] sm:$0xff]
      %v223 = vld [vmem:[%s201 + $0x38] sm:$0xf]
      %v224 = vld [vmem:[%s201 + $0x3c] sm:$0xff]
      %v225 = vld [vmem:[%s201 + $0x44] sm:$0xf]
      %v226 = vld [vmem:[%s201 + $0x48] sm:$0xff]
      %v227 = vld [vmem:[%s201 + $0x50] sm:$0xf]
      %v228 = vld [vmem:[%s201 + $0x54] sm:$0xff]
      %v229 = vld [vmem:[%s201 + $0x5c] sm:$0xf]
      %v230 = vld [vmem:[%s201 + $0x60] sm:$0xff]
      %v231 = vld [vmem:[%s201 + $0x68] sm:$0xf]
      %v232 = vld [vmem:[%s201 + $0x6c] sm:$0xff]
      %v233 = vld [vmem:[%s201 + $0x74] sm:$0xf]
      %v234 = vld [vmem:[%s201 + $0x78] sm:$0xff]
      %v235 = vld [vmem:[%s201 + $0x80] sm:$0xf]
      %v236 = vld [vmem:[%s201 + $0x84] sm:$0xff]
      %v237 = vld [vmem:[%s201 + $0x8c] sm:$0xf]
      %v238 = vld [vmem:[%s201 + $0x90] sm:$0xff]
      %v239 = vld [vmem:[%s201 + $0x98] sm:$0xf]
      %v240 = vld [vmem:[%s201 + $0x9c] sm:$0xff]
      %v241 = vld [vmem:[%s201 + $0xa4] sm:$0xf]
      %v242 = vld [vmem:[%s201 + $0xa8] sm:$0xff]
      %v243 = vld [vmem:[%s201 + $0xb0] sm:$0xf]
      %v244 = vld [vmem:[%s201 + $0xb4] sm:$0xff]
      %v245 = vld [vmem:[%s201 + $0xbc] sm:$0xf]
      %v246 = vld [vmem:[%s1] sm:$0xf]
      %v247 = vld [vmem:[%s1 + $0x4] sm:$0xf]
      %v248 = vld [vmem:[%s1 + $0x8] sm:$0xf]
      %v249 = vld [vmem:[%s1 + $0xc] sm:$0xf]
      %v250 = vld [vmem:[%s1 + $0x10] sm:$0xf]
      %v251 = vld [vmem:[%s1 + $0x14] sm:$0xf]
      %v252 = vld [vmem:[%s1 + $0x18] sm:$0xf]
      %v253 = vld [vmem:[%s1 + $0x1c] sm:$0xf]
      %v254 = vld [vmem:[%s1 + $0x20] sm:$0xf]
      %v255 = vld [vmem:[%s1 + $0x24] sm:$0xf]
      %v256 = vld [vmem:[%s1 + $0x28] sm:$0xf]
      %v257 = vld [vmem:[%s1 + $0x2c] sm:$0xf]
      %v258 = vld [vmem:[%s1 + $0x30] sm:$0xf]
      %v259 = vld [vmem:[%s1 + $0x34] sm:$0xf]
      %v260 = vld [vmem:[%s1 + $0x38] sm:$0xf]
      %v261 = vld [vmem:[%s1 + $0x3c] sm:$0xf]
      %v262 = vld [vmem:[%s1 + $0x40] sm:$0xf]
      %v263 = vld [vmem:[%s1 + $0x44] sm:$0xf]
      %v264 = vld [vmem:[%s1 + $0x48] sm:$0xf]
      %v265 = vld [vmem:[%s1 + $0x4c] sm:$0xf]
      %v266 = vld [vmem:[%s1 + $0x50] sm:$0xf]
      %v267 = vld [vmem:[%s1 + $0x54] sm:$0xf]
      %v268 = vld [vmem:[%s1 + $0x58] sm:$0xf]
      %v269 = vld [vmem:[%s1 + $0x5c] sm:$0xf]
      %v270 = vld [vmem:[%s1 + $0x60] sm:$0xf]
      %v271 = vld [vmem:[%s1 + $0x64] sm:$0xf]
      %v272 = vld [vmem:[%s1 + $0x68] sm:$0xf]
      %v273 = vld [vmem:[%s1 + $0x6c] sm:$0xf]
      %v274 = vld [vmem:[%s1 + $0x70] sm:$0xf]
      %v275 = vld [vmem:[%s1 + $0x74] sm:$0xf]
      %v276 = vld [vmem:[%s1 + $0x78] sm:$0xf]
      %v277 = vld [vmem:[%s1 + $0x7c] sm:$0xf]
      %v278 = vld [vmem:[%s1 + $0x80] sm:$0xf]
      %v279 = vld [vmem:[%s1 + $0x84] sm:$0xf]
      %v280 = vld [vmem:[%s1 + $0x88] sm:$0xf]
      %v281 = vld [vmem:[%s1 + $0x8c] sm:$0xf]
      %v282 = vld [vmem:[%s1 + $0x90] sm:$0xf]
      %v283 = vld [vmem:[%s1 + $0x94] sm:$0xf]
      %v284 = vld [vmem:[%s1 + $0x98] sm:$0xf]
      %v285 = vld [vmem:[%s1 + $0x9c] sm:$0xf]
      %v286 = vld [vmem:[%s1 + $0xa0] sm:$0xf]
      %v287 = vld [vmem:[%s1 + $0xa4] sm:$0xf]
      %v288 = vld [vmem:[%s1 + $0xa8] sm:$0xf]
      %v289 = vld [vmem:[%s1 + $0xac] sm:$0xf]
      %v290 = vld [vmem:[%s1 + $0xb0] sm:$0xf]
      %v291 = vld [vmem:[%s1 + $0xb4] sm:$0xf]
      %v292 = vld [vmem:[%s1 + $0xb8] sm:$0xf]
      %v293 = vld [vmem:[%s1 + $0xbc] sm:$0xf]
      %v294 = vld [vmem:[%s2] sm:$0x1]
      %v296 = vlaneseq
      %v297 = vshrl.u32 %v296, 7
      %v298 = vsub.s32 0, %v297
      %v299 = vrot.slane %v294, %v298
      %v333 = vunpack.c.l.b16 %v214
      %v334 = vunpack.c.h.b16 %v214
      %v335 = vunpack.c.l.b16 %v215
      %v336 = vunpack.c.l.b16 %v216
      %v337 = vunpack.c.h.b16 %v216
      %v338 = vunpack.c.l.b16 %v217
      %v339 = vunpack.c.l.b16 %v218
      %v340 = vunpack.c.h.b16 %v218
      %v341 = vunpack.c.l.b16 %v219
      %v342 = vunpack.c.l.b16 %v220
      %v343 = vunpack.c.h.b16 %v220
      %v344 = vunpack.c.l.b16 %v221
      %v345 = vunpack.c.l.b16 %v222
      %v346 = vunpack.c.h.b16 %v222
      %v347 = vunpack.c.l.b16 %v223
      %v348 = vunpack.c.l.b16 %v224
      %v349 = vunpack.c.h.b16 %v224
      %v350 = vunpack.c.l.b16 %v225
      %v351 = vunpack.c.l.b16 %v226
      %v352 = vunpack.c.h.b16 %v226
      %v353 = vunpack.c.l.b16 %v227
      %v354 = vunpack.c.l.b16 %v228
      %v355 = vunpack.c.h.b16 %v228
      %v356 = vunpack.c.l.b16 %v229
      %v357 = vunpack.c.l.b16 %v230
      %v358 = vunpack.c.h.b16 %v230
      %v359 = vunpack.c.l.b16 %v231
      %v360 = vunpack.c.l.b16 %v232
      %v361 = vunpack.c.h.b16 %v232
      %v362 = vunpack.c.l.b16 %v233
      %v363 = vunpack.c.l.b16 %v234
      %v364 = vunpack.c.h.b16 %v234
      %v365 = vunpack.c.l.b16 %v235
      %v366 = vunpack.c.l.b16 %v236
      %v367 = vunpack.c.h.b16 %v236
      %v368 = vunpack.c.l.b16 %v237
      %v369 = vunpack.c.l.b16 %v238
      %v370 = vunpack.c.h.b16 %v238
      %v371 = vunpack.c.l.b16 %v239
      %v372 = vunpack.c.l.b16 %v240
      %v373 = vunpack.c.h.b16 %v240
      %v374 = vunpack.c.l.b16 %v241
      %v375 = vunpack.c.l.b16 %v242
      %v376 = vunpack.c.h.b16 %v242
      %v377 = vunpack.c.l.b16 %v243
      %v378 = vunpack.c.l.b16 %v244
      %v379 = vunpack.c.h.b16 %v244
      %v380 = vunpack.c.l.b16 %v245
      %v381 = vpack.c.b16 %v336, %v333
      %v382 = vpack.c.b16 %v337, %v334
      %v383 = vpack.c.b16 %v338, %v335
      %v384 = vpack.c.b16 %v342, %v339
      %v385 = vpack.c.b16 %v343, %v340
      %v386 = vpack.c.b16 %v344, %v341
      %v387 = vpack.c.b16 %v348, %v345
      %v388 = vpack.c.b16 %v349, %v346
      %v389 = vpack.c.b16 %v350, %v347
      %v390 = vpack.c.b16 %v354, %v351
      %v391 = vpack.c.b16 %v355, %v352
      %v392 = vpack.c.b16 %v356, %v353
      %v393 = vpack.c.b16 %v360, %v357
      %v394 = vpack.c.b16 %v361, %v358
      %v395 = vpack.c.b16 %v362, %v359
      %v396 = vpack.c.b16 %v366, %v363
      %v397 = vpack.c.b16 %v367, %v364
      %v398 = vpack.c.b16 %v368, %v365
      %v399 = vpack.c.b16 %v372, %v369
      %v400 = vpack.c.b16 %v373, %v370
      %v401 = vpack.c.b16 %v374, %v371
      %v402 = vpack.c.b16 %v378, %v375
      %v403 = vpack.c.b16 %v379, %v376
      %v404 = vpack.c.b16 %v380, %v377
      %v477 = vunpack.c.l.b16 %v246
      %v478 = vunpack.c.l.b16 %v247
      %v479 = vunpack.c.l.b16 %v248
      %v480 = vunpack.c.l.b16 %v249
      %v481 = vunpack.c.l.b16 %v250
      %v482 = vunpack.c.l.b16 %v251
      %v483 = vunpack.c.l.b16 %v252
      %v484 = vunpack.c.l.b16 %v253
      %v485 = vunpack.c.l.b16 %v254
      %v486 = vunpack.c.l.b16 %v255
      %v487 = vunpack.c.l.b16 %v256
      %v488 = vunpack.c.l.b16 %v257
      %v489 = vunpack.c.l.b16 %v258
      %v490 = vunpack.c.l.b16 %v259
      %v491 = vunpack.c.l.b16 %v260
      %v492 = vunpack.c.l.b16 %v261
      %v493 = vunpack.c.l.b16 %v262
      %v494 = vunpack.c.l.b16 %v263
      %v495 = vunpack.c.l.b16 %v264
      %v496 = vunpack.c.l.b16 %v265
      %v497 = vunpack.c.l.b16 %v266
      %v498 = vunpack.c.l.b16 %v267
      %v499 = vunpack.c.l.b16 %v268
      %v500 = vunpack.c.l.b16 %v269
      %v501 = vunpack.c.l.b16 %v270
      %v502 = vunpack.c.l.b16 %v271
      %v503 = vunpack.c.l.b16 %v272
      %v504 = vunpack.c.l.b16 %v273
      %v505 = vunpack.c.l.b16 %v274
      %v506 = vunpack.c.l.b16 %v275
      %v507 = vunpack.c.l.b16 %v276
      %v508 = vunpack.c.l.b16 %v277
      %v509 = vunpack.c.l.b16 %v278
      %v510 = vunpack.c.l.b16 %v279
      %v511 = vunpack.c.l.b16 %v280
      %v512 = vunpack.c.l.b16 %v281
      %v513 = vunpack.c.l.b16 %v282
      %v514 = vunpack.c.l.b16 %v283
      %v515 = vunpack.c.l.b16 %v284
      %v516 = vunpack.c.l.b16 %v285
      %v517 = vunpack.c.l.b16 %v286
      %v518 = vunpack.c.l.b16 %v287
      %v519 = vunpack.c.l.b16 %v288
      %v520 = vunpack.c.l.b16 %v289
      %v521 = vunpack.c.l.b16 %v290
      %v522 = vunpack.c.l.b16 %v291
      %v523 = vunpack.c.l.b16 %v292
      %v524 = vunpack.c.l.b16 %v293
      %v525 = vpack.c.b16 %v478, %v477
      %v526 = vpack.c.b16 %v480, %v479
      %v527 = vpack.c.b16 %v482, %v481
      %v528 = vpack.c.b16 %v484, %v483
      %v529 = vpack.c.b16 %v486, %v485
      %v530 = vpack.c.b16 %v488, %v487
      %v531 = vpack.c.b16 %v490, %v489
      %v532 = vpack.c.b16 %v492, %v491
      %v533 = vpack.c.b16 %v494, %v493
      %v534 = vpack.c.b16 %v496, %v495
      %v535 = vpack.c.b16 %v498, %v497
      %v536 = vpack.c.b16 %v500, %v499
      %v537 = vpack.c.b16 %v502, %v501
      %v538 = vpack.c.b16 %v504, %v503
      %v539 = vpack.c.b16 %v506, %v505
      %v540 = vpack.c.b16 %v508, %v507
      %v541 = vpack.c.b16 %v510, %v509
      %v542 = vpack.c.b16 %v512, %v511
      %v543 = vpack.c.b16 %v514, %v513
      %v544 = vpack.c.b16 %v516, %v515
      %v545 = vpack.c.b16 %v518, %v517
      %v546 = vpack.c.b16 %v520, %v519
      %v547 = vpack.c.b16 %v522, %v521
      %v548 = vpack.c.b16 %v524, %v523
      %573 = vmatprep.subr.bf16.mxu0 0
      %574 = vmatpush1.bf16.msra.mxu0 %v532
      %575 = vmatprep.subr.bf16.mxu0 0
      %576 = vmatpush1.bf16.msra.mxu0 %v531
      %577 = vmatprep.subr.bf16.mxu0 0
      %578 = vmatpush1.bf16.msra.mxu0 %v530
      %579 = vmatprep.subr.bf16.mxu0 0
      %580 = vmatpush1.bf16.msra.mxu0 %v529
      %581 = vmatprep.subr.bf16.mxu0 0
      %582 = vmatpush1.bf16.msra.mxu0 %v528
      %583 = vmatprep.subr.bf16.mxu0 0
      %584 = vmatpush1.bf16.msra.mxu0 %v527
      %585 = vmatprep.subr.bf16.mxu0 0
      %586 = vmatpush1.bf16.msra.mxu0 %v526
      %587 = vmatprep.subr.bf16.mxu0 0
      %588 = vmatpush1.bf16.msra.mxu0 %v525
      %589 = vmatprep.subr.bf16.mxu0 0
      %590 = vmatpush2.bf16.msra.mxu0 %v540
      %591 = vmatprep.subr.bf16.mxu0 0
      %592 = vmatpush2.bf16.msra.mxu0 %v539
      %593 = vmatprep.subr.bf16.mxu0 0
      %594 = vmatpush2.bf16.msra.mxu0 %v538
      %595 = vmatprep.subr.bf16.mxu0 0
      %596 = vmatpush2.bf16.msra.mxu0 %v537
      %597 = vmatprep.subr.bf16.mxu0 0
      %598 = vmatpush2.bf16.msra.mxu0 %v536
      %599 = vmatprep.subr.bf16.mxu0 0
      %600 = vmatpush2.bf16.msra.mxu0 %v535
      %601 = vmatprep.subr.bf16.mxu0 0
      %602 = vmatpush2.bf16.msra.mxu0 %v534
      %603 = vmatprep.subr.bf16.mxu0 0
      %604 = vmatpush2.bf16.msra.mxu0 %v533
      %605 = vmatprep.mubr.bf16.mxu0 %v382
      %606 = vmatmul.mubr.bf16.gmra.mxu0 %v381
      %v607 = vpop.f32.mrf.mxu0
      %v608 = vadd.f32 %v299, %v607
      %v609 = vpop.f32.mrf.mxu0
      %v610 = vpop.f32.mrf.mxu0
      %v611 = vadd.f32 %v299, %v610
      %v612 = vpop.f32.mrf.mxu0
      %613 = vmatprep.mubr.bf16.mxu0 %v385
      %614 = vmatmul.mubr.bf16.gmra.mxu0 %v384
      %v615 = vpop.f32.mrf.mxu0
      %v616 = vadd.f32 %v299, %v615
      %v617 = vpop.f32.mrf.mxu0
      %v618 = vpop.f32.mrf.mxu0
      %v619 = vadd.f32 %v299, %v618
      %v620 = vpop.f32.mrf.mxu0
      %621 = vmatprep.mubr.bf16.mxu0 %v388
      %622 = vmatmul.mubr.bf16.gmra.mxu0 %v387
      %v623 = vpop.f32.mrf.mxu0
      %v624 = vadd.f32 %v299, %v623
      %v625 = vpop.f32.mrf.mxu0
      %v626 = vpop.f32.mrf.mxu0
      %v627 = vadd.f32 %v299, %v626
      %v628 = vpop.f32.mrf.mxu0
      %629 = vmatprep.mubr.bf16.mxu0 %v391
      %630 = vmatmul.mubr.bf16.gmra.mxu0 %v390
      %v631 = vpop.f32.mrf.mxu0
      %v632 = vadd.f32 %v299, %v631
      %v633 = vpop.f32.mrf.mxu0
      %v634 = vpop.f32.mrf.mxu0
      %v635 = vadd.f32 %v299, %v634
      %v636 = vpop.f32.mrf.mxu0
      %637 = vmatprep.mubr.bf16.mxu0 %v394
      %638 = vmatmul.mubr.bf16.gmra.mxu0 %v393
      %v639 = vpop.f32.mrf.mxu0
      %v640 = vadd.f32 %v299, %v639
      %v641 = vpop.f32.mrf.mxu0
      %v642 = vpop.f32.mrf.mxu0
      %v643 = vadd.f32 %v299, %v642
      %v644 = vpop.f32.mrf.mxu0
      %645 = vmatprep.mubr.bf16.mxu0 %v397
      %646 = vmatmul.mubr.bf16.gmra.mxu0 %v396
      %v647 = vpop.f32.mrf.mxu0
      %v648 = vadd.f32 %v299, %v647
      %v649 = vpop.f32.mrf.mxu0
      %v650 = vpop.f32.mrf.mxu0
      %v651 = vadd.f32 %v299, %v650
      %v652 = vpop.f32.mrf.mxu0
      %653 = vmatprep.mubr.bf16.mxu0 %v400
      %654 = vmatmul.mubr.bf16.gmra.mxu0 %v399
      %v655 = vpop.f32.mrf.mxu0
      %v656 = vadd.f32 %v299, %v655
      %v657 = vpop.f32.mrf.mxu0
      %v658 = vpop.f32.mrf.mxu0
      %v659 = vadd.f32 %v299, %v658
      %v660 = vpop.f32.mrf.mxu0
      %661 = vmatprep.mubr.bf16.mxu0 %v403
      %662 = vmatmul.mubr.bf16.gmra.mxu0 %v402
      %v663 = vpop.f32.mrf.mxu0
      %v664 = vadd.f32 %v299, %v663
      %v665 = vpop.f32.mrf.mxu0
      %v666 = vpop.f32.mrf.mxu0
      %v667 = vadd.f32 %v299, %v666
      %v668 = vpop.f32.mrf.mxu0
      %669 = vdwg.mxu0
      %670 = vmatprep.subr.bf16.mxu0 0
      %671 = vmatpush1.bf16.msra.mxu0 %v548
      %672 = vmatprep.subr.bf16.mxu0 0
      %673 = vmatpush1.bf16.msra.mxu0 %v547
      %674 = vmatprep.subr.bf16.mxu0 0
      %675 = vmatpush1.bf16.msra.mxu0 %v546
      %676 = vmatprep.subr.bf16.mxu0 0
      %677 = vmatpush1.bf16.msra.mxu0 %v545
      %678 = vmatprep.subr.bf16.mxu0 0
      %679 = vmatpush1.bf16.msra.mxu0 %v544
      %680 = vmatprep.subr.bf16.mxu0 0
      %681 = vmatpush1.bf16.msra.mxu0 %v543
      %682 = vmatprep.subr.bf16.mxu0 0
      %683 = vmatpush1.bf16.msra.mxu0 %v542
      %684 = vmatprep.subr.bf16.mxu0 0
      %685 = vmatpush1.bf16.msra.mxu0 %v541
      %686 = vmatprep.subr.bf16.mxu0 0
      %687 = vmatpush2.bf16.msra.mxu0 0
      %688 = vmatprep.subr.bf16.mxu0 0
      %689 = vmatpush2.bf16.msra.mxu0 0
      %690 = vmatprep.subr.bf16.mxu0 0
      %691 = vmatpush2.bf16.msra.mxu0 0
      %692 = vmatprep.subr.bf16.mxu0 0
      %693 = vmatpush2.bf16.msra.mxu0 0
      %694 = vmatprep.subr.bf16.mxu0 0
      %695 = vmatpush2.bf16.msra.mxu0 0
      %696 = vmatprep.subr.bf16.mxu0 0
      %697 = vmatpush2.bf16.msra.mxu0 0
      %698 = vmatprep.subr.bf16.mxu0 0
      %699 = vmatpush2.bf16.msra.mxu0 0
      %700 = vmatprep.subr.bf16.mxu0 0
      %701 = vmatpush2.bf16.msra.mxu0 0
      %702 = vmatprep.mubr.bf16.mxu0 0
      %703 = vmatmul.mubr.bf16.gmra.mxu0 %v383
      %v704 = vpop.f32.mrf.mxu0
      %v705 = vadd.f32 %v608, %v704
      %v706 = vpop.f32.mrf.mxu0
      %v707 = vpop.f32.mrf.mxu0
      %v708 = vadd.f32 %v611, %v707
      %v709 = vpop.f32.mrf.mxu0
      %710 = vmatprep.mubr.bf16.mxu0 0
      %711 = vmatmul.mubr.bf16.gmra.mxu0 %v386
      %v712 = vpop.f32.mrf.mxu0
      %v713 = vadd.f32 %v616, %v712
      %v714 = vpop.f32.mrf.mxu0
      %v715 = vpop.f32.mrf.mxu0
      %v716 = vadd.f32 %v619, %v715
      %v717 = vpop.f32.mrf.mxu0
      %718 = vmatprep.mubr.bf16.mxu0 0
      %719 = vmatmul.mubr.bf16.gmra.mxu0 %v389
      %v720 = vpop.f32.mrf.mxu0
      %v721 = vadd.f32 %v624, %v720
      %v722 = vpop.f32.mrf.mxu0
      %v723 = vpop.f32.mrf.mxu0
      %v724 = vadd.f32 %v627, %v723
      %v725 = vpop.f32.mrf.mxu0
      %726 = vmatprep.mubr.bf16.mxu0 0
      %727 = vmatmul.mubr.bf16.gmra.mxu0 %v392
      %v728 = vpop.f32.mrf.mxu0
      %v729 = vadd.f32 %v632, %v728
      %v730 = vpop.f32.mrf.mxu0
      %v731 = vpop.f32.mrf.mxu0
      %v732 = vadd.f32 %v635, %v731
      %v733 = vpop.f32.mrf.mxu0
      %734 = vmatprep.mubr.bf16.mxu0 0
      %735 = vmatmul.mubr.bf16.gmra.mxu0 %v395
      %v736 = vpop.f32.mrf.mxu0
      %v737 = vadd.f32 %v640, %v736
      %v738 = vpop.f32.mrf.mxu0
      %v739 = vpop.f32.mrf.mxu0
      %v740 = vadd.f32 %v643, %v739
      %v741 = vpop.f32.mrf.mxu0
      %742 = vmatprep.mubr.bf16.mxu0 0
      %743 = vmatmul.mubr.bf16.gmra.mxu0 %v398
      %v744 = vpop.f32.mrf.mxu0
      %v745 = vadd.f32 %v648, %v744
      %v746 = vpop.f32.mrf.mxu0
      %v747 = vpop.f32.mrf.mxu0
      %v748 = vadd.f32 %v651, %v747
      %v749 = vpop.f32.mrf.mxu0
      %750 = vmatprep.mubr.bf16.mxu0 0
      %751 = vmatmul.mubr.bf16.gmra.mxu0 %v401
      %v752 = vpop.f32.mrf.mxu0
      %v753 = vadd.f32 %v656, %v752
      %v754 = vpop.f32.mrf.mxu0
      %v755 = vpop.f32.mrf.mxu0
      %v756 = vadd.f32 %v659, %v755
      %v757 = vpop.f32.mrf.mxu0
      %758 = vmatprep.mubr.bf16.mxu0 0
      %759 = vmatmul.mubr.bf16.gmra.mxu0 %v404
      %v760 = vpop.f32.mrf.mxu0
      %v761 = vadd.f32 %v664, %v760
      %v762 = vpop.f32.mrf.mxu0
      %v763 = vpop.f32.mrf.mxu0
      %v764 = vadd.f32 %v667, %v763
      %v765 = vpop.f32.mrf.mxu0
      %766 = vdwg.mxu0
      %v767 = vmax.f32 %v705, 0.0
      %v768 = vmax.f32 %v708, 0.0
      %v769 = vmax.f32 %v713, 0.0
      %v770 = vmax.f32 %v716, 0.0
      %v771 = vmax.f32 %v721, 0.0
      %v772 = vmax.f32 %v724, 0.0
      %v773 = vmax.f32 %v729, 0.0
      %v774 = vmax.f32 %v732, 0.0
      %v775 = vmax.f32 %v737, 0.0
      %v776 = vmax.f32 %v740, 0.0
      %v777 = vmax.f32 %v745, 0.0
      %v778 = vmax.f32 %v748, 0.0
      %v779 = vmax.f32 %v753, 0.0
      %v780 = vmax.f32 %v756, 0.0
      %v781 = vmax.f32 %v761, 0.0
      %v782 = vmax.f32 %v764, 0.0
      %v783 = vpack.c.bf16 %v768, %v767
      %v784 = vpack.c.bf16 %v770, %v769
      %v785 = vpack.c.bf16 %v772, %v771
      %v786 = vpack.c.bf16 %v774, %v773
      %v787 = vpack.c.bf16 %v776, %v775
      %v788 = vpack.c.bf16 %v778, %v777
      %v789 = vpack.c.bf16 %v780, %v779
      %v790 = vpack.c.bf16 %v782, %v781
      %v799 = vunpack.c.l.b16 %v783
      %v800 = vunpack.c.h.b16 %v783
      %v801 = vunpack.c.l.b16 %v784
      %v802 = vunpack.c.h.b16 %v784
      %v803 = vunpack.c.l.b16 %v785
      %v804 = vunpack.c.h.b16 %v785
      %v805 = vunpack.c.l.b16 %v786
      %v806 = vunpack.c.h.b16 %v786
      %v807 = vunpack.c.l.b16 %v787
      %v808 = vunpack.c.h.b16 %v787
      %v809 = vunpack.c.l.b16 %v788
      %v810 = vunpack.c.h.b16 %v788
      %v811 = vunpack.c.l.b16 %v789
      %v812 = vunpack.c.h.b16 %v789
      %v813 = vunpack.c.l.b16 %v790
      %v814 = vunpack.c.h.b16 %v790
      %v815 = vpack.c.b16 %v799, %v799
      %v816 = vpack.c.b16 %v800, %v800
      %v817 = vpack.c.b16 %v801, %v801
      %v818 = vpack.c.b16 %v802, %v802
      %v819 = vpack.c.b16 %v803, %v803
      %v820 = vpack.c.b16 %v804, %v804
      %v821 = vpack.c.b16 %v805, %v805
      %v822 = vpack.c.b16 %v806, %v806
      %v823 = vpack.c.b16 %v807, %v807
      %v824 = vpack.c.b16 %v808, %v808
      %v825 = vpack.c.b16 %v809, %v809
      %v826 = vpack.c.b16 %v810, %v810
      %v827 = vpack.c.b16 %v811, %v811
      %v828 = vpack.c.b16 %v812, %v812
      %v829 = vpack.c.b16 %v813, %v813
      %v830 = vpack.c.b16 %v814, %v814
      %847 = vst [vmem:[%s211] sm:$0xf] %v815
      %848 = vst [vmem:[%s211 + $0x4] sm:$0xf] %v816
      %849 = vst [vmem:[%s211 + $0x8] sm:$0xf] %v817
      %850 = vst [vmem:[%s211 + $0xc] sm:$0xf] %v818
      %851 = vst [vmem:[%s211 + $0x10] sm:$0xf] %v819
      %852 = vst [vmem:[%s211 + $0x14] sm:$0xf] %v820
      %853 = vst [vmem:[%s211 + $0x18] sm:$0xf] %v821
      %854 = vst [vmem:[%s211 + $0x1c] sm:$0xf] %v822
      %855 = vst [vmem:[%s211 + $0x20] sm:$0xf] %v823
      %856 = vst [vmem:[%s211 + $0x24] sm:$0xf] %v824
      %857 = vst [vmem:[%s211 + $0x28] sm:$0xf] %v825
      %858 = vst [vmem:[%s211 + $0x2c] sm:$0xf] %v826
      %859 = vst [vmem:[%s211 + $0x30] sm:$0xf] %v827
      %860 = vst [vmem:[%s211 + $0x34] sm:$0xf] %v828
      %861 = vst [vmem:[%s211 + $0x38] sm:$0xf] %v829
      %862 = vst [vmem:[%s211 + $0x3c] sm:$0xf] %v830
      %s863 = smul.u32 16, %s19
      %p864 = scmp.lt.s32.totalorder %s18, 1
      %s865 = scalar_select %p864, %s18, 1
      %p866 = scmp.lt.s32.totalorder %s863, 15
      %s867 = scalar_select %p866, %s863, 15
      %s868 = smul.addr %s865, 16
      %s869 = sadd.s32 %s867, %s868
      %s870 = smul.addr %s869, 4
      %s871 = scalar_lea.vmem %s3, %s870
      // Predicated region
      $region33: #{_lambda_.13} parent=31 // pred_check
        %p872 = pneg %p116
      $region34: #{_lambda_.13} parent=31 // pred_check_branch
        %874 = sbr.rel (%p872) target = $region36
      $region35: #{_lambda_.13} parent=31 // pred_region
        %s875 = smul.u32 16, %s19
      $region36: #{_lambda_.13} parent=31 // pred_fallthru
        _
    $region32: #{_lambda_.13} parent=5 // pred_fallthru
      _
    %p876 = scmp.le.s32.totalorder 2, %s9
    // Predicated region
    $region37: #{_lambda_.13} parent=5 // pred_check
      %p877 = pneg %p876
    $region38: #{_lambda_.13} parent=5 // pred_check_branch
      %879 = sbr.rel (%p877) target = $region40
    $region39: #{_lambda_.13} parent=5 // pred_region
      %s880 = ssub.s32 %s9, 2
      // Predicated region
      $region41: #{_lambda_.13} parent=39 // pred_check
        %p881 = pneg %p122
      $region42: #{_lambda_.13} parent=39 // pred_check_branch
        %883 = sbr.rel (%p881) target = $region44
      $region43: #{_lambda_.13} parent=39 // pred_region
        %s884 = smul.u32 16, %s21
        %p885 = scmp.lt.s32.totalorder %s20, 1
        %s886 = scalar_select %p885, %s20, 1
        %p887 = scmp.lt.s32.totalorder %s884, 15
        %s888 = scalar_select %p887, %s884, 15
        %s889 = smul.addr %s886, 16
        %s890 = sadd.s32 %s888, %s889
        %s891 = smul.addr %s890, 4
        %s892 = scalar_lea.vmem %s3, %s891
      $region44: #{_lambda_.13} parent=39 // pred_fallthru
        _
    $region40: #{_lambda_.13} parent=5 // pred_fallthru
      _
  $region6: #{_lambda_.13} parent=0 // loop_footer
    %s13 = sadd.s32 1, %s9
  $region7: #{_lambda_.13} parent=0 // loop_footer_branch
    %8 = sbr.rel target = $region3
  $region8: #{_lambda_.13} parent=0 // loop_exit
    _

// kernel: _lambda_.15
$region0: #{_lambda_.15}
  #allocation0 [shape = 'u32[]', space=smem, size = 0x4, offset = 0x4, fixed_abs, tag = 'smem constant byte address 0x4 - core index']
  #allocation1 [shape = 'u32[144,128]{1,0:T(1,128)}', space=vmem, size = 0x12000, scoped, tag = 'internal scratch']
  %s0 = inlined_call_operand.vmem [shape: bf16[2,32,32], index: 0, kind: input, shape index: {}]
  %s1 = inlined_call_operand.vmem [shape: f32[1,32], index: 1, kind: input, shape index: {}]
  %s2 = inlined_call_operand.vmem [shape: f32[2,32,32], index: 2, kind: output, shape index: {}]
  %s3 = sld [smem:[#allocation0]]
  $region41: #{_lambda_.15} parent=0
    _
  %s5 = ssub.s32 1, %s3
  %s6 = scalar_select 0, %s5, %s3
  loop: start=0, step=1, limit=4
  $region2: #{_lambda_.15} parent=0 // loop_pre_header
    _
  $region3: #{_lambda_.15} parent=0 // loop_header
    %s8 = sphi 0, %s12
    %p9 = scmp.ge.s32.totalorder %s8, 4
    %s18 = sphi 0, %s20
    %s21 = sphi 0, %s18
    %s22 = sphi 0, %s21
    %s38 = sphi 0, %s22
    %s42 = sphi 0, %s42
    %s44 = sphi 0, %s42
    %s45 = sphi 0, %s44
    %s59 = sphi 0, %s45
    %s65 = sphi 0, %s67
    %s68 = sphi 0, %s65
    %s69 = sphi 0, %s68
    %s85 = sphi 0, %s69
  $region4: #{_lambda_.15} parent=0 // loop_header_branch
    %11 = sbr.rel (%p9) target = $region8
  $region5: #{_lambda_.15} parent=0 // loop_body
    %s13 = ssub.s32 %s8, 1
    %s14 = ssub.s32 %s8, 2
    %s15 = sadd.s32 %s8, 1
    %s16 = ssub.s32 %s8, %s15
    %p17 = scmp.eq.s32.totalorder %s16, 0
    %s19 = sadd.s32 %s18, 1
    %s20 = scalar_select %p17, %s18, %s19
    %p23 = pneg %p17
    %p24 = scmp.eq.s32.totalorder %s8, 1
    %p25 = por %p23, %p24
    %p26 = scmp.ne.s32.totalorder %s18, %s21
    %p27 = scmp.eq.s32.totalorder %s8, 0
    %p28 = por %p26, %p27
    %p29 = scmp.ne.s32.totalorder %s18, %s21
    %p30 = scmp.eq.s32.totalorder %s13, 1
    %p31 = por %p29, %p30
    %p32 = scmp.ne.s32.totalorder %s21, %s22
    %p33 = scmp.eq.s32.totalorder %s13, 0
    %p34 = por %p32, %p33
    %p35 = scmp.ne.s32.totalorder %s21, %s22
    %p36 = scmp.eq.s32.totalorder %s14, 1
    %p37 = por %p35, %p36
    %p39 = scmp.ne.s32.totalorder %s22, %s38
    %p40 = scmp.eq.s32.totalorder %s14, 0
    %p41 = por %p39, %p40
    %s43 = sadd.s32 %s42, 1
    %p46 = scmp.eq.s32.totalorder %s8, 1
    %p47 = scmp.ne.s32.totalorder %s42, %s44
    %p48 = scmp.eq.s32.totalorder %s8, 0
    %p49 = por %p47, %p48
    %p50 = scmp.ne.s32.totalorder %s42, %s44
    %p51 = scmp.eq.s32.totalorder %s13, 1
    %p52 = por %p50, %p51
    %p53 = scmp.ne.s32.totalorder %s44, %s45
    %p54 = scmp.eq.s32.totalorder %s13, 0
    %p55 = por %p53, %p54
    %p56 = scmp.ne.s32.totalorder %s44, %s45
    %p57 = scmp.eq.s32.totalorder %s14, 1
    %p58 = por %p56, %p57
    %p60 = scmp.ne.s32.totalorder %s45, %s59
    %p61 = scmp.eq.s32.totalorder %s14, 0
    %p62 = por %p60, %p61
    %s63 = ssub.s32 %s8, %s15
    %p64 = scmp.eq.s32.totalorder %s63, 0
    %s66 = sadd.s32 %s65, 1
    %s67 = scalar_select %p64, %s65, %s66
    %p70 = pneg %p64
    %p71 = scmp.eq.s32.totalorder %s8, 1
    %p72 = por %p70, %p71
    %p73 = scmp.ne.s32.totalorder %s65, %s68
    %p74 = scmp.eq.s32.totalorder %s8, 0
    %p75 = por %p73, %p74
    %p76 = scmp.ne.s32.totalorder %s65, %s68
    %p77 = scmp.eq.s32.totalorder %s13, 1
    %p78 = por %p76, %p77
    %p79 = scmp.ne.s32.totalorder %s68, %s69
    %p80 = scmp.eq.s32.totalorder %s13, 0
    %p81 = por %p79, %p80
    %p82 = scmp.ne.s32.totalorder %s68, %s69
    %p83 = scmp.eq.s32.totalorder %s14, 1
    %p84 = por %p82, %p83
    %p86 = scmp.ne.s32.totalorder %s69, %s85
    %p87 = scmp.eq.s32.totalorder %s14, 0
    %p88 = por %p86, %p87
    %p89 = scmp.le.s32.totalorder 1, %s8
    %p90 = scmp.lt.s32.totalorder %s8, 3
    %p91 = pnand %p89, %p90
    %p92 = pneg %p91
    // Predicated region
    $region9: #{_lambda_.15} parent=5 // pred_check
      _
    $region10: #{_lambda_.15} parent=5 // pred_check_branch
      %94 = sbr.rel (%p91) target = $region12
    $region11: #{_lambda_.15} parent=5 // pred_region
      %s95 = ssub.s32 %s8, 1
      // Predicated region
      $region13: #{_lambda_.15} parent=11 // pred_check
        %p96 = pneg %p55
      $region14: #{_lambda_.15} parent=11 // pred_check_branch
        %98 = sbr.rel (%p96) target = $region16
      $region15: #{_lambda_.15} parent=11 // pred_region
        _
      $region16: #{_lambda_.15} parent=11 // pred_fallthru
        _
    $region12: #{_lambda_.15} parent=5 // pred_fallthru
      _
    %p99 = scmp.lt.s32.totalorder %s8, 2
    // Predicated region
    $region17: #{_lambda_.15} parent=5 // pred_check
      %p100 = pneg %p99
    $region18: #{_lambda_.15} parent=5 // pred_check_branch
      %102 = sbr.rel (%p100) target = $region20
    $region19: #{_lambda_.15} parent=5 // pred_region
      // Predicated region
      $region21: #{_lambda_.15} parent=19 // pred_check
        %p103 = pneg %p28
      $region22: #{_lambda_.15} parent=19 // pred_check_branch
        %105 = sbr.rel (%p103) target = $region24
      $region23: #{_lambda_.15} parent=19 // pred_region
        %p106 = scmp.lt.s32.totalorder %s8, 1
        %s107 = scalar_select %p106, %s8, 1
        %s108 = smul.addr %s107, 4
        %s109 = smul.addr %s108, 4
        %s110 = scalar_lea.vmem %s0, %s109
      $region24: #{_lambda_.15} parent=19 // pred_fallthru
        _
    $region20: #{_lambda_.15} parent=5 // pred_fallthru
      _
    %p111 = scmp.le.s32.totalorder 1, %s8
    %p112 = scmp.lt.s32.totalorder %s8, 3
    %p113 = pnand %p111, %p112
    %p114 = pneg %p113
    // Predicated region
    $region25: #{_lambda_.15} parent=5 // pred_check
      _
    $region26: #{_lambda_.15} parent=5 // pred_check_branch
      %116 = sbr.rel (%p113) target = $region28
    $region27: #{_lambda_.15} parent=5 // pred_region
      %s117 = ssub.s32 %s8, 1
      %p118 = scmp.lt.s32.totalorder %s13, 1
      %s119 = scalar_select %p118, %s13, 1
      %s120 = smul.addr %s119, 4
      %s121 = smul.addr %s120, 4
      %s122 = scalar_lea.vmem %s0, %s121
      %p123 = pneg %p34
      %p124 = pneg %p31
      %p125 = pneg %p55
      %p126 = pneg %p52
      %p127 = pneg %p81
      %p128 = pneg %p78
      %p129 = scmp.lt.s32.totalorder %s13, 1
      %s130 = scalar_select %p129, %s13, 1
      %s131 = smul.addr %s130, 4
      %s132 = smul.addr %s131, 8
      %s133 = scalar_lea.vmem %s2, %s132
      %p134 = scmp.lt.s32.totalorder %s13, 1
      %s135 = scalar_select %p134, %s13, 1
      %s136 = smul.addr %s135, 4
      %s137 = smul.addr %s136, 4
      %s138 = scalar_lea.vmem %s0, %s137
      %p139 = scmp.lt.s32.totalorder %s13, 1
      %s140 = scalar_select %p139, %s13, 1
      %s141 = smul.addr %s140, 4
      %s142 = smul.addr %s141, 8
      %s143 = scalar_lea.vmem %s2, %s142
      %v144 = vld [vmem:[%s138] sm:$0xf]
      %v145 = vld [vmem:[%s138 + $0x4] sm:$0xf]
      %v146 = vld [vmem:[%s138 + $0x8] sm:$0xf]
      %v147 = vld [vmem:[%s138 + $0xc] sm:$0xf]
      %v148 = vunpack.c.l.bf16 %v144
      %v149 = vunpack.c.l.bf16 %v145
      %v150 = vunpack.c.l.bf16 %v146
      %v151 = vunpack.c.l.bf16 %v147
      %v152 = vmul.f32 %v148, %v148
      %v153 = vmul.f32 %v149, %v149
      %v154 = vmul.f32 %v150, %v150
      %v155 = vmul.f32 %v151, %v151
      %vm156 = vcmask 261120
      %v157 = vsel %vm156, %v152, 0.0
      %158 = vadd.xlane.f32.xlu0 %v157
      %v159 = vpop.xlane.xlu0 %158
      %v160 = vsel %vm156, %v153, 0.0
      %161 = vadd.xlane.f32.xlu0 %v160
      %v162 = vpop.xlane.xlu0 %161
      %v163 = vsel %vm156, %v154, 0.0
      %164 = vadd.xlane.f32.xlu0 %v163
      %v165 = vpop.xlane.xlu0 %164
      %v166 = vsel %vm156, %v155, 0.0
      %167 = vadd.xlane.f32.xlu0 %v166
      %v168 = vpop.xlane.xlu0 %167
      %v169 = vadd.f32 %v159, 1e-20
      %v170 = vadd.f32 %v162, 1e-20
      %v171 = vadd.f32 %v165, 1e-20
      %v172 = vadd.f32 %v168, 1e-20
      %v173 = vrsqrt.pop %v169
      %v174 = vrsqrt.pop %v170
      %v175 = vrsqrt.pop %v171
      %v176 = vrsqrt.pop %v172
      %v177 = vmul.f32 %v148, %v173
      %v178 = vmul.f32 %v149, %v174
      %v179 = vmul.f32 %v150, %v175
      %v180 = vmul.f32 %v151, %v176
      %v181 = vld [vmem:[%s1] sm:$0x1]
      %v183 = vlaneseq
      %v184 = vshrl.u32 %v183, 7
      %v185 = vsub.s32 0, %v184
      %v186 = vrot.slane %v181, %v185
      %v188 = vmul.f32 %v177, %v186
      %v189 = vmul.f32 %v178, %v186
      %v190 = vmul.f32 %v179, %v186
      %v191 = vmul.f32 %v180, %v186
      %192 = vst.msk [vmem:[%s143] sm:$0xff] %vm156, %v188
      %193 = vst.msk [vmem:[%s143 + $0x8] sm:$0xff] %vm156, %v189
      %194 = vst.msk [vmem:[%s143 + $0x10] sm:$0xff] %vm156, %v190
      %195 = vst.msk [vmem:[%s143 + $0x18] sm:$0xff] %vm156, %v191
      %p196 = scmp.lt.s32.totalorder %s13, 1
      %s197 = scalar_select %p196, %s13, 1
      %s198 = smul.addr %s197, 4
      %s199 = smul.addr %s198, 8
      %s200 = scalar_lea.vmem %s2, %s199
      // Predicated region
      $region29: #{_lambda_.15} parent=27 // pred_check
        %p201 = pneg %p78
      $region30: #{_lambda_.15} parent=27 // pred_check_branch
        %203 = sbr.rel (%p201) target = $region32
      $region31: #{_lambda_.15} parent=27 // pred_region
        _
      $region32: #{_lambda_.15} parent=27 // pred_fallthru
        _
    $region28: #{_lambda_.15} parent=5 // pred_fallthru
      _
    %p204 = scmp.le.s32.totalorder 2, %s8
    // Predicated region
    $region33: #{_lambda_.15} parent=5 // pred_check
      %p205 = pneg %p204
    $region34: #{_lambda_.15} parent=5 // pred_check_branch
      %207 = sbr.rel (%p205) target = $region36
    $region35: #{_lambda_.15} parent=5 // pred_region
      %s208 = ssub.s32 %s8, 2
      // Predicated region
      $region37: #{_lambda_.15} parent=35 // pred_check
        %p209 = pneg %p84
      $region38: #{_lambda_.15} parent=35 // pred_check_branch
        %211 = sbr.rel (%p209) target = $region40
      $region39: #{_lambda_.15} parent=35 // pred_region
        %p212 = scmp.lt.s32.totalorder %s14, 1
        %s213 = scalar_select %p212, %s14, 1
        %s214 = smul.addr %s213, 4
        %s215 = smul.addr %s214, 8
        %s216 = scalar_lea.vmem %s2, %s215
      $region40: #{_lambda_.15} parent=35 // pred_fallthru
        _
    $region36: #{_lambda_.15} parent=5 // pred_fallthru
      _
  $region6: #{_lambda_.15} parent=0 // loop_footer
    %s12 = sadd.s32 1, %s8
  $region7: #{_lambda_.15} parent=0 // loop_footer_branch
    %7 = sbr.rel target = $region3
  $region8: #{_lambda_.15} parent=0 // loop_exit
    _

</llo_original>
